<compile_context>
chip_gen: v6e
topology: v6e:2x2x1
jax: 0.10.0
libtpu: 0.0.40
codegen_flags: <defaults>
</compile_context>

<pallas_src>
import functools
import math

import numpy as np
import jax
import jax.numpy as jnp
from jax.experimental import pallas as pl
from jax.experimental.pallas import tpu as pltpu


NUM_CLASSES = 5          # stand-in for len(le.classes_)
STEM_PATCH = 4
CH = 32                  # scaled-down backbone width (ConvNeXt-Base would be 128..1024)
BACKBONE_FEATS = 1000    # torchvision convnext_base output dim
KSIZE = 7
LANE = 128               # TPU lane width; classifier output padded to a multiple of this


def _gelu_tanh(x):
    # TODO(synk): torchvision ConvNeXt uses exact (erf) GELU; erf has no guaranteed
    # Mosaic lowering, so the tanh approximation (~1e-3 abs drift) is used instead.
    c = math.sqrt(2.0 / math.pi)
    return 0.5 * x * (1.0 + jnp.tanh(c * (x + 0.044715 * x * x * x)))


def _ln(x, g, b, eps):
    mean = jnp.mean(x, axis=-1, keepdims=True)
    xc = x - mean
    var = jnp.mean(xc * xc, axis=-1, keepdims=True)
    return xc * jax.lax.rsqrt(var + eps) * g + b


# ----------------------------------------------------------------------------
# Single fused kernel: whole forward pass for one batch-tile (grid = batch tiles)
# ----------------------------------------------------------------------------
def _convnext_fused_kernel(
        patches_ref,                                     # [rows, patch_dim] bf16
        ii_ref, jj_ref,                                  # [rows, 1] int32 image-local (row, col)
        stem_w_ref, stem_b_ref, stem_g_ref, stem_bt_ref,
        dw_w_ref, dw_b_ref,                              # [49, 1, C] f32, [1, C] f32
        blk_g_ref, blk_bt_ref, w1_ref, b1_ref, w2_ref, b2_ref, ls_ref,
        head_g_ref, head_bt_ref, weff_ref, beff_ref,
        o_ref,                                           # [bt, ncp] f32 (lane-dense padded)
        *, eps, H, W, hw, bt, ksize):
    f32 = jnp.float32
    bf16 = jnp.bfloat16
    rows = bt * hw
    half = ksize // 2

    # ---- stem: patchify conv (one big-M matmul over all bt*HW tokens) + bias + LN ----
    feat = jnp.dot(patches_ref[...], stem_w_ref[...],
                   preferred_element_type=f32) + stem_b_ref[...]
    feat = _ln(feat, stem_g_ref[...], stem_bt_ref[...], eps)          # [rows, C] f32

    # ---- 7x7 depthwise conv: XLU sublane rolls + VPU masked FMA.
    #      For every valid (unmasked) destination row the rolled source row lies in the
    #      same image, so folding the batch into the row axis is exact; wrap-around and
    #      cross-image rows are zeroed by the boundary mask. ----
    ii = ii_ref[...]
    jj = jj_ref[...]
    row_masks = [jnp.where((ii + d >= 0) & (ii + d < H), 1.0, 0.0)
                 for d in range(-half, half + 1)]                     # [rows, 1] f32
    col_masks = [jnp.where((jj + d >= 0) & (jj + d < W), 1.0, 0.0)
                 for d in range(-half, half + 1)]

    acc = jnp.zeros(feat.shape, f32)
    for ki in range(ksize):
        for kj in range(ksize):
            shift = (ki - half) * W + (kj - half)        # source-row offset for this tap
            rolled = feat if shift == 0 else pltpu.roll(feat, (-shift) % rows, axis=0)
            m = row_masks[ki] * col_masks[kj]            # [rows, 1]
            acc = acc + rolled * dw_w_ref[ki * ksize + kj] * m
    y = acc + dw_b_ref[...]

    # ---- LN -> Linear(C,4C) -> GELU -> Linear(4C,C) -> layer-scale -> residual ----
    yn = _ln(y, blk_g_ref[...], blk_bt_ref[...], eps)
    h = jnp.dot(yn.astype(bf16), w1_ref[...], preferred_element_type=f32) + b1_ref[...]
    h = _gelu_tanh(h)
    h = jnp.dot(h.astype(bf16), w2_ref[...], preferred_element_type=f32) + b2_ref[...]
    y2 = feat + ls_ref[...] * h                                       # [rows, C] f32

    # ---- per-image global average pool (XLU sublane reduce over aligned segments) ----
    pooled_rows = []
    for b in range(bt):
        seg = y2[b * hw:(b + 1) * hw]                    # static, 8-aligned slice
        pooled_rows.append(jnp.mean(seg, axis=0, keepdims=True))
    pooled = jnp.concatenate(pooled_rows, axis=0)        # [bt, C]

    # ---- head LN + folded head@classifier (lane-dense padded logits) ----
    pooled = _ln(pooled, head_g_ref[...], head_bt_ref[...], eps)
    logits = jnp.dot(pooled.astype(bf16), weff_ref[...],
                     preferred_element_type=f32) + beff_ref[...]      # [bt, ncp]
    o_ref[...] = logits


# ----------------------------------------------------------------------------
# Parameters (deterministic synthetic init — no checkpoint loading)
# ----------------------------------------------------------------------------
def init_params(key):
    ks = jax.random.split(key, 8)
    s = 0.02
    patch_dim = 3 * STEM_PATCH * STEM_PATCH
    return {
        # stem: Conv2d(3, CH, kernel=4, stride=4) as patchify matmul + LN
        "stem_w": s * jax.random.normal(ks[0], (patch_dim, CH), jnp.float32),
        "stem_b": jnp.zeros((CH,), jnp.float32),
        "stem_ln_g": jnp.ones((CH,), jnp.float32),
        "stem_ln_b": jnp.zeros((CH,), jnp.float32),
        # ConvNeXt block
        "dw_w": s * jax.random.normal(ks[1], (KSIZE, KSIZE, CH), jnp.float32),
        "dw_b": jnp.zeros((CH,), jnp.float32),
        "blk_ln_g": jnp.ones((CH,), jnp.float32),
        "blk_ln_b": jnp.zeros((CH,), jnp.float32),
        "blk_w1": s * jax.random.normal(ks[2], (CH, 4 * CH), jnp.float32),
        "blk_b1": jnp.zeros((4 * CH,), jnp.float32),
        "blk_w2": s * jax.random.normal(ks[3], (4 * CH, CH), jnp.float32),
        "blk_b2": jnp.zeros((CH,), jnp.float32),
        "blk_ls": 1e-6 * jnp.ones((CH,), jnp.float32),
        # head: LN + Linear(CH, 1000)   (backbone's 1000-dim output)
        "head_ln_g": jnp.ones((CH,), jnp.float32),
        "head_ln_b": jnp.zeros((CH,), jnp.float32),
        "head_w": s * jax.random.normal(ks[4], (CH, BACKBONE_FEATS), jnp.float32),
        "head_b": s * jax.random.normal(ks[6], (BACKBONE_FEATS,), jnp.float32),
        # classifier: Linear(1000, num_classes)   (exactly as in BaseModel)
        "cls_w": s * jax.random.normal(ks[5], (BACKBONE_FEATS, NUM_CLASSES), jnp.float32),
        "cls_b": s * jax.random.normal(ks[7], (NUM_CLASSES,), jnp.float32),
    }


def _token_rowcol(Hs, Ws, bt):
    """Image-local (row, col) index for every token row of a batch-tile."""
    hw = Hs * Ws
    t = np.arange(hw)
    ii = np.tile((t // Ws).astype(np.int32), bt).reshape(bt * hw, 1)
    jj = np.tile((t % Ws).astype(np.int32), bt).reshape(bt * hw, 1)
    return ii, jj


def _pick_batch_tile(B, hw, max_rows=4096):
    """Images per grid step: feed each step a fat row-tile (multiple of 8 rows)."""
    bt = B
    while bt > 1 and bt % 2 == 0 and bt * hw > max_rows:
        bt //= 2
    # output BlockSpec needs bt % 8 == 0 unless bt == B (8-sublane rule)
    if bt != B and bt % 8 != 0:
        bt = B
    return bt


# ----------------------------------------------------------------------------
# Forward pass (mirrors BaseModel.forward: backbone -> classifier)
# ----------------------------------------------------------------------------
def forward(params, x_nchw):
    B, Cin, Himg, Wimg = x_nchw.shape
    assert Cin == 3 and Himg % STEM_PATCH == 0 and Wimg % STEM_PATCH == 0
    Hs, Ws = Himg // STEM_PATCH, Wimg // STEM_PATCH
    HW = Hs * Ws
    patch_dim = Cin * STEM_PATCH * STEM_PATCH
    ncp = ((NUM_CLASSES + LANE - 1) // LANE) * LANE

    bt = _pick_batch_tile(B, HW)
    assert B % bt == 0
    rows = bt * HW

    # --- patchify (pure layout glue; stays in JAX); batch folded into the row axis;
    #     bf16 so the only streamed per-step DMA is half-width ---
    x = jnp.transpose(x_nchw, (0, 2, 3, 1))                              # NHWC
    patches = x.reshape(B, Hs, STEM_PATCH, Ws, STEM_PATCH, Cin)
    patches = jnp.transpose(patches, (0, 1, 3, 2, 4, 5)).reshape(B * HW, patch_dim)
    patches = patches.astype(jnp.bfloat16)

    # --- tiny per-token (row, col) index vectors for in-kernel boundary masks ---
    ii_np, jj_np = _token_rowcol(Hs, Ws, bt)
    ii = jnp.asarray(ii_np)
    jj = jnp.asarray(jj_np)

    # --- fold head Linear(CH,1000) + classifier Linear(1000,nc); pad to lane width ---
    w_eff = params["head_w"] @ params["cls_w"]                           # [CH, nc]
    b_eff = params["head_b"] @ params["cls_w"] + params["cls_b"]         # [nc]
    w_eff = jnp.pad(w_eff, ((0, 0), (0, ncp - NUM_CLASSES))).astype(jnp.bfloat16)
    b_eff = jnp.pad(b_eff, (0, ncp - NUM_CLASSES)).reshape(1, ncp)

    r1 = lambda v: v.reshape(1, -1)
    ins = (
        patches, ii, jj,
        params["stem_w"].astype(jnp.bfloat16), r1(params["stem_b"]),
        r1(params["stem_ln_g"]), r1(params["stem_ln_b"]),
        params["dw_w"].reshape(KSIZE * KSIZE, 1, CH), r1(params["dw_b"]),
        r1(params["blk_ln_g"]), r1(params["blk_ln_b"]),
        params["blk_w1"].astype(jnp.bfloat16), r1(params["blk_b1"]),
        params["blk_w2"].astype(jnp.bfloat16), r1(params["blk_b2"]),
        r1(params["blk_ls"]),
        r1(params["head_ln_g"]), r1(params["head_ln_b"]),
        w_eff, b_eff,
    )

    # patches stream per batch-tile; ii/jj and all weights are grid-invariant.
    # TODO(synk): once the grid has >1-2 steps, add pipeline_mode=pl.Buffered(1) on the
    #             grid-invariant weight specs to drop their redundant double-buffering.
    in_specs = [pl.BlockSpec((rows, patch_dim), lambda i: (i, 0))]
    in_specs += [pl.BlockSpec(a.shape, lambda i, n=a.ndim: (0,) * n) for a in ins[1:]]
    out_specs = pl.BlockSpec((bt, ncp), lambda i: (i, 0))

    kernel = functools.partial(
        _convnext_fused_kernel,
        eps=1e-6, H=Hs, W=Ws, hw=HW, bt=bt, ksize=KSIZE)

    out = pl.pallas_call(
        kernel,
        out_shape=jax.ShapeDtypeStruct((B, ncp), jnp.float32),
        grid=(B // bt,),
        in_specs=in_specs,
        out_specs=out_specs,
        compiler_params=pltpu.CompilerParams(
            dimension_semantics=("parallel",),     # v7x: batch tiles across TensorCores
            vmem_limit_bytes=32 * 1024 * 1024),
    )(*ins)

    # padded lane-dense logits -> actual class count
    return out[:, :NUM_CLASSES]


if __name__ == "__main__":
    key = jax.random.PRNGKey(0)
    k_params, k_x = jax.random.split(key)
    params = init_params(k_params)
    x = jax.random.normal(k_x, (2, 3, 32, 32), jnp.float32)   # small NCHW input
    out = jax.jit(forward)(params, x)
    out = jax.block_until_ready(out)
    assert out.shape == (2, NUM_CLASSES)
    assert out.dtype == jnp.float32
    print("KERNEL_OK")
</pallas_src>

<mosaic_0001>
module attributes {stable_mosaic.version = 11 : i64} {
  func.func @_convnext_fused_kernel(%arg0: i32, %arg1: memref<128x48xbf16, #tpu.memory_space<vmem>>, %arg2: memref<128x1xi32, #tpu.memory_space<vmem>>, %arg3: memref<128x1xi32, #tpu.memory_space<vmem>>, %arg4: memref<48x32xbf16, #tpu.memory_space<vmem>>, %arg5: memref<1x32xf32, #tpu.memory_space<vmem>>, %arg6: memref<1x32xf32, #tpu.memory_space<vmem>>, %arg7: memref<1x32xf32, #tpu.memory_space<vmem>>, %arg8: memref<49x1x32xf32, #tpu.memory_space<vmem>>, %arg9: memref<1x32xf32, #tpu.memory_space<vmem>>, %arg10: memref<1x32xf32, #tpu.memory_space<vmem>>, %arg11: memref<1x32xf32, #tpu.memory_space<vmem>>, %arg12: memref<32x128xbf16, #tpu.memory_space<vmem>>, %arg13: memref<1x128xf32, #tpu.memory_space<vmem>>, %arg14: memref<128x32xbf16, #tpu.memory_space<vmem>>, %arg15: memref<1x32xf32, #tpu.memory_space<vmem>>, %arg16: memref<1x32xf32, #tpu.memory_space<vmem>>, %arg17: memref<1x32xf32, #tpu.memory_space<vmem>>, %arg18: memref<1x32xf32, #tpu.memory_space<vmem>>, %arg19: memref<32x128xbf16, #tpu.memory_space<vmem>>, %arg20: memref<1x128xf32, #tpu.memory_space<vmem>>, %arg21: memref<2x128xf32, #tpu.memory_space<vmem>>) attributes {dimension_semantics = [#tpu.dimension_semantics<parallel>], iteration_bounds = array<i64: 1>, scalar_prefetch = 0 : i64, scratch_operands = 0 : i64, tpu.core_type = #tpu.core_type<tc>, window_params = [{transform_indices = @transform_0, window_bounds = array<i64: 128, 48>}, {pipeline_mode = #tpu.pipeline_mode<synchronous>, transform_indices = @transform_1, window_bounds = array<i64: 128, 1>}, {pipeline_mode = #tpu.pipeline_mode<synchronous>, transform_indices = @transform_2, window_bounds = array<i64: 128, 1>}, {pipeline_mode = #tpu.pipeline_mode<synchronous>, transform_indices = @transform_3, window_bounds = array<i64: 48, 32>}, {pipeline_mode = #tpu.pipeline_mode<synchronous>, transform_indices = @transform_4, window_bounds = array<i64: 1, 32>}, {pipeline_mode = #tpu.pipeline_mode<synchronous>, transform_indices = @transform_5, window_bounds = array<i64: 1, 32>}, {pipeline_mode = #tpu.pipeline_mode<synchronous>, transform_indices = @transform_6, window_bounds = array<i64: 1, 32>}, {pipeline_mode = #tpu.pipeline_mode<synchronous>, transform_indices = @transform_7, window_bounds = array<i64: 49, 1, 32>}, {pipeline_mode = #tpu.pipeline_mode<synchronous>, transform_indices = @transform_8, window_bounds = array<i64: 1, 32>}, {pipeline_mode = #tpu.pipeline_mode<synchronous>, transform_indices = @transform_9, window_bounds = array<i64: 1, 32>}, {pipeline_mode = #tpu.pipeline_mode<synchronous>, transform_indices = @transform_10, window_bounds = array<i64: 1, 32>}, {pipeline_mode = #tpu.pipeline_mode<synchronous>, transform_indices = @transform_11, window_bounds = array<i64: 32, 128>}, {pipeline_mode = #tpu.pipeline_mode<synchronous>, transform_indices = @transform_12, window_bounds = array<i64: 1, 128>}, {pipeline_mode = #tpu.pipeline_mode<synchronous>, transform_indices = @transform_13, window_bounds = array<i64: 128, 32>}, {pipeline_mode = #tpu.pipeline_mode<synchronous>, transform_indices = @transform_14, window_bounds = array<i64: 1, 32>}, {pipeline_mode = #tpu.pipeline_mode<synchronous>, transform_indices = @transform_15, window_bounds = array<i64: 1, 32>}, {pipeline_mode = #tpu.pipeline_mode<synchronous>, transform_indices = @transform_16, window_bounds = array<i64: 1, 32>}, {pipeline_mode = #tpu.pipeline_mode<synchronous>, transform_indices = @transform_17, window_bounds = array<i64: 1, 32>}, {pipeline_mode = #tpu.pipeline_mode<synchronous>, transform_indices = @transform_18, window_bounds = array<i64: 32, 128>}, {pipeline_mode = #tpu.pipeline_mode<synchronous>, transform_indices = @transform_19, window_bounds = array<i64: 1, 128>}, {transform_indices = @transform_20, window_bounds = array<i64: 2, 128>}]} {
    %c0 = arith.constant 0 : index
    %c0_0 = arith.constant 0 : index
    %0 = vector.load %arg1[%c0, %c0_0] : memref<128x48xbf16, #tpu.memory_space<vmem>>, vector<128x48xbf16>
    %c0_1 = arith.constant 0 : index
    %c0_2 = arith.constant 0 : index
    %1 = vector.load %arg4[%c0_1, %c0_2] : memref<48x32xbf16, #tpu.memory_space<vmem>>, vector<48x32xbf16>
    %cst = arith.constant dense<0.000000e+00> : vector<128x32xf32>
    %2 = tpu.matmul %0, %1, %cst {dimension_numbers = #tpu.dot_dimension_numbers<[1], [0], [0], [1], [0, 0, 1, 1], [], []>} : vector<128x48xbf16>, vector<48x32xbf16>, vector<128x32xf32> -> vector<128x32xf32>
    %c0_3 = arith.constant 0 : index
    %c0_4 = arith.constant 0 : index
    %3 = vector.load %arg5[%c0_3, %c0_4] : memref<1x32xf32, #tpu.memory_space<vmem>>, vector<1x32xf32>
    %4 = vector.broadcast %3 : vector<1x32xf32> to vector<128x32xf32>
    %5 = arith.addf %2, %4 : vector<128x32xf32>
    %c0_5 = arith.constant 0 : index
    %c0_6 = arith.constant 0 : index
    %6 = vector.load %arg6[%c0_5, %c0_6] : memref<1x32xf32, #tpu.memory_space<vmem>>, vector<1x32xf32>
    %c0_7 = arith.constant 0 : index
    %c0_8 = arith.constant 0 : index
    %7 = vector.load %arg7[%c0_7, %c0_8] : memref<1x32xf32, #tpu.memory_space<vmem>>, vector<1x32xf32>
    %cst_9 = arith.constant dense<0.000000e+00> : vector<128xf32>
    %8 = vector.multi_reduction <add>, %5, %cst_9 [1] : vector<128x32xf32> to vector<128xf32>
    %9 = vector.shape_cast %8 : vector<128xf32> to vector<128x1xf32>
    %cst_10 = arith.constant 3.200000e+01 : f32
    %10 = vector.broadcast %cst_10 : f32 to vector<128x1xf32>
    %11 = arith.divf %9, %10 : vector<128x1xf32>
    %12 = vector.broadcast %11 : vector<128x1xf32> to vector<128x32xf32>
    %13 = arith.subf %5, %12 : vector<128x32xf32>
    %14 = arith.mulf %13, %13 : vector<128x32xf32>
    %cst_11 = arith.constant dense<0.000000e+00> : vector<128xf32>
    %15 = vector.multi_reduction <add>, %14, %cst_11 [1] : vector<128x32xf32> to vector<128xf32>
    %16 = vector.shape_cast %15 : vector<128xf32> to vector<128x1xf32>
    %cst_12 = arith.constant 3.200000e+01 : f32
    %17 = vector.broadcast %cst_12 : f32 to vector<128x1xf32>
    %18 = arith.divf %16, %17 : vector<128x1xf32>
    %cst_13 = arith.constant 9.99999997E-7 : f32
    %19 = vector.broadcast %cst_13 : f32 to vector<128x1xf32>
    %20 = arith.addf %18, %19 : vector<128x1xf32>
    %21 = math.rsqrt %20 : vector<128x1xf32>
    %22 = vector.broadcast %21 : vector<128x1xf32> to vector<128x32xf32>
    %23 = arith.mulf %13, %22 : vector<128x32xf32>
    %24 = vector.broadcast %6 : vector<1x32xf32> to vector<128x32xf32>
    %25 = arith.mulf %23, %24 : vector<128x32xf32>
    %26 = vector.broadcast %7 : vector<1x32xf32> to vector<128x32xf32>
    %27 = arith.addf %25, %26 : vector<128x32xf32>
    %c0_14 = arith.constant 0 : index
    %c0_15 = arith.constant 0 : index
    %28 = vector.load %arg2[%c0_14, %c0_15] : memref<128x1xi32, #tpu.memory_space<vmem>>, vector<128x1xi32>
    %c0_16 = arith.constant 0 : index
    %c0_17 = arith.constant 0 : index
    %29 = vector.load %arg3[%c0_16, %c0_17] : memref<128x1xi32, #tpu.memory_space<vmem>>, vector<128x1xi32>
    %c-3_i32 = arith.constant -3 : i32
    %30 = vector.broadcast %c-3_i32 : i32 to vector<128x1xi32>
    %31 = arith.addi %28, %30 : vector<128x1xi32>
    %c0_i32 = arith.constant 0 : i32
    %32 = vector.broadcast %c0_i32 : i32 to vector<128x1xi32>
    %33 = arith.cmpi sge, %31, %32 : vector<128x1xi32>
    %c-3_i32_18 = arith.constant -3 : i32
    %34 = vector.broadcast %c-3_i32_18 : i32 to vector<128x1xi32>
    %35 = arith.addi %28, %34 : vector<128x1xi32>
    %c8_i32 = arith.constant 8 : i32
    %36 = vector.broadcast %c8_i32 : i32 to vector<128x1xi32>
    %37 = arith.cmpi slt, %35, %36 : vector<128x1xi32>
    %38 = arith.andi %33, %37 : vector<128x1xi1>
    %cst_19 = arith.constant 1.000000e+00 : f32
    %cst_20 = arith.constant 0.000000e+00 : f32
    %39 = vector.broadcast %cst_19 : f32 to vector<128x1xf32>
    %40 = vector.broadcast %cst_20 : f32 to vector<128x1xf32>
    %41 = arith.select %38, %39, %40 : vector<128x1xi1>, vector<128x1xf32>
    %c-2_i32 = arith.constant -2 : i32
    %42 = vector.broadcast %c-2_i32 : i32 to vector<128x1xi32>
    %43 = arith.addi %28, %42 : vector<128x1xi32>
    %c0_i32_21 = arith.constant 0 : i32
    %44 = vector.broadcast %c0_i32_21 : i32 to vector<128x1xi32>
    %45 = arith.cmpi sge, %43, %44 : vector<128x1xi32>
    %c-2_i32_22 = arith.constant -2 : i32
    %46 = vector.broadcast %c-2_i32_22 : i32 to vector<128x1xi32>
    %47 = arith.addi %28, %46 : vector<128x1xi32>
    %c8_i32_23 = arith.constant 8 : i32
    %48 = vector.broadcast %c8_i32_23 : i32 to vector<128x1xi32>
    %49 = arith.cmpi slt, %47, %48 : vector<128x1xi32>
    %50 = arith.andi %45, %49 : vector<128x1xi1>
    %cst_24 = arith.constant 1.000000e+00 : f32
    %cst_25 = arith.constant 0.000000e+00 : f32
    %51 = vector.broadcast %cst_24 : f32 to vector<128x1xf32>
    %52 = vector.broadcast %cst_25 : f32 to vector<128x1xf32>
    %53 = arith.select %50, %51, %52 : vector<128x1xi1>, vector<128x1xf32>
    %c-1_i32 = arith.constant -1 : i32
    %54 = vector.broadcast %c-1_i32 : i32 to vector<128x1xi32>
    %55 = arith.addi %28, %54 : vector<128x1xi32>
    %c0_i32_26 = arith.constant 0 : i32
    %56 = vector.broadcast %c0_i32_26 : i32 to vector<128x1xi32>
    %57 = arith.cmpi sge, %55, %56 : vector<128x1xi32>
    %c-1_i32_27 = arith.constant -1 : i32
    %58 = vector.broadcast %c-1_i32_27 : i32 to vector<128x1xi32>
    %59 = arith.addi %28, %58 : vector<128x1xi32>
    %c8_i32_28 = arith.constant 8 : i32
    %60 = vector.broadcast %c8_i32_28 : i32 to vector<128x1xi32>
    %61 = arith.cmpi slt, %59, %60 : vector<128x1xi32>
    %62 = arith.andi %57, %61 : vector<128x1xi1>
    %cst_29 = arith.constant 1.000000e+00 : f32
    %cst_30 = arith.constant 0.000000e+00 : f32
    %63 = vector.broadcast %cst_29 : f32 to vector<128x1xf32>
    %64 = vector.broadcast %cst_30 : f32 to vector<128x1xf32>
    %65 = arith.select %62, %63, %64 : vector<128x1xi1>, vector<128x1xf32>
    %c0_i32_31 = arith.constant 0 : i32
    %66 = vector.broadcast %c0_i32_31 : i32 to vector<128x1xi32>
    %67 = arith.addi %28, %66 : vector<128x1xi32>
    %c0_i32_32 = arith.constant 0 : i32
    %68 = vector.broadcast %c0_i32_32 : i32 to vector<128x1xi32>
    %69 = arith.cmpi sge, %67, %68 : vector<128x1xi32>
    %c0_i32_33 = arith.constant 0 : i32
    %70 = vector.broadcast %c0_i32_33 : i32 to vector<128x1xi32>
    %71 = arith.addi %28, %70 : vector<128x1xi32>
    %c8_i32_34 = arith.constant 8 : i32
    %72 = vector.broadcast %c8_i32_34 : i32 to vector<128x1xi32>
    %73 = arith.cmpi slt, %71, %72 : vector<128x1xi32>
    %74 = arith.andi %69, %73 : vector<128x1xi1>
    %cst_35 = arith.constant 1.000000e+00 : f32
    %cst_36 = arith.constant 0.000000e+00 : f32
    %75 = vector.broadcast %cst_35 : f32 to vector<128x1xf32>
    %76 = vector.broadcast %cst_36 : f32 to vector<128x1xf32>
    %77 = arith.select %74, %75, %76 : vector<128x1xi1>, vector<128x1xf32>
    %c1_i32 = arith.constant 1 : i32
    %78 = vector.broadcast %c1_i32 : i32 to vector<128x1xi32>
    %79 = arith.addi %28, %78 : vector<128x1xi32>
    %c0_i32_37 = arith.constant 0 : i32
    %80 = vector.broadcast %c0_i32_37 : i32 to vector<128x1xi32>
    %81 = arith.cmpi sge, %79, %80 : vector<128x1xi32>
    %c1_i32_38 = arith.constant 1 : i32
    %82 = vector.broadcast %c1_i32_38 : i32 to vector<128x1xi32>
    %83 = arith.addi %28, %82 : vector<128x1xi32>
    %c8_i32_39 = arith.constant 8 : i32
    %84 = vector.broadcast %c8_i32_39 : i32 to vector<128x1xi32>
    %85 = arith.cmpi slt, %83, %84 : vector<128x1xi32>
    %86 = arith.andi %81, %85 : vector<128x1xi1>
    %cst_40 = arith.constant 1.000000e+00 : f32
    %cst_41 = arith.constant 0.000000e+00 : f32
    %87 = vector.broadcast %cst_40 : f32 to vector<128x1xf32>
    %88 = vector.broadcast %cst_41 : f32 to vector<128x1xf32>
    %89 = arith.select %86, %87, %88 : vector<128x1xi1>, vector<128x1xf32>
    %c2_i32 = arith.constant 2 : i32
    %90 = vector.broadcast %c2_i32 : i32 to vector<128x1xi32>
    %91 = arith.addi %28, %90 : vector<128x1xi32>
    %c0_i32_42 = arith.constant 0 : i32
    %92 = vector.broadcast %c0_i32_42 : i32 to vector<128x1xi32>
    %93 = arith.cmpi sge, %91, %92 : vector<128x1xi32>
    %c2_i32_43 = arith.constant 2 : i32
    %94 = vector.broadcast %c2_i32_43 : i32 to vector<128x1xi32>
    %95 = arith.addi %28, %94 : vector<128x1xi32>
    %c8_i32_44 = arith.constant 8 : i32
    %96 = vector.broadcast %c8_i32_44 : i32 to vector<128x1xi32>
    %97 = arith.cmpi slt, %95, %96 : vector<128x1xi32>
    %98 = arith.andi %93, %97 : vector<128x1xi1>
    %cst_45 = arith.constant 1.000000e+00 : f32
    %cst_46 = arith.constant 0.000000e+00 : f32
    %99 = vector.broadcast %cst_45 : f32 to vector<128x1xf32>
    %100 = vector.broadcast %cst_46 : f32 to vector<128x1xf32>
    %101 = arith.select %98, %99, %100 : vector<128x1xi1>, vector<128x1xf32>
    %c3_i32 = arith.constant 3 : i32
    %102 = vector.broadcast %c3_i32 : i32 to vector<128x1xi32>
    %103 = arith.addi %28, %102 : vector<128x1xi32>
    %c0_i32_47 = arith.constant 0 : i32
    %104 = vector.broadcast %c0_i32_47 : i32 to vector<128x1xi32>
    %105 = arith.cmpi sge, %103, %104 : vector<128x1xi32>
    %c3_i32_48 = arith.constant 3 : i32
    %106 = vector.broadcast %c3_i32_48 : i32 to vector<128x1xi32>
    %107 = arith.addi %28, %106 : vector<128x1xi32>
    %c8_i32_49 = arith.constant 8 : i32
    %108 = vector.broadcast %c8_i32_49 : i32 to vector<128x1xi32>
    %109 = arith.cmpi slt, %107, %108 : vector<128x1xi32>
    %110 = arith.andi %105, %109 : vector<128x1xi1>
    %cst_50 = arith.constant 1.000000e+00 : f32
    %cst_51 = arith.constant 0.000000e+00 : f32
    %111 = vector.broadcast %cst_50 : f32 to vector<128x1xf32>
    %112 = vector.broadcast %cst_51 : f32 to vector<128x1xf32>
    %113 = arith.select %110, %111, %112 : vector<128x1xi1>, vector<128x1xf32>
    %c-3_i32_52 = arith.constant -3 : i32
    %114 = vector.broadcast %c-3_i32_52 : i32 to vector<128x1xi32>
    %115 = arith.addi %29, %114 : vector<128x1xi32>
    %c0_i32_53 = arith.constant 0 : i32
    %116 = vector.broadcast %c0_i32_53 : i32 to vector<128x1xi32>
    %117 = arith.cmpi sge, %115, %116 : vector<128x1xi32>
    %c-3_i32_54 = arith.constant -3 : i32
    %118 = vector.broadcast %c-3_i32_54 : i32 to vector<128x1xi32>
    %119 = arith.addi %29, %118 : vector<128x1xi32>
    %c8_i32_55 = arith.constant 8 : i32
    %120 = vector.broadcast %c8_i32_55 : i32 to vector<128x1xi32>
    %121 = arith.cmpi slt, %119, %120 : vector<128x1xi32>
    %122 = arith.andi %117, %121 : vector<128x1xi1>
    %cst_56 = arith.constant 1.000000e+00 : f32
    %cst_57 = arith.constant 0.000000e+00 : f32
    %123 = vector.broadcast %cst_56 : f32 to vector<128x1xf32>
    %124 = vector.broadcast %cst_57 : f32 to vector<128x1xf32>
    %125 = arith.select %122, %123, %124 : vector<128x1xi1>, vector<128x1xf32>
    %c-2_i32_58 = arith.constant -2 : i32
    %126 = vector.broadcast %c-2_i32_58 : i32 to vector<128x1xi32>
    %127 = arith.addi %29, %126 : vector<128x1xi32>
    %c0_i32_59 = arith.constant 0 : i32
    %128 = vector.broadcast %c0_i32_59 : i32 to vector<128x1xi32>
    %129 = arith.cmpi sge, %127, %128 : vector<128x1xi32>
    %c-2_i32_60 = arith.constant -2 : i32
    %130 = vector.broadcast %c-2_i32_60 : i32 to vector<128x1xi32>
    %131 = arith.addi %29, %130 : vector<128x1xi32>
    %c8_i32_61 = arith.constant 8 : i32
    %132 = vector.broadcast %c8_i32_61 : i32 to vector<128x1xi32>
    %133 = arith.cmpi slt, %131, %132 : vector<128x1xi32>
    %134 = arith.andi %129, %133 : vector<128x1xi1>
    %cst_62 = arith.constant 1.000000e+00 : f32
    %cst_63 = arith.constant 0.000000e+00 : f32
    %135 = vector.broadcast %cst_62 : f32 to vector<128x1xf32>
    %136 = vector.broadcast %cst_63 : f32 to vector<128x1xf32>
    %137 = arith.select %134, %135, %136 : vector<128x1xi1>, vector<128x1xf32>
    %c-1_i32_64 = arith.constant -1 : i32
    %138 = vector.broadcast %c-1_i32_64 : i32 to vector<128x1xi32>
    %139 = arith.addi %29, %138 : vector<128x1xi32>
    %c0_i32_65 = arith.constant 0 : i32
    %140 = vector.broadcast %c0_i32_65 : i32 to vector<128x1xi32>
    %141 = arith.cmpi sge, %139, %140 : vector<128x1xi32>
    %c-1_i32_66 = arith.constant -1 : i32
    %142 = vector.broadcast %c-1_i32_66 : i32 to vector<128x1xi32>
    %143 = arith.addi %29, %142 : vector<128x1xi32>
    %c8_i32_67 = arith.constant 8 : i32
    %144 = vector.broadcast %c8_i32_67 : i32 to vector<128x1xi32>
    %145 = arith.cmpi slt, %143, %144 : vector<128x1xi32>
    %146 = arith.andi %141, %145 : vector<128x1xi1>
    %cst_68 = arith.constant 1.000000e+00 : f32
    %cst_69 = arith.constant 0.000000e+00 : f32
    %147 = vector.broadcast %cst_68 : f32 to vector<128x1xf32>
    %148 = vector.broadcast %cst_69 : f32 to vector<128x1xf32>
    %149 = arith.select %146, %147, %148 : vector<128x1xi1>, vector<128x1xf32>
    %c0_i32_70 = arith.constant 0 : i32
    %150 = vector.broadcast %c0_i32_70 : i32 to vector<128x1xi32>
    %151 = arith.addi %29, %150 : vector<128x1xi32>
    %c0_i32_71 = arith.constant 0 : i32
    %152 = vector.broadcast %c0_i32_71 : i32 to vector<128x1xi32>
    %153 = arith.cmpi sge, %151, %152 : vector<128x1xi32>
    %c0_i32_72 = arith.constant 0 : i32
    %154 = vector.broadcast %c0_i32_72 : i32 to vector<128x1xi32>
    %155 = arith.addi %29, %154 : vector<128x1xi32>
    %c8_i32_73 = arith.constant 8 : i32
    %156 = vector.broadcast %c8_i32_73 : i32 to vector<128x1xi32>
    %157 = arith.cmpi slt, %155, %156 : vector<128x1xi32>
    %158 = arith.andi %153, %157 : vector<128x1xi1>
    %cst_74 = arith.constant 1.000000e+00 : f32
    %cst_75 = arith.constant 0.000000e+00 : f32
    %159 = vector.broadcast %cst_74 : f32 to vector<128x1xf32>
    %160 = vector.broadcast %cst_75 : f32 to vector<128x1xf32>
    %161 = arith.select %158, %159, %160 : vector<128x1xi1>, vector<128x1xf32>
    %c1_i32_76 = arith.constant 1 : i32
    %162 = vector.broadcast %c1_i32_76 : i32 to vector<128x1xi32>
    %163 = arith.addi %29, %162 : vector<128x1xi32>
    %c0_i32_77 = arith.constant 0 : i32
    %164 = vector.broadcast %c0_i32_77 : i32 to vector<128x1xi32>
    %165 = arith.cmpi sge, %163, %164 : vector<128x1xi32>
    %c1_i32_78 = arith.constant 1 : i32
    %166 = vector.broadcast %c1_i32_78 : i32 to vector<128x1xi32>
    %167 = arith.addi %29, %166 : vector<128x1xi32>
    %c8_i32_79 = arith.constant 8 : i32
    %168 = vector.broadcast %c8_i32_79 : i32 to vector<128x1xi32>
    %169 = arith.cmpi slt, %167, %168 : vector<128x1xi32>
    %170 = arith.andi %165, %169 : vector<128x1xi1>
    %cst_80 = arith.constant 1.000000e+00 : f32
    %cst_81 = arith.constant 0.000000e+00 : f32
    %171 = vector.broadcast %cst_80 : f32 to vector<128x1xf32>
    %172 = vector.broadcast %cst_81 : f32 to vector<128x1xf32>
    %173 = arith.select %170, %171, %172 : vector<128x1xi1>, vector<128x1xf32>
    %c2_i32_82 = arith.constant 2 : i32
    %174 = vector.broadcast %c2_i32_82 : i32 to vector<128x1xi32>
    %175 = arith.addi %29, %174 : vector<128x1xi32>
    %c0_i32_83 = arith.constant 0 : i32
    %176 = vector.broadcast %c0_i32_83 : i32 to vector<128x1xi32>
    %177 = arith.cmpi sge, %175, %176 : vector<128x1xi32>
    %c2_i32_84 = arith.constant 2 : i32
    %178 = vector.broadcast %c2_i32_84 : i32 to vector<128x1xi32>
    %179 = arith.addi %29, %178 : vector<128x1xi32>
    %c8_i32_85 = arith.constant 8 : i32
    %180 = vector.broadcast %c8_i32_85 : i32 to vector<128x1xi32>
    %181 = arith.cmpi slt, %179, %180 : vector<128x1xi32>
    %182 = arith.andi %177, %181 : vector<128x1xi1>
    %cst_86 = arith.constant 1.000000e+00 : f32
    %cst_87 = arith.constant 0.000000e+00 : f32
    %183 = vector.broadcast %cst_86 : f32 to vector<128x1xf32>
    %184 = vector.broadcast %cst_87 : f32 to vector<128x1xf32>
    %185 = arith.select %182, %183, %184 : vector<128x1xi1>, vector<128x1xf32>
    %c3_i32_88 = arith.constant 3 : i32
    %186 = vector.broadcast %c3_i32_88 : i32 to vector<128x1xi32>
    %187 = arith.addi %29, %186 : vector<128x1xi32>
    %c0_i32_89 = arith.constant 0 : i32
    %188 = vector.broadcast %c0_i32_89 : i32 to vector<128x1xi32>
    %189 = arith.cmpi sge, %187, %188 : vector<128x1xi32>
    %c3_i32_90 = arith.constant 3 : i32
    %190 = vector.broadcast %c3_i32_90 : i32 to vector<128x1xi32>
    %191 = arith.addi %29, %190 : vector<128x1xi32>
    %c8_i32_91 = arith.constant 8 : i32
    %192 = vector.broadcast %c8_i32_91 : i32 to vector<128x1xi32>
    %193 = arith.cmpi slt, %191, %192 : vector<128x1xi32>
    %194 = arith.andi %189, %193 : vector<128x1xi1>
    %cst_92 = arith.constant 1.000000e+00 : f32
    %cst_93 = arith.constant 0.000000e+00 : f32
    %195 = vector.broadcast %cst_92 : f32 to vector<128x1xf32>
    %196 = vector.broadcast %cst_93 : f32 to vector<128x1xf32>
    %197 = arith.select %194, %195, %196 : vector<128x1xi1>, vector<128x1xf32>
    %cst_94 = arith.constant 0.000000e+00 : f32
    %198 = vector.broadcast %cst_94 : f32 to vector<128x32xf32>
    %c27_i32 = arith.constant 27 : i32
    %199 = tpu.dynamic_rotate %27 by %c27_i32 dim 0 : vector<128x32xf32>, i32 -> vector<128x32xf32>
    %200 = arith.mulf %41, %125 : vector<128x1xf32>
    %c0_95 = arith.constant 0 : index
    %c0_96 = arith.constant 0 : index
    %c0_97 = arith.constant 0 : index
    %201 = vector.load %arg8[%c0_95, %c0_96, %c0_97] : memref<49x1x32xf32, #tpu.memory_space<vmem>>, vector<1x1x32xf32>
    %202 = vector.shape_cast %201 : vector<1x1x32xf32> to vector<1x32xf32>
    %203 = vector.broadcast %202 : vector<1x32xf32> to vector<128x32xf32>
    %204 = arith.mulf %199, %203 : vector<128x32xf32>
    %205 = vector.broadcast %200 : vector<128x1xf32> to vector<128x32xf32>
    %206 = arith.mulf %204, %205 : vector<128x32xf32>
    %207 = arith.addf %198, %206 : vector<128x32xf32>
    %c26_i32 = arith.constant 26 : i32
    %208 = tpu.dynamic_rotate %27 by %c26_i32 dim 0 : vector<128x32xf32>, i32 -> vector<128x32xf32>
    %209 = arith.mulf %41, %137 : vector<128x1xf32>
    %c1 = arith.constant 1 : index
    %c0_98 = arith.constant 0 : index
    %c0_99 = arith.constant 0 : index
    %210 = vector.load %arg8[%c1, %c0_98, %c0_99] : memref<49x1x32xf32, #tpu.memory_space<vmem>>, vector<1x1x32xf32>
    %211 = vector.shape_cast %210 : vector<1x1x32xf32> to vector<1x32xf32>
    %212 = vector.broadcast %211 : vector<1x32xf32> to vector<128x32xf32>
    %213 = arith.mulf %208, %212 : vector<128x32xf32>
    %214 = vector.broadcast %209 : vector<128x1xf32> to vector<128x32xf32>
    %215 = arith.mulf %213, %214 : vector<128x32xf32>
    %216 = arith.addf %207, %215 : vector<128x32xf32>
    %c25_i32 = arith.constant 25 : i32
    %217 = tpu.dynamic_rotate %27 by %c25_i32 dim 0 : vector<128x32xf32>, i32 -> vector<128x32xf32>
    %218 = arith.mulf %41, %149 : vector<128x1xf32>
    %c2 = arith.constant 2 : index
    %c0_100 = arith.constant 0 : index
    %c0_101 = arith.constant 0 : index
    %219 = vector.load %arg8[%c2, %c0_100, %c0_101] : memref<49x1x32xf32, #tpu.memory_space<vmem>>, vector<1x1x32xf32>
    %220 = vector.shape_cast %219 : vector<1x1x32xf32> to vector<1x32xf32>
    %221 = vector.broadcast %220 : vector<1x32xf32> to vector<128x32xf32>
    %222 = arith.mulf %217, %221 : vector<128x32xf32>
    %223 = vector.broadcast %218 : vector<128x1xf32> to vector<128x32xf32>
    %224 = arith.mulf %222, %223 : vector<128x32xf32>
    %225 = arith.addf %216, %224 : vector<128x32xf32>
    %c24_i32 = arith.constant 24 : i32
    %226 = tpu.dynamic_rotate %27 by %c24_i32 dim 0 : vector<128x32xf32>, i32 -> vector<128x32xf32>
    %227 = arith.mulf %41, %161 : vector<128x1xf32>
    %c3 = arith.constant 3 : index
    %c0_102 = arith.constant 0 : index
    %c0_103 = arith.constant 0 : index
    %228 = vector.load %arg8[%c3, %c0_102, %c0_103] : memref<49x1x32xf32, #tpu.memory_space<vmem>>, vector<1x1x32xf32>
    %229 = vector.shape_cast %228 : vector<1x1x32xf32> to vector<1x32xf32>
    %230 = vector.broadcast %229 : vector<1x32xf32> to vector<128x32xf32>
    %231 = arith.mulf %226, %230 : vector<128x32xf32>
    %232 = vector.broadcast %227 : vector<128x1xf32> to vector<128x32xf32>
    %233 = arith.mulf %231, %232 : vector<128x32xf32>
    %234 = arith.addf %225, %233 : vector<128x32xf32>
    %c23_i32 = arith.constant 23 : i32
    %235 = tpu.dynamic_rotate %27 by %c23_i32 dim 0 : vector<128x32xf32>, i32 -> vector<128x32xf32>
    %236 = arith.mulf %41, %173 : vector<128x1xf32>
    %c4 = arith.constant 4 : index
    %c0_104 = arith.constant 0 : index
    %c0_105 = arith.constant 0 : index
    %237 = vector.load %arg8[%c4, %c0_104, %c0_105] : memref<49x1x32xf32, #tpu.memory_space<vmem>>, vector<1x1x32xf32>
    %238 = vector.shape_cast %237 : vector<1x1x32xf32> to vector<1x32xf32>
    %239 = vector.broadcast %238 : vector<1x32xf32> to vector<128x32xf32>
    %240 = arith.mulf %235, %239 : vector<128x32xf32>
    %241 = vector.broadcast %236 : vector<128x1xf32> to vector<128x32xf32>
    %242 = arith.mulf %240, %241 : vector<128x32xf32>
    %243 = arith.addf %234, %242 : vector<128x32xf32>
    %c22_i32 = arith.constant 22 : i32
    %244 = tpu.dynamic_rotate %27 by %c22_i32 dim 0 : vector<128x32xf32>, i32 -> vector<128x32xf32>
    %245 = arith.mulf %41, %185 : vector<128x1xf32>
    %c5 = arith.constant 5 : index
    %c0_106 = arith.constant 0 : index
    %c0_107 = arith.constant 0 : index
    %246 = vector.load %arg8[%c5, %c0_106, %c0_107] : memref<49x1x32xf32, #tpu.memory_space<vmem>>, vector<1x1x32xf32>
    %247 = vector.shape_cast %246 : vector<1x1x32xf32> to vector<1x32xf32>
    %248 = vector.broadcast %247 : vector<1x32xf32> to vector<128x32xf32>
    %249 = arith.mulf %244, %248 : vector<128x32xf32>
    %250 = vector.broadcast %245 : vector<128x1xf32> to vector<128x32xf32>
    %251 = arith.mulf %249, %250 : vector<128x32xf32>
    %252 = arith.addf %243, %251 : vector<128x32xf32>
    %c21_i32 = arith.constant 21 : i32
    %253 = tpu.dynamic_rotate %27 by %c21_i32 dim 0 : vector<128x32xf32>, i32 -> vector<128x32xf32>
    %254 = arith.mulf %41, %197 : vector<128x1xf32>
    %c6 = arith.constant 6 : index
    %c0_108 = arith.constant 0 : index
    %c0_109 = arith.constant 0 : index
    %255 = vector.load %arg8[%c6, %c0_108, %c0_109] : memref<49x1x32xf32, #tpu.memory_space<vmem>>, vector<1x1x32xf32>
    %256 = vector.shape_cast %255 : vector<1x1x32xf32> to vector<1x32xf32>
    %257 = vector.broadcast %256 : vector<1x32xf32> to vector<128x32xf32>
    %258 = arith.mulf %253, %257 : vector<128x32xf32>
    %259 = vector.broadcast %254 : vector<128x1xf32> to vector<128x32xf32>
    %260 = arith.mulf %258, %259 : vector<128x32xf32>
    %261 = arith.addf %252, %260 : vector<128x32xf32>
    %c19_i32 = arith.constant 19 : i32
    %262 = tpu.dynamic_rotate %27 by %c19_i32 dim 0 : vector<128x32xf32>, i32 -> vector<128x32xf32>
    %263 = arith.mulf %53, %125 : vector<128x1xf32>
    %c7 = arith.constant 7 : index
    %c0_110 = arith.constant 0 : index
    %c0_111 = arith.constant 0 : index
    %264 = vector.load %arg8[%c7, %c0_110, %c0_111] : memref<49x1x32xf32, #tpu.memory_space<vmem>>, vector<1x1x32xf32>
    %265 = vector.shape_cast %264 : vector<1x1x32xf32> to vector<1x32xf32>
    %266 = vector.broadcast %265 : vector<1x32xf32> to vector<128x32xf32>
    %267 = arith.mulf %262, %266 : vector<128x32xf32>
    %268 = vector.broadcast %263 : vector<128x1xf32> to vector<128x32xf32>
    %269 = arith.mulf %267, %268 : vector<128x32xf32>
    %270 = arith.addf %261, %269 : vector<128x32xf32>
    %c18_i32 = arith.constant 18 : i32
    %271 = tpu.dynamic_rotate %27 by %c18_i32 dim 0 : vector<128x32xf32>, i32 -> vector<128x32xf32>
    %272 = arith.mulf %53, %137 : vector<128x1xf32>
    %c8 = arith.constant 8 : index
    %c0_112 = arith.constant 0 : index
    %c0_113 = arith.constant 0 : index
    %273 = vector.load %arg8[%c8, %c0_112, %c0_113] : memref<49x1x32xf32, #tpu.memory_space<vmem>>, vector<1x1x32xf32>
    %274 = vector.shape_cast %273 : vector<1x1x32xf32> to vector<1x32xf32>
    %275 = vector.broadcast %274 : vector<1x32xf32> to vector<128x32xf32>
    %276 = arith.mulf %271, %275 : vector<128x32xf32>
    %277 = vector.broadcast %272 : vector<128x1xf32> to vector<128x32xf32>
    %278 = arith.mulf %276, %277 : vector<128x32xf32>
    %279 = arith.addf %270, %278 : vector<128x32xf32>
    %c17_i32 = arith.constant 17 : i32
    %280 = tpu.dynamic_rotate %27 by %c17_i32 dim 0 : vector<128x32xf32>, i32 -> vector<128x32xf32>
    %281 = arith.mulf %53, %149 : vector<128x1xf32>
    %c9 = arith.constant 9 : index
    %c0_114 = arith.constant 0 : index
    %c0_115 = arith.constant 0 : index
    %282 = vector.load %arg8[%c9, %c0_114, %c0_115] : memref<49x1x32xf32, #tpu.memory_space<vmem>>, vector<1x1x32xf32>
    %283 = vector.shape_cast %282 : vector<1x1x32xf32> to vector<1x32xf32>
    %284 = vector.broadcast %283 : vector<1x32xf32> to vector<128x32xf32>
    %285 = arith.mulf %280, %284 : vector<128x32xf32>
    %286 = vector.broadcast %281 : vector<128x1xf32> to vector<128x32xf32>
    %287 = arith.mulf %285, %286 : vector<128x32xf32>
    %288 = arith.addf %279, %287 : vector<128x32xf32>
    %c16_i32 = arith.constant 16 : i32
    %289 = tpu.dynamic_rotate %27 by %c16_i32 dim 0 : vector<128x32xf32>, i32 -> vector<128x32xf32>
    %290 = arith.mulf %53, %161 : vector<128x1xf32>
    %c10 = arith.constant 10 : index
    %c0_116 = arith.constant 0 : index
    %c0_117 = arith.constant 0 : index
    %291 = vector.load %arg8[%c10, %c0_116, %c0_117] : memref<49x1x32xf32, #tpu.memory_space<vmem>>, vector<1x1x32xf32>
    %292 = vector.shape_cast %291 : vector<1x1x32xf32> to vector<1x32xf32>
    %293 = vector.broadcast %292 : vector<1x32xf32> to vector<128x32xf32>
    %294 = arith.mulf %289, %293 : vector<128x32xf32>
    %295 = vector.broadcast %290 : vector<128x1xf32> to vector<128x32xf32>
    %296 = arith.mulf %294, %295 : vector<128x32xf32>
    %297 = arith.addf %288, %296 : vector<128x32xf32>
    %c15_i32 = arith.constant 15 : i32
    %298 = tpu.dynamic_rotate %27 by %c15_i32 dim 0 : vector<128x32xf32>, i32 -> vector<128x32xf32>
    %299 = arith.mulf %53, %173 : vector<128x1xf32>
    %c11 = arith.constant 11 : index
    %c0_118 = arith.constant 0 : index
    %c0_119 = arith.constant 0 : index
    %300 = vector.load %arg8[%c11, %c0_118, %c0_119] : memref<49x1x32xf32, #tpu.memory_space<vmem>>, vector<1x1x32xf32>
    %301 = vector.shape_cast %300 : vector<1x1x32xf32> to vector<1x32xf32>
    %302 = vector.broadcast %301 : vector<1x32xf32> to vector<128x32xf32>
    %303 = arith.mulf %298, %302 : vector<128x32xf32>
    %304 = vector.broadcast %299 : vector<128x1xf32> to vector<128x32xf32>
    %305 = arith.mulf %303, %304 : vector<128x32xf32>
    %306 = arith.addf %297, %305 : vector<128x32xf32>
    %c14_i32 = arith.constant 14 : i32
    %307 = tpu.dynamic_rotate %27 by %c14_i32 dim 0 : vector<128x32xf32>, i32 -> vector<128x32xf32>
    %308 = arith.mulf %53, %185 : vector<128x1xf32>
    %c12 = arith.constant 12 : index
    %c0_120 = arith.constant 0 : index
    %c0_121 = arith.constant 0 : index
    %309 = vector.load %arg8[%c12, %c0_120, %c0_121] : memref<49x1x32xf32, #tpu.memory_space<vmem>>, vector<1x1x32xf32>
    %310 = vector.shape_cast %309 : vector<1x1x32xf32> to vector<1x32xf32>
    %311 = vector.broadcast %310 : vector<1x32xf32> to vector<128x32xf32>
    %312 = arith.mulf %307, %311 : vector<128x32xf32>
    %313 = vector.broadcast %308 : vector<128x1xf32> to vector<128x32xf32>
    %314 = arith.mulf %312, %313 : vector<128x32xf32>
    %315 = arith.addf %306, %314 : vector<128x32xf32>
    %c13_i32 = arith.constant 13 : i32
    %316 = tpu.dynamic_rotate %27 by %c13_i32 dim 0 : vector<128x32xf32>, i32 -> vector<128x32xf32>
    %317 = arith.mulf %53, %197 : vector<128x1xf32>
    %c13 = arith.constant 13 : index
    %c0_122 = arith.constant 0 : index
    %c0_123 = arith.constant 0 : index
    %318 = vector.load %arg8[%c13, %c0_122, %c0_123] : memref<49x1x32xf32, #tpu.memory_space<vmem>>, vector<1x1x32xf32>
    %319 = vector.shape_cast %318 : vector<1x1x32xf32> to vector<1x32xf32>
    %320 = vector.broadcast %319 : vector<1x32xf32> to vector<128x32xf32>
    %321 = arith.mulf %316, %320 : vector<128x32xf32>
    %322 = vector.broadcast %317 : vector<128x1xf32> to vector<128x32xf32>
    %323 = arith.mulf %321, %322 : vector<128x32xf32>
    %324 = arith.addf %315, %323 : vector<128x32xf32>
    %c11_i32 = arith.constant 11 : i32
    %325 = tpu.dynamic_rotate %27 by %c11_i32 dim 0 : vector<128x32xf32>, i32 -> vector<128x32xf32>
    %326 = arith.mulf %65, %125 : vector<128x1xf32>
    %c14 = arith.constant 14 : index
    %c0_124 = arith.constant 0 : index
    %c0_125 = arith.constant 0 : index
    %327 = vector.load %arg8[%c14, %c0_124, %c0_125] : memref<49x1x32xf32, #tpu.memory_space<vmem>>, vector<1x1x32xf32>
    %328 = vector.shape_cast %327 : vector<1x1x32xf32> to vector<1x32xf32>
    %329 = vector.broadcast %328 : vector<1x32xf32> to vector<128x32xf32>
    %330 = arith.mulf %325, %329 : vector<128x32xf32>
    %331 = vector.broadcast %326 : vector<128x1xf32> to vector<128x32xf32>
    %332 = arith.mulf %330, %331 : vector<128x32xf32>
    %333 = arith.addf %324, %332 : vector<128x32xf32>
    %c10_i32 = arith.constant 10 : i32
    %334 = tpu.dynamic_rotate %27 by %c10_i32 dim 0 : vector<128x32xf32>, i32 -> vector<128x32xf32>
    %335 = arith.mulf %65, %137 : vector<128x1xf32>
    %c15 = arith.constant 15 : index
    %c0_126 = arith.constant 0 : index
    %c0_127 = arith.constant 0 : index
    %336 = vector.load %arg8[%c15, %c0_126, %c0_127] : memref<49x1x32xf32, #tpu.memory_space<vmem>>, vector<1x1x32xf32>
    %337 = vector.shape_cast %336 : vector<1x1x32xf32> to vector<1x32xf32>
    %338 = vector.broadcast %337 : vector<1x32xf32> to vector<128x32xf32>
    %339 = arith.mulf %334, %338 : vector<128x32xf32>
    %340 = vector.broadcast %335 : vector<128x1xf32> to vector<128x32xf32>
    %341 = arith.mulf %339, %340 : vector<128x32xf32>
    %342 = arith.addf %333, %341 : vector<128x32xf32>
    %c9_i32 = arith.constant 9 : i32
    %343 = tpu.dynamic_rotate %27 by %c9_i32 dim 0 : vector<128x32xf32>, i32 -> vector<128x32xf32>
    %344 = arith.mulf %65, %149 : vector<128x1xf32>
    %c16 = arith.constant 16 : index
    %c0_128 = arith.constant 0 : index
    %c0_129 = arith.constant 0 : index
    %345 = vector.load %arg8[%c16, %c0_128, %c0_129] : memref<49x1x32xf32, #tpu.memory_space<vmem>>, vector<1x1x32xf32>
    %346 = vector.shape_cast %345 : vector<1x1x32xf32> to vector<1x32xf32>
    %347 = vector.broadcast %346 : vector<1x32xf32> to vector<128x32xf32>
    %348 = arith.mulf %343, %347 : vector<128x32xf32>
    %349 = vector.broadcast %344 : vector<128x1xf32> to vector<128x32xf32>
    %350 = arith.mulf %348, %349 : vector<128x32xf32>
    %351 = arith.addf %342, %350 : vector<128x32xf32>
    %c8_i32_130 = arith.constant 8 : i32
    %352 = tpu.dynamic_rotate %27 by %c8_i32_130 dim 0 : vector<128x32xf32>, i32 -> vector<128x32xf32>
    %353 = arith.mulf %65, %161 : vector<128x1xf32>
    %c17 = arith.constant 17 : index
    %c0_131 = arith.constant 0 : index
    %c0_132 = arith.constant 0 : index
    %354 = vector.load %arg8[%c17, %c0_131, %c0_132] : memref<49x1x32xf32, #tpu.memory_space<vmem>>, vector<1x1x32xf32>
    %355 = vector.shape_cast %354 : vector<1x1x32xf32> to vector<1x32xf32>
    %356 = vector.broadcast %355 : vector<1x32xf32> to vector<128x32xf32>
    %357 = arith.mulf %352, %356 : vector<128x32xf32>
    %358 = vector.broadcast %353 : vector<128x1xf32> to vector<128x32xf32>
    %359 = arith.mulf %357, %358 : vector<128x32xf32>
    %360 = arith.addf %351, %359 : vector<128x32xf32>
    %c7_i32 = arith.constant 7 : i32
    %361 = tpu.dynamic_rotate %27 by %c7_i32 dim 0 : vector<128x32xf32>, i32 -> vector<128x32xf32>
    %362 = arith.mulf %65, %173 : vector<128x1xf32>
    %c18 = arith.constant 18 : index
    %c0_133 = arith.constant 0 : index
    %c0_134 = arith.constant 0 : index
    %363 = vector.load %arg8[%c18, %c0_133, %c0_134] : memref<49x1x32xf32, #tpu.memory_space<vmem>>, vector<1x1x32xf32>
    %364 = vector.shape_cast %363 : vector<1x1x32xf32> to vector<1x32xf32>
    %365 = vector.broadcast %364 : vector<1x32xf32> to vector<128x32xf32>
    %366 = arith.mulf %361, %365 : vector<128x32xf32>
    %367 = vector.broadcast %362 : vector<128x1xf32> to vector<128x32xf32>
    %368 = arith.mulf %366, %367 : vector<128x32xf32>
    %369 = arith.addf %360, %368 : vector<128x32xf32>
    %c6_i32 = arith.constant 6 : i32
    %370 = tpu.dynamic_rotate %27 by %c6_i32 dim 0 : vector<128x32xf32>, i32 -> vector<128x32xf32>
    %371 = arith.mulf %65, %185 : vector<128x1xf32>
    %c19 = arith.constant 19 : index
    %c0_135 = arith.constant 0 : index
    %c0_136 = arith.constant 0 : index
    %372 = vector.load %arg8[%c19, %c0_135, %c0_136] : memref<49x1x32xf32, #tpu.memory_space<vmem>>, vector<1x1x32xf32>
    %373 = vector.shape_cast %372 : vector<1x1x32xf32> to vector<1x32xf32>
    %374 = vector.broadcast %373 : vector<1x32xf32> to vector<128x32xf32>
    %375 = arith.mulf %370, %374 : vector<128x32xf32>
    %376 = vector.broadcast %371 : vector<128x1xf32> to vector<128x32xf32>
    %377 = arith.mulf %375, %376 : vector<128x32xf32>
    %378 = arith.addf %369, %377 : vector<128x32xf32>
    %c5_i32 = arith.constant 5 : i32
    %379 = tpu.dynamic_rotate %27 by %c5_i32 dim 0 : vector<128x32xf32>, i32 -> vector<128x32xf32>
    %380 = arith.mulf %65, %197 : vector<128x1xf32>
    %c20 = arith.constant 20 : index
    %c0_137 = arith.constant 0 : index
    %c0_138 = arith.constant 0 : index
    %381 = vector.load %arg8[%c20, %c0_137, %c0_138] : memref<49x1x32xf32, #tpu.memory_space<vmem>>, vector<1x1x32xf32>
    %382 = vector.shape_cast %381 : vector<1x1x32xf32> to vector<1x32xf32>
    %383 = vector.broadcast %382 : vector<1x32xf32> to vector<128x32xf32>
    %384 = arith.mulf %379, %383 : vector<128x32xf32>
    %385 = vector.broadcast %380 : vector<128x1xf32> to vector<128x32xf32>
    %386 = arith.mulf %384, %385 : vector<128x32xf32>
    %387 = arith.addf %378, %386 : vector<128x32xf32>
    %c3_i32_139 = arith.constant 3 : i32
    %388 = tpu.dynamic_rotate %27 by %c3_i32_139 dim 0 : vector<128x32xf32>, i32 -> vector<128x32xf32>
    %389 = arith.mulf %77, %125 : vector<128x1xf32>
    %c21 = arith.constant 21 : index
    %c0_140 = arith.constant 0 : index
    %c0_141 = arith.constant 0 : index
    %390 = vector.load %arg8[%c21, %c0_140, %c0_141] : memref<49x1x32xf32, #tpu.memory_space<vmem>>, vector<1x1x32xf32>
    %391 = vector.shape_cast %390 : vector<1x1x32xf32> to vector<1x32xf32>
    %392 = vector.broadcast %391 : vector<1x32xf32> to vector<128x32xf32>
    %393 = arith.mulf %388, %392 : vector<128x32xf32>
    %394 = vector.broadcast %389 : vector<128x1xf32> to vector<128x32xf32>
    %395 = arith.mulf %393, %394 : vector<128x32xf32>
    %396 = arith.addf %387, %395 : vector<128x32xf32>
    %c2_i32_142 = arith.constant 2 : i32
    %397 = tpu.dynamic_rotate %27 by %c2_i32_142 dim 0 : vector<128x32xf32>, i32 -> vector<128x32xf32>
    %398 = arith.mulf %77, %137 : vector<128x1xf32>
    %c22 = arith.constant 22 : index
    %c0_143 = arith.constant 0 : index
    %c0_144 = arith.constant 0 : index
    %399 = vector.load %arg8[%c22, %c0_143, %c0_144] : memref<49x1x32xf32, #tpu.memory_space<vmem>>, vector<1x1x32xf32>
    %400 = vector.shape_cast %399 : vector<1x1x32xf32> to vector<1x32xf32>
    %401 = vector.broadcast %400 : vector<1x32xf32> to vector<128x32xf32>
    %402 = arith.mulf %397, %401 : vector<128x32xf32>
    %403 = vector.broadcast %398 : vector<128x1xf32> to vector<128x32xf32>
    %404 = arith.mulf %402, %403 : vector<128x32xf32>
    %405 = arith.addf %396, %404 : vector<128x32xf32>
    %c1_i32_145 = arith.constant 1 : i32
    %406 = tpu.dynamic_rotate %27 by %c1_i32_145 dim 0 : vector<128x32xf32>, i32 -> vector<128x32xf32>
    %407 = arith.mulf %77, %149 : vector<128x1xf32>
    %c23 = arith.constant 23 : index
    %c0_146 = arith.constant 0 : index
    %c0_147 = arith.constant 0 : index
    %408 = vector.load %arg8[%c23, %c0_146, %c0_147] : memref<49x1x32xf32, #tpu.memory_space<vmem>>, vector<1x1x32xf32>
    %409 = vector.shape_cast %408 : vector<1x1x32xf32> to vector<1x32xf32>
    %410 = vector.broadcast %409 : vector<1x32xf32> to vector<128x32xf32>
    %411 = arith.mulf %406, %410 : vector<128x32xf32>
    %412 = vector.broadcast %407 : vector<128x1xf32> to vector<128x32xf32>
    %413 = arith.mulf %411, %412 : vector<128x32xf32>
    %414 = arith.addf %405, %413 : vector<128x32xf32>
    %415 = arith.mulf %77, %161 : vector<128x1xf32>
    %c24 = arith.constant 24 : index
    %c0_148 = arith.constant 0 : index
    %c0_149 = arith.constant 0 : index
    %416 = vector.load %arg8[%c24, %c0_148, %c0_149] : memref<49x1x32xf32, #tpu.memory_space<vmem>>, vector<1x1x32xf32>
    %417 = vector.shape_cast %416 : vector<1x1x32xf32> to vector<1x32xf32>
    %418 = vector.broadcast %417 : vector<1x32xf32> to vector<128x32xf32>
    %419 = arith.mulf %27, %418 : vector<128x32xf32>
    %420 = vector.broadcast %415 : vector<128x1xf32> to vector<128x32xf32>
    %421 = arith.mulf %419, %420 : vector<128x32xf32>
    %422 = arith.addf %414, %421 : vector<128x32xf32>
    %c127_i32 = arith.constant 127 : i32
    %423 = tpu.dynamic_rotate %27 by %c127_i32 dim 0 : vector<128x32xf32>, i32 -> vector<128x32xf32>
    %424 = arith.mulf %77, %173 : vector<128x1xf32>
    %c25 = arith.constant 25 : index
    %c0_150 = arith.constant 0 : index
    %c0_151 = arith.constant 0 : index
    %425 = vector.load %arg8[%c25, %c0_150, %c0_151] : memref<49x1x32xf32, #tpu.memory_space<vmem>>, vector<1x1x32xf32>
    %426 = vector.shape_cast %425 : vector<1x1x32xf32> to vector<1x32xf32>
    %427 = vector.broadcast %426 : vector<1x32xf32> to vector<128x32xf32>
    %428 = arith.mulf %423, %427 : vector<128x32xf32>
    %429 = vector.broadcast %424 : vector<128x1xf32> to vector<128x32xf32>
    %430 = arith.mulf %428, %429 : vector<128x32xf32>
    %431 = arith.addf %422, %430 : vector<128x32xf32>
    %c126_i32 = arith.constant 126 : i32
    %432 = tpu.dynamic_rotate %27 by %c126_i32 dim 0 : vector<128x32xf32>, i32 -> vector<128x32xf32>
    %433 = arith.mulf %77, %185 : vector<128x1xf32>
    %c26 = arith.constant 26 : index
    %c0_152 = arith.constant 0 : index
    %c0_153 = arith.constant 0 : index
    %434 = vector.load %arg8[%c26, %c0_152, %c0_153] : memref<49x1x32xf32, #tpu.memory_space<vmem>>, vector<1x1x32xf32>
    %435 = vector.shape_cast %434 : vector<1x1x32xf32> to vector<1x32xf32>
    %436 = vector.broadcast %435 : vector<1x32xf32> to vector<128x32xf32>
    %437 = arith.mulf %432, %436 : vector<128x32xf32>
    %438 = vector.broadcast %433 : vector<128x1xf32> to vector<128x32xf32>
    %439 = arith.mulf %437, %438 : vector<128x32xf32>
    %440 = arith.addf %431, %439 : vector<128x32xf32>
    %c125_i32 = arith.constant 125 : i32
    %441 = tpu.dynamic_rotate %27 by %c125_i32 dim 0 : vector<128x32xf32>, i32 -> vector<128x32xf32>
    %442 = arith.mulf %77, %197 : vector<128x1xf32>
    %c27 = arith.constant 27 : index
    %c0_154 = arith.constant 0 : index
    %c0_155 = arith.constant 0 : index
    %443 = vector.load %arg8[%c27, %c0_154, %c0_155] : memref<49x1x32xf32, #tpu.memory_space<vmem>>, vector<1x1x32xf32>
    %444 = vector.shape_cast %443 : vector<1x1x32xf32> to vector<1x32xf32>
    %445 = vector.broadcast %444 : vector<1x32xf32> to vector<128x32xf32>
    %446 = arith.mulf %441, %445 : vector<128x32xf32>
    %447 = vector.broadcast %442 : vector<128x1xf32> to vector<128x32xf32>
    %448 = arith.mulf %446, %447 : vector<128x32xf32>
    %449 = arith.addf %440, %448 : vector<128x32xf32>
    %c123_i32 = arith.constant 123 : i32
    %450 = tpu.dynamic_rotate %27 by %c123_i32 dim 0 : vector<128x32xf32>, i32 -> vector<128x32xf32>
    %451 = arith.mulf %89, %125 : vector<128x1xf32>
    %c28 = arith.constant 28 : index
    %c0_156 = arith.constant 0 : index
    %c0_157 = arith.constant 0 : index
    %452 = vector.load %arg8[%c28, %c0_156, %c0_157] : memref<49x1x32xf32, #tpu.memory_space<vmem>>, vector<1x1x32xf32>
    %453 = vector.shape_cast %452 : vector<1x1x32xf32> to vector<1x32xf32>
    %454 = vector.broadcast %453 : vector<1x32xf32> to vector<128x32xf32>
    %455 = arith.mulf %450, %454 : vector<128x32xf32>
    %456 = vector.broadcast %451 : vector<128x1xf32> to vector<128x32xf32>
    %457 = arith.mulf %455, %456 : vector<128x32xf32>
    %458 = arith.addf %449, %457 : vector<128x32xf32>
    %c122_i32 = arith.constant 122 : i32
    %459 = tpu.dynamic_rotate %27 by %c122_i32 dim 0 : vector<128x32xf32>, i32 -> vector<128x32xf32>
    %460 = arith.mulf %89, %137 : vector<128x1xf32>
    %c29 = arith.constant 29 : index
    %c0_158 = arith.constant 0 : index
    %c0_159 = arith.constant 0 : index
    %461 = vector.load %arg8[%c29, %c0_158, %c0_159] : memref<49x1x32xf32, #tpu.memory_space<vmem>>, vector<1x1x32xf32>
    %462 = vector.shape_cast %461 : vector<1x1x32xf32> to vector<1x32xf32>
    %463 = vector.broadcast %462 : vector<1x32xf32> to vector<128x32xf32>
    %464 = arith.mulf %459, %463 : vector<128x32xf32>
    %465 = vector.broadcast %460 : vector<128x1xf32> to vector<128x32xf32>
    %466 = arith.mulf %464, %465 : vector<128x32xf32>
    %467 = arith.addf %458, %466 : vector<128x32xf32>
    %c121_i32 = arith.constant 121 : i32
    %468 = tpu.dynamic_rotate %27 by %c121_i32 dim 0 : vector<128x32xf32>, i32 -> vector<128x32xf32>
    %469 = arith.mulf %89, %149 : vector<128x1xf32>
    %c30 = arith.constant 30 : index
    %c0_160 = arith.constant 0 : index
    %c0_161 = arith.constant 0 : index
    %470 = vector.load %arg8[%c30, %c0_160, %c0_161] : memref<49x1x32xf32, #tpu.memory_space<vmem>>, vector<1x1x32xf32>
    %471 = vector.shape_cast %470 : vector<1x1x32xf32> to vector<1x32xf32>
    %472 = vector.broadcast %471 : vector<1x32xf32> to vector<128x32xf32>
    %473 = arith.mulf %468, %472 : vector<128x32xf32>
    %474 = vector.broadcast %469 : vector<128x1xf32> to vector<128x32xf32>
    %475 = arith.mulf %473, %474 : vector<128x32xf32>
    %476 = arith.addf %467, %475 : vector<128x32xf32>
    %c120_i32 = arith.constant 120 : i32
    %477 = tpu.dynamic_rotate %27 by %c120_i32 dim 0 : vector<128x32xf32>, i32 -> vector<128x32xf32>
    %478 = arith.mulf %89, %161 : vector<128x1xf32>
    %c31 = arith.constant 31 : index
    %c0_162 = arith.constant 0 : index
    %c0_163 = arith.constant 0 : index
    %479 = vector.load %arg8[%c31, %c0_162, %c0_163] : memref<49x1x32xf32, #tpu.memory_space<vmem>>, vector<1x1x32xf32>
    %480 = vector.shape_cast %479 : vector<1x1x32xf32> to vector<1x32xf32>
    %481 = vector.broadcast %480 : vector<1x32xf32> to vector<128x32xf32>
    %482 = arith.mulf %477, %481 : vector<128x32xf32>
    %483 = vector.broadcast %478 : vector<128x1xf32> to vector<128x32xf32>
    %484 = arith.mulf %482, %483 : vector<128x32xf32>
    %485 = arith.addf %476, %484 : vector<128x32xf32>
    %c119_i32 = arith.constant 119 : i32
    %486 = tpu.dynamic_rotate %27 by %c119_i32 dim 0 : vector<128x32xf32>, i32 -> vector<128x32xf32>
    %487 = arith.mulf %89, %173 : vector<128x1xf32>
    %c32 = arith.constant 32 : index
    %c0_164 = arith.constant 0 : index
    %c0_165 = arith.constant 0 : index
    %488 = vector.load %arg8[%c32, %c0_164, %c0_165] : memref<49x1x32xf32, #tpu.memory_space<vmem>>, vector<1x1x32xf32>
    %489 = vector.shape_cast %488 : vector<1x1x32xf32> to vector<1x32xf32>
    %490 = vector.broadcast %489 : vector<1x32xf32> to vector<128x32xf32>
    %491 = arith.mulf %486, %490 : vector<128x32xf32>
    %492 = vector.broadcast %487 : vector<128x1xf32> to vector<128x32xf32>
    %493 = arith.mulf %491, %492 : vector<128x32xf32>
    %494 = arith.addf %485, %493 : vector<128x32xf32>
    %c118_i32 = arith.constant 118 : i32
    %495 = tpu.dynamic_rotate %27 by %c118_i32 dim 0 : vector<128x32xf32>, i32 -> vector<128x32xf32>
    %496 = arith.mulf %89, %185 : vector<128x1xf32>
    %c33 = arith.constant 33 : index
    %c0_166 = arith.constant 0 : index
    %c0_167 = arith.constant 0 : index
    %497 = vector.load %arg8[%c33, %c0_166, %c0_167] : memref<49x1x32xf32, #tpu.memory_space<vmem>>, vector<1x1x32xf32>
    %498 = vector.shape_cast %497 : vector<1x1x32xf32> to vector<1x32xf32>
    %499 = vector.broadcast %498 : vector<1x32xf32> to vector<128x32xf32>
    %500 = arith.mulf %495, %499 : vector<128x32xf32>
    %501 = vector.broadcast %496 : vector<128x1xf32> to vector<128x32xf32>
    %502 = arith.mulf %500, %501 : vector<128x32xf32>
    %503 = arith.addf %494, %502 : vector<128x32xf32>
    %c117_i32 = arith.constant 117 : i32
    %504 = tpu.dynamic_rotate %27 by %c117_i32 dim 0 : vector<128x32xf32>, i32 -> vector<128x32xf32>
    %505 = arith.mulf %89, %197 : vector<128x1xf32>
    %c34 = arith.constant 34 : index
    %c0_168 = arith.constant 0 : index
    %c0_169 = arith.constant 0 : index
    %506 = vector.load %arg8[%c34, %c0_168, %c0_169] : memref<49x1x32xf32, #tpu.memory_space<vmem>>, vector<1x1x32xf32>
    %507 = vector.shape_cast %506 : vector<1x1x32xf32> to vector<1x32xf32>
    %508 = vector.broadcast %507 : vector<1x32xf32> to vector<128x32xf32>
    %509 = arith.mulf %504, %508 : vector<128x32xf32>
    %510 = vector.broadcast %505 : vector<128x1xf32> to vector<128x32xf32>
    %511 = arith.mulf %509, %510 : vector<128x32xf32>
    %512 = arith.addf %503, %511 : vector<128x32xf32>
    %c115_i32 = arith.constant 115 : i32
    %513 = tpu.dynamic_rotate %27 by %c115_i32 dim 0 : vector<128x32xf32>, i32 -> vector<128x32xf32>
    %514 = arith.mulf %101, %125 : vector<128x1xf32>
    %c35 = arith.constant 35 : index
    %c0_170 = arith.constant 0 : index
    %c0_171 = arith.constant 0 : index
    %515 = vector.load %arg8[%c35, %c0_170, %c0_171] : memref<49x1x32xf32, #tpu.memory_space<vmem>>, vector<1x1x32xf32>
    %516 = vector.shape_cast %515 : vector<1x1x32xf32> to vector<1x32xf32>
    %517 = vector.broadcast %516 : vector<1x32xf32> to vector<128x32xf32>
    %518 = arith.mulf %513, %517 : vector<128x32xf32>
    %519 = vector.broadcast %514 : vector<128x1xf32> to vector<128x32xf32>
    %520 = arith.mulf %518, %519 : vector<128x32xf32>
    %521 = arith.addf %512, %520 : vector<128x32xf32>
    %c114_i32 = arith.constant 114 : i32
    %522 = tpu.dynamic_rotate %27 by %c114_i32 dim 0 : vector<128x32xf32>, i32 -> vector<128x32xf32>
    %523 = arith.mulf %101, %137 : vector<128x1xf32>
    %c36 = arith.constant 36 : index
    %c0_172 = arith.constant 0 : index
    %c0_173 = arith.constant 0 : index
    %524 = vector.load %arg8[%c36, %c0_172, %c0_173] : memref<49x1x32xf32, #tpu.memory_space<vmem>>, vector<1x1x32xf32>
    %525 = vector.shape_cast %524 : vector<1x1x32xf32> to vector<1x32xf32>
    %526 = vector.broadcast %525 : vector<1x32xf32> to vector<128x32xf32>
    %527 = arith.mulf %522, %526 : vector<128x32xf32>
    %528 = vector.broadcast %523 : vector<128x1xf32> to vector<128x32xf32>
    %529 = arith.mulf %527, %528 : vector<128x32xf32>
    %530 = arith.addf %521, %529 : vector<128x32xf32>
    %c113_i32 = arith.constant 113 : i32
    %531 = tpu.dynamic_rotate %27 by %c113_i32 dim 0 : vector<128x32xf32>, i32 -> vector<128x32xf32>
    %532 = arith.mulf %101, %149 : vector<128x1xf32>
    %c37 = arith.constant 37 : index
    %c0_174 = arith.constant 0 : index
    %c0_175 = arith.constant 0 : index
    %533 = vector.load %arg8[%c37, %c0_174, %c0_175] : memref<49x1x32xf32, #tpu.memory_space<vmem>>, vector<1x1x32xf32>
    %534 = vector.shape_cast %533 : vector<1x1x32xf32> to vector<1x32xf32>
    %535 = vector.broadcast %534 : vector<1x32xf32> to vector<128x32xf32>
    %536 = arith.mulf %531, %535 : vector<128x32xf32>
    %537 = vector.broadcast %532 : vector<128x1xf32> to vector<128x32xf32>
    %538 = arith.mulf %536, %537 : vector<128x32xf32>
    %539 = arith.addf %530, %538 : vector<128x32xf32>
    %c112_i32 = arith.constant 112 : i32
    %540 = tpu.dynamic_rotate %27 by %c112_i32 dim 0 : vector<128x32xf32>, i32 -> vector<128x32xf32>
    %541 = arith.mulf %101, %161 : vector<128x1xf32>
    %c38 = arith.constant 38 : index
    %c0_176 = arith.constant 0 : index
    %c0_177 = arith.constant 0 : index
    %542 = vector.load %arg8[%c38, %c0_176, %c0_177] : memref<49x1x32xf32, #tpu.memory_space<vmem>>, vector<1x1x32xf32>
    %543 = vector.shape_cast %542 : vector<1x1x32xf32> to vector<1x32xf32>
    %544 = vector.broadcast %543 : vector<1x32xf32> to vector<128x32xf32>
    %545 = arith.mulf %540, %544 : vector<128x32xf32>
    %546 = vector.broadcast %541 : vector<128x1xf32> to vector<128x32xf32>
    %547 = arith.mulf %545, %546 : vector<128x32xf32>
    %548 = arith.addf %539, %547 : vector<128x32xf32>
    %c111_i32 = arith.constant 111 : i32
    %549 = tpu.dynamic_rotate %27 by %c111_i32 dim 0 : vector<128x32xf32>, i32 -> vector<128x32xf32>
    %550 = arith.mulf %101, %173 : vector<128x1xf32>
    %c39 = arith.constant 39 : index
    %c0_178 = arith.constant 0 : index
    %c0_179 = arith.constant 0 : index
    %551 = vector.load %arg8[%c39, %c0_178, %c0_179] : memref<49x1x32xf32, #tpu.memory_space<vmem>>, vector<1x1x32xf32>
    %552 = vector.shape_cast %551 : vector<1x1x32xf32> to vector<1x32xf32>
    %553 = vector.broadcast %552 : vector<1x32xf32> to vector<128x32xf32>
    %554 = arith.mulf %549, %553 : vector<128x32xf32>
    %555 = vector.broadcast %550 : vector<128x1xf32> to vector<128x32xf32>
    %556 = arith.mulf %554, %555 : vector<128x32xf32>
    %557 = arith.addf %548, %556 : vector<128x32xf32>
    %c110_i32 = arith.constant 110 : i32
    %558 = tpu.dynamic_rotate %27 by %c110_i32 dim 0 : vector<128x32xf32>, i32 -> vector<128x32xf32>
    %559 = arith.mulf %101, %185 : vector<128x1xf32>
    %c40 = arith.constant 40 : index
    %c0_180 = arith.constant 0 : index
    %c0_181 = arith.constant 0 : index
    %560 = vector.load %arg8[%c40, %c0_180, %c0_181] : memref<49x1x32xf32, #tpu.memory_space<vmem>>, vector<1x1x32xf32>
    %561 = vector.shape_cast %560 : vector<1x1x32xf32> to vector<1x32xf32>
    %562 = vector.broadcast %561 : vector<1x32xf32> to vector<128x32xf32>
    %563 = arith.mulf %558, %562 : vector<128x32xf32>
    %564 = vector.broadcast %559 : vector<128x1xf32> to vector<128x32xf32>
    %565 = arith.mulf %563, %564 : vector<128x32xf32>
    %566 = arith.addf %557, %565 : vector<128x32xf32>
    %c109_i32 = arith.constant 109 : i32
    %567 = tpu.dynamic_rotate %27 by %c109_i32 dim 0 : vector<128x32xf32>, i32 -> vector<128x32xf32>
    %568 = arith.mulf %101, %197 : vector<128x1xf32>
    %c41 = arith.constant 41 : index
    %c0_182 = arith.constant 0 : index
    %c0_183 = arith.constant 0 : index
    %569 = vector.load %arg8[%c41, %c0_182, %c0_183] : memref<49x1x32xf32, #tpu.memory_space<vmem>>, vector<1x1x32xf32>
    %570 = vector.shape_cast %569 : vector<1x1x32xf32> to vector<1x32xf32>
    %571 = vector.broadcast %570 : vector<1x32xf32> to vector<128x32xf32>
    %572 = arith.mulf %567, %571 : vector<128x32xf32>
    %573 = vector.broadcast %568 : vector<128x1xf32> to vector<128x32xf32>
    %574 = arith.mulf %572, %573 : vector<128x32xf32>
    %575 = arith.addf %566, %574 : vector<128x32xf32>
    %c107_i32 = arith.constant 107 : i32
    %576 = tpu.dynamic_rotate %27 by %c107_i32 dim 0 : vector<128x32xf32>, i32 -> vector<128x32xf32>
    %577 = arith.mulf %113, %125 : vector<128x1xf32>
    %c42 = arith.constant 42 : index
    %c0_184 = arith.constant 0 : index
    %c0_185 = arith.constant 0 : index
    %578 = vector.load %arg8[%c42, %c0_184, %c0_185] : memref<49x1x32xf32, #tpu.memory_space<vmem>>, vector<1x1x32xf32>
    %579 = vector.shape_cast %578 : vector<1x1x32xf32> to vector<1x32xf32>
    %580 = vector.broadcast %579 : vector<1x32xf32> to vector<128x32xf32>
    %581 = arith.mulf %576, %580 : vector<128x32xf32>
    %582 = vector.broadcast %577 : vector<128x1xf32> to vector<128x32xf32>
    %583 = arith.mulf %581, %582 : vector<128x32xf32>
    %584 = arith.addf %575, %583 : vector<128x32xf32>
    %c106_i32 = arith.constant 106 : i32
    %585 = tpu.dynamic_rotate %27 by %c106_i32 dim 0 : vector<128x32xf32>, i32 -> vector<128x32xf32>
    %586 = arith.mulf %113, %137 : vector<128x1xf32>
    %c43 = arith.constant 43 : index
    %c0_186 = arith.constant 0 : index
    %c0_187 = arith.constant 0 : index
    %587 = vector.load %arg8[%c43, %c0_186, %c0_187] : memref<49x1x32xf32, #tpu.memory_space<vmem>>, vector<1x1x32xf32>
    %588 = vector.shape_cast %587 : vector<1x1x32xf32> to vector<1x32xf32>
    %589 = vector.broadcast %588 : vector<1x32xf32> to vector<128x32xf32>
    %590 = arith.mulf %585, %589 : vector<128x32xf32>
    %591 = vector.broadcast %586 : vector<128x1xf32> to vector<128x32xf32>
    %592 = arith.mulf %590, %591 : vector<128x32xf32>
    %593 = arith.addf %584, %592 : vector<128x32xf32>
    %c105_i32 = arith.constant 105 : i32
    %594 = tpu.dynamic_rotate %27 by %c105_i32 dim 0 : vector<128x32xf32>, i32 -> vector<128x32xf32>
    %595 = arith.mulf %113, %149 : vector<128x1xf32>
    %c44 = arith.constant 44 : index
    %c0_188 = arith.constant 0 : index
    %c0_189 = arith.constant 0 : index
    %596 = vector.load %arg8[%c44, %c0_188, %c0_189] : memref<49x1x32xf32, #tpu.memory_space<vmem>>, vector<1x1x32xf32>
    %597 = vector.shape_cast %596 : vector<1x1x32xf32> to vector<1x32xf32>
    %598 = vector.broadcast %597 : vector<1x32xf32> to vector<128x32xf32>
    %599 = arith.mulf %594, %598 : vector<128x32xf32>
    %600 = vector.broadcast %595 : vector<128x1xf32> to vector<128x32xf32>
    %601 = arith.mulf %599, %600 : vector<128x32xf32>
    %602 = arith.addf %593, %601 : vector<128x32xf32>
    %c104_i32 = arith.constant 104 : i32
    %603 = tpu.dynamic_rotate %27 by %c104_i32 dim 0 : vector<128x32xf32>, i32 -> vector<128x32xf32>
    %604 = arith.mulf %113, %161 : vector<128x1xf32>
    %c45 = arith.constant 45 : index
    %c0_190 = arith.constant 0 : index
    %c0_191 = arith.constant 0 : index
    %605 = vector.load %arg8[%c45, %c0_190, %c0_191] : memref<49x1x32xf32, #tpu.memory_space<vmem>>, vector<1x1x32xf32>
    %606 = vector.shape_cast %605 : vector<1x1x32xf32> to vector<1x32xf32>
    %607 = vector.broadcast %606 : vector<1x32xf32> to vector<128x32xf32>
    %608 = arith.mulf %603, %607 : vector<128x32xf32>
    %609 = vector.broadcast %604 : vector<128x1xf32> to vector<128x32xf32>
    %610 = arith.mulf %608, %609 : vector<128x32xf32>
    %611 = arith.addf %602, %610 : vector<128x32xf32>
    %c103_i32 = arith.constant 103 : i32
    %612 = tpu.dynamic_rotate %27 by %c103_i32 dim 0 : vector<128x32xf32>, i32 -> vector<128x32xf32>
    %613 = arith.mulf %113, %173 : vector<128x1xf32>
    %c46 = arith.constant 46 : index
    %c0_192 = arith.constant 0 : index
    %c0_193 = arith.constant 0 : index
    %614 = vector.load %arg8[%c46, %c0_192, %c0_193] : memref<49x1x32xf32, #tpu.memory_space<vmem>>, vector<1x1x32xf32>
    %615 = vector.shape_cast %614 : vector<1x1x32xf32> to vector<1x32xf32>
    %616 = vector.broadcast %615 : vector<1x32xf32> to vector<128x32xf32>
    %617 = arith.mulf %612, %616 : vector<128x32xf32>
    %618 = vector.broadcast %613 : vector<128x1xf32> to vector<128x32xf32>
    %619 = arith.mulf %617, %618 : vector<128x32xf32>
    %620 = arith.addf %611, %619 : vector<128x32xf32>
    %c102_i32 = arith.constant 102 : i32
    %621 = tpu.dynamic_rotate %27 by %c102_i32 dim 0 : vector<128x32xf32>, i32 -> vector<128x32xf32>
    %622 = arith.mulf %113, %185 : vector<128x1xf32>
    %c47 = arith.constant 47 : index
    %c0_194 = arith.constant 0 : index
    %c0_195 = arith.constant 0 : index
    %623 = vector.load %arg8[%c47, %c0_194, %c0_195] : memref<49x1x32xf32, #tpu.memory_space<vmem>>, vector<1x1x32xf32>
    %624 = vector.shape_cast %623 : vector<1x1x32xf32> to vector<1x32xf32>
    %625 = vector.broadcast %624 : vector<1x32xf32> to vector<128x32xf32>
    %626 = arith.mulf %621, %625 : vector<128x32xf32>
    %627 = vector.broadcast %622 : vector<128x1xf32> to vector<128x32xf32>
    %628 = arith.mulf %626, %627 : vector<128x32xf32>
    %629 = arith.addf %620, %628 : vector<128x32xf32>
    %c101_i32 = arith.constant 101 : i32
    %630 = tpu.dynamic_rotate %27 by %c101_i32 dim 0 : vector<128x32xf32>, i32 -> vector<128x32xf32>
    %631 = arith.mulf %113, %197 : vector<128x1xf32>
    %c48 = arith.constant 48 : index
    %c0_196 = arith.constant 0 : index
    %c0_197 = arith.constant 0 : index
    %632 = vector.load %arg8[%c48, %c0_196, %c0_197] : memref<49x1x32xf32, #tpu.memory_space<vmem>>, vector<1x1x32xf32>
    %633 = vector.shape_cast %632 : vector<1x1x32xf32> to vector<1x32xf32>
    %634 = vector.broadcast %633 : vector<1x32xf32> to vector<128x32xf32>
    %635 = arith.mulf %630, %634 : vector<128x32xf32>
    %636 = vector.broadcast %631 : vector<128x1xf32> to vector<128x32xf32>
    %637 = arith.mulf %635, %636 : vector<128x32xf32>
    %638 = arith.addf %629, %637 : vector<128x32xf32>
    %c0_198 = arith.constant 0 : index
    %c0_199 = arith.constant 0 : index
    %639 = vector.load %arg9[%c0_198, %c0_199] : memref<1x32xf32, #tpu.memory_space<vmem>>, vector<1x32xf32>
    %640 = vector.broadcast %639 : vector<1x32xf32> to vector<128x32xf32>
    %641 = arith.addf %638, %640 : vector<128x32xf32>
    %c0_200 = arith.constant 0 : index
    %c0_201 = arith.constant 0 : index
    %642 = vector.load %arg10[%c0_200, %c0_201] : memref<1x32xf32, #tpu.memory_space<vmem>>, vector<1x32xf32>
    %c0_202 = arith.constant 0 : index
    %c0_203 = arith.constant 0 : index
    %643 = vector.load %arg11[%c0_202, %c0_203] : memref<1x32xf32, #tpu.memory_space<vmem>>, vector<1x32xf32>
    %cst_204 = arith.constant dense<0.000000e+00> : vector<128xf32>
    %644 = vector.multi_reduction <add>, %641, %cst_204 [1] : vector<128x32xf32> to vector<128xf32>
    %645 = vector.shape_cast %644 : vector<128xf32> to vector<128x1xf32>
    %cst_205 = arith.constant 3.200000e+01 : f32
    %646 = vector.broadcast %cst_205 : f32 to vector<128x1xf32>
    %647 = arith.divf %645, %646 : vector<128x1xf32>
    %648 = vector.broadcast %647 : vector<128x1xf32> to vector<128x32xf32>
    %649 = arith.subf %641, %648 : vector<128x32xf32>
    %650 = arith.mulf %649, %649 : vector<128x32xf32>
    %cst_206 = arith.constant dense<0.000000e+00> : vector<128xf32>
    %651 = vector.multi_reduction <add>, %650, %cst_206 [1] : vector<128x32xf32> to vector<128xf32>
    %652 = vector.shape_cast %651 : vector<128xf32> to vector<128x1xf32>
    %cst_207 = arith.constant 3.200000e+01 : f32
    %653 = vector.broadcast %cst_207 : f32 to vector<128x1xf32>
    %654 = arith.divf %652, %653 : vector<128x1xf32>
    %cst_208 = arith.constant 9.99999997E-7 : f32
    %655 = vector.broadcast %cst_208 : f32 to vector<128x1xf32>
    %656 = arith.addf %654, %655 : vector<128x1xf32>
    %657 = math.rsqrt %656 : vector<128x1xf32>
    %658 = vector.broadcast %657 : vector<128x1xf32> to vector<128x32xf32>
    %659 = arith.mulf %649, %658 : vector<128x32xf32>
    %660 = vector.broadcast %642 : vector<1x32xf32> to vector<128x32xf32>
    %661 = arith.mulf %659, %660 : vector<128x32xf32>
    %662 = vector.broadcast %643 : vector<1x32xf32> to vector<128x32xf32>
    %663 = arith.addf %661, %662 : vector<128x32xf32>
    %664 = arith.truncf %663 : vector<128x32xf32> to vector<128x32xbf16>
    %c0_209 = arith.constant 0 : index
    %c0_210 = arith.constant 0 : index
    %665 = vector.load %arg12[%c0_209, %c0_210] : memref<32x128xbf16, #tpu.memory_space<vmem>>, vector<32x128xbf16>
    %cst_211 = arith.constant dense<0.000000e+00> : vector<128x128xf32>
    %666 = tpu.matmul %664, %665, %cst_211 {dimension_numbers = #tpu.dot_dimension_numbers<[1], [0], [0], [1], [0, 0, 1, 1], [], []>} : vector<128x32xbf16>, vector<32x128xbf16>, vector<128x128xf32> -> vector<128x128xf32>
    %c0_212 = arith.constant 0 : index
    %c0_213 = arith.constant 0 : index
    %667 = vector.load %arg13[%c0_212, %c0_213] : memref<1x128xf32, #tpu.memory_space<vmem>>, vector<1x128xf32>
    %668 = vector.broadcast %667 : vector<1x128xf32> to vector<128x128xf32>
    %669 = arith.addf %666, %668 : vector<128x128xf32>
    %cst_214 = arith.constant 5.000000e-01 : f32
    %670 = vector.broadcast %cst_214 : f32 to vector<128x128xf32>
    %671 = arith.mulf %670, %669 : vector<128x128xf32>
    %cst_215 = arith.constant 4.471500e-02 : f32
    %672 = vector.broadcast %cst_215 : f32 to vector<128x128xf32>
    %673 = arith.mulf %672, %669 : vector<128x128xf32>
    %674 = arith.mulf %673, %669 : vector<128x128xf32>
    %675 = arith.mulf %674, %669 : vector<128x128xf32>
    %676 = arith.addf %669, %675 : vector<128x128xf32>
    %cst_216 = arith.constant 0.797884583 : f32
    %677 = vector.broadcast %cst_216 : f32 to vector<128x128xf32>
    %678 = arith.mulf %677, %676 : vector<128x128xf32>
    %679 = math.tanh %678 : vector<128x128xf32>
    %cst_217 = arith.constant 1.000000e+00 : f32
    %680 = vector.broadcast %cst_217 : f32 to vector<128x128xf32>
    %681 = arith.addf %680, %679 : vector<128x128xf32>
    %682 = arith.mulf %671, %681 : vector<128x128xf32>
    %683 = arith.truncf %682 : vector<128x128xf32> to vector<128x128xbf16>
    %c0_218 = arith.constant 0 : index
    %c0_219 = arith.constant 0 : index
    %684 = vector.load %arg14[%c0_218, %c0_219] : memref<128x32xbf16, #tpu.memory_space<vmem>>, vector<128x32xbf16>
    %cst_220 = arith.constant dense<0.000000e+00> : vector<128x32xf32>
    %685 = tpu.matmul %683, %684, %cst_220 {dimension_numbers = #tpu.dot_dimension_numbers<[1], [0], [0], [1], [0, 0, 1, 1], [], []>} : vector<128x128xbf16>, vector<128x32xbf16>, vector<128x32xf32> -> vector<128x32xf32>
    %c0_221 = arith.constant 0 : index
    %c0_222 = arith.constant 0 : index
    %686 = vector.load %arg15[%c0_221, %c0_222] : memref<1x32xf32, #tpu.memory_space<vmem>>, vector<1x32xf32>
    %687 = vector.broadcast %686 : vector<1x32xf32> to vector<128x32xf32>
    %688 = arith.addf %685, %687 : vector<128x32xf32>
    %c0_223 = arith.constant 0 : index
    %c0_224 = arith.constant 0 : index
    %689 = vector.load %arg16[%c0_223, %c0_224] : memref<1x32xf32, #tpu.memory_space<vmem>>, vector<1x32xf32>
    %690 = vector.broadcast %689 : vector<1x32xf32> to vector<128x32xf32>
    %691 = arith.mulf %690, %688 : vector<128x32xf32>
    %692 = arith.addf %27, %691 : vector<128x32xf32>
    %693 = vector.extract_strided_slice %692 {offsets = [0, 0], sizes = [64, 32], strides = [1, 1]} : vector<128x32xf32> to vector<64x32xf32>
    %cst_225 = arith.constant dense<0.000000e+00> : vector<32xf32>
    %694 = vector.multi_reduction <add>, %693, %cst_225 [0] : vector<64x32xf32> to vector<32xf32>
    %695 = vector.shape_cast %694 : vector<32xf32> to vector<1x32xf32>
    %cst_226 = arith.constant 6.400000e+01 : f32
    %696 = vector.broadcast %cst_226 : f32 to vector<1x32xf32>
    %697 = arith.divf %695, %696 : vector<1x32xf32>
    %698 = vector.extract_strided_slice %692 {offsets = [64, 0], sizes = [64, 32], strides = [1, 1]} : vector<128x32xf32> to vector<64x32xf32>
    %cst_227 = arith.constant dense<0.000000e+00> : vector<32xf32>
    %699 = vector.multi_reduction <add>, %698, %cst_227 [0] : vector<64x32xf32> to vector<32xf32>
    %700 = vector.shape_cast %699 : vector<32xf32> to vector<1x32xf32>
    %cst_228 = arith.constant 6.400000e+01 : f32
    %701 = vector.broadcast %cst_228 : f32 to vector<1x32xf32>
    %702 = arith.divf %700, %701 : vector<1x32xf32>
    %703 = tpu.concatenate %697, %702 in 0 : vector<1x32xf32>, vector<1x32xf32> -> vector<2x32xf32>
    %c0_229 = arith.constant 0 : index
    %c0_230 = arith.constant 0 : index
    %704 = vector.load %arg17[%c0_229, %c0_230] : memref<1x32xf32, #tpu.memory_space<vmem>>, vector<1x32xf32>
    %c0_231 = arith.constant 0 : index
    %c0_232 = arith.constant 0 : index
    %705 = vector.load %arg18[%c0_231, %c0_232] : memref<1x32xf32, #tpu.memory_space<vmem>>, vector<1x32xf32>
    %cst_233 = arith.constant dense<0.000000e+00> : vector<2xf32>
    %706 = vector.multi_reduction <add>, %703, %cst_233 [1] : vector<2x32xf32> to vector<2xf32>
    %707 = vector.shape_cast %706 : vector<2xf32> to vector<2x1xf32>
    %cst_234 = arith.constant 3.200000e+01 : f32
    %708 = vector.broadcast %cst_234 : f32 to vector<2x1xf32>
    %709 = arith.divf %707, %708 : vector<2x1xf32>
    %710 = vector.broadcast %709 : vector<2x1xf32> to vector<2x32xf32>
    %711 = arith.subf %703, %710 : vector<2x32xf32>
    %712 = arith.mulf %711, %711 : vector<2x32xf32>
    %cst_235 = arith.constant dense<0.000000e+00> : vector<2xf32>
    %713 = vector.multi_reduction <add>, %712, %cst_235 [1] : vector<2x32xf32> to vector<2xf32>
    %714 = vector.shape_cast %713 : vector<2xf32> to vector<2x1xf32>
    %cst_236 = arith.constant 3.200000e+01 : f32
    %715 = vector.broadcast %cst_236 : f32 to vector<2x1xf32>
    %716 = arith.divf %714, %715 : vector<2x1xf32>
    %cst_237 = arith.constant 9.99999997E-7 : f32
    %717 = vector.broadcast %cst_237 : f32 to vector<2x1xf32>
    %718 = arith.addf %716, %717 : vector<2x1xf32>
    %719 = math.rsqrt %718 : vector<2x1xf32>
    %720 = vector.broadcast %719 : vector<2x1xf32> to vector<2x32xf32>
    %721 = arith.mulf %711, %720 : vector<2x32xf32>
    %722 = vector.broadcast %704 : vector<1x32xf32> to vector<2x32xf32>
    %723 = arith.mulf %721, %722 : vector<2x32xf32>
    %724 = vector.broadcast %705 : vector<1x32xf32> to vector<2x32xf32>
    %725 = arith.addf %723, %724 : vector<2x32xf32>
    %726 = arith.truncf %725 : vector<2x32xf32> to vector<2x32xbf16>
    %c0_238 = arith.constant 0 : index
    %c0_239 = arith.constant 0 : index
    %727 = vector.load %arg19[%c0_238, %c0_239] : memref<32x128xbf16, #tpu.memory_space<vmem>>, vector<32x128xbf16>
    %cst_240 = arith.constant dense<0.000000e+00> : vector<2x128xf32>
    %728 = tpu.matmul %726, %727, %cst_240 {dimension_numbers = #tpu.dot_dimension_numbers<[1], [0], [0], [1], [0, 0, 1, 1], [], []>} : vector<2x32xbf16>, vector<32x128xbf16>, vector<2x128xf32> -> vector<2x128xf32>
    %c0_241 = arith.constant 0 : index
    %c0_242 = arith.constant 0 : index
    %729 = vector.load %arg20[%c0_241, %c0_242] : memref<1x128xf32, #tpu.memory_space<vmem>>, vector<1x128xf32>
    %730 = vector.broadcast %729 : vector<1x128xf32> to vector<2x128xf32>
    %731 = arith.addf %728, %730 : vector<2x128xf32>
    %c0_243 = arith.constant 0 : index
    %c0_244 = arith.constant 0 : index
    %732 = vector.load %arg21[%c0_243, %c0_244] : memref<2x128xf32, #tpu.memory_space<vmem>>, vector<2x128xf32>
    tpu.vector_store %arg21[%c0_243, %c0_244], %731 {strides = array<i32>} : memref<2x128xf32, #tpu.memory_space<vmem>>, vector<2x128xf32>,
    return
  }
  func.func @transform_0(%arg0: i32) -> (i32, i32) {
    %c0_i32 = arith.constant 0 : i32
    %c0_i32_0 = arith.constant 0 : i32
    return %arg0, %c0_i32 : i32, i32
  }
  func.func @transform_1(%arg0: i32) -> (i32, i32) {
    %c0_i32 = arith.constant 0 : i32
    %c0_i32_0 = arith.constant 0 : i32
    %c0_i32_1 = arith.constant 0 : i32
    return %c0_i32, %c0_i32_0 : i32, i32
  }
  func.func @transform_2(%arg0: i32) -> (i32, i32) {
    %c0_i32 = arith.constant 0 : i32
    %c0_i32_0 = arith.constant 0 : i32
    %c0_i32_1 = arith.constant 0 : i32
    return %c0_i32, %c0_i32_0 : i32, i32
  }
  func.func @transform_3(%arg0: i32) -> (i32, i32) {
    %c0_i32 = arith.constant 0 : i32
    %c0_i32_0 = arith.constant 0 : i32
    %c0_i32_1 = arith.constant 0 : i32
    return %c0_i32, %c0_i32_0 : i32, i32
  }
  func.func @transform_4(%arg0: i32) -> (i32, i32) {
    %c0_i32 = arith.constant 0 : i32
    %c0_i32_0 = arith.constant 0 : i32
    %c0_i32_1 = arith.constant 0 : i32
    return %c0_i32, %c0_i32_0 : i32, i32
  }
  func.func @transform_5(%arg0: i32) -> (i32, i32) {
    %c0_i32 = arith.constant 0 : i32
    %c0_i32_0 = arith.constant 0 : i32
    %c0_i32_1 = arith.constant 0 : i32
    return %c0_i32, %c0_i32_0 : i32, i32
  }
  func.func @transform_6(%arg0: i32) -> (i32, i32) {
    %c0_i32 = arith.constant 0 : i32
    %c0_i32_0 = arith.constant 0 : i32
    %c0_i32_1 = arith.constant 0 : i32
    return %c0_i32, %c0_i32_0 : i32, i32
  }
  func.func @transform_7(%arg0: i32) -> (i32, i32, i32) {
    %c0_i32 = arith.constant 0 : i32
    %c0_i32_0 = arith.constant 0 : i32
    %c0_i32_1 = arith.constant 0 : i32
    %c0_i32_2 = arith.constant 0 : i32
    return %c0_i32, %c0_i32_0, %c0_i32_1 : i32, i32, i32
  }
  func.func @transform_8(%arg0: i32) -> (i32, i32) {
    %c0_i32 = arith.constant 0 : i32
    %c0_i32_0 = arith.constant 0 : i32
    %c0_i32_1 = arith.constant 0 : i32
    return %c0_i32, %c0_i32_0 : i32, i32
  }
  func.func @transform_9(%arg0: i32) -> (i32, i32) {
    %c0_i32 = arith.constant 0 : i32
    %c0_i32_0 = arith.constant 0 : i32
    %c0_i32_1 = arith.constant 0 : i32
    return %c0_i32, %c0_i32_0 : i32, i32
  }
  func.func @transform_10(%arg0: i32) -> (i32, i32) {
    %c0_i32 = arith.constant 0 : i32
    %c0_i32_0 = arith.constant 0 : i32
    %c0_i32_1 = arith.constant 0 : i32
    return %c0_i32, %c0_i32_0 : i32, i32
  }
  func.func @transform_11(%arg0: i32) -> (i32, i32) {
    %c0_i32 = arith.constant 0 : i32
    %c0_i32_0 = arith.constant 0 : i32
    %c0_i32_1 = arith.constant 0 : i32
    return %c0_i32, %c0_i32_0 : i32, i32
  }
  func.func @transform_12(%arg0: i32) -> (i32, i32) {
    %c0_i32 = arith.constant 0 : i32
    %c0_i32_0 = arith.constant 0 : i32
    %c0_i32_1 = arith.constant 0 : i32
    return %c0_i32, %c0_i32_0 : i32, i32
  }
  func.func @transform_13(%arg0: i32) -> (i32, i32) {
    %c0_i32 = arith.constant 0 : i32
    %c0_i32_0 = arith.constant 0 : i32
    %c0_i32_1 = arith.constant 0 : i32
    return %c0_i32, %c0_i32_0 : i32, i32
  }
  func.func @transform_14(%arg0: i32) -> (i32, i32) {
    %c0_i32 = arith.constant 0 : i32
    %c0_i32_0 = arith.constant 0 : i32
    %c0_i32_1 = arith.constant 0 : i32
    return %c0_i32, %c0_i32_0 : i32, i32
  }
  func.func @transform_15(%arg0: i32) -> (i32, i32) {
    %c0_i32 = arith.constant 0 : i32
    %c0_i32_0 = arith.constant 0 : i32
    %c0_i32_1 = arith.constant 0 : i32
    return %c0_i32, %c0_i32_0 : i32, i32
  }
  func.func @transform_16(%arg0: i32) -> (i32, i32) {
    %c0_i32 = arith.constant 0 : i32
    %c0_i32_0 = arith.constant 0 : i32
    %c0_i32_1 = arith.constant 0 : i32
    return %c0_i32, %c0_i32_0 : i32, i32
  }
  func.func @transform_17(%arg0: i32) -> (i32, i32) {
    %c0_i32 = arith.constant 0 : i32
    %c0_i32_0 = arith.constant 0 : i32
    %c0_i32_1 = arith.constant 0 : i32
    return %c0_i32, %c0_i32_0 : i32, i32
  }
  func.func @transform_18(%arg0: i32) -> (i32, i32) {
    %c0_i32 = arith.constant 0 : i32
    %c0_i32_0 = arith.constant 0 : i32
    %c0_i32_1 = arith.constant 0 : i32
    return %c0_i32, %c0_i32_0 : i32, i32
  }
  func.func @transform_19(%arg0: i32) -> (i32, i32) {
    %c0_i32 = arith.constant 0 : i32
    %c0_i32_0 = arith.constant 0 : i32
    %c0_i32_1 = arith.constant 0 : i32
    return %c0_i32, %c0_i32_0 : i32, i32
  }
  func.func @transform_20(%arg0: i32) -> (i32, i32) {
    %c0_i32 = arith.constant 0 : i32
    %c0_i32_0 = arith.constant 0 : i32
    return %arg0, %c0_i32 : i32, i32
  }
}

</mosaic_0001>

<llo_original>
// kernel: forward.1
$region0: #{forward.1}
  #allocation0 [shape = 'u32[]', space=smem, size = 0x4, offset = 0x4, fixed_abs, tag = 'smem constant byte address 0x4 - core index']
  #allocation1 [shape = 'u32[144,128]{1,0:T(1,128)}', space=vmem, size = 0x12000, scoped, tag = 'internal scratch']
  %s0 = inlined_call_operand.vmem [shape: bf16[128,48], index: 0, kind: input, shape index: {}]
  %s1 = inlined_call_operand.vmem [shape: s32[128,1], index: 1, kind: input, shape index: {}]
  %s2 = inlined_call_operand.vmem [shape: s32[128,1], index: 2, kind: input, shape index: {}]
  %s3 = inlined_call_operand.vmem [shape: bf16[48,32], index: 3, kind: input, shape index: {}]
  %s4 = inlined_call_operand.vmem [shape: f32[1,32], index: 4, kind: input, shape index: {}]
  %s5 = inlined_call_operand.vmem [shape: f32[1,32], index: 5, kind: input, shape index: {}]
  %s6 = inlined_call_operand.vmem [shape: f32[1,32], index: 6, kind: input, shape index: {}]
  %s7 = inlined_call_operand.vmem [shape: f32[49,1,32], index: 7, kind: input, shape index: {}]
  %s8 = inlined_call_operand.vmem [shape: f32[1,32], index: 8, kind: input, shape index: {}]
  %s9 = inlined_call_operand.vmem [shape: f32[1,32], index: 9, kind: input, shape index: {}]
  %s10 = inlined_call_operand.vmem [shape: f32[1,32], index: 10, kind: input, shape index: {}]
  %s11 = inlined_call_operand.vmem [shape: bf16[32,128], index: 11, kind: input, shape index: {}]
  %s12 = inlined_call_operand.vmem [shape: f32[1,128], index: 12, kind: input, shape index: {}]
  %s13 = inlined_call_operand.vmem [shape: bf16[128,32], index: 13, kind: input, shape index: {}]
  %s14 = inlined_call_operand.vmem [shape: f32[1,32], index: 14, kind: input, shape index: {}]
  %s15 = inlined_call_operand.vmem [shape: f32[1,32], index: 15, kind: input, shape index: {}]
  %s16 = inlined_call_operand.vmem [shape: f32[1,32], index: 16, kind: input, shape index: {}]
  %s17 = inlined_call_operand.vmem [shape: f32[1,32], index: 17, kind: input, shape index: {}]
  %s18 = inlined_call_operand.vmem [shape: bf16[32,128], index: 18, kind: input, shape index: {}]
  %s19 = inlined_call_operand.vmem [shape: f32[1,128], index: 19, kind: input, shape index: {}]
  %s20 = inlined_call_operand.hbm [shape: f32[2,128], index: 20, kind: output, shape index: {}]
  %s21 = sld [smem:[#allocation0]]
  $region90: #{forward.1} parent=0
    _
  %s23 = ssub.s32 1, %s21
  %s24 = scalar_select 0, %s23, %s21
  $region1: #{forward.1} parent=0
    #allocation2 [shape = 'u8[1024]{0}', space=vmem, size = 0x400, scoped, tag = 'output window, operand 0, single buffered']
    #allocation3 [shape = 's32[1]{0}', space=sflag, size = 0x4, scoped, tag = 'scoped memory for forward.1']
    %25 = vsyncpa [#allocation3], 0
    // Predicated region
    $region2: #{forward.1} parent=1 // pred_check
      _
    $region3: #{forward.1} parent=1 // pred_check_branch
      %27 = sbr.rel (0) target = $region5
    $region4: #{forward.1} parent=1 // pred_region
      _
    $region5: #{forward.1} parent=1 // pred_fallthru
      _
    // Predicated region
    $region6: #{forward.1} parent=1 // pred_check
      _
    $region7: #{forward.1} parent=1 // pred_check_branch
      %29 = sbr.rel (0) target = $region9
    $region8: #{forward.1} parent=1 // pred_region
      _
    $region9: #{forward.1} parent=1 // pred_fallthru
      _
    // Predicated region
    $region10: #{forward.1} parent=1 // pred_check
      _
    $region11: #{forward.1} parent=1 // pred_check_branch
      %31 = sbr.rel (0) target = $region13
    $region12: #{forward.1} parent=1 // pred_region
      _
    $region13: #{forward.1} parent=1 // pred_fallthru
      _
    // Predicated region
    $region14: #{forward.1} parent=1 // pred_check
      _
    $region15: #{forward.1} parent=1 // pred_check_branch
      %33 = sbr.rel (0) target = $region17
    $region16: #{forward.1} parent=1 // pred_region
      _
    $region17: #{forward.1} parent=1 // pred_fallthru
      _
    // Predicated region
    $region18: #{forward.1} parent=1 // pred_check
      _
    $region19: #{forward.1} parent=1 // pred_check_branch
      %35 = sbr.rel (0) target = $region21
    $region20: #{forward.1} parent=1 // pred_region
      _
    $region21: #{forward.1} parent=1 // pred_fallthru
      _
    // Predicated region
    $region22: #{forward.1} parent=1 // pred_check
      _
    $region23: #{forward.1} parent=1 // pred_check_branch
      %37 = sbr.rel (0) target = $region25
    $region24: #{forward.1} parent=1 // pred_region
      _
    $region25: #{forward.1} parent=1 // pred_fallthru
      _
    // Predicated region
    $region26: #{forward.1} parent=1 // pred_check
      _
    $region27: #{forward.1} parent=1 // pred_check_branch
      %39 = sbr.rel (0) target = $region29
    $region28: #{forward.1} parent=1 // pred_region
      _
    $region29: #{forward.1} parent=1 // pred_fallthru
      _
    // Predicated region
    $region30: #{forward.1} parent=1 // pred_check
      _
    $region31: #{forward.1} parent=1 // pred_check_branch
      %41 = sbr.rel (0) target = $region33
    $region32: #{forward.1} parent=1 // pred_region
      _
    $region33: #{forward.1} parent=1 // pred_fallthru
      _
    // Predicated region
    $region34: #{forward.1} parent=1 // pred_check
      _
    $region35: #{forward.1} parent=1 // pred_check_branch
      %43 = sbr.rel (0) target = $region37
    $region36: #{forward.1} parent=1 // pred_region
      _
    $region37: #{forward.1} parent=1 // pred_fallthru
      _
    // Predicated region
    $region38: #{forward.1} parent=1 // pred_check
      _
    $region39: #{forward.1} parent=1 // pred_check_branch
      %45 = sbr.rel (0) target = $region41
    $region40: #{forward.1} parent=1 // pred_region
      _
    $region41: #{forward.1} parent=1 // pred_fallthru
      _
    // Predicated region
    $region42: #{forward.1} parent=1 // pred_check
      _
    $region43: #{forward.1} parent=1 // pred_check_branch
      %47 = sbr.rel (0) target = $region45
    $region44: #{forward.1} parent=1 // pred_region
      _
    $region45: #{forward.1} parent=1 // pred_fallthru
      _
    // Predicated region
    $region46: #{forward.1} parent=1 // pred_check
      _
    $region47: #{forward.1} parent=1 // pred_check_branch
      %49 = sbr.rel (0) target = $region49
    $region48: #{forward.1} parent=1 // pred_region
      _
    $region49: #{forward.1} parent=1 // pred_fallthru
      _
    // Predicated region
    $region50: #{forward.1} parent=1 // pred_check
      _
    $region51: #{forward.1} parent=1 // pred_check_branch
      %51 = sbr.rel (0) target = $region53
    $region52: #{forward.1} parent=1 // pred_region
      _
    $region53: #{forward.1} parent=1 // pred_fallthru
      _
    // Predicated region
    $region54: #{forward.1} parent=1 // pred_check
      _
    $region55: #{forward.1} parent=1 // pred_check_branch
      %53 = sbr.rel (0) target = $region57
    $region56: #{forward.1} parent=1 // pred_region
      _
    $region57: #{forward.1} parent=1 // pred_fallthru
      _
    // Predicated region
    $region58: #{forward.1} parent=1 // pred_check
      _
    $region59: #{forward.1} parent=1 // pred_check_branch
      %55 = sbr.rel (0) target = $region61
    $region60: #{forward.1} parent=1 // pred_region
      _
    $region61: #{forward.1} parent=1 // pred_fallthru
      _
    // Predicated region
    $region62: #{forward.1} parent=1 // pred_check
      _
    $region63: #{forward.1} parent=1 // pred_check_branch
      %57 = sbr.rel (0) target = $region65
    $region64: #{forward.1} parent=1 // pred_region
      _
    $region65: #{forward.1} parent=1 // pred_fallthru
      _
    // Predicated region
    $region66: #{forward.1} parent=1 // pred_check
      _
    $region67: #{forward.1} parent=1 // pred_check_branch
      %59 = sbr.rel (0) target = $region69
    $region68: #{forward.1} parent=1 // pred_region
      _
    $region69: #{forward.1} parent=1 // pred_fallthru
      _
    // Predicated region
    $region70: #{forward.1} parent=1 // pred_check
      _
    $region71: #{forward.1} parent=1 // pred_check_branch
      %61 = sbr.rel (0) target = $region73
    $region72: #{forward.1} parent=1 // pred_region
      _
    $region73: #{forward.1} parent=1 // pred_fallthru
      _
    // Predicated region
    $region74: #{forward.1} parent=1 // pred_check
      _
    $region75: #{forward.1} parent=1 // pred_check_branch
      %63 = sbr.rel (0) target = $region77
    $region76: #{forward.1} parent=1 // pred_region
      _
    $region77: #{forward.1} parent=1 // pred_fallthru
      _
    // Predicated region
    $region78: #{forward.1} parent=1 // pred_check
      _
    $region79: #{forward.1} parent=1 // pred_check_branch
      %65 = sbr.rel (0) target = $region81
    $region80: #{forward.1} parent=1 // pred_region
      _
    $region81: #{forward.1} parent=1 // pred_fallthru
      _
    %v67 = vld [vmem:[%s0] sm:$0xf]
    %v68 = vld [vmem:[%s0 + $0x4] sm:$0xf]
    %v69 = vld [vmem:[%s0 + $0x8] sm:$0xf]
    %v70 = vld [vmem:[%s0 + $0xc] sm:$0xf]
    %v71 = vld [vmem:[%s0 + $0x10] sm:$0xf]
    %v72 = vld [vmem:[%s0 + $0x14] sm:$0xf]
    %v73 = vld [vmem:[%s0 + $0x18] sm:$0xf]
    %v74 = vld [vmem:[%s0 + $0x1c] sm:$0xf]
    %v75 = vld [vmem:[%s0 + $0x20] sm:$0xf]
    %v76 = vld [vmem:[%s0 + $0x24] sm:$0xf]
    %v77 = vld [vmem:[%s0 + $0x28] sm:$0xf]
    %v78 = vld [vmem:[%s0 + $0x2c] sm:$0xf]
    %v79 = vld [vmem:[%s0 + $0x30] sm:$0xf]
    %v80 = vld [vmem:[%s0 + $0x34] sm:$0xf]
    %v81 = vld [vmem:[%s0 + $0x38] sm:$0xf]
    %v82 = vld [vmem:[%s0 + $0x3c] sm:$0xf]
    %v83 = vld [vmem:[%s3] sm:$0xf]
    %v84 = vld [vmem:[%s3 + $0x4] sm:$0xf]
    %v85 = vld [vmem:[%s3 + $0x8] sm:$0xf]
    %v86 = vld [vmem:[%s3 + $0xc] sm:$0xf]
    %v87 = vld [vmem:[%s3 + $0x10] sm:$0xf]
    %v88 = vld [vmem:[%s3 + $0x14] sm:$0xf]
    %v89 = vld [vmem:[%s4] sm:$0x1]
    %v91 = vlaneseq
    %v92 = vshrl.u32 %v91, 7
    %v93 = vsub.s32 0, %v92
    %v94 = vrot.slane %v89, %v93
    %v112 = vunpack.c.l.b16 %v67
    %v113 = vunpack.c.l.b16 %v68
    %v114 = vunpack.c.l.b16 %v69
    %v115 = vunpack.c.l.b16 %v70
    %v116 = vunpack.c.l.b16 %v71
    %v117 = vunpack.c.l.b16 %v72
    %v118 = vunpack.c.l.b16 %v73
    %v119 = vunpack.c.l.b16 %v74
    %v120 = vunpack.c.l.b16 %v75
    %v121 = vunpack.c.l.b16 %v76
    %v122 = vunpack.c.l.b16 %v77
    %v123 = vunpack.c.l.b16 %v78
    %v124 = vunpack.c.l.b16 %v79
    %v125 = vunpack.c.l.b16 %v80
    %v126 = vunpack.c.l.b16 %v81
    %v127 = vunpack.c.l.b16 %v82
    %v128 = vpack.c.b16 %v113, %v112
    %v129 = vpack.c.b16 %v115, %v114
    %v130 = vpack.c.b16 %v117, %v116
    %v131 = vpack.c.b16 %v119, %v118
    %v132 = vpack.c.b16 %v121, %v120
    %v133 = vpack.c.b16 %v123, %v122
    %v134 = vpack.c.b16 %v125, %v124
    %v135 = vpack.c.b16 %v127, %v126
    %v142 = vunpack.c.l.b16 %v83
    %v143 = vunpack.c.l.b16 %v84
    %v144 = vunpack.c.l.b16 %v85
    %v145 = vunpack.c.l.b16 %v86
    %v146 = vunpack.c.l.b16 %v87
    %v147 = vunpack.c.l.b16 %v88
    %v148 = vpack.c.b16 %v143, %v142
    %v149 = vpack.c.b16 %v145, %v144
    %v150 = vpack.c.b16 %v147, %v146
    %vm154 = vcmask 392192
    %v156 = vsel %vm154, %v128, 0
    %v159 = vsel %vm154, %v129, 0
    %v162 = vsel %vm154, %v130, 0
    %v165 = vsel %vm154, %v131, 0
    %v168 = vsel %vm154, %v132, 0
    %v171 = vsel %vm154, %v133, 0
    %v174 = vsel %vm154, %v134, 0
    %v177 = vsel %vm154, %v135, 0
    %179 = vmatprep.subr.bf16.mxu0 0
    %180 = vmatpush1.bf16.msra.mxu0 0
    %181 = vmatprep.subr.bf16.mxu0 0
    %182 = vmatpush1.bf16.msra.mxu0 0
    %183 = vmatprep.subr.bf16.mxu0 0
    %184 = vmatpush1.bf16.msra.mxu0 0
    %185 = vmatprep.subr.bf16.mxu0 0
    %186 = vmatpush1.bf16.msra.mxu0 0
    %187 = vmatprep.subr.bf16.mxu0 0
    %188 = vmatpush1.bf16.msra.mxu0 0
    %189 = vmatprep.subr.bf16.mxu0 0
    %190 = vmatpush1.bf16.msra.mxu0 %v150
    %191 = vmatprep.subr.bf16.mxu0 0
    %192 = vmatpush1.bf16.msra.mxu0 %v149
    %193 = vmatprep.subr.bf16.mxu0 0
    %194 = vmatpush1.bf16.msra.mxu0 %v148
    %195 = vmatprep.subr.bf16.mxu0 0
    %196 = vmatpush2.bf16.msra.mxu0 0
    %197 = vmatprep.subr.bf16.mxu0 0
    %198 = vmatpush2.bf16.msra.mxu0 0
    %199 = vmatprep.subr.bf16.mxu0 0
    %200 = vmatpush2.bf16.msra.mxu0 0
    %201 = vmatprep.subr.bf16.mxu0 0
    %202 = vmatpush2.bf16.msra.mxu0 0
    %203 = vmatprep.subr.bf16.mxu0 0
    %204 = vmatpush2.bf16.msra.mxu0 0
    %205 = vmatprep.subr.bf16.mxu0 0
    %206 = vmatpush2.bf16.msra.mxu0 0
    %207 = vmatprep.subr.bf16.mxu0 0
    %208 = vmatpush2.bf16.msra.mxu0 0
    %209 = vmatprep.subr.bf16.mxu0 0
    %210 = vmatpush2.bf16.msra.mxu0 0
    %211 = vmatprep.mubr.bf16.mxu0 0
    %212 = vmatmul.mubr.bf16.gmra.mxu0 %v156
    %v213 = vpop.f32.mrf.mxu0
    %v214 = vadd.f32 %v94, %v213
    %v215 = vpop.f32.mrf.mxu0
    %v216 = vpop.f32.mrf.mxu0
    %v217 = vadd.f32 %v94, %v216
    %v218 = vpop.f32.mrf.mxu0
    %219 = vmatprep.mubr.bf16.mxu0 0
    %220 = vmatmul.mubr.bf16.gmra.mxu0 %v159
    %v221 = vpop.f32.mrf.mxu0
    %v222 = vadd.f32 %v94, %v221
    %v223 = vpop.f32.mrf.mxu0
    %v224 = vpop.f32.mrf.mxu0
    %v225 = vadd.f32 %v94, %v224
    %v226 = vpop.f32.mrf.mxu0
    %227 = vmatprep.mubr.bf16.mxu0 0
    %228 = vmatmul.mubr.bf16.gmra.mxu0 %v162
    %v229 = vpop.f32.mrf.mxu0
    %v230 = vadd.f32 %v94, %v229
    %v231 = vpop.f32.mrf.mxu0
    %v232 = vpop.f32.mrf.mxu0
    %v233 = vadd.f32 %v94, %v232
    %v234 = vpop.f32.mrf.mxu0
    %235 = vmatprep.mubr.bf16.mxu0 0
    %236 = vmatmul.mubr.bf16.gmra.mxu0 %v165
    %v237 = vpop.f32.mrf.mxu0
    %v238 = vadd.f32 %v94, %v237
    %v239 = vpop.f32.mrf.mxu0
    %v240 = vpop.f32.mrf.mxu0
    %v241 = vadd.f32 %v94, %v240
    %v242 = vpop.f32.mrf.mxu0
    %243 = vmatprep.mubr.bf16.mxu0 0
    %244 = vmatmul.mubr.bf16.gmra.mxu0 %v168
    %v245 = vpop.f32.mrf.mxu0
    %v246 = vadd.f32 %v94, %v245
    %v247 = vpop.f32.mrf.mxu0
    %v248 = vpop.f32.mrf.mxu0
    %v249 = vadd.f32 %v94, %v248
    %v250 = vpop.f32.mrf.mxu0
    %251 = vmatprep.mubr.bf16.mxu0 0
    %252 = vmatmul.mubr.bf16.gmra.mxu0 %v171
    %v253 = vpop.f32.mrf.mxu0
    %v254 = vadd.f32 %v94, %v253
    %v255 = vpop.f32.mrf.mxu0
    %v256 = vpop.f32.mrf.mxu0
    %v257 = vadd.f32 %v94, %v256
    %v258 = vpop.f32.mrf.mxu0
    %259 = vmatprep.mubr.bf16.mxu0 0
    %260 = vmatmul.mubr.bf16.gmra.mxu0 %v174
    %v261 = vpop.f32.mrf.mxu0
    %v262 = vadd.f32 %v94, %v261
    %v263 = vpop.f32.mrf.mxu0
    %v264 = vpop.f32.mrf.mxu0
    %v265 = vadd.f32 %v94, %v264
    %v266 = vpop.f32.mrf.mxu0
    %267 = vmatprep.mubr.bf16.mxu0 0
    %268 = vmatmul.mubr.bf16.gmra.mxu0 %v177
    %v269 = vpop.f32.mrf.mxu0
    %v270 = vadd.f32 %v94, %v269
    %v271 = vpop.f32.mrf.mxu0
    %v272 = vpop.f32.mrf.mxu0
    %v273 = vadd.f32 %v94, %v272
    %v274 = vpop.f32.mrf.mxu0
    %275 = vdwg.mxu0
    %v276 = vld [vmem:[%s5] sm:$0x1]
    %v277 = vld [vmem:[%s6] sm:$0x1]
    %vm278 = vcmask 261120
    %v279 = vsel %vm278, %v214, 0.0
    %280 = vadd.xlane.f32.xlu0 %v279
    %v281 = vpop.xlane.xlu0 %280
    %v282 = vsel %vm278, %v217, 0.0
    %283 = vadd.xlane.f32.xlu0 %v282
    %v284 = vpop.xlane.xlu0 %283
    %v285 = vsel %vm278, %v222, 0.0
    %286 = vadd.xlane.f32.xlu0 %v285
    %v287 = vpop.xlane.xlu0 %286
    %v288 = vsel %vm278, %v225, 0.0
    %289 = vadd.xlane.f32.xlu0 %v288
    %v290 = vpop.xlane.xlu0 %289
    %v291 = vsel %vm278, %v230, 0.0
    %292 = vadd.xlane.f32.xlu0 %v291
    %v293 = vpop.xlane.xlu0 %292
    %v294 = vsel %vm278, %v233, 0.0
    %295 = vadd.xlane.f32.xlu0 %v294
    %v296 = vpop.xlane.xlu0 %295
    %v297 = vsel %vm278, %v238, 0.0
    %298 = vadd.xlane.f32.xlu0 %v297
    %v299 = vpop.xlane.xlu0 %298
    %v300 = vsel %vm278, %v241, 0.0
    %301 = vadd.xlane.f32.xlu0 %v300
    %v302 = vpop.xlane.xlu0 %301
    %v303 = vsel %vm278, %v246, 0.0
    %304 = vadd.xlane.f32.xlu0 %v303
    %v305 = vpop.xlane.xlu0 %304
    %v306 = vsel %vm278, %v249, 0.0
    %307 = vadd.xlane.f32.xlu0 %v306
    %v308 = vpop.xlane.xlu0 %307
    %v309 = vsel %vm278, %v254, 0.0
    %310 = vadd.xlane.f32.xlu0 %v309
    %v311 = vpop.xlane.xlu0 %310
    %v312 = vsel %vm278, %v257, 0.0
    %313 = vadd.xlane.f32.xlu0 %v312
    %v314 = vpop.xlane.xlu0 %313
    %v315 = vsel %vm278, %v262, 0.0
    %316 = vadd.xlane.f32.xlu0 %v315
    %v317 = vpop.xlane.xlu0 %316
    %v318 = vsel %vm278, %v265, 0.0
    %319 = vadd.xlane.f32.xlu0 %v318
    %v320 = vpop.xlane.xlu0 %319
    %v321 = vsel %vm278, %v270, 0.0
    %322 = vadd.xlane.f32.xlu0 %v321
    %v323 = vpop.xlane.xlu0 %322
    %v324 = vsel %vm278, %v273, 0.0
    %325 = vadd.xlane.f32.xlu0 %v324
    %v326 = vpop.xlane.xlu0 %325
    %v327 = vrcp.pop 32.0
    %v328 = vmul.f32 %v281, %v327
    %v329 = vmul.f32 %v284, %v327
    %v330 = vmul.f32 %v287, %v327
    %v331 = vmul.f32 %v290, %v327
    %v332 = vmul.f32 %v293, %v327
    %v333 = vmul.f32 %v296, %v327
    %v334 = vmul.f32 %v299, %v327
    %v335 = vmul.f32 %v302, %v327
    %v336 = vmul.f32 %v305, %v327
    %v337 = vmul.f32 %v308, %v327
    %v338 = vmul.f32 %v311, %v327
    %v339 = vmul.f32 %v314, %v327
    %v340 = vmul.f32 %v317, %v327
    %v341 = vmul.f32 %v320, %v327
    %v342 = vmul.f32 %v323, %v327
    %v343 = vmul.f32 %v326, %v327
    %v344 = vsub.f32 %v214, %v328
    %v345 = vsub.f32 %v217, %v329
    %v346 = vsub.f32 %v222, %v330
    %v347 = vsub.f32 %v225, %v331
    %v348 = vsub.f32 %v230, %v332
    %v349 = vsub.f32 %v233, %v333
    %v350 = vsub.f32 %v238, %v334
    %v351 = vsub.f32 %v241, %v335
    %v352 = vsub.f32 %v246, %v336
    %v353 = vsub.f32 %v249, %v337
    %v354 = vsub.f32 %v254, %v338
    %v355 = vsub.f32 %v257, %v339
    %v356 = vsub.f32 %v262, %v340
    %v357 = vsub.f32 %v265, %v341
    %v358 = vsub.f32 %v270, %v342
    %v359 = vsub.f32 %v273, %v343
    %v360 = vmul.f32 %v344, %v344
    %v361 = vmul.f32 %v345, %v345
    %v362 = vmul.f32 %v346, %v346
    %v363 = vmul.f32 %v347, %v347
    %v364 = vmul.f32 %v348, %v348
    %v365 = vmul.f32 %v349, %v349
    %v366 = vmul.f32 %v350, %v350
    %v367 = vmul.f32 %v351, %v351
    %v368 = vmul.f32 %v352, %v352
    %v369 = vmul.f32 %v353, %v353
    %v370 = vmul.f32 %v354, %v354
    %v371 = vmul.f32 %v355, %v355
    %v372 = vmul.f32 %v356, %v356
    %v373 = vmul.f32 %v357, %v357
    %v374 = vmul.f32 %v358, %v358
    %v375 = vmul.f32 %v359, %v359
    %v376 = vsel %vm278, %v360, 0.0
    %377 = vadd.xlane.f32.xlu0 %v376
    %v378 = vpop.xlane.xlu0 %377
    %v379 = vsel %vm278, %v361, 0.0
    %380 = vadd.xlane.f32.xlu0 %v379
    %v381 = vpop.xlane.xlu0 %380
    %v382 = vsel %vm278, %v362, 0.0
    %383 = vadd.xlane.f32.xlu0 %v382
    %v384 = vpop.xlane.xlu0 %383
    %v385 = vsel %vm278, %v363, 0.0
    %386 = vadd.xlane.f32.xlu0 %v385
    %v387 = vpop.xlane.xlu0 %386
    %v388 = vsel %vm278, %v364, 0.0
    %389 = vadd.xlane.f32.xlu0 %v388
    %v390 = vpop.xlane.xlu0 %389
    %v391 = vsel %vm278, %v365, 0.0
    %392 = vadd.xlane.f32.xlu0 %v391
    %v393 = vpop.xlane.xlu0 %392
    %v394 = vsel %vm278, %v366, 0.0
    %395 = vadd.xlane.f32.xlu0 %v394
    %v396 = vpop.xlane.xlu0 %395
    %v397 = vsel %vm278, %v367, 0.0
    %398 = vadd.xlane.f32.xlu0 %v397
    %v399 = vpop.xlane.xlu0 %398
    %v400 = vsel %vm278, %v368, 0.0
    %401 = vadd.xlane.f32.xlu0 %v400
    %v402 = vpop.xlane.xlu0 %401
    %v403 = vsel %vm278, %v369, 0.0
    %404 = vadd.xlane.f32.xlu0 %v403
    %v405 = vpop.xlane.xlu0 %404
    %v406 = vsel %vm278, %v370, 0.0
    %407 = vadd.xlane.f32.xlu0 %v406
    %v408 = vpop.xlane.xlu0 %407
    %v409 = vsel %vm278, %v371, 0.0
    %410 = vadd.xlane.f32.xlu0 %v409
    %v411 = vpop.xlane.xlu0 %410
    %v412 = vsel %vm278, %v372, 0.0
    %413 = vadd.xlane.f32.xlu0 %v412
    %v414 = vpop.xlane.xlu0 %413
    %v415 = vsel %vm278, %v373, 0.0
    %416 = vadd.xlane.f32.xlu0 %v415
    %v417 = vpop.xlane.xlu0 %416
    %v418 = vsel %vm278, %v374, 0.0
    %419 = vadd.xlane.f32.xlu0 %v418
    %v420 = vpop.xlane.xlu0 %419
    %v421 = vsel %vm278, %v375, 0.0
    %422 = vadd.xlane.f32.xlu0 %v421
    %v423 = vpop.xlane.xlu0 %422
    %v424 = vmul.f32 %v378, %v327
    %v425 = vmul.f32 %v381, %v327
    %v426 = vmul.f32 %v384, %v327
    %v427 = vmul.f32 %v387, %v327
    %v428 = vmul.f32 %v390, %v327
    %v429 = vmul.f32 %v393, %v327
    %v430 = vmul.f32 %v396, %v327
    %v431 = vmul.f32 %v399, %v327
    %v432 = vmul.f32 %v402, %v327
    %v433 = vmul.f32 %v405, %v327
    %v434 = vmul.f32 %v408, %v327
    %v435 = vmul.f32 %v411, %v327
    %v436 = vmul.f32 %v414, %v327
    %v437 = vmul.f32 %v417, %v327
    %v438 = vmul.f32 %v420, %v327
    %v439 = vmul.f32 %v423, %v327
    %v440 = vadd.f32 %v424, 1e-06
    %v441 = vadd.f32 %v425, 1e-06
    %v442 = vadd.f32 %v426, 1e-06
    %v443 = vadd.f32 %v427, 1e-06
    %v444 = vadd.f32 %v428, 1e-06
    %v445 = vadd.f32 %v429, 1e-06
    %v446 = vadd.f32 %v430, 1e-06
    %v447 = vadd.f32 %v431, 1e-06
    %v448 = vadd.f32 %v432, 1e-06
    %v449 = vadd.f32 %v433, 1e-06
    %v450 = vadd.f32 %v434, 1e-06
    %v451 = vadd.f32 %v435, 1e-06
    %v452 = vadd.f32 %v436, 1e-06
    %v453 = vadd.f32 %v437, 1e-06
    %v454 = vadd.f32 %v438, 1e-06
    %v455 = vadd.f32 %v439, 1e-06
    %v456 = vrsqrt.pop %v440
    %v457 = vrsqrt.pop %v441
    %v458 = vrsqrt.pop %v442
    %v459 = vrsqrt.pop %v443
    %v460 = vrsqrt.pop %v444
    %v461 = vrsqrt.pop %v445
    %v462 = vrsqrt.pop %v446
    %v463 = vrsqrt.pop %v447
    %v464 = vrsqrt.pop %v448
    %v465 = vrsqrt.pop %v449
    %v466 = vrsqrt.pop %v450
    %v467 = vrsqrt.pop %v451
    %v468 = vrsqrt.pop %v452
    %v469 = vrsqrt.pop %v453
    %v470 = vrsqrt.pop %v454
    %v471 = vrsqrt.pop %v455
    %v472 = vmul.f32 %v344, %v456
    %v473 = vmul.f32 %v345, %v457
    %v474 = vmul.f32 %v346, %v458
    %v475 = vmul.f32 %v347, %v459
    %v476 = vmul.f32 %v348, %v460
    %v477 = vmul.f32 %v349, %v461
    %v478 = vmul.f32 %v350, %v462
    %v479 = vmul.f32 %v351, %v463
    %v480 = vmul.f32 %v352, %v464
    %v481 = vmul.f32 %v353, %v465
    %v482 = vmul.f32 %v354, %v466
    %v483 = vmul.f32 %v355, %v467
    %v484 = vmul.f32 %v356, %v468
    %v485 = vmul.f32 %v357, %v469
    %v486 = vmul.f32 %v358, %v470
    %v487 = vmul.f32 %v359, %v471
    %v489 = vlaneseq
    %v490 = vshrl.u32 %v489, 7
    %v491 = vsub.s32 0, %v490
    %v492 = vrot.slane %v276, %v491
    %v494 = vmul.f32 %v472, %v492
    %v495 = vmul.f32 %v473, %v492
    %v496 = vmul.f32 %v474, %v492
    %v497 = vmul.f32 %v475, %v492
    %v498 = vmul.f32 %v476, %v492
    %v499 = vmul.f32 %v477, %v492
    %v500 = vmul.f32 %v478, %v492
    %v501 = vmul.f32 %v479, %v492
    %v502 = vmul.f32 %v480, %v492
    %v503 = vmul.f32 %v481, %v492
    %v504 = vmul.f32 %v482, %v492
    %v505 = vmul.f32 %v483, %v492
    %v506 = vmul.f32 %v484, %v492
    %v507 = vmul.f32 %v485, %v492
    %v508 = vmul.f32 %v486, %v492
    %v509 = vmul.f32 %v487, %v492
    %v511 = vlaneseq
    %v512 = vshrl.u32 %v511, 7
    %v513 = vsub.s32 0, %v512
    %v514 = vrot.slane %v277, %v513
    %v516 = vadd.f32 %v494, %v514
    %v517 = vadd.f32 %v495, %v514
    %v518 = vadd.f32 %v496, %v514
    %v519 = vadd.f32 %v497, %v514
    %v520 = vadd.f32 %v498, %v514
    %v521 = vadd.f32 %v499, %v514
    %v522 = vadd.f32 %v500, %v514
    %v523 = vadd.f32 %v501, %v514
    %v524 = vadd.f32 %v502, %v514
    %v525 = vadd.f32 %v503, %v514
    %v526 = vadd.f32 %v504, %v514
    %v527 = vadd.f32 %v505, %v514
    %v528 = vadd.f32 %v506, %v514
    %v529 = vadd.f32 %v507, %v514
    %v530 = vadd.f32 %v508, %v514
    %v531 = vadd.f32 %v509, %v514
    %v532 = vld [vmem:[%s1] sm:$0xff]
    %v533 = vld [vmem:[%s1 + $0x8] sm:$0xff]
    %v534 = vld [vmem:[%s1 + $0x10] sm:$0xff]
    %v535 = vld [vmem:[%s1 + $0x18] sm:$0xff]
    %v536 = vld [vmem:[%s1 + $0x20] sm:$0xff]
    %v537 = vld [vmem:[%s1 + $0x28] sm:$0xff]
    %v538 = vld [vmem:[%s1 + $0x30] sm:$0xff]
    %v539 = vld [vmem:[%s1 + $0x38] sm:$0xff]
    %v540 = vld [vmem:[%s1 + $0x40] sm:$0xff]
    %v541 = vld [vmem:[%s1 + $0x48] sm:$0xff]
    %v542 = vld [vmem:[%s1 + $0x50] sm:$0xff]
    %v543 = vld [vmem:[%s1 + $0x58] sm:$0xff]
    %v544 = vld [vmem:[%s1 + $0x60] sm:$0xff]
    %v545 = vld [vmem:[%s1 + $0x68] sm:$0xff]
    %v546 = vld [vmem:[%s1 + $0x70] sm:$0xff]
    %v547 = vld [vmem:[%s1 + $0x78] sm:$0xff]
    %v548 = vld [vmem:[%s2] sm:$0xff]
    %v549 = vld [vmem:[%s2 + $0x8] sm:$0xff]
    %v550 = vld [vmem:[%s2 + $0x10] sm:$0xff]
    %v551 = vld [vmem:[%s2 + $0x18] sm:$0xff]
    %v552 = vld [vmem:[%s2 + $0x20] sm:$0xff]
    %v553 = vld [vmem:[%s2 + $0x28] sm:$0xff]
    %v554 = vld [vmem:[%s2 + $0x30] sm:$0xff]
    %v555 = vld [vmem:[%s2 + $0x38] sm:$0xff]
    %v556 = vld [vmem:[%s2 + $0x40] sm:$0xff]
    %v557 = vld [vmem:[%s2 + $0x48] sm:$0xff]
    %v558 = vld [vmem:[%s2 + $0x50] sm:$0xff]
    %v559 = vld [vmem:[%s2 + $0x58] sm:$0xff]
    %v560 = vld [vmem:[%s2 + $0x60] sm:$0xff]
    %v561 = vld [vmem:[%s2 + $0x68] sm:$0xff]
    %v562 = vld [vmem:[%s2 + $0x70] sm:$0xff]
    %v563 = vld [vmem:[%s2 + $0x78] sm:$0xff]
    %v564 = vadd.s32 %v532, 4294967293
    %v565 = vadd.s32 %v533, 4294967293
    %v566 = vadd.s32 %v534, 4294967293
    %v567 = vadd.s32 %v535, 4294967293
    %v568 = vadd.s32 %v536, 4294967293
    %v569 = vadd.s32 %v537, 4294967293
    %v570 = vadd.s32 %v538, 4294967293
    %v571 = vadd.s32 %v539, 4294967293
    %v572 = vadd.s32 %v540, 4294967293
    %v573 = vadd.s32 %v541, 4294967293
    %v574 = vadd.s32 %v542, 4294967293
    %v575 = vadd.s32 %v543, 4294967293
    %v576 = vadd.s32 %v544, 4294967293
    %v577 = vadd.s32 %v545, 4294967293
    %v578 = vadd.s32 %v546, 4294967293
    %v579 = vadd.s32 %v547, 4294967293
    %vm580 = vcmp.ge.s32.totalorder %v564, 0
    %vm581 = vcmp.ge.s32.totalorder %v565, 0
    %vm582 = vcmp.ge.s32.totalorder %v566, 0
    %vm583 = vcmp.ge.s32.totalorder %v567, 0
    %vm584 = vcmp.ge.s32.totalorder %v568, 0
    %vm585 = vcmp.ge.s32.totalorder %v569, 0
    %vm586 = vcmp.ge.s32.totalorder %v570, 0
    %vm587 = vcmp.ge.s32.totalorder %v571, 0
    %vm588 = vcmp.ge.s32.totalorder %v572, 0
    %vm589 = vcmp.ge.s32.totalorder %v573, 0
    %vm590 = vcmp.ge.s32.totalorder %v574, 0
    %vm591 = vcmp.ge.s32.totalorder %v575, 0
    %vm592 = vcmp.ge.s32.totalorder %v576, 0
    %vm593 = vcmp.ge.s32.totalorder %v577, 0
    %vm594 = vcmp.ge.s32.totalorder %v578, 0
    %vm595 = vcmp.ge.s32.totalorder %v579, 0
    %vm596 = vcmp.lt.s32.totalorder %v564, 8
    %vm597 = vcmp.lt.s32.totalorder %v565, 8
    %vm598 = vcmp.lt.s32.totalorder %v566, 8
    %vm599 = vcmp.lt.s32.totalorder %v567, 8
    %vm600 = vcmp.lt.s32.totalorder %v568, 8
    %vm601 = vcmp.lt.s32.totalorder %v569, 8
    %vm602 = vcmp.lt.s32.totalorder %v570, 8
    %vm603 = vcmp.lt.s32.totalorder %v571, 8
    %vm604 = vcmp.lt.s32.totalorder %v572, 8
    %vm605 = vcmp.lt.s32.totalorder %v573, 8
    %vm606 = vcmp.lt.s32.totalorder %v574, 8
    %vm607 = vcmp.lt.s32.totalorder %v575, 8
    %vm608 = vcmp.lt.s32.totalorder %v576, 8
    %vm609 = vcmp.lt.s32.totalorder %v577, 8
    %vm610 = vcmp.lt.s32.totalorder %v578, 8
    %vm611 = vcmp.lt.s32.totalorder %v579, 8
    %vm612 = vmand %vm580, %vm596
    %vm613 = vmand %vm581, %vm597
    %vm614 = vmand %vm582, %vm598
    %vm615 = vmand %vm583, %vm599
    %vm616 = vmand %vm584, %vm600
    %vm617 = vmand %vm585, %vm601
    %vm618 = vmand %vm586, %vm602
    %vm619 = vmand %vm587, %vm603
    %vm620 = vmand %vm588, %vm604
    %vm621 = vmand %vm589, %vm605
    %vm622 = vmand %vm590, %vm606
    %vm623 = vmand %vm591, %vm607
    %vm624 = vmand %vm592, %vm608
    %vm625 = vmand %vm593, %vm609
    %vm626 = vmand %vm594, %vm610
    %vm627 = vmand %vm595, %vm611
    %v628 = vsel %vm612, 1.0, 0.0
    %v629 = vsel %vm613, 1.0, 0.0
    %v630 = vsel %vm614, 1.0, 0.0
    %v631 = vsel %vm615, 1.0, 0.0
    %v632 = vsel %vm616, 1.0, 0.0
    %v633 = vsel %vm617, 1.0, 0.0
    %v634 = vsel %vm618, 1.0, 0.0
    %v635 = vsel %vm619, 1.0, 0.0
    %v636 = vsel %vm620, 1.0, 0.0
    %v637 = vsel %vm621, 1.0, 0.0
    %v638 = vsel %vm622, 1.0, 0.0
    %v639 = vsel %vm623, 1.0, 0.0
    %v640 = vsel %vm624, 1.0, 0.0
    %v641 = vsel %vm625, 1.0, 0.0
    %v642 = vsel %vm626, 1.0, 0.0
    %v643 = vsel %vm627, 1.0, 0.0
    %v644 = vadd.s32 %v532, 4294967294
    %v645 = vadd.s32 %v533, 4294967294
    %v646 = vadd.s32 %v534, 4294967294
    %v647 = vadd.s32 %v535, 4294967294
    %v648 = vadd.s32 %v536, 4294967294
    %v649 = vadd.s32 %v537, 4294967294
    %v650 = vadd.s32 %v538, 4294967294
    %v651 = vadd.s32 %v539, 4294967294
    %v652 = vadd.s32 %v540, 4294967294
    %v653 = vadd.s32 %v541, 4294967294
    %v654 = vadd.s32 %v542, 4294967294
    %v655 = vadd.s32 %v543, 4294967294
    %v656 = vadd.s32 %v544, 4294967294
    %v657 = vadd.s32 %v545, 4294967294
    %v658 = vadd.s32 %v546, 4294967294
    %v659 = vadd.s32 %v547, 4294967294
    %vm660 = vcmp.ge.s32.totalorder %v644, 0
    %vm661 = vcmp.ge.s32.totalorder %v645, 0
    %vm662 = vcmp.ge.s32.totalorder %v646, 0
    %vm663 = vcmp.ge.s32.totalorder %v647, 0
    %vm664 = vcmp.ge.s32.totalorder %v648, 0
    %vm665 = vcmp.ge.s32.totalorder %v649, 0
    %vm666 = vcmp.ge.s32.totalorder %v650, 0
    %vm667 = vcmp.ge.s32.totalorder %v651, 0
    %vm668 = vcmp.ge.s32.totalorder %v652, 0
    %vm669 = vcmp.ge.s32.totalorder %v653, 0
    %vm670 = vcmp.ge.s32.totalorder %v654, 0
    %vm671 = vcmp.ge.s32.totalorder %v655, 0
    %vm672 = vcmp.ge.s32.totalorder %v656, 0
    %vm673 = vcmp.ge.s32.totalorder %v657, 0
    %vm674 = vcmp.ge.s32.totalorder %v658, 0
    %vm675 = vcmp.ge.s32.totalorder %v659, 0
    %vm676 = vcmp.lt.s32.totalorder %v644, 8
    %vm677 = vcmp.lt.s32.totalorder %v645, 8
    %vm678 = vcmp.lt.s32.totalorder %v646, 8
    %vm679 = vcmp.lt.s32.totalorder %v647, 8
    %vm680 = vcmp.lt.s32.totalorder %v648, 8
    %vm681 = vcmp.lt.s32.totalorder %v649, 8
    %vm682 = vcmp.lt.s32.totalorder %v650, 8
    %vm683 = vcmp.lt.s32.totalorder %v651, 8
    %vm684 = vcmp.lt.s32.totalorder %v652, 8
    %vm685 = vcmp.lt.s32.totalorder %v653, 8
    %vm686 = vcmp.lt.s32.totalorder %v654, 8
    %vm687 = vcmp.lt.s32.totalorder %v655, 8
    %vm688 = vcmp.lt.s32.totalorder %v656, 8
    %vm689 = vcmp.lt.s32.totalorder %v657, 8
    %vm690 = vcmp.lt.s32.totalorder %v658, 8
    %vm691 = vcmp.lt.s32.totalorder %v659, 8
    %vm692 = vmand %vm660, %vm676
    %vm693 = vmand %vm661, %vm677
    %vm694 = vmand %vm662, %vm678
    %vm695 = vmand %vm663, %vm679
    %vm696 = vmand %vm664, %vm680
    %vm697 = vmand %vm665, %vm681
    %vm698 = vmand %vm666, %vm682
    %vm699 = vmand %vm667, %vm683
    %vm700 = vmand %vm668, %vm684
    %vm701 = vmand %vm669, %vm685
    %vm702 = vmand %vm670, %vm686
    %vm703 = vmand %vm671, %vm687
    %vm704 = vmand %vm672, %vm688
    %vm705 = vmand %vm673, %vm689
    %vm706 = vmand %vm674, %vm690
    %vm707 = vmand %vm675, %vm691
    %v708 = vsel %vm692, 1.0, 0.0
    %v709 = vsel %vm693, 1.0, 0.0
    %v710 = vsel %vm694, 1.0, 0.0
    %v711 = vsel %vm695, 1.0, 0.0
    %v712 = vsel %vm696, 1.0, 0.0
    %v713 = vsel %vm697, 1.0, 0.0
    %v714 = vsel %vm698, 1.0, 0.0
    %v715 = vsel %vm699, 1.0, 0.0
    %v716 = vsel %vm700, 1.0, 0.0
    %v717 = vsel %vm701, 1.0, 0.0
    %v718 = vsel %vm702, 1.0, 0.0
    %v719 = vsel %vm703, 1.0, 0.0
    %v720 = vsel %vm704, 1.0, 0.0
    %v721 = vsel %vm705, 1.0, 0.0
    %v722 = vsel %vm706, 1.0, 0.0
    %v723 = vsel %vm707, 1.0, 0.0
    %v724 = vadd.s32 %v532, 4294967295
    %v725 = vadd.s32 %v533, 4294967295
    %v726 = vadd.s32 %v534, 4294967295
    %v727 = vadd.s32 %v535, 4294967295
    %v728 = vadd.s32 %v536, 4294967295
    %v729 = vadd.s32 %v537, 4294967295
    %v730 = vadd.s32 %v538, 4294967295
    %v731 = vadd.s32 %v539, 4294967295
    %v732 = vadd.s32 %v540, 4294967295
    %v733 = vadd.s32 %v541, 4294967295
    %v734 = vadd.s32 %v542, 4294967295
    %v735 = vadd.s32 %v543, 4294967295
    %v736 = vadd.s32 %v544, 4294967295
    %v737 = vadd.s32 %v545, 4294967295
    %v738 = vadd.s32 %v546, 4294967295
    %v739 = vadd.s32 %v547, 4294967295
    %vm740 = vcmp.ge.s32.totalorder %v724, 0
    %vm741 = vcmp.ge.s32.totalorder %v725, 0
    %vm742 = vcmp.ge.s32.totalorder %v726, 0
    %vm743 = vcmp.ge.s32.totalorder %v727, 0
    %vm744 = vcmp.ge.s32.totalorder %v728, 0
    %vm745 = vcmp.ge.s32.totalorder %v729, 0
    %vm746 = vcmp.ge.s32.totalorder %v730, 0
    %vm747 = vcmp.ge.s32.totalorder %v731, 0
    %vm748 = vcmp.ge.s32.totalorder %v732, 0
    %vm749 = vcmp.ge.s32.totalorder %v733, 0
    %vm750 = vcmp.ge.s32.totalorder %v734, 0
    %vm751 = vcmp.ge.s32.totalorder %v735, 0
    %vm752 = vcmp.ge.s32.totalorder %v736, 0
    %vm753 = vcmp.ge.s32.totalorder %v737, 0
    %vm754 = vcmp.ge.s32.totalorder %v738, 0
    %vm755 = vcmp.ge.s32.totalorder %v739, 0
    %vm756 = vcmp.lt.s32.totalorder %v724, 8
    %vm757 = vcmp.lt.s32.totalorder %v725, 8
    %vm758 = vcmp.lt.s32.totalorder %v726, 8
    %vm759 = vcmp.lt.s32.totalorder %v727, 8
    %vm760 = vcmp.lt.s32.totalorder %v728, 8
    %vm761 = vcmp.lt.s32.totalorder %v729, 8
    %vm762 = vcmp.lt.s32.totalorder %v730, 8
    %vm763 = vcmp.lt.s32.totalorder %v731, 8
    %vm764 = vcmp.lt.s32.totalorder %v732, 8
    %vm765 = vcmp.lt.s32.totalorder %v733, 8
    %vm766 = vcmp.lt.s32.totalorder %v734, 8
    %vm767 = vcmp.lt.s32.totalorder %v735, 8
    %vm768 = vcmp.lt.s32.totalorder %v736, 8
    %vm769 = vcmp.lt.s32.totalorder %v737, 8
    %vm770 = vcmp.lt.s32.totalorder %v738, 8
    %vm771 = vcmp.lt.s32.totalorder %v739, 8
    %vm772 = vmand %vm740, %vm756
    %vm773 = vmand %vm741, %vm757
    %vm774 = vmand %vm742, %vm758
    %vm775 = vmand %vm743, %vm759
    %vm776 = vmand %vm744, %vm760
    %vm777 = vmand %vm745, %vm761
    %vm778 = vmand %vm746, %vm762
    %vm779 = vmand %vm747, %vm763
    %vm780 = vmand %vm748, %vm764
    %vm781 = vmand %vm749, %vm765
    %vm782 = vmand %vm750, %vm766
    %vm783 = vmand %vm751, %vm767
    %vm784 = vmand %vm752, %vm768
    %vm785 = vmand %vm753, %vm769
    %vm786 = vmand %vm754, %vm770
    %vm787 = vmand %vm755, %vm771
    %v788 = vsel %vm772, 1.0, 0.0
    %v789 = vsel %vm773, 1.0, 0.0
    %v790 = vsel %vm774, 1.0, 0.0
    %v791 = vsel %vm775, 1.0, 0.0
    %v792 = vsel %vm776, 1.0, 0.0
    %v793 = vsel %vm777, 1.0, 0.0
    %v794 = vsel %vm778, 1.0, 0.0
    %v795 = vsel %vm779, 1.0, 0.0
    %v796 = vsel %vm780, 1.0, 0.0
    %v797 = vsel %vm781, 1.0, 0.0
    %v798 = vsel %vm782, 1.0, 0.0
    %v799 = vsel %vm783, 1.0, 0.0
    %v800 = vsel %vm784, 1.0, 0.0
    %v801 = vsel %vm785, 1.0, 0.0
    %v802 = vsel %vm786, 1.0, 0.0
    %v803 = vsel %vm787, 1.0, 0.0
    %vm804 = vcmp.ge.s32.totalorder %v532, 0
    %vm805 = vcmp.ge.s32.totalorder %v533, 0
    %vm806 = vcmp.ge.s32.totalorder %v534, 0
    %vm807 = vcmp.ge.s32.totalorder %v535, 0
    %vm808 = vcmp.ge.s32.totalorder %v536, 0
    %vm809 = vcmp.ge.s32.totalorder %v537, 0
    %vm810 = vcmp.ge.s32.totalorder %v538, 0
    %vm811 = vcmp.ge.s32.totalorder %v539, 0
    %vm812 = vcmp.ge.s32.totalorder %v540, 0
    %vm813 = vcmp.ge.s32.totalorder %v541, 0
    %vm814 = vcmp.ge.s32.totalorder %v542, 0
    %vm815 = vcmp.ge.s32.totalorder %v543, 0
    %vm816 = vcmp.ge.s32.totalorder %v544, 0
    %vm817 = vcmp.ge.s32.totalorder %v545, 0
    %vm818 = vcmp.ge.s32.totalorder %v546, 0
    %vm819 = vcmp.ge.s32.totalorder %v547, 0
    %vm820 = vcmp.lt.s32.totalorder %v532, 8
    %vm821 = vcmp.lt.s32.totalorder %v533, 8
    %vm822 = vcmp.lt.s32.totalorder %v534, 8
    %vm823 = vcmp.lt.s32.totalorder %v535, 8
    %vm824 = vcmp.lt.s32.totalorder %v536, 8
    %vm825 = vcmp.lt.s32.totalorder %v537, 8
    %vm826 = vcmp.lt.s32.totalorder %v538, 8
    %vm827 = vcmp.lt.s32.totalorder %v539, 8
    %vm828 = vcmp.lt.s32.totalorder %v540, 8
    %vm829 = vcmp.lt.s32.totalorder %v541, 8
    %vm830 = vcmp.lt.s32.totalorder %v542, 8
    %vm831 = vcmp.lt.s32.totalorder %v543, 8
    %vm832 = vcmp.lt.s32.totalorder %v544, 8
    %vm833 = vcmp.lt.s32.totalorder %v545, 8
    %vm834 = vcmp.lt.s32.totalorder %v546, 8
    %vm835 = vcmp.lt.s32.totalorder %v547, 8
    %vm836 = vmand %vm804, %vm820
    %vm837 = vmand %vm805, %vm821
    %vm838 = vmand %vm806, %vm822
    %vm839 = vmand %vm807, %vm823
    %vm840 = vmand %vm808, %vm824
    %vm841 = vmand %vm809, %vm825
    %vm842 = vmand %vm810, %vm826
    %vm843 = vmand %vm811, %vm827
    %vm844 = vmand %vm812, %vm828
    %vm845 = vmand %vm813, %vm829
    %vm846 = vmand %vm814, %vm830
    %vm847 = vmand %vm815, %vm831
    %vm848 = vmand %vm816, %vm832
    %vm849 = vmand %vm817, %vm833
    %vm850 = vmand %vm818, %vm834
    %vm851 = vmand %vm819, %vm835
    %v852 = vsel %vm836, 1.0, 0.0
    %v853 = vsel %vm837, 1.0, 0.0
    %v854 = vsel %vm838, 1.0, 0.0
    %v855 = vsel %vm839, 1.0, 0.0
    %v856 = vsel %vm840, 1.0, 0.0
    %v857 = vsel %vm841, 1.0, 0.0
    %v858 = vsel %vm842, 1.0, 0.0
    %v859 = vsel %vm843, 1.0, 0.0
    %v860 = vsel %vm844, 1.0, 0.0
    %v861 = vsel %vm845, 1.0, 0.0
    %v862 = vsel %vm846, 1.0, 0.0
    %v863 = vsel %vm847, 1.0, 0.0
    %v864 = vsel %vm848, 1.0, 0.0
    %v865 = vsel %vm849, 1.0, 0.0
    %v866 = vsel %vm850, 1.0, 0.0
    %v867 = vsel %vm851, 1.0, 0.0
    %v868 = vadd.s32 %v532, 1
    %v869 = vadd.s32 %v533, 1
    %v870 = vadd.s32 %v534, 1
    %v871 = vadd.s32 %v535, 1
    %v872 = vadd.s32 %v536, 1
    %v873 = vadd.s32 %v537, 1
    %v874 = vadd.s32 %v538, 1
    %v875 = vadd.s32 %v539, 1
    %v876 = vadd.s32 %v540, 1
    %v877 = vadd.s32 %v541, 1
    %v878 = vadd.s32 %v542, 1
    %v879 = vadd.s32 %v543, 1
    %v880 = vadd.s32 %v544, 1
    %v881 = vadd.s32 %v545, 1
    %v882 = vadd.s32 %v546, 1
    %v883 = vadd.s32 %v547, 1
    %vm884 = vcmp.ge.s32.totalorder %v868, 0
    %vm885 = vcmp.ge.s32.totalorder %v869, 0
    %vm886 = vcmp.ge.s32.totalorder %v870, 0
    %vm887 = vcmp.ge.s32.totalorder %v871, 0
    %vm888 = vcmp.ge.s32.totalorder %v872, 0
    %vm889 = vcmp.ge.s32.totalorder %v873, 0
    %vm890 = vcmp.ge.s32.totalorder %v874, 0
    %vm891 = vcmp.ge.s32.totalorder %v875, 0
    %vm892 = vcmp.ge.s32.totalorder %v876, 0
    %vm893 = vcmp.ge.s32.totalorder %v877, 0
    %vm894 = vcmp.ge.s32.totalorder %v878, 0
    %vm895 = vcmp.ge.s32.totalorder %v879, 0
    %vm896 = vcmp.ge.s32.totalorder %v880, 0
    %vm897 = vcmp.ge.s32.totalorder %v881, 0
    %vm898 = vcmp.ge.s32.totalorder %v882, 0
    %vm899 = vcmp.ge.s32.totalorder %v883, 0
    %vm900 = vcmp.lt.s32.totalorder %v868, 8
    %vm901 = vcmp.lt.s32.totalorder %v869, 8
    %vm902 = vcmp.lt.s32.totalorder %v870, 8
    %vm903 = vcmp.lt.s32.totalorder %v871, 8
    %vm904 = vcmp.lt.s32.totalorder %v872, 8
    %vm905 = vcmp.lt.s32.totalorder %v873, 8
    %vm906 = vcmp.lt.s32.totalorder %v874, 8
    %vm907 = vcmp.lt.s32.totalorder %v875, 8
    %vm908 = vcmp.lt.s32.totalorder %v876, 8
    %vm909 = vcmp.lt.s32.totalorder %v877, 8
    %vm910 = vcmp.lt.s32.totalorder %v878, 8
    %vm911 = vcmp.lt.s32.totalorder %v879, 8
    %vm912 = vcmp.lt.s32.totalorder %v880, 8
    %vm913 = vcmp.lt.s32.totalorder %v881, 8
    %vm914 = vcmp.lt.s32.totalorder %v882, 8
    %vm915 = vcmp.lt.s32.totalorder %v883, 8
    %vm916 = vmand %vm884, %vm900
    %vm917 = vmand %vm885, %vm901
    %vm918 = vmand %vm886, %vm902
    %vm919 = vmand %vm887, %vm903
    %vm920 = vmand %vm888, %vm904
    %vm921 = vmand %vm889, %vm905
    %vm922 = vmand %vm890, %vm906
    %vm923 = vmand %vm891, %vm907
    %vm924 = vmand %vm892, %vm908
    %vm925 = vmand %vm893, %vm909
    %vm926 = vmand %vm894, %vm910
    %vm927 = vmand %vm895, %vm911
    %vm928 = vmand %vm896, %vm912
    %vm929 = vmand %vm897, %vm913
    %vm930 = vmand %vm898, %vm914
    %vm931 = vmand %vm899, %vm915
    %v932 = vsel %vm916, 1.0, 0.0
    %v933 = vsel %vm917, 1.0, 0.0
    %v934 = vsel %vm918, 1.0, 0.0
    %v935 = vsel %vm919, 1.0, 0.0
    %v936 = vsel %vm920, 1.0, 0.0
    %v937 = vsel %vm921, 1.0, 0.0
    %v938 = vsel %vm922, 1.0, 0.0
    %v939 = vsel %vm923, 1.0, 0.0
    %v940 = vsel %vm924, 1.0, 0.0
    %v941 = vsel %vm925, 1.0, 0.0
    %v942 = vsel %vm926, 1.0, 0.0
    %v943 = vsel %vm927, 1.0, 0.0
    %v944 = vsel %vm928, 1.0, 0.0
    %v945 = vsel %vm929, 1.0, 0.0
    %v946 = vsel %vm930, 1.0, 0.0
    %v947 = vsel %vm931, 1.0, 0.0
    %v948 = vadd.s32 %v532, 2
    %v949 = vadd.s32 %v533, 2
    %v950 = vadd.s32 %v534, 2
    %v951 = vadd.s32 %v535, 2
    %v952 = vadd.s32 %v536, 2
    %v953 = vadd.s32 %v537, 2
    %v954 = vadd.s32 %v538, 2
    %v955 = vadd.s32 %v539, 2
    %v956 = vadd.s32 %v540, 2
    %v957 = vadd.s32 %v541, 2
    %v958 = vadd.s32 %v542, 2
    %v959 = vadd.s32 %v543, 2
    %v960 = vadd.s32 %v544, 2
    %v961 = vadd.s32 %v545, 2
    %v962 = vadd.s32 %v546, 2
    %v963 = vadd.s32 %v547, 2
    %vm964 = vcmp.ge.s32.totalorder %v948, 0
    %vm965 = vcmp.ge.s32.totalorder %v949, 0
    %vm966 = vcmp.ge.s32.totalorder %v950, 0
    %vm967 = vcmp.ge.s32.totalorder %v951, 0
    %vm968 = vcmp.ge.s32.totalorder %v952, 0
    %vm969 = vcmp.ge.s32.totalorder %v953, 0
    %vm970 = vcmp.ge.s32.totalorder %v954, 0
    %vm971 = vcmp.ge.s32.totalorder %v955, 0
    %vm972 = vcmp.ge.s32.totalorder %v956, 0
    %vm973 = vcmp.ge.s32.totalorder %v957, 0
    %vm974 = vcmp.ge.s32.totalorder %v958, 0
    %vm975 = vcmp.ge.s32.totalorder %v959, 0
    %vm976 = vcmp.ge.s32.totalorder %v960, 0
    %vm977 = vcmp.ge.s32.totalorder %v961, 0
    %vm978 = vcmp.ge.s32.totalorder %v962, 0
    %vm979 = vcmp.ge.s32.totalorder %v963, 0
    %vm980 = vcmp.lt.s32.totalorder %v948, 8
    %vm981 = vcmp.lt.s32.totalorder %v949, 8
    %vm982 = vcmp.lt.s32.totalorder %v950, 8
    %vm983 = vcmp.lt.s32.totalorder %v951, 8
    %vm984 = vcmp.lt.s32.totalorder %v952, 8
    %vm985 = vcmp.lt.s32.totalorder %v953, 8
    %vm986 = vcmp.lt.s32.totalorder %v954, 8
    %vm987 = vcmp.lt.s32.totalorder %v955, 8
    %vm988 = vcmp.lt.s32.totalorder %v956, 8
    %vm989 = vcmp.lt.s32.totalorder %v957, 8
    %vm990 = vcmp.lt.s32.totalorder %v958, 8
    %vm991 = vcmp.lt.s32.totalorder %v959, 8
    %vm992 = vcmp.lt.s32.totalorder %v960, 8
    %vm993 = vcmp.lt.s32.totalorder %v961, 8
    %vm994 = vcmp.lt.s32.totalorder %v962, 8
    %vm995 = vcmp.lt.s32.totalorder %v963, 8
    %vm996 = vmand %vm964, %vm980
    %vm997 = vmand %vm965, %vm981
    %vm998 = vmand %vm966, %vm982
    %vm999 = vmand %vm967, %vm983
    %vm1000 = vmand %vm968, %vm984
    %vm1001 = vmand %vm969, %vm985
    %vm1002 = vmand %vm970, %vm986
    %vm1003 = vmand %vm971, %vm987
    %vm1004 = vmand %vm972, %vm988
    %vm1005 = vmand %vm973, %vm989
    %vm1006 = vmand %vm974, %vm990
    %vm1007 = vmand %vm975, %vm991
    %vm1008 = vmand %vm976, %vm992
    %vm1009 = vmand %vm977, %vm993
    %vm1010 = vmand %vm978, %vm994
    %vm1011 = vmand %vm979, %vm995
    %v1012 = vsel %vm996, 1.0, 0.0
    %v1013 = vsel %vm997, 1.0, 0.0
    %v1014 = vsel %vm998, 1.0, 0.0
    %v1015 = vsel %vm999, 1.0, 0.0
    %v1016 = vsel %vm1000, 1.0, 0.0
    %v1017 = vsel %vm1001, 1.0, 0.0
    %v1018 = vsel %vm1002, 1.0, 0.0
    %v1019 = vsel %vm1003, 1.0, 0.0
    %v1020 = vsel %vm1004, 1.0, 0.0
    %v1021 = vsel %vm1005, 1.0, 0.0
    %v1022 = vsel %vm1006, 1.0, 0.0
    %v1023 = vsel %vm1007, 1.0, 0.0
    %v1024 = vsel %vm1008, 1.0, 0.0
    %v1025 = vsel %vm1009, 1.0, 0.0
    %v1026 = vsel %vm1010, 1.0, 0.0
    %v1027 = vsel %vm1011, 1.0, 0.0
    %v1028 = vadd.s32 %v532, 3
    %v1029 = vadd.s32 %v533, 3
    %v1030 = vadd.s32 %v534, 3
    %v1031 = vadd.s32 %v535, 3
    %v1032 = vadd.s32 %v536, 3
    %v1033 = vadd.s32 %v537, 3
    %v1034 = vadd.s32 %v538, 3
    %v1035 = vadd.s32 %v539, 3
    %v1036 = vadd.s32 %v540, 3
    %v1037 = vadd.s32 %v541, 3
    %v1038 = vadd.s32 %v542, 3
    %v1039 = vadd.s32 %v543, 3
    %v1040 = vadd.s32 %v544, 3
    %v1041 = vadd.s32 %v545, 3
    %v1042 = vadd.s32 %v546, 3
    %v1043 = vadd.s32 %v547, 3
    %vm1044 = vcmp.ge.s32.totalorder %v1028, 0
    %vm1045 = vcmp.ge.s32.totalorder %v1029, 0
    %vm1046 = vcmp.ge.s32.totalorder %v1030, 0
    %vm1047 = vcmp.ge.s32.totalorder %v1031, 0
    %vm1048 = vcmp.ge.s32.totalorder %v1032, 0
    %vm1049 = vcmp.ge.s32.totalorder %v1033, 0
    %vm1050 = vcmp.ge.s32.totalorder %v1034, 0
    %vm1051 = vcmp.ge.s32.totalorder %v1035, 0
    %vm1052 = vcmp.ge.s32.totalorder %v1036, 0
    %vm1053 = vcmp.ge.s32.totalorder %v1037, 0
    %vm1054 = vcmp.ge.s32.totalorder %v1038, 0
    %vm1055 = vcmp.ge.s32.totalorder %v1039, 0
    %vm1056 = vcmp.ge.s32.totalorder %v1040, 0
    %vm1057 = vcmp.ge.s32.totalorder %v1041, 0
    %vm1058 = vcmp.ge.s32.totalorder %v1042, 0
    %vm1059 = vcmp.ge.s32.totalorder %v1043, 0
    %vm1060 = vcmp.lt.s32.totalorder %v1028, 8
    %vm1061 = vcmp.lt.s32.totalorder %v1029, 8
    %vm1062 = vcmp.lt.s32.totalorder %v1030, 8
    %vm1063 = vcmp.lt.s32.totalorder %v1031, 8
    %vm1064 = vcmp.lt.s32.totalorder %v1032, 8
    %vm1065 = vcmp.lt.s32.totalorder %v1033, 8
    %vm1066 = vcmp.lt.s32.totalorder %v1034, 8
    %vm1067 = vcmp.lt.s32.totalorder %v1035, 8
    %vm1068 = vcmp.lt.s32.totalorder %v1036, 8
    %vm1069 = vcmp.lt.s32.totalorder %v1037, 8
    %vm1070 = vcmp.lt.s32.totalorder %v1038, 8
    %vm1071 = vcmp.lt.s32.totalorder %v1039, 8
    %vm1072 = vcmp.lt.s32.totalorder %v1040, 8
    %vm1073 = vcmp.lt.s32.totalorder %v1041, 8
    %vm1074 = vcmp.lt.s32.totalorder %v1042, 8
    %vm1075 = vcmp.lt.s32.totalorder %v1043, 8
    %vm1076 = vmand %vm1044, %vm1060
    %vm1077 = vmand %vm1045, %vm1061
    %vm1078 = vmand %vm1046, %vm1062
    %vm1079 = vmand %vm1047, %vm1063
    %vm1080 = vmand %vm1048, %vm1064
    %vm1081 = vmand %vm1049, %vm1065
    %vm1082 = vmand %vm1050, %vm1066
    %vm1083 = vmand %vm1051, %vm1067
    %vm1084 = vmand %vm1052, %vm1068
    %vm1085 = vmand %vm1053, %vm1069
    %vm1086 = vmand %vm1054, %vm1070
    %vm1087 = vmand %vm1055, %vm1071
    %vm1088 = vmand %vm1056, %vm1072
    %vm1089 = vmand %vm1057, %vm1073
    %vm1090 = vmand %vm1058, %vm1074
    %vm1091 = vmand %vm1059, %vm1075
    %v1092 = vsel %vm1076, 1.0, 0.0
    %v1093 = vsel %vm1077, 1.0, 0.0
    %v1094 = vsel %vm1078, 1.0, 0.0
    %v1095 = vsel %vm1079, 1.0, 0.0
    %v1096 = vsel %vm1080, 1.0, 0.0
    %v1097 = vsel %vm1081, 1.0, 0.0
    %v1098 = vsel %vm1082, 1.0, 0.0
    %v1099 = vsel %vm1083, 1.0, 0.0
    %v1100 = vsel %vm1084, 1.0, 0.0
    %v1101 = vsel %vm1085, 1.0, 0.0
    %v1102 = vsel %vm1086, 1.0, 0.0
    %v1103 = vsel %vm1087, 1.0, 0.0
    %v1104 = vsel %vm1088, 1.0, 0.0
    %v1105 = vsel %vm1089, 1.0, 0.0
    %v1106 = vsel %vm1090, 1.0, 0.0
    %v1107 = vsel %vm1091, 1.0, 0.0
    %v1108 = vadd.s32 %v548, 4294967293
    %v1109 = vadd.s32 %v549, 4294967293
    %v1110 = vadd.s32 %v550, 4294967293
    %v1111 = vadd.s32 %v551, 4294967293
    %v1112 = vadd.s32 %v552, 4294967293
    %v1113 = vadd.s32 %v553, 4294967293
    %v1114 = vadd.s32 %v554, 4294967293
    %v1115 = vadd.s32 %v555, 4294967293
    %v1116 = vadd.s32 %v556, 4294967293
    %v1117 = vadd.s32 %v557, 4294967293
    %v1118 = vadd.s32 %v558, 4294967293
    %v1119 = vadd.s32 %v559, 4294967293
    %v1120 = vadd.s32 %v560, 4294967293
    %v1121 = vadd.s32 %v561, 4294967293
    %v1122 = vadd.s32 %v562, 4294967293
    %v1123 = vadd.s32 %v563, 4294967293
    %vm1124 = vcmp.ge.s32.totalorder %v1108, 0
    %vm1125 = vcmp.ge.s32.totalorder %v1109, 0
    %vm1126 = vcmp.ge.s32.totalorder %v1110, 0
    %vm1127 = vcmp.ge.s32.totalorder %v1111, 0
    %vm1128 = vcmp.ge.s32.totalorder %v1112, 0
    %vm1129 = vcmp.ge.s32.totalorder %v1113, 0
    %vm1130 = vcmp.ge.s32.totalorder %v1114, 0
    %vm1131 = vcmp.ge.s32.totalorder %v1115, 0
    %vm1132 = vcmp.ge.s32.totalorder %v1116, 0
    %vm1133 = vcmp.ge.s32.totalorder %v1117, 0
    %vm1134 = vcmp.ge.s32.totalorder %v1118, 0
    %vm1135 = vcmp.ge.s32.totalorder %v1119, 0
    %vm1136 = vcmp.ge.s32.totalorder %v1120, 0
    %vm1137 = vcmp.ge.s32.totalorder %v1121, 0
    %vm1138 = vcmp.ge.s32.totalorder %v1122, 0
    %vm1139 = vcmp.ge.s32.totalorder %v1123, 0
    %vm1140 = vcmp.lt.s32.totalorder %v1108, 8
    %vm1141 = vcmp.lt.s32.totalorder %v1109, 8
    %vm1142 = vcmp.lt.s32.totalorder %v1110, 8
    %vm1143 = vcmp.lt.s32.totalorder %v1111, 8
    %vm1144 = vcmp.lt.s32.totalorder %v1112, 8
    %vm1145 = vcmp.lt.s32.totalorder %v1113, 8
    %vm1146 = vcmp.lt.s32.totalorder %v1114, 8
    %vm1147 = vcmp.lt.s32.totalorder %v1115, 8
    %vm1148 = vcmp.lt.s32.totalorder %v1116, 8
    %vm1149 = vcmp.lt.s32.totalorder %v1117, 8
    %vm1150 = vcmp.lt.s32.totalorder %v1118, 8
    %vm1151 = vcmp.lt.s32.totalorder %v1119, 8
    %vm1152 = vcmp.lt.s32.totalorder %v1120, 8
    %vm1153 = vcmp.lt.s32.totalorder %v1121, 8
    %vm1154 = vcmp.lt.s32.totalorder %v1122, 8
    %vm1155 = vcmp.lt.s32.totalorder %v1123, 8
    %vm1156 = vmand %vm1124, %vm1140
    %vm1157 = vmand %vm1125, %vm1141
    %vm1158 = vmand %vm1126, %vm1142
    %vm1159 = vmand %vm1127, %vm1143
    %vm1160 = vmand %vm1128, %vm1144
    %vm1161 = vmand %vm1129, %vm1145
    %vm1162 = vmand %vm1130, %vm1146
    %vm1163 = vmand %vm1131, %vm1147
    %vm1164 = vmand %vm1132, %vm1148
    %vm1165 = vmand %vm1133, %vm1149
    %vm1166 = vmand %vm1134, %vm1150
    %vm1167 = vmand %vm1135, %vm1151
    %vm1168 = vmand %vm1136, %vm1152
    %vm1169 = vmand %vm1137, %vm1153
    %vm1170 = vmand %vm1138, %vm1154
    %vm1171 = vmand %vm1139, %vm1155
    %v1172 = vsel %vm1156, 1.0, 0.0
    %v1173 = vsel %vm1157, 1.0, 0.0
    %v1174 = vsel %vm1158, 1.0, 0.0
    %v1175 = vsel %vm1159, 1.0, 0.0
    %v1176 = vsel %vm1160, 1.0, 0.0
    %v1177 = vsel %vm1161, 1.0, 0.0
    %v1178 = vsel %vm1162, 1.0, 0.0
    %v1179 = vsel %vm1163, 1.0, 0.0
    %v1180 = vsel %vm1164, 1.0, 0.0
    %v1181 = vsel %vm1165, 1.0, 0.0
    %v1182 = vsel %vm1166, 1.0, 0.0
    %v1183 = vsel %vm1167, 1.0, 0.0
    %v1184 = vsel %vm1168, 1.0, 0.0
    %v1185 = vsel %vm1169, 1.0, 0.0
    %v1186 = vsel %vm1170, 1.0, 0.0
    %v1187 = vsel %vm1171, 1.0, 0.0
    %v1188 = vadd.s32 %v548, 4294967294
    %v1189 = vadd.s32 %v549, 4294967294
    %v1190 = vadd.s32 %v550, 4294967294
    %v1191 = vadd.s32 %v551, 4294967294
    %v1192 = vadd.s32 %v552, 4294967294
    %v1193 = vadd.s32 %v553, 4294967294
    %v1194 = vadd.s32 %v554, 4294967294
    %v1195 = vadd.s32 %v555, 4294967294
    %v1196 = vadd.s32 %v556, 4294967294
    %v1197 = vadd.s32 %v557, 4294967294
    %v1198 = vadd.s32 %v558, 4294967294
    %v1199 = vadd.s32 %v559, 4294967294
    %v1200 = vadd.s32 %v560, 4294967294
    %v1201 = vadd.s32 %v561, 4294967294
    %v1202 = vadd.s32 %v562, 4294967294
    %v1203 = vadd.s32 %v563, 4294967294
    %vm1204 = vcmp.ge.s32.totalorder %v1188, 0
    %vm1205 = vcmp.ge.s32.totalorder %v1189, 0
    %vm1206 = vcmp.ge.s32.totalorder %v1190, 0
    %vm1207 = vcmp.ge.s32.totalorder %v1191, 0
    %vm1208 = vcmp.ge.s32.totalorder %v1192, 0
    %vm1209 = vcmp.ge.s32.totalorder %v1193, 0
    %vm1210 = vcmp.ge.s32.totalorder %v1194, 0
    %vm1211 = vcmp.ge.s32.totalorder %v1195, 0
    %vm1212 = vcmp.ge.s32.totalorder %v1196, 0
    %vm1213 = vcmp.ge.s32.totalorder %v1197, 0
    %vm1214 = vcmp.ge.s32.totalorder %v1198, 0
    %vm1215 = vcmp.ge.s32.totalorder %v1199, 0
    %vm1216 = vcmp.ge.s32.totalorder %v1200, 0
    %vm1217 = vcmp.ge.s32.totalorder %v1201, 0
    %vm1218 = vcmp.ge.s32.totalorder %v1202, 0
    %vm1219 = vcmp.ge.s32.totalorder %v1203, 0
    %vm1220 = vcmp.lt.s32.totalorder %v1188, 8
    %vm1221 = vcmp.lt.s32.totalorder %v1189, 8
    %vm1222 = vcmp.lt.s32.totalorder %v1190, 8
    %vm1223 = vcmp.lt.s32.totalorder %v1191, 8
    %vm1224 = vcmp.lt.s32.totalorder %v1192, 8
    %vm1225 = vcmp.lt.s32.totalorder %v1193, 8
    %vm1226 = vcmp.lt.s32.totalorder %v1194, 8
    %vm1227 = vcmp.lt.s32.totalorder %v1195, 8
    %vm1228 = vcmp.lt.s32.totalorder %v1196, 8
    %vm1229 = vcmp.lt.s32.totalorder %v1197, 8
    %vm1230 = vcmp.lt.s32.totalorder %v1198, 8
    %vm1231 = vcmp.lt.s32.totalorder %v1199, 8
    %vm1232 = vcmp.lt.s32.totalorder %v1200, 8
    %vm1233 = vcmp.lt.s32.totalorder %v1201, 8
    %vm1234 = vcmp.lt.s32.totalorder %v1202, 8
    %vm1235 = vcmp.lt.s32.totalorder %v1203, 8
    %vm1236 = vmand %vm1204, %vm1220
    %vm1237 = vmand %vm1205, %vm1221
    %vm1238 = vmand %vm1206, %vm1222
    %vm1239 = vmand %vm1207, %vm1223
    %vm1240 = vmand %vm1208, %vm1224
    %vm1241 = vmand %vm1209, %vm1225
    %vm1242 = vmand %vm1210, %vm1226
    %vm1243 = vmand %vm1211, %vm1227
    %vm1244 = vmand %vm1212, %vm1228
    %vm1245 = vmand %vm1213, %vm1229
    %vm1246 = vmand %vm1214, %vm1230
    %vm1247 = vmand %vm1215, %vm1231
    %vm1248 = vmand %vm1216, %vm1232
    %vm1249 = vmand %vm1217, %vm1233
    %vm1250 = vmand %vm1218, %vm1234
    %vm1251 = vmand %vm1219, %vm1235
    %v1252 = vsel %vm1236, 1.0, 0.0
    %v1253 = vsel %vm1237, 1.0, 0.0
    %v1254 = vsel %vm1238, 1.0, 0.0
    %v1255 = vsel %vm1239, 1.0, 0.0
    %v1256 = vsel %vm1240, 1.0, 0.0
    %v1257 = vsel %vm1241, 1.0, 0.0
    %v1258 = vsel %vm1242, 1.0, 0.0
    %v1259 = vsel %vm1243, 1.0, 0.0
    %v1260 = vsel %vm1244, 1.0, 0.0
    %v1261 = vsel %vm1245, 1.0, 0.0
    %v1262 = vsel %vm1246, 1.0, 0.0
    %v1263 = vsel %vm1247, 1.0, 0.0
    %v1264 = vsel %vm1248, 1.0, 0.0
    %v1265 = vsel %vm1249, 1.0, 0.0
    %v1266 = vsel %vm1250, 1.0, 0.0
    %v1267 = vsel %vm1251, 1.0, 0.0
    %v1268 = vadd.s32 %v548, 4294967295
    %v1269 = vadd.s32 %v549, 4294967295
    %v1270 = vadd.s32 %v550, 4294967295
    %v1271 = vadd.s32 %v551, 4294967295
    %v1272 = vadd.s32 %v552, 4294967295
    %v1273 = vadd.s32 %v553, 4294967295
    %v1274 = vadd.s32 %v554, 4294967295
    %v1275 = vadd.s32 %v555, 4294967295
    %v1276 = vadd.s32 %v556, 4294967295
    %v1277 = vadd.s32 %v557, 4294967295
    %v1278 = vadd.s32 %v558, 4294967295
    %v1279 = vadd.s32 %v559, 4294967295
    %v1280 = vadd.s32 %v560, 4294967295
    %v1281 = vadd.s32 %v561, 4294967295
    %v1282 = vadd.s32 %v562, 4294967295
    %v1283 = vadd.s32 %v563, 4294967295
    %vm1284 = vcmp.ge.s32.totalorder %v1268, 0
    %vm1285 = vcmp.ge.s32.totalorder %v1269, 0
    %vm1286 = vcmp.ge.s32.totalorder %v1270, 0
    %vm1287 = vcmp.ge.s32.totalorder %v1271, 0
    %vm1288 = vcmp.ge.s32.totalorder %v1272, 0
    %vm1289 = vcmp.ge.s32.totalorder %v1273, 0
    %vm1290 = vcmp.ge.s32.totalorder %v1274, 0
    %vm1291 = vcmp.ge.s32.totalorder %v1275, 0
    %vm1292 = vcmp.ge.s32.totalorder %v1276, 0
    %vm1293 = vcmp.ge.s32.totalorder %v1277, 0
    %vm1294 = vcmp.ge.s32.totalorder %v1278, 0
    %vm1295 = vcmp.ge.s32.totalorder %v1279, 0
    %vm1296 = vcmp.ge.s32.totalorder %v1280, 0
    %vm1297 = vcmp.ge.s32.totalorder %v1281, 0
    %vm1298 = vcmp.ge.s32.totalorder %v1282, 0
    %vm1299 = vcmp.ge.s32.totalorder %v1283, 0
    %vm1300 = vcmp.lt.s32.totalorder %v1268, 8
    %vm1301 = vcmp.lt.s32.totalorder %v1269, 8
    %vm1302 = vcmp.lt.s32.totalorder %v1270, 8
    %vm1303 = vcmp.lt.s32.totalorder %v1271, 8
    %vm1304 = vcmp.lt.s32.totalorder %v1272, 8
    %vm1305 = vcmp.lt.s32.totalorder %v1273, 8
    %vm1306 = vcmp.lt.s32.totalorder %v1274, 8
    %vm1307 = vcmp.lt.s32.totalorder %v1275, 8
    %vm1308 = vcmp.lt.s32.totalorder %v1276, 8
    %vm1309 = vcmp.lt.s32.totalorder %v1277, 8
    %vm1310 = vcmp.lt.s32.totalorder %v1278, 8
    %vm1311 = vcmp.lt.s32.totalorder %v1279, 8
    %vm1312 = vcmp.lt.s32.totalorder %v1280, 8
    %vm1313 = vcmp.lt.s32.totalorder %v1281, 8
    %vm1314 = vcmp.lt.s32.totalorder %v1282, 8
    %vm1315 = vcmp.lt.s32.totalorder %v1283, 8
    %vm1316 = vmand %vm1284, %vm1300
    %vm1317 = vmand %vm1285, %vm1301
    %vm1318 = vmand %vm1286, %vm1302
    %vm1319 = vmand %vm1287, %vm1303
    %vm1320 = vmand %vm1288, %vm1304
    %vm1321 = vmand %vm1289, %vm1305
    %vm1322 = vmand %vm1290, %vm1306
    %vm1323 = vmand %vm1291, %vm1307
    %vm1324 = vmand %vm1292, %vm1308
    %vm1325 = vmand %vm1293, %vm1309
    %vm1326 = vmand %vm1294, %vm1310
    %vm1327 = vmand %vm1295, %vm1311
    %vm1328 = vmand %vm1296, %vm1312
    %vm1329 = vmand %vm1297, %vm1313
    %vm1330 = vmand %vm1298, %vm1314
    %vm1331 = vmand %vm1299, %vm1315
    %v1332 = vsel %vm1316, 1.0, 0.0
    %v1333 = vsel %vm1317, 1.0, 0.0
    %v1334 = vsel %vm1318, 1.0, 0.0
    %v1335 = vsel %vm1319, 1.0, 0.0
    %v1336 = vsel %vm1320, 1.0, 0.0
    %v1337 = vsel %vm1321, 1.0, 0.0
    %v1338 = vsel %vm1322, 1.0, 0.0
    %v1339 = vsel %vm1323, 1.0, 0.0
    %v1340 = vsel %vm1324, 1.0, 0.0
    %v1341 = vsel %vm1325, 1.0, 0.0
    %v1342 = vsel %vm1326, 1.0, 0.0
    %v1343 = vsel %vm1327, 1.0, 0.0
    %v1344 = vsel %vm1328, 1.0, 0.0
    %v1345 = vsel %vm1329, 1.0, 0.0
    %v1346 = vsel %vm1330, 1.0, 0.0
    %v1347 = vsel %vm1331, 1.0, 0.0
    %vm1348 = vcmp.ge.s32.totalorder %v548, 0
    %vm1349 = vcmp.ge.s32.totalorder %v549, 0
    %vm1350 = vcmp.ge.s32.totalorder %v550, 0
    %vm1351 = vcmp.ge.s32.totalorder %v551, 0
    %vm1352 = vcmp.ge.s32.totalorder %v552, 0
    %vm1353 = vcmp.ge.s32.totalorder %v553, 0
    %vm1354 = vcmp.ge.s32.totalorder %v554, 0
    %vm1355 = vcmp.ge.s32.totalorder %v555, 0
    %vm1356 = vcmp.ge.s32.totalorder %v556, 0
    %vm1357 = vcmp.ge.s32.totalorder %v557, 0
    %vm1358 = vcmp.ge.s32.totalorder %v558, 0
    %vm1359 = vcmp.ge.s32.totalorder %v559, 0
    %vm1360 = vcmp.ge.s32.totalorder %v560, 0
    %vm1361 = vcmp.ge.s32.totalorder %v561, 0
    %vm1362 = vcmp.ge.s32.totalorder %v562, 0
    %vm1363 = vcmp.ge.s32.totalorder %v563, 0
    %vm1364 = vcmp.lt.s32.totalorder %v548, 8
    %vm1365 = vcmp.lt.s32.totalorder %v549, 8
    %vm1366 = vcmp.lt.s32.totalorder %v550, 8
    %vm1367 = vcmp.lt.s32.totalorder %v551, 8
    %vm1368 = vcmp.lt.s32.totalorder %v552, 8
    %vm1369 = vcmp.lt.s32.totalorder %v553, 8
    %vm1370 = vcmp.lt.s32.totalorder %v554, 8
    %vm1371 = vcmp.lt.s32.totalorder %v555, 8
    %vm1372 = vcmp.lt.s32.totalorder %v556, 8
    %vm1373 = vcmp.lt.s32.totalorder %v557, 8
    %vm1374 = vcmp.lt.s32.totalorder %v558, 8
    %vm1375 = vcmp.lt.s32.totalorder %v559, 8
    %vm1376 = vcmp.lt.s32.totalorder %v560, 8
    %vm1377 = vcmp.lt.s32.totalorder %v561, 8
    %vm1378 = vcmp.lt.s32.totalorder %v562, 8
    %vm1379 = vcmp.lt.s32.totalorder %v563, 8
    %vm1380 = vmand %vm1348, %vm1364
    %vm1381 = vmand %vm1349, %vm1365
    %vm1382 = vmand %vm1350, %vm1366
    %vm1383 = vmand %vm1351, %vm1367
    %vm1384 = vmand %vm1352, %vm1368
    %vm1385 = vmand %vm1353, %vm1369
    %vm1386 = vmand %vm1354, %vm1370
    %vm1387 = vmand %vm1355, %vm1371
    %vm1388 = vmand %vm1356, %vm1372
    %vm1389 = vmand %vm1357, %vm1373
    %vm1390 = vmand %vm1358, %vm1374
    %vm1391 = vmand %vm1359, %vm1375
    %vm1392 = vmand %vm1360, %vm1376
    %vm1393 = vmand %vm1361, %vm1377
    %vm1394 = vmand %vm1362, %vm1378
    %vm1395 = vmand %vm1363, %vm1379
    %v1396 = vsel %vm1380, 1.0, 0.0
    %v1397 = vsel %vm1381, 1.0, 0.0
    %v1398 = vsel %vm1382, 1.0, 0.0
    %v1399 = vsel %vm1383, 1.0, 0.0
    %v1400 = vsel %vm1384, 1.0, 0.0
    %v1401 = vsel %vm1385, 1.0, 0.0
    %v1402 = vsel %vm1386, 1.0, 0.0
    %v1403 = vsel %vm1387, 1.0, 0.0
    %v1404 = vsel %vm1388, 1.0, 0.0
    %v1405 = vsel %vm1389, 1.0, 0.0
    %v1406 = vsel %vm1390, 1.0, 0.0
    %v1407 = vsel %vm1391, 1.0, 0.0
    %v1408 = vsel %vm1392, 1.0, 0.0
    %v1409 = vsel %vm1393, 1.0, 0.0
    %v1410 = vsel %vm1394, 1.0, 0.0
    %v1411 = vsel %vm1395, 1.0, 0.0
    %v1412 = vadd.s32 %v548, 1
    %v1413 = vadd.s32 %v549, 1
    %v1414 = vadd.s32 %v550, 1
    %v1415 = vadd.s32 %v551, 1
    %v1416 = vadd.s32 %v552, 1
    %v1417 = vadd.s32 %v553, 1
    %v1418 = vadd.s32 %v554, 1
    %v1419 = vadd.s32 %v555, 1
    %v1420 = vadd.s32 %v556, 1
    %v1421 = vadd.s32 %v557, 1
    %v1422 = vadd.s32 %v558, 1
    %v1423 = vadd.s32 %v559, 1
    %v1424 = vadd.s32 %v560, 1
    %v1425 = vadd.s32 %v561, 1
    %v1426 = vadd.s32 %v562, 1
    %v1427 = vadd.s32 %v563, 1
    %vm1428 = vcmp.ge.s32.totalorder %v1412, 0
    %vm1429 = vcmp.ge.s32.totalorder %v1413, 0
    %vm1430 = vcmp.ge.s32.totalorder %v1414, 0
    %vm1431 = vcmp.ge.s32.totalorder %v1415, 0
    %vm1432 = vcmp.ge.s32.totalorder %v1416, 0
    %vm1433 = vcmp.ge.s32.totalorder %v1417, 0
    %vm1434 = vcmp.ge.s32.totalorder %v1418, 0
    %vm1435 = vcmp.ge.s32.totalorder %v1419, 0
    %vm1436 = vcmp.ge.s32.totalorder %v1420, 0
    %vm1437 = vcmp.ge.s32.totalorder %v1421, 0
    %vm1438 = vcmp.ge.s32.totalorder %v1422, 0
    %vm1439 = vcmp.ge.s32.totalorder %v1423, 0
    %vm1440 = vcmp.ge.s32.totalorder %v1424, 0
    %vm1441 = vcmp.ge.s32.totalorder %v1425, 0
    %vm1442 = vcmp.ge.s32.totalorder %v1426, 0
    %vm1443 = vcmp.ge.s32.totalorder %v1427, 0
    %vm1444 = vcmp.lt.s32.totalorder %v1412, 8
    %vm1445 = vcmp.lt.s32.totalorder %v1413, 8
    %vm1446 = vcmp.lt.s32.totalorder %v1414, 8
    %vm1447 = vcmp.lt.s32.totalorder %v1415, 8
    %vm1448 = vcmp.lt.s32.totalorder %v1416, 8
    %vm1449 = vcmp.lt.s32.totalorder %v1417, 8
    %vm1450 = vcmp.lt.s32.totalorder %v1418, 8
    %vm1451 = vcmp.lt.s32.totalorder %v1419, 8
    %vm1452 = vcmp.lt.s32.totalorder %v1420, 8
    %vm1453 = vcmp.lt.s32.totalorder %v1421, 8
    %vm1454 = vcmp.lt.s32.totalorder %v1422, 8
    %vm1455 = vcmp.lt.s32.totalorder %v1423, 8
    %vm1456 = vcmp.lt.s32.totalorder %v1424, 8
    %vm1457 = vcmp.lt.s32.totalorder %v1425, 8
    %vm1458 = vcmp.lt.s32.totalorder %v1426, 8
    %vm1459 = vcmp.lt.s32.totalorder %v1427, 8
    %vm1460 = vmand %vm1428, %vm1444
    %vm1461 = vmand %vm1429, %vm1445
    %vm1462 = vmand %vm1430, %vm1446
    %vm1463 = vmand %vm1431, %vm1447
    %vm1464 = vmand %vm1432, %vm1448
    %vm1465 = vmand %vm1433, %vm1449
    %vm1466 = vmand %vm1434, %vm1450
    %vm1467 = vmand %vm1435, %vm1451
    %vm1468 = vmand %vm1436, %vm1452
    %vm1469 = vmand %vm1437, %vm1453
    %vm1470 = vmand %vm1438, %vm1454
    %vm1471 = vmand %vm1439, %vm1455
    %vm1472 = vmand %vm1440, %vm1456
    %vm1473 = vmand %vm1441, %vm1457
    %vm1474 = vmand %vm1442, %vm1458
    %vm1475 = vmand %vm1443, %vm1459
    %v1476 = vsel %vm1460, 1.0, 0.0
    %v1477 = vsel %vm1461, 1.0, 0.0
    %v1478 = vsel %vm1462, 1.0, 0.0
    %v1479 = vsel %vm1463, 1.0, 0.0
    %v1480 = vsel %vm1464, 1.0, 0.0
    %v1481 = vsel %vm1465, 1.0, 0.0
    %v1482 = vsel %vm1466, 1.0, 0.0
    %v1483 = vsel %vm1467, 1.0, 0.0
    %v1484 = vsel %vm1468, 1.0, 0.0
    %v1485 = vsel %vm1469, 1.0, 0.0
    %v1486 = vsel %vm1470, 1.0, 0.0
    %v1487 = vsel %vm1471, 1.0, 0.0
    %v1488 = vsel %vm1472, 1.0, 0.0
    %v1489 = vsel %vm1473, 1.0, 0.0
    %v1490 = vsel %vm1474, 1.0, 0.0
    %v1491 = vsel %vm1475, 1.0, 0.0
    %v1492 = vadd.s32 %v548, 2
    %v1493 = vadd.s32 %v549, 2
    %v1494 = vadd.s32 %v550, 2
    %v1495 = vadd.s32 %v551, 2
    %v1496 = vadd.s32 %v552, 2
    %v1497 = vadd.s32 %v553, 2
    %v1498 = vadd.s32 %v554, 2
    %v1499 = vadd.s32 %v555, 2
    %v1500 = vadd.s32 %v556, 2
    %v1501 = vadd.s32 %v557, 2
    %v1502 = vadd.s32 %v558, 2
    %v1503 = vadd.s32 %v559, 2
    %v1504 = vadd.s32 %v560, 2
    %v1505 = vadd.s32 %v561, 2
    %v1506 = vadd.s32 %v562, 2
    %v1507 = vadd.s32 %v563, 2
    %vm1508 = vcmp.ge.s32.totalorder %v1492, 0
    %vm1509 = vcmp.ge.s32.totalorder %v1493, 0
    %vm1510 = vcmp.ge.s32.totalorder %v1494, 0
    %vm1511 = vcmp.ge.s32.totalorder %v1495, 0
    %vm1512 = vcmp.ge.s32.totalorder %v1496, 0
    %vm1513 = vcmp.ge.s32.totalorder %v1497, 0
    %vm1514 = vcmp.ge.s32.totalorder %v1498, 0
    %vm1515 = vcmp.ge.s32.totalorder %v1499, 0
    %vm1516 = vcmp.ge.s32.totalorder %v1500, 0
    %vm1517 = vcmp.ge.s32.totalorder %v1501, 0
    %vm1518 = vcmp.ge.s32.totalorder %v1502, 0
    %vm1519 = vcmp.ge.s32.totalorder %v1503, 0
    %vm1520 = vcmp.ge.s32.totalorder %v1504, 0
    %vm1521 = vcmp.ge.s32.totalorder %v1505, 0
    %vm1522 = vcmp.ge.s32.totalorder %v1506, 0
    %vm1523 = vcmp.ge.s32.totalorder %v1507, 0
    %vm1524 = vcmp.lt.s32.totalorder %v1492, 8
    %vm1525 = vcmp.lt.s32.totalorder %v1493, 8
    %vm1526 = vcmp.lt.s32.totalorder %v1494, 8
    %vm1527 = vcmp.lt.s32.totalorder %v1495, 8
    %vm1528 = vcmp.lt.s32.totalorder %v1496, 8
    %vm1529 = vcmp.lt.s32.totalorder %v1497, 8
    %vm1530 = vcmp.lt.s32.totalorder %v1498, 8
    %vm1531 = vcmp.lt.s32.totalorder %v1499, 8
    %vm1532 = vcmp.lt.s32.totalorder %v1500, 8
    %vm1533 = vcmp.lt.s32.totalorder %v1501, 8
    %vm1534 = vcmp.lt.s32.totalorder %v1502, 8
    %vm1535 = vcmp.lt.s32.totalorder %v1503, 8
    %vm1536 = vcmp.lt.s32.totalorder %v1504, 8
    %vm1537 = vcmp.lt.s32.totalorder %v1505, 8
    %vm1538 = vcmp.lt.s32.totalorder %v1506, 8
    %vm1539 = vcmp.lt.s32.totalorder %v1507, 8
    %vm1540 = vmand %vm1508, %vm1524
    %vm1541 = vmand %vm1509, %vm1525
    %vm1542 = vmand %vm1510, %vm1526
    %vm1543 = vmand %vm1511, %vm1527
    %vm1544 = vmand %vm1512, %vm1528
    %vm1545 = vmand %vm1513, %vm1529
    %vm1546 = vmand %vm1514, %vm1530
    %vm1547 = vmand %vm1515, %vm1531
    %vm1548 = vmand %vm1516, %vm1532
    %vm1549 = vmand %vm1517, %vm1533
    %vm1550 = vmand %vm1518, %vm1534
    %vm1551 = vmand %vm1519, %vm1535
    %vm1552 = vmand %vm1520, %vm1536
    %vm1553 = vmand %vm1521, %vm1537
    %vm1554 = vmand %vm1522, %vm1538
    %vm1555 = vmand %vm1523, %vm1539
    %v1556 = vsel %vm1540, 1.0, 0.0
    %v1557 = vsel %vm1541, 1.0, 0.0
    %v1558 = vsel %vm1542, 1.0, 0.0
    %v1559 = vsel %vm1543, 1.0, 0.0
    %v1560 = vsel %vm1544, 1.0, 0.0
    %v1561 = vsel %vm1545, 1.0, 0.0
    %v1562 = vsel %vm1546, 1.0, 0.0
    %v1563 = vsel %vm1547, 1.0, 0.0
    %v1564 = vsel %vm1548, 1.0, 0.0
    %v1565 = vsel %vm1549, 1.0, 0.0
    %v1566 = vsel %vm1550, 1.0, 0.0
    %v1567 = vsel %vm1551, 1.0, 0.0
    %v1568 = vsel %vm1552, 1.0, 0.0
    %v1569 = vsel %vm1553, 1.0, 0.0
    %v1570 = vsel %vm1554, 1.0, 0.0
    %v1571 = vsel %vm1555, 1.0, 0.0
    %v1572 = vadd.s32 %v548, 3
    %v1573 = vadd.s32 %v549, 3
    %v1574 = vadd.s32 %v550, 3
    %v1575 = vadd.s32 %v551, 3
    %v1576 = vadd.s32 %v552, 3
    %v1577 = vadd.s32 %v553, 3
    %v1578 = vadd.s32 %v554, 3
    %v1579 = vadd.s32 %v555, 3
    %v1580 = vadd.s32 %v556, 3
    %v1581 = vadd.s32 %v557, 3
    %v1582 = vadd.s32 %v558, 3
    %v1583 = vadd.s32 %v559, 3
    %v1584 = vadd.s32 %v560, 3
    %v1585 = vadd.s32 %v561, 3
    %v1586 = vadd.s32 %v562, 3
    %v1587 = vadd.s32 %v563, 3
    %vm1588 = vcmp.ge.s32.totalorder %v1572, 0
    %vm1589 = vcmp.ge.s32.totalorder %v1573, 0
    %vm1590 = vcmp.ge.s32.totalorder %v1574, 0
    %vm1591 = vcmp.ge.s32.totalorder %v1575, 0
    %vm1592 = vcmp.ge.s32.totalorder %v1576, 0
    %vm1593 = vcmp.ge.s32.totalorder %v1577, 0
    %vm1594 = vcmp.ge.s32.totalorder %v1578, 0
    %vm1595 = vcmp.ge.s32.totalorder %v1579, 0
    %vm1596 = vcmp.ge.s32.totalorder %v1580, 0
    %vm1597 = vcmp.ge.s32.totalorder %v1581, 0
    %vm1598 = vcmp.ge.s32.totalorder %v1582, 0
    %vm1599 = vcmp.ge.s32.totalorder %v1583, 0
    %vm1600 = vcmp.ge.s32.totalorder %v1584, 0
    %vm1601 = vcmp.ge.s32.totalorder %v1585, 0
    %vm1602 = vcmp.ge.s32.totalorder %v1586, 0
    %vm1603 = vcmp.ge.s32.totalorder %v1587, 0
    %vm1604 = vcmp.lt.s32.totalorder %v1572, 8
    %vm1605 = vcmp.lt.s32.totalorder %v1573, 8
    %vm1606 = vcmp.lt.s32.totalorder %v1574, 8
    %vm1607 = vcmp.lt.s32.totalorder %v1575, 8
    %vm1608 = vcmp.lt.s32.totalorder %v1576, 8
    %vm1609 = vcmp.lt.s32.totalorder %v1577, 8
    %vm1610 = vcmp.lt.s32.totalorder %v1578, 8
    %vm1611 = vcmp.lt.s32.totalorder %v1579, 8
    %vm1612 = vcmp.lt.s32.totalorder %v1580, 8
    %vm1613 = vcmp.lt.s32.totalorder %v1581, 8
    %vm1614 = vcmp.lt.s32.totalorder %v1582, 8
    %vm1615 = vcmp.lt.s32.totalorder %v1583, 8
    %vm1616 = vcmp.lt.s32.totalorder %v1584, 8
    %vm1617 = vcmp.lt.s32.totalorder %v1585, 8
    %vm1618 = vcmp.lt.s32.totalorder %v1586, 8
    %vm1619 = vcmp.lt.s32.totalorder %v1587, 8
    %vm1620 = vmand %vm1588, %vm1604
    %vm1621 = vmand %vm1589, %vm1605
    %vm1622 = vmand %vm1590, %vm1606
    %vm1623 = vmand %vm1591, %vm1607
    %vm1624 = vmand %vm1592, %vm1608
    %vm1625 = vmand %vm1593, %vm1609
    %vm1626 = vmand %vm1594, %vm1610
    %vm1627 = vmand %vm1595, %vm1611
    %vm1628 = vmand %vm1596, %vm1612
    %vm1629 = vmand %vm1597, %vm1613
    %vm1630 = vmand %vm1598, %vm1614
    %vm1631 = vmand %vm1599, %vm1615
    %vm1632 = vmand %vm1600, %vm1616
    %vm1633 = vmand %vm1601, %vm1617
    %vm1634 = vmand %vm1602, %vm1618
    %vm1635 = vmand %vm1603, %vm1619
    %v1636 = vsel %vm1620, 1.0, 0.0
    %v1637 = vsel %vm1621, 1.0, 0.0
    %v1638 = vsel %vm1622, 1.0, 0.0
    %v1639 = vsel %vm1623, 1.0, 0.0
    %v1640 = vsel %vm1624, 1.0, 0.0
    %v1641 = vsel %vm1625, 1.0, 0.0
    %v1642 = vsel %vm1626, 1.0, 0.0
    %v1643 = vsel %vm1627, 1.0, 0.0
    %v1644 = vsel %vm1628, 1.0, 0.0
    %v1645 = vsel %vm1629, 1.0, 0.0
    %v1646 = vsel %vm1630, 1.0, 0.0
    %v1647 = vsel %vm1631, 1.0, 0.0
    %v1648 = vsel %vm1632, 1.0, 0.0
    %v1649 = vsel %vm1633, 1.0, 0.0
    %v1650 = vsel %vm1634, 1.0, 0.0
    %v1651 = vsel %vm1635, 1.0, 0.0
    %v1652 = vrot.slane %v516, 5
    %v1653 = vrot.slane %v517, 5
    %v1654 = vrot.slane %v518, 5
    %v1655 = vrot.slane %v519, 5
    %v1656 = vrot.slane %v520, 5
    %v1657 = vrot.slane %v521, 5
    %v1658 = vrot.slane %v522, 5
    %v1659 = vrot.slane %v523, 5
    %v1660 = vrot.slane %v524, 5
    %v1661 = vrot.slane %v525, 5
    %v1662 = vrot.slane %v526, 5
    %v1663 = vrot.slane %v527, 5
    %v1664 = vrot.slane %v528, 5
    %v1665 = vrot.slane %v529, 5
    %v1666 = vrot.slane %v530, 5
    %v1667 = vrot.slane %v531, 5
    %v1668 = vlaneseq
    %v1669 = vshrl.u32 %v1668, 7
    %vm1670 = vcmp.lt.s32.totalorder %v1669, 3
    %v1671 = vsel %vm1670, %v1666, %v1667
    %v1672 = vsel %vm1670, %v1665, %v1666
    %v1673 = vsel %vm1670, %v1664, %v1665
    %v1674 = vsel %vm1670, %v1663, %v1664
    %v1675 = vsel %vm1670, %v1662, %v1663
    %v1676 = vsel %vm1670, %v1661, %v1662
    %v1677 = vsel %vm1670, %v1660, %v1661
    %v1678 = vsel %vm1670, %v1659, %v1660
    %v1679 = vsel %vm1670, %v1658, %v1659
    %v1680 = vsel %vm1670, %v1657, %v1658
    %v1681 = vsel %vm1670, %v1656, %v1657
    %v1682 = vsel %vm1670, %v1655, %v1656
    %v1683 = vsel %vm1670, %v1654, %v1655
    %v1684 = vsel %vm1670, %v1653, %v1654
    %v1685 = vsel %vm1670, %v1652, %v1653
    %v1686 = vsel %vm1670, %v1667, %v1652
    %v1687 = vmul.f32 %v628, %v1172
    %v1688 = vmul.f32 %v629, %v1173
    %v1689 = vmul.f32 %v630, %v1174
    %v1690 = vmul.f32 %v631, %v1175
    %v1691 = vmul.f32 %v632, %v1176
    %v1692 = vmul.f32 %v633, %v1177
    %v1693 = vmul.f32 %v634, %v1178
    %v1694 = vmul.f32 %v635, %v1179
    %v1695 = vmul.f32 %v636, %v1180
    %v1696 = vmul.f32 %v637, %v1181
    %v1697 = vmul.f32 %v638, %v1182
    %v1698 = vmul.f32 %v639, %v1183
    %v1699 = vmul.f32 %v640, %v1184
    %v1700 = vmul.f32 %v641, %v1185
    %v1701 = vmul.f32 %v642, %v1186
    %v1702 = vmul.f32 %v643, %v1187
    %v1703 = vld [vmem:[%s7] sm:$0x1]
    %v1705 = vlaneseq
    %v1706 = vshrl.u32 %v1705, 7
    %v1707 = vsub.s32 0, %v1706
    %v1708 = vrot.slane %v1703, %v1707
    %v1710 = vmul.f32 %v1673, %v1708
    %v1711 = vmul.f32 %v1672, %v1708
    %v1712 = vmul.f32 %v1671, %v1708
    %v1713 = vmul.f32 %v1686, %v1708
    %v1714 = vmul.f32 %v1685, %v1708
    %v1715 = vmul.f32 %v1684, %v1708
    %v1716 = vmul.f32 %v1683, %v1708
    %v1717 = vmul.f32 %v1682, %v1708
    %v1718 = vmul.f32 %v1681, %v1708
    %v1719 = vmul.f32 %v1680, %v1708
    %v1720 = vmul.f32 %v1679, %v1708
    %v1721 = vmul.f32 %v1678, %v1708
    %v1722 = vmul.f32 %v1677, %v1708
    %v1723 = vmul.f32 %v1676, %v1708
    %v1724 = vmul.f32 %v1675, %v1708
    %v1725 = vmul.f32 %v1674, %v1708
    %1727 = vset.pattern.permute.xlu0 0
    %1728 = vperm.xlu0 %1727, %v1687
    %v1729 = vpop.permute.xlu0 %1728
    %1732 = vset.pattern.permute.xlu0 0
    %1733 = vperm.xlu0 %1732, %v1688
    %v1734 = vpop.permute.xlu0 %1733
    %1737 = vset.pattern.permute.xlu0 0
    %1738 = vperm.xlu0 %1737, %v1689
    %v1739 = vpop.permute.xlu0 %1738
    %1742 = vset.pattern.permute.xlu0 0
    %1743 = vperm.xlu0 %1742, %v1690
    %v1744 = vpop.permute.xlu0 %1743
    %1747 = vset.pattern.permute.xlu0 0
    %1748 = vperm.xlu0 %1747, %v1691
    %v1749 = vpop.permute.xlu0 %1748
    %1752 = vset.pattern.permute.xlu0 0
    %1753 = vperm.xlu0 %1752, %v1692
    %v1754 = vpop.permute.xlu0 %1753
    %1757 = vset.pattern.permute.xlu0 0
    %1758 = vperm.xlu0 %1757, %v1693
    %v1759 = vpop.permute.xlu0 %1758
    %1762 = vset.pattern.permute.xlu0 0
    %1763 = vperm.xlu0 %1762, %v1694
    %v1764 = vpop.permute.xlu0 %1763
    %1767 = vset.pattern.permute.xlu0 0
    %1768 = vperm.xlu0 %1767, %v1695
    %v1769 = vpop.permute.xlu0 %1768
    %1772 = vset.pattern.permute.xlu0 0
    %1773 = vperm.xlu0 %1772, %v1696
    %v1774 = vpop.permute.xlu0 %1773
    %1777 = vset.pattern.permute.xlu0 0
    %1778 = vperm.xlu0 %1777, %v1697
    %v1779 = vpop.permute.xlu0 %1778
    %1782 = vset.pattern.permute.xlu0 0
    %1783 = vperm.xlu0 %1782, %v1698
    %v1784 = vpop.permute.xlu0 %1783
    %1787 = vset.pattern.permute.xlu0 0
    %1788 = vperm.xlu0 %1787, %v1699
    %v1789 = vpop.permute.xlu0 %1788
    %1792 = vset.pattern.permute.xlu0 0
    %1793 = vperm.xlu0 %1792, %v1700
    %v1794 = vpop.permute.xlu0 %1793
    %1797 = vset.pattern.permute.xlu0 0
    %1798 = vperm.xlu0 %1797, %v1701
    %v1799 = vpop.permute.xlu0 %1798
    %1802 = vset.pattern.permute.xlu0 0
    %1803 = vperm.xlu0 %1802, %v1702
    %v1804 = vpop.permute.xlu0 %1803
    %v1806 = vmul.f32 %v1710, %v1729
    %v1807 = vmul.f32 %v1711, %v1734
    %v1808 = vmul.f32 %v1712, %v1739
    %v1809 = vmul.f32 %v1713, %v1744
    %v1810 = vmul.f32 %v1714, %v1749
    %v1811 = vmul.f32 %v1715, %v1754
    %v1812 = vmul.f32 %v1716, %v1759
    %v1813 = vmul.f32 %v1717, %v1764
    %v1814 = vmul.f32 %v1718, %v1769
    %v1815 = vmul.f32 %v1719, %v1774
    %v1816 = vmul.f32 %v1720, %v1779
    %v1817 = vmul.f32 %v1721, %v1784
    %v1818 = vmul.f32 %v1722, %v1789
    %v1819 = vmul.f32 %v1723, %v1794
    %v1820 = vmul.f32 %v1724, %v1799
    %v1821 = vmul.f32 %v1725, %v1804
    %v1822 = vadd.f32 %v1806, 0.0
    %v1823 = vadd.f32 %v1807, 0.0
    %v1824 = vadd.f32 %v1808, 0.0
    %v1825 = vadd.f32 %v1809, 0.0
    %v1826 = vadd.f32 %v1810, 0.0
    %v1827 = vadd.f32 %v1811, 0.0
    %v1828 = vadd.f32 %v1812, 0.0
    %v1829 = vadd.f32 %v1813, 0.0
    %v1830 = vadd.f32 %v1814, 0.0
    %v1831 = vadd.f32 %v1815, 0.0
    %v1832 = vadd.f32 %v1816, 0.0
    %v1833 = vadd.f32 %v1817, 0.0
    %v1834 = vadd.f32 %v1818, 0.0
    %v1835 = vadd.f32 %v1819, 0.0
    %v1836 = vadd.f32 %v1820, 0.0
    %v1837 = vadd.f32 %v1821, 0.0
    %v1838 = vrot.slane %v516, 6
    %v1839 = vrot.slane %v517, 6
    %v1840 = vrot.slane %v518, 6
    %v1841 = vrot.slane %v519, 6
    %v1842 = vrot.slane %v520, 6
    %v1843 = vrot.slane %v521, 6
    %v1844 = vrot.slane %v522, 6
    %v1845 = vrot.slane %v523, 6
    %v1846 = vrot.slane %v524, 6
    %v1847 = vrot.slane %v525, 6
    %v1848 = vrot.slane %v526, 6
    %v1849 = vrot.slane %v527, 6
    %v1850 = vrot.slane %v528, 6
    %v1851 = vrot.slane %v529, 6
    %v1852 = vrot.slane %v530, 6
    %v1853 = vrot.slane %v531, 6
    %vm1854 = vcmp.lt.s32.totalorder %v1669, 2
    %v1855 = vsel %vm1854, %v1852, %v1853
    %v1856 = vsel %vm1854, %v1851, %v1852
    %v1857 = vsel %vm1854, %v1850, %v1851
    %v1858 = vsel %vm1854, %v1849, %v1850
    %v1859 = vsel %vm1854, %v1848, %v1849
    %v1860 = vsel %vm1854, %v1847, %v1848
    %v1861 = vsel %vm1854, %v1846, %v1847
    %v1862 = vsel %vm1854, %v1845, %v1846
    %v1863 = vsel %vm1854, %v1844, %v1845
    %v1864 = vsel %vm1854, %v1843, %v1844
    %v1865 = vsel %vm1854, %v1842, %v1843
    %v1866 = vsel %vm1854, %v1841, %v1842
    %v1867 = vsel %vm1854, %v1840, %v1841
    %v1868 = vsel %vm1854, %v1839, %v1840
    %v1869 = vsel %vm1854, %v1838, %v1839
    %v1870 = vsel %vm1854, %v1853, %v1838
    %v1871 = vmul.f32 %v628, %v1252
    %v1872 = vmul.f32 %v629, %v1253
    %v1873 = vmul.f32 %v630, %v1254
    %v1874 = vmul.f32 %v631, %v1255
    %v1875 = vmul.f32 %v632, %v1256
    %v1876 = vmul.f32 %v633, %v1257
    %v1877 = vmul.f32 %v634, %v1258
    %v1878 = vmul.f32 %v635, %v1259
    %v1879 = vmul.f32 %v636, %v1260
    %v1880 = vmul.f32 %v637, %v1261
    %v1881 = vmul.f32 %v638, %v1262
    %v1882 = vmul.f32 %v639, %v1263
    %v1883 = vmul.f32 %v640, %v1264
    %v1884 = vmul.f32 %v641, %v1265
    %v1885 = vmul.f32 %v642, %v1266
    %v1886 = vmul.f32 %v643, %v1267
    %s1887 = scalar_lea.vmem %s7, 1
    %v1888 = vld [vmem:[%s1887] sm:$0x1]
    %v1890 = vlaneseq
    %v1891 = vshrl.u32 %v1890, 7
    %v1892 = vsub.s32 0, %v1891
    %v1893 = vrot.slane %v1888, %v1892
    %v1895 = vmul.f32 %v1857, %v1893
    %v1896 = vmul.f32 %v1856, %v1893
    %v1897 = vmul.f32 %v1855, %v1893
    %v1898 = vmul.f32 %v1870, %v1893
    %v1899 = vmul.f32 %v1869, %v1893
    %v1900 = vmul.f32 %v1868, %v1893
    %v1901 = vmul.f32 %v1867, %v1893
    %v1902 = vmul.f32 %v1866, %v1893
    %v1903 = vmul.f32 %v1865, %v1893
    %v1904 = vmul.f32 %v1864, %v1893
    %v1905 = vmul.f32 %v1863, %v1893
    %v1906 = vmul.f32 %v1862, %v1893
    %v1907 = vmul.f32 %v1861, %v1893
    %v1908 = vmul.f32 %v1860, %v1893
    %v1909 = vmul.f32 %v1859, %v1893
    %v1910 = vmul.f32 %v1858, %v1893
    %1912 = vset.pattern.permute.xlu0 0
    %1913 = vperm.xlu0 %1912, %v1871
    %v1914 = vpop.permute.xlu0 %1913
    %1917 = vset.pattern.permute.xlu0 0
    %1918 = vperm.xlu0 %1917, %v1872
    %v1919 = vpop.permute.xlu0 %1918
    %1922 = vset.pattern.permute.xlu0 0
    %1923 = vperm.xlu0 %1922, %v1873
    %v1924 = vpop.permute.xlu0 %1923
    %1927 = vset.pattern.permute.xlu0 0
    %1928 = vperm.xlu0 %1927, %v1874
    %v1929 = vpop.permute.xlu0 %1928
    %1932 = vset.pattern.permute.xlu0 0
    %1933 = vperm.xlu0 %1932, %v1875
    %v1934 = vpop.permute.xlu0 %1933
    %1937 = vset.pattern.permute.xlu0 0
    %1938 = vperm.xlu0 %1937, %v1876
    %v1939 = vpop.permute.xlu0 %1938
    %1942 = vset.pattern.permute.xlu0 0
    %1943 = vperm.xlu0 %1942, %v1877
    %v1944 = vpop.permute.xlu0 %1943
    %1947 = vset.pattern.permute.xlu0 0
    %1948 = vperm.xlu0 %1947, %v1878
    %v1949 = vpop.permute.xlu0 %1948
    %1952 = vset.pattern.permute.xlu0 0
    %1953 = vperm.xlu0 %1952, %v1879
    %v1954 = vpop.permute.xlu0 %1953
    %1957 = vset.pattern.permute.xlu0 0
    %1958 = vperm.xlu0 %1957, %v1880
    %v1959 = vpop.permute.xlu0 %1958
    %1962 = vset.pattern.permute.xlu0 0
    %1963 = vperm.xlu0 %1962, %v1881
    %v1964 = vpop.permute.xlu0 %1963
    %1967 = vset.pattern.permute.xlu0 0
    %1968 = vperm.xlu0 %1967, %v1882
    %v1969 = vpop.permute.xlu0 %1968
    %1972 = vset.pattern.permute.xlu0 0
    %1973 = vperm.xlu0 %1972, %v1883
    %v1974 = vpop.permute.xlu0 %1973
    %1977 = vset.pattern.permute.xlu0 0
    %1978 = vperm.xlu0 %1977, %v1884
    %v1979 = vpop.permute.xlu0 %1978
    %1982 = vset.pattern.permute.xlu0 0
    %1983 = vperm.xlu0 %1982, %v1885
    %v1984 = vpop.permute.xlu0 %1983
    %1987 = vset.pattern.permute.xlu0 0
    %1988 = vperm.xlu0 %1987, %v1886
    %v1989 = vpop.permute.xlu0 %1988
    %v1991 = vmul.f32 %v1895, %v1914
    %v1992 = vmul.f32 %v1896, %v1919
    %v1993 = vmul.f32 %v1897, %v1924
    %v1994 = vmul.f32 %v1898, %v1929
    %v1995 = vmul.f32 %v1899, %v1934
    %v1996 = vmul.f32 %v1900, %v1939
    %v1997 = vmul.f32 %v1901, %v1944
    %v1998 = vmul.f32 %v1902, %v1949
    %v1999 = vmul.f32 %v1903, %v1954
    %v2000 = vmul.f32 %v1904, %v1959
    %v2001 = vmul.f32 %v1905, %v1964
    %v2002 = vmul.f32 %v1906, %v1969
    %v2003 = vmul.f32 %v1907, %v1974
    %v2004 = vmul.f32 %v1908, %v1979
    %v2005 = vmul.f32 %v1909, %v1984
    %v2006 = vmul.f32 %v1910, %v1989
    %v2007 = vadd.f32 %v1822, %v1991
    %v2008 = vadd.f32 %v1823, %v1992
    %v2009 = vadd.f32 %v1824, %v1993
    %v2010 = vadd.f32 %v1825, %v1994
    %v2011 = vadd.f32 %v1826, %v1995
    %v2012 = vadd.f32 %v1827, %v1996
    %v2013 = vadd.f32 %v1828, %v1997
    %v2014 = vadd.f32 %v1829, %v1998
    %v2015 = vadd.f32 %v1830, %v1999
    %v2016 = vadd.f32 %v1831, %v2000
    %v2017 = vadd.f32 %v1832, %v2001
    %v2018 = vadd.f32 %v1833, %v2002
    %v2019 = vadd.f32 %v1834, %v2003
    %v2020 = vadd.f32 %v1835, %v2004
    %v2021 = vadd.f32 %v1836, %v2005
    %v2022 = vadd.f32 %v1837, %v2006
    %v2023 = vrot.slane %v516, 7
    %v2024 = vrot.slane %v517, 7
    %v2025 = vrot.slane %v518, 7
    %v2026 = vrot.slane %v519, 7
    %v2027 = vrot.slane %v520, 7
    %v2028 = vrot.slane %v521, 7
    %v2029 = vrot.slane %v522, 7
    %v2030 = vrot.slane %v523, 7
    %v2031 = vrot.slane %v524, 7
    %v2032 = vrot.slane %v525, 7
    %v2033 = vrot.slane %v526, 7
    %v2034 = vrot.slane %v527, 7
    %v2035 = vrot.slane %v528, 7
    %v2036 = vrot.slane %v529, 7
    %v2037 = vrot.slane %v530, 7
    %v2038 = vrot.slane %v531, 7
    %vm2039 = vcmp.lt.s32.totalorder %v1669, 1
    %v2040 = vsel %vm2039, %v2037, %v2038
    %v2041 = vsel %vm2039, %v2036, %v2037
    %v2042 = vsel %vm2039, %v2035, %v2036
    %v2043 = vsel %vm2039, %v2034, %v2035
    %v2044 = vsel %vm2039, %v2033, %v2034
    %v2045 = vsel %vm2039, %v2032, %v2033
    %v2046 = vsel %vm2039, %v2031, %v2032
    %v2047 = vsel %vm2039, %v2030, %v2031
    %v2048 = vsel %vm2039, %v2029, %v2030
    %v2049 = vsel %vm2039, %v2028, %v2029
    %v2050 = vsel %vm2039, %v2027, %v2028
    %v2051 = vsel %vm2039, %v2026, %v2027
    %v2052 = vsel %vm2039, %v2025, %v2026
    %v2053 = vsel %vm2039, %v2024, %v2025
    %v2054 = vsel %vm2039, %v2023, %v2024
    %v2055 = vsel %vm2039, %v2038, %v2023
    %v2056 = vmul.f32 %v628, %v1332
    %v2057 = vmul.f32 %v629, %v1333
    %v2058 = vmul.f32 %v630, %v1334
    %v2059 = vmul.f32 %v631, %v1335
    %v2060 = vmul.f32 %v632, %v1336
    %v2061 = vmul.f32 %v633, %v1337
    %v2062 = vmul.f32 %v634, %v1338
    %v2063 = vmul.f32 %v635, %v1339
    %v2064 = vmul.f32 %v636, %v1340
    %v2065 = vmul.f32 %v637, %v1341
    %v2066 = vmul.f32 %v638, %v1342
    %v2067 = vmul.f32 %v639, %v1343
    %v2068 = vmul.f32 %v640, %v1344
    %v2069 = vmul.f32 %v641, %v1345
    %v2070 = vmul.f32 %v642, %v1346
    %v2071 = vmul.f32 %v643, %v1347
    %s2072 = scalar_lea.vmem %s7, 2
    %v2073 = vld [vmem:[%s2072] sm:$0x1]
    %v2075 = vlaneseq
    %v2076 = vshrl.u32 %v2075, 7
    %v2077 = vsub.s32 0, %v2076
    %v2078 = vrot.slane %v2073, %v2077
    %v2080 = vmul.f32 %v2042, %v2078
    %v2081 = vmul.f32 %v2041, %v2078
    %v2082 = vmul.f32 %v2040, %v2078
    %v2083 = vmul.f32 %v2055, %v2078
    %v2084 = vmul.f32 %v2054, %v2078
    %v2085 = vmul.f32 %v2053, %v2078
    %v2086 = vmul.f32 %v2052, %v2078
    %v2087 = vmul.f32 %v2051, %v2078
    %v2088 = vmul.f32 %v2050, %v2078
    %v2089 = vmul.f32 %v2049, %v2078
    %v2090 = vmul.f32 %v2048, %v2078
    %v2091 = vmul.f32 %v2047, %v2078
    %v2092 = vmul.f32 %v2046, %v2078
    %v2093 = vmul.f32 %v2045, %v2078
    %v2094 = vmul.f32 %v2044, %v2078
    %v2095 = vmul.f32 %v2043, %v2078
    %2097 = vset.pattern.permute.xlu0 0
    %2098 = vperm.xlu0 %2097, %v2056
    %v2099 = vpop.permute.xlu0 %2098
    %2102 = vset.pattern.permute.xlu0 0
    %2103 = vperm.xlu0 %2102, %v2057
    %v2104 = vpop.permute.xlu0 %2103
    %2107 = vset.pattern.permute.xlu0 0
    %2108 = vperm.xlu0 %2107, %v2058
    %v2109 = vpop.permute.xlu0 %2108
    %2112 = vset.pattern.permute.xlu0 0
    %2113 = vperm.xlu0 %2112, %v2059
    %v2114 = vpop.permute.xlu0 %2113
    %2117 = vset.pattern.permute.xlu0 0
    %2118 = vperm.xlu0 %2117, %v2060
    %v2119 = vpop.permute.xlu0 %2118
    %2122 = vset.pattern.permute.xlu0 0
    %2123 = vperm.xlu0 %2122, %v2061
    %v2124 = vpop.permute.xlu0 %2123
    %2127 = vset.pattern.permute.xlu0 0
    %2128 = vperm.xlu0 %2127, %v2062
    %v2129 = vpop.permute.xlu0 %2128
    %2132 = vset.pattern.permute.xlu0 0
    %2133 = vperm.xlu0 %2132, %v2063
    %v2134 = vpop.permute.xlu0 %2133
    %2137 = vset.pattern.permute.xlu0 0
    %2138 = vperm.xlu0 %2137, %v2064
    %v2139 = vpop.permute.xlu0 %2138
    %2142 = vset.pattern.permute.xlu0 0
    %2143 = vperm.xlu0 %2142, %v2065
    %v2144 = vpop.permute.xlu0 %2143
    %2147 = vset.pattern.permute.xlu0 0
    %2148 = vperm.xlu0 %2147, %v2066
    %v2149 = vpop.permute.xlu0 %2148
    %2152 = vset.pattern.permute.xlu0 0
    %2153 = vperm.xlu0 %2152, %v2067
    %v2154 = vpop.permute.xlu0 %2153
    %2157 = vset.pattern.permute.xlu0 0
    %2158 = vperm.xlu0 %2157, %v2068
    %v2159 = vpop.permute.xlu0 %2158
    %2162 = vset.pattern.permute.xlu0 0
    %2163 = vperm.xlu0 %2162, %v2069
    %v2164 = vpop.permute.xlu0 %2163
    %2167 = vset.pattern.permute.xlu0 0
    %2168 = vperm.xlu0 %2167, %v2070
    %v2169 = vpop.permute.xlu0 %2168
    %2172 = vset.pattern.permute.xlu0 0
    %2173 = vperm.xlu0 %2172, %v2071
    %v2174 = vpop.permute.xlu0 %2173
    %v2176 = vmul.f32 %v2080, %v2099
    %v2177 = vmul.f32 %v2081, %v2104
    %v2178 = vmul.f32 %v2082, %v2109
    %v2179 = vmul.f32 %v2083, %v2114
    %v2180 = vmul.f32 %v2084, %v2119
    %v2181 = vmul.f32 %v2085, %v2124
    %v2182 = vmul.f32 %v2086, %v2129
    %v2183 = vmul.f32 %v2087, %v2134
    %v2184 = vmul.f32 %v2088, %v2139
    %v2185 = vmul.f32 %v2089, %v2144
    %v2186 = vmul.f32 %v2090, %v2149
    %v2187 = vmul.f32 %v2091, %v2154
    %v2188 = vmul.f32 %v2092, %v2159
    %v2189 = vmul.f32 %v2093, %v2164
    %v2190 = vmul.f32 %v2094, %v2169
    %v2191 = vmul.f32 %v2095, %v2174
    %v2192 = vadd.f32 %v2007, %v2176
    %v2193 = vadd.f32 %v2008, %v2177
    %v2194 = vadd.f32 %v2009, %v2178
    %v2195 = vadd.f32 %v2010, %v2179
    %v2196 = vadd.f32 %v2011, %v2180
    %v2197 = vadd.f32 %v2012, %v2181
    %v2198 = vadd.f32 %v2013, %v2182
    %v2199 = vadd.f32 %v2014, %v2183
    %v2200 = vadd.f32 %v2015, %v2184
    %v2201 = vadd.f32 %v2016, %v2185
    %v2202 = vadd.f32 %v2017, %v2186
    %v2203 = vadd.f32 %v2018, %v2187
    %v2204 = vadd.f32 %v2019, %v2188
    %v2205 = vadd.f32 %v2020, %v2189
    %v2206 = vadd.f32 %v2021, %v2190
    %v2207 = vadd.f32 %v2022, %v2191
    %v2208 = vmul.f32 %v628, %v1396
    %v2209 = vmul.f32 %v629, %v1397
    %v2210 = vmul.f32 %v630, %v1398
    %v2211 = vmul.f32 %v631, %v1399
    %v2212 = vmul.f32 %v632, %v1400
    %v2213 = vmul.f32 %v633, %v1401
    %v2214 = vmul.f32 %v634, %v1402
    %v2215 = vmul.f32 %v635, %v1403
    %v2216 = vmul.f32 %v636, %v1404
    %v2217 = vmul.f32 %v637, %v1405
    %v2218 = vmul.f32 %v638, %v1406
    %v2219 = vmul.f32 %v639, %v1407
    %v2220 = vmul.f32 %v640, %v1408
    %v2221 = vmul.f32 %v641, %v1409
    %v2222 = vmul.f32 %v642, %v1410
    %v2223 = vmul.f32 %v643, %v1411
    %s2224 = scalar_lea.vmem %s7, 3
    %v2225 = vld [vmem:[%s2224] sm:$0x1]
    %v2227 = vlaneseq
    %v2228 = vshrl.u32 %v2227, 7
    %v2229 = vsub.s32 0, %v2228
    %v2230 = vrot.slane %v2225, %v2229
    %v2232 = vmul.f32 %v529, %v2230
    %v2233 = vmul.f32 %v530, %v2230
    %v2234 = vmul.f32 %v531, %v2230
    %v2235 = vmul.f32 %v516, %v2230
    %v2236 = vmul.f32 %v517, %v2230
    %v2237 = vmul.f32 %v518, %v2230
    %v2238 = vmul.f32 %v519, %v2230
    %v2239 = vmul.f32 %v520, %v2230
    %v2240 = vmul.f32 %v521, %v2230
    %v2241 = vmul.f32 %v522, %v2230
    %v2242 = vmul.f32 %v523, %v2230
    %v2243 = vmul.f32 %v524, %v2230
    %v2244 = vmul.f32 %v525, %v2230
    %v2245 = vmul.f32 %v526, %v2230
    %v2246 = vmul.f32 %v527, %v2230
    %v2247 = vmul.f32 %v528, %v2230
    %2249 = vset.pattern.permute.xlu0 0
    %2250 = vperm.xlu0 %2249, %v2208
    %v2251 = vpop.permute.xlu0 %2250
    %2254 = vset.pattern.permute.xlu0 0
    %2255 = vperm.xlu0 %2254, %v2209
    %v2256 = vpop.permute.xlu0 %2255
    %2259 = vset.pattern.permute.xlu0 0
    %2260 = vperm.xlu0 %2259, %v2210
    %v2261 = vpop.permute.xlu0 %2260
    %2264 = vset.pattern.permute.xlu0 0
    %2265 = vperm.xlu0 %2264, %v2211
    %v2266 = vpop.permute.xlu0 %2265
    %2269 = vset.pattern.permute.xlu0 0
    %2270 = vperm.xlu0 %2269, %v2212
    %v2271 = vpop.permute.xlu0 %2270
    %2274 = vset.pattern.permute.xlu0 0
    %2275 = vperm.xlu0 %2274, %v2213
    %v2276 = vpop.permute.xlu0 %2275
    %2279 = vset.pattern.permute.xlu0 0
    %2280 = vperm.xlu0 %2279, %v2214
    %v2281 = vpop.permute.xlu0 %2280
    %2284 = vset.pattern.permute.xlu0 0
    %2285 = vperm.xlu0 %2284, %v2215
    %v2286 = vpop.permute.xlu0 %2285
    %2289 = vset.pattern.permute.xlu0 0
    %2290 = vperm.xlu0 %2289, %v2216
    %v2291 = vpop.permute.xlu0 %2290
    %2294 = vset.pattern.permute.xlu0 0
    %2295 = vperm.xlu0 %2294, %v2217
    %v2296 = vpop.permute.xlu0 %2295
    %2299 = vset.pattern.permute.xlu0 0
    %2300 = vperm.xlu0 %2299, %v2218
    %v2301 = vpop.permute.xlu0 %2300
    %2304 = vset.pattern.permute.xlu0 0
    %2305 = vperm.xlu0 %2304, %v2219
    %v2306 = vpop.permute.xlu0 %2305
    %2309 = vset.pattern.permute.xlu0 0
    %2310 = vperm.xlu0 %2309, %v2220
    %v2311 = vpop.permute.xlu0 %2310
    %2314 = vset.pattern.permute.xlu0 0
    %2315 = vperm.xlu0 %2314, %v2221
    %v2316 = vpop.permute.xlu0 %2315
    %2319 = vset.pattern.permute.xlu0 0
    %2320 = vperm.xlu0 %2319, %v2222
    %v2321 = vpop.permute.xlu0 %2320
    %2324 = vset.pattern.permute.xlu0 0
    %2325 = vperm.xlu0 %2324, %v2223
    %v2326 = vpop.permute.xlu0 %2325
    %v2328 = vmul.f32 %v2232, %v2251
    %v2329 = vmul.f32 %v2233, %v2256
    %v2330 = vmul.f32 %v2234, %v2261
    %v2331 = vmul.f32 %v2235, %v2266
    %v2332 = vmul.f32 %v2236, %v2271
    %v2333 = vmul.f32 %v2237, %v2276
    %v2334 = vmul.f32 %v2238, %v2281
    %v2335 = vmul.f32 %v2239, %v2286
    %v2336 = vmul.f32 %v2240, %v2291
    %v2337 = vmul.f32 %v2241, %v2296
    %v2338 = vmul.f32 %v2242, %v2301
    %v2339 = vmul.f32 %v2243, %v2306
    %v2340 = vmul.f32 %v2244, %v2311
    %v2341 = vmul.f32 %v2245, %v2316
    %v2342 = vmul.f32 %v2246, %v2321
    %v2343 = vmul.f32 %v2247, %v2326
    %v2344 = vadd.f32 %v2192, %v2328
    %v2345 = vadd.f32 %v2193, %v2329
    %v2346 = vadd.f32 %v2194, %v2330
    %v2347 = vadd.f32 %v2195, %v2331
    %v2348 = vadd.f32 %v2196, %v2332
    %v2349 = vadd.f32 %v2197, %v2333
    %v2350 = vadd.f32 %v2198, %v2334
    %v2351 = vadd.f32 %v2199, %v2335
    %v2352 = vadd.f32 %v2200, %v2336
    %v2353 = vadd.f32 %v2201, %v2337
    %v2354 = vadd.f32 %v2202, %v2338
    %v2355 = vadd.f32 %v2203, %v2339
    %v2356 = vadd.f32 %v2204, %v2340
    %v2357 = vadd.f32 %v2205, %v2341
    %v2358 = vadd.f32 %v2206, %v2342
    %v2359 = vadd.f32 %v2207, %v2343
    %v2360 = vrot.slane %v516, 1
    %v2361 = vrot.slane %v517, 1
    %v2362 = vrot.slane %v518, 1
    %v2363 = vrot.slane %v519, 1
    %v2364 = vrot.slane %v520, 1
    %v2365 = vrot.slane %v521, 1
    %v2366 = vrot.slane %v522, 1
    %v2367 = vrot.slane %v523, 1
    %v2368 = vrot.slane %v524, 1
    %v2369 = vrot.slane %v525, 1
    %v2370 = vrot.slane %v526, 1
    %v2371 = vrot.slane %v527, 1
    %v2372 = vrot.slane %v528, 1
    %v2373 = vrot.slane %v529, 1
    %v2374 = vrot.slane %v530, 1
    %v2375 = vrot.slane %v531, 1
    %vm2376 = vcmp.lt.s32.totalorder %v1669, 7
    %v2377 = vsel %vm2376, %v2374, %v2375
    %v2378 = vsel %vm2376, %v2373, %v2374
    %v2379 = vsel %vm2376, %v2372, %v2373
    %v2380 = vsel %vm2376, %v2371, %v2372
    %v2381 = vsel %vm2376, %v2370, %v2371
    %v2382 = vsel %vm2376, %v2369, %v2370
    %v2383 = vsel %vm2376, %v2368, %v2369
    %v2384 = vsel %vm2376, %v2367, %v2368
    %v2385 = vsel %vm2376, %v2366, %v2367
    %v2386 = vsel %vm2376, %v2365, %v2366
    %v2387 = vsel %vm2376, %v2364, %v2365
    %v2388 = vsel %vm2376, %v2363, %v2364
    %v2389 = vsel %vm2376, %v2362, %v2363
    %v2390 = vsel %vm2376, %v2361, %v2362
    %v2391 = vsel %vm2376, %v2360, %v2361
    %v2392 = vsel %vm2376, %v2375, %v2360
    %v2393 = vmul.f32 %v628, %v1476
    %v2394 = vmul.f32 %v629, %v1477
    %v2395 = vmul.f32 %v630, %v1478
    %v2396 = vmul.f32 %v631, %v1479
    %v2397 = vmul.f32 %v632, %v1480
    %v2398 = vmul.f32 %v633, %v1481
    %v2399 = vmul.f32 %v634, %v1482
    %v2400 = vmul.f32 %v635, %v1483
    %v2401 = vmul.f32 %v636, %v1484
    %v2402 = vmul.f32 %v637, %v1485
    %v2403 = vmul.f32 %v638, %v1486
    %v2404 = vmul.f32 %v639, %v1487
    %v2405 = vmul.f32 %v640, %v1488
    %v2406 = vmul.f32 %v641, %v1489
    %v2407 = vmul.f32 %v642, %v1490
    %v2408 = vmul.f32 %v643, %v1491
    %s2409 = scalar_lea.vmem %s7, 4
    %v2410 = vld [vmem:[%s2409] sm:$0x1]
    %v2412 = vlaneseq
    %v2413 = vshrl.u32 %v2412, 7
    %v2414 = vsub.s32 0, %v2413
    %v2415 = vrot.slane %v2410, %v2414
    %v2417 = vmul.f32 %v2378, %v2415
    %v2418 = vmul.f32 %v2377, %v2415
    %v2419 = vmul.f32 %v2392, %v2415
    %v2420 = vmul.f32 %v2391, %v2415
    %v2421 = vmul.f32 %v2390, %v2415
    %v2422 = vmul.f32 %v2389, %v2415
    %v2423 = vmul.f32 %v2388, %v2415
    %v2424 = vmul.f32 %v2387, %v2415
    %v2425 = vmul.f32 %v2386, %v2415
    %v2426 = vmul.f32 %v2385, %v2415
    %v2427 = vmul.f32 %v2384, %v2415
    %v2428 = vmul.f32 %v2383, %v2415
    %v2429 = vmul.f32 %v2382, %v2415
    %v2430 = vmul.f32 %v2381, %v2415
    %v2431 = vmul.f32 %v2380, %v2415
    %v2432 = vmul.f32 %v2379, %v2415
    %2434 = vset.pattern.permute.xlu0 0
    %2435 = vperm.xlu0 %2434, %v2393
    %v2436 = vpop.permute.xlu0 %2435
    %2439 = vset.pattern.permute.xlu0 0
    %2440 = vperm.xlu0 %2439, %v2394
    %v2441 = vpop.permute.xlu0 %2440
    %2444 = vset.pattern.permute.xlu0 0
    %2445 = vperm.xlu0 %2444, %v2395
    %v2446 = vpop.permute.xlu0 %2445
    %2449 = vset.pattern.permute.xlu0 0
    %2450 = vperm.xlu0 %2449, %v2396
    %v2451 = vpop.permute.xlu0 %2450
    %2454 = vset.pattern.permute.xlu0 0
    %2455 = vperm.xlu0 %2454, %v2397
    %v2456 = vpop.permute.xlu0 %2455
    %2459 = vset.pattern.permute.xlu0 0
    %2460 = vperm.xlu0 %2459, %v2398
    %v2461 = vpop.permute.xlu0 %2460
    %2464 = vset.pattern.permute.xlu0 0
    %2465 = vperm.xlu0 %2464, %v2399
    %v2466 = vpop.permute.xlu0 %2465
    %2469 = vset.pattern.permute.xlu0 0
    %2470 = vperm.xlu0 %2469, %v2400
    %v2471 = vpop.permute.xlu0 %2470
    %2474 = vset.pattern.permute.xlu0 0
    %2475 = vperm.xlu0 %2474, %v2401
    %v2476 = vpop.permute.xlu0 %2475
    %2479 = vset.pattern.permute.xlu0 0
    %2480 = vperm.xlu0 %2479, %v2402
    %v2481 = vpop.permute.xlu0 %2480
    %2484 = vset.pattern.permute.xlu0 0
    %2485 = vperm.xlu0 %2484, %v2403
    %v2486 = vpop.permute.xlu0 %2485
    %2489 = vset.pattern.permute.xlu0 0
    %2490 = vperm.xlu0 %2489, %v2404
    %v2491 = vpop.permute.xlu0 %2490
    %2494 = vset.pattern.permute.xlu0 0
    %2495 = vperm.xlu0 %2494, %v2405
    %v2496 = vpop.permute.xlu0 %2495
    %2499 = vset.pattern.permute.xlu0 0
    %2500 = vperm.xlu0 %2499, %v2406
    %v2501 = vpop.permute.xlu0 %2500
    %2504 = vset.pattern.permute.xlu0 0
    %2505 = vperm.xlu0 %2504, %v2407
    %v2506 = vpop.permute.xlu0 %2505
    %2509 = vset.pattern.permute.xlu0 0
    %2510 = vperm.xlu0 %2509, %v2408
    %v2511 = vpop.permute.xlu0 %2510
    %v2513 = vmul.f32 %v2417, %v2436
    %v2514 = vmul.f32 %v2418, %v2441
    %v2515 = vmul.f32 %v2419, %v2446
    %v2516 = vmul.f32 %v2420, %v2451
    %v2517 = vmul.f32 %v2421, %v2456
    %v2518 = vmul.f32 %v2422, %v2461
    %v2519 = vmul.f32 %v2423, %v2466
    %v2520 = vmul.f32 %v2424, %v2471
    %v2521 = vmul.f32 %v2425, %v2476
    %v2522 = vmul.f32 %v2426, %v2481
    %v2523 = vmul.f32 %v2427, %v2486
    %v2524 = vmul.f32 %v2428, %v2491
    %v2525 = vmul.f32 %v2429, %v2496
    %v2526 = vmul.f32 %v2430, %v2501
    %v2527 = vmul.f32 %v2431, %v2506
    %v2528 = vmul.f32 %v2432, %v2511
    %v2529 = vadd.f32 %v2344, %v2513
    %v2530 = vadd.f32 %v2345, %v2514
    %v2531 = vadd.f32 %v2346, %v2515
    %v2532 = vadd.f32 %v2347, %v2516
    %v2533 = vadd.f32 %v2348, %v2517
    %v2534 = vadd.f32 %v2349, %v2518
    %v2535 = vadd.f32 %v2350, %v2519
    %v2536 = vadd.f32 %v2351, %v2520
    %v2537 = vadd.f32 %v2352, %v2521
    %v2538 = vadd.f32 %v2353, %v2522
    %v2539 = vadd.f32 %v2354, %v2523
    %v2540 = vadd.f32 %v2355, %v2524
    %v2541 = vadd.f32 %v2356, %v2525
    %v2542 = vadd.f32 %v2357, %v2526
    %v2543 = vadd.f32 %v2358, %v2527
    %v2544 = vadd.f32 %v2359, %v2528
    %v2545 = vrot.slane %v516, 2
    %v2546 = vrot.slane %v517, 2
    %v2547 = vrot.slane %v518, 2
    %v2548 = vrot.slane %v519, 2
    %v2549 = vrot.slane %v520, 2
    %v2550 = vrot.slane %v521, 2
    %v2551 = vrot.slane %v522, 2
    %v2552 = vrot.slane %v523, 2
    %v2553 = vrot.slane %v524, 2
    %v2554 = vrot.slane %v525, 2
    %v2555 = vrot.slane %v526, 2
    %v2556 = vrot.slane %v527, 2
    %v2557 = vrot.slane %v528, 2
    %v2558 = vrot.slane %v529, 2
    %v2559 = vrot.slane %v530, 2
    %v2560 = vrot.slane %v531, 2
    %vm2561 = vcmp.lt.s32.totalorder %v1669, 6
    %v2562 = vsel %vm2561, %v2559, %v2560
    %v2563 = vsel %vm2561, %v2558, %v2559
    %v2564 = vsel %vm2561, %v2557, %v2558
    %v2565 = vsel %vm2561, %v2556, %v2557
    %v2566 = vsel %vm2561, %v2555, %v2556
    %v2567 = vsel %vm2561, %v2554, %v2555
    %v2568 = vsel %vm2561, %v2553, %v2554
    %v2569 = vsel %vm2561, %v2552, %v2553
    %v2570 = vsel %vm2561, %v2551, %v2552
    %v2571 = vsel %vm2561, %v2550, %v2551
    %v2572 = vsel %vm2561, %v2549, %v2550
    %v2573 = vsel %vm2561, %v2548, %v2549
    %v2574 = vsel %vm2561, %v2547, %v2548
    %v2575 = vsel %vm2561, %v2546, %v2547
    %v2576 = vsel %vm2561, %v2545, %v2546
    %v2577 = vsel %vm2561, %v2560, %v2545
    %v2578 = vmul.f32 %v628, %v1556
    %v2579 = vmul.f32 %v629, %v1557
    %v2580 = vmul.f32 %v630, %v1558
    %v2581 = vmul.f32 %v631, %v1559
    %v2582 = vmul.f32 %v632, %v1560
    %v2583 = vmul.f32 %v633, %v1561
    %v2584 = vmul.f32 %v634, %v1562
    %v2585 = vmul.f32 %v635, %v1563
    %v2586 = vmul.f32 %v636, %v1564
    %v2587 = vmul.f32 %v637, %v1565
    %v2588 = vmul.f32 %v638, %v1566
    %v2589 = vmul.f32 %v639, %v1567
    %v2590 = vmul.f32 %v640, %v1568
    %v2591 = vmul.f32 %v641, %v1569
    %v2592 = vmul.f32 %v642, %v1570
    %v2593 = vmul.f32 %v643, %v1571
    %s2594 = scalar_lea.vmem %s7, 5
    %v2595 = vld [vmem:[%s2594] sm:$0x1]
    %v2597 = vlaneseq
    %v2598 = vshrl.u32 %v2597, 7
    %v2599 = vsub.s32 0, %v2598
    %v2600 = vrot.slane %v2595, %v2599
    %v2602 = vmul.f32 %v2563, %v2600
    %v2603 = vmul.f32 %v2562, %v2600
    %v2604 = vmul.f32 %v2577, %v2600
    %v2605 = vmul.f32 %v2576, %v2600
    %v2606 = vmul.f32 %v2575, %v2600
    %v2607 = vmul.f32 %v2574, %v2600
    %v2608 = vmul.f32 %v2573, %v2600
    %v2609 = vmul.f32 %v2572, %v2600
    %v2610 = vmul.f32 %v2571, %v2600
    %v2611 = vmul.f32 %v2570, %v2600
    %v2612 = vmul.f32 %v2569, %v2600
    %v2613 = vmul.f32 %v2568, %v2600
    %v2614 = vmul.f32 %v2567, %v2600
    %v2615 = vmul.f32 %v2566, %v2600
    %v2616 = vmul.f32 %v2565, %v2600
    %v2617 = vmul.f32 %v2564, %v2600
    %2619 = vset.pattern.permute.xlu0 0
    %2620 = vperm.xlu0 %2619, %v2578
    %v2621 = vpop.permute.xlu0 %2620
    %2624 = vset.pattern.permute.xlu0 0
    %2625 = vperm.xlu0 %2624, %v2579
    %v2626 = vpop.permute.xlu0 %2625
    %2629 = vset.pattern.permute.xlu0 0
    %2630 = vperm.xlu0 %2629, %v2580
    %v2631 = vpop.permute.xlu0 %2630
    %2634 = vset.pattern.permute.xlu0 0
    %2635 = vperm.xlu0 %2634, %v2581
    %v2636 = vpop.permute.xlu0 %2635
    %2639 = vset.pattern.permute.xlu0 0
    %2640 = vperm.xlu0 %2639, %v2582
    %v2641 = vpop.permute.xlu0 %2640
    %2644 = vset.pattern.permute.xlu0 0
    %2645 = vperm.xlu0 %2644, %v2583
    %v2646 = vpop.permute.xlu0 %2645
    %2649 = vset.pattern.permute.xlu0 0
    %2650 = vperm.xlu0 %2649, %v2584
    %v2651 = vpop.permute.xlu0 %2650
    %2654 = vset.pattern.permute.xlu0 0
    %2655 = vperm.xlu0 %2654, %v2585
    %v2656 = vpop.permute.xlu0 %2655
    %2659 = vset.pattern.permute.xlu0 0
    %2660 = vperm.xlu0 %2659, %v2586
    %v2661 = vpop.permute.xlu0 %2660
    %2664 = vset.pattern.permute.xlu0 0
    %2665 = vperm.xlu0 %2664, %v2587
    %v2666 = vpop.permute.xlu0 %2665
    %2669 = vset.pattern.permute.xlu0 0
    %2670 = vperm.xlu0 %2669, %v2588
    %v2671 = vpop.permute.xlu0 %2670
    %2674 = vset.pattern.permute.xlu0 0
    %2675 = vperm.xlu0 %2674, %v2589
    %v2676 = vpop.permute.xlu0 %2675
    %2679 = vset.pattern.permute.xlu0 0
    %2680 = vperm.xlu0 %2679, %v2590
    %v2681 = vpop.permute.xlu0 %2680
    %2684 = vset.pattern.permute.xlu0 0
    %2685 = vperm.xlu0 %2684, %v2591
    %v2686 = vpop.permute.xlu0 %2685
    %2689 = vset.pattern.permute.xlu0 0
    %2690 = vperm.xlu0 %2689, %v2592
    %v2691 = vpop.permute.xlu0 %2690
    %2694 = vset.pattern.permute.xlu0 0
    %2695 = vperm.xlu0 %2694, %v2593
    %v2696 = vpop.permute.xlu0 %2695
    %v2698 = vmul.f32 %v2602, %v2621
    %v2699 = vmul.f32 %v2603, %v2626
    %v2700 = vmul.f32 %v2604, %v2631
    %v2701 = vmul.f32 %v2605, %v2636
    %v2702 = vmul.f32 %v2606, %v2641
    %v2703 = vmul.f32 %v2607, %v2646
    %v2704 = vmul.f32 %v2608, %v2651
    %v2705 = vmul.f32 %v2609, %v2656
    %v2706 = vmul.f32 %v2610, %v2661
    %v2707 = vmul.f32 %v2611, %v2666
    %v2708 = vmul.f32 %v2612, %v2671
    %v2709 = vmul.f32 %v2613, %v2676
    %v2710 = vmul.f32 %v2614, %v2681
    %v2711 = vmul.f32 %v2615, %v2686
    %v2712 = vmul.f32 %v2616, %v2691
    %v2713 = vmul.f32 %v2617, %v2696
    %v2714 = vadd.f32 %v2529, %v2698
    %v2715 = vadd.f32 %v2530, %v2699
    %v2716 = vadd.f32 %v2531, %v2700
    %v2717 = vadd.f32 %v2532, %v2701
    %v2718 = vadd.f32 %v2533, %v2702
    %v2719 = vadd.f32 %v2534, %v2703
    %v2720 = vadd.f32 %v2535, %v2704
    %v2721 = vadd.f32 %v2536, %v2705
    %v2722 = vadd.f32 %v2537, %v2706
    %v2723 = vadd.f32 %v2538, %v2707
    %v2724 = vadd.f32 %v2539, %v2708
    %v2725 = vadd.f32 %v2540, %v2709
    %v2726 = vadd.f32 %v2541, %v2710
    %v2727 = vadd.f32 %v2542, %v2711
    %v2728 = vadd.f32 %v2543, %v2712
    %v2729 = vadd.f32 %v2544, %v2713
    %v2730 = vrot.slane %v516, 3
    %v2731 = vrot.slane %v517, 3
    %v2732 = vrot.slane %v518, 3
    %v2733 = vrot.slane %v519, 3
    %v2734 = vrot.slane %v520, 3
    %v2735 = vrot.slane %v521, 3
    %v2736 = vrot.slane %v522, 3
    %v2737 = vrot.slane %v523, 3
    %v2738 = vrot.slane %v524, 3
    %v2739 = vrot.slane %v525, 3
    %v2740 = vrot.slane %v526, 3
    %v2741 = vrot.slane %v527, 3
    %v2742 = vrot.slane %v528, 3
    %v2743 = vrot.slane %v529, 3
    %v2744 = vrot.slane %v530, 3
    %v2745 = vrot.slane %v531, 3
    %vm2746 = vcmp.lt.s32.totalorder %v1669, 5
    %v2747 = vsel %vm2746, %v2744, %v2745
    %v2748 = vsel %vm2746, %v2743, %v2744
    %v2749 = vsel %vm2746, %v2742, %v2743
    %v2750 = vsel %vm2746, %v2741, %v2742
    %v2751 = vsel %vm2746, %v2740, %v2741
    %v2752 = vsel %vm2746, %v2739, %v2740
    %v2753 = vsel %vm2746, %v2738, %v2739
    %v2754 = vsel %vm2746, %v2737, %v2738
    %v2755 = vsel %vm2746, %v2736, %v2737
    %v2756 = vsel %vm2746, %v2735, %v2736
    %v2757 = vsel %vm2746, %v2734, %v2735
    %v2758 = vsel %vm2746, %v2733, %v2734
    %v2759 = vsel %vm2746, %v2732, %v2733
    %v2760 = vsel %vm2746, %v2731, %v2732
    %v2761 = vsel %vm2746, %v2730, %v2731
    %v2762 = vsel %vm2746, %v2745, %v2730
    %v2763 = vmul.f32 %v628, %v1636
    %v2764 = vmul.f32 %v629, %v1637
    %v2765 = vmul.f32 %v630, %v1638
    %v2766 = vmul.f32 %v631, %v1639
    %v2767 = vmul.f32 %v632, %v1640
    %v2768 = vmul.f32 %v633, %v1641
    %v2769 = vmul.f32 %v634, %v1642
    %v2770 = vmul.f32 %v635, %v1643
    %v2771 = vmul.f32 %v636, %v1644
    %v2772 = vmul.f32 %v637, %v1645
    %v2773 = vmul.f32 %v638, %v1646
    %v2774 = vmul.f32 %v639, %v1647
    %v2775 = vmul.f32 %v640, %v1648
    %v2776 = vmul.f32 %v641, %v1649
    %v2777 = vmul.f32 %v642, %v1650
    %v2778 = vmul.f32 %v643, %v1651
    %s2779 = scalar_lea.vmem %s7, 6
    %v2780 = vld [vmem:[%s2779] sm:$0x1]
    %v2782 = vlaneseq
    %v2783 = vshrl.u32 %v2782, 7
    %v2784 = vsub.s32 0, %v2783
    %v2785 = vrot.slane %v2780, %v2784
    %v2787 = vmul.f32 %v2748, %v2785
    %v2788 = vmul.f32 %v2747, %v2785
    %v2789 = vmul.f32 %v2762, %v2785
    %v2790 = vmul.f32 %v2761, %v2785
    %v2791 = vmul.f32 %v2760, %v2785
    %v2792 = vmul.f32 %v2759, %v2785
    %v2793 = vmul.f32 %v2758, %v2785
    %v2794 = vmul.f32 %v2757, %v2785
    %v2795 = vmul.f32 %v2756, %v2785
    %v2796 = vmul.f32 %v2755, %v2785
    %v2797 = vmul.f32 %v2754, %v2785
    %v2798 = vmul.f32 %v2753, %v2785
    %v2799 = vmul.f32 %v2752, %v2785
    %v2800 = vmul.f32 %v2751, %v2785
    %v2801 = vmul.f32 %v2750, %v2785
    %v2802 = vmul.f32 %v2749, %v2785
    %2804 = vset.pattern.permute.xlu0 0
    %2805 = vperm.xlu0 %2804, %v2763
    %v2806 = vpop.permute.xlu0 %2805
    %2809 = vset.pattern.permute.xlu0 0
    %2810 = vperm.xlu0 %2809, %v2764
    %v2811 = vpop.permute.xlu0 %2810
    %2814 = vset.pattern.permute.xlu0 0
    %2815 = vperm.xlu0 %2814, %v2765
    %v2816 = vpop.permute.xlu0 %2815
    %2819 = vset.pattern.permute.xlu0 0
    %2820 = vperm.xlu0 %2819, %v2766
    %v2821 = vpop.permute.xlu0 %2820
    %2824 = vset.pattern.permute.xlu0 0
    %2825 = vperm.xlu0 %2824, %v2767
    %v2826 = vpop.permute.xlu0 %2825
    %2829 = vset.pattern.permute.xlu0 0
    %2830 = vperm.xlu0 %2829, %v2768
    %v2831 = vpop.permute.xlu0 %2830
    %2834 = vset.pattern.permute.xlu0 0
    %2835 = vperm.xlu0 %2834, %v2769
    %v2836 = vpop.permute.xlu0 %2835
    %2839 = vset.pattern.permute.xlu0 0
    %2840 = vperm.xlu0 %2839, %v2770
    %v2841 = vpop.permute.xlu0 %2840
    %2844 = vset.pattern.permute.xlu0 0
    %2845 = vperm.xlu0 %2844, %v2771
    %v2846 = vpop.permute.xlu0 %2845
    %2849 = vset.pattern.permute.xlu0 0
    %2850 = vperm.xlu0 %2849, %v2772
    %v2851 = vpop.permute.xlu0 %2850
    %2854 = vset.pattern.permute.xlu0 0
    %2855 = vperm.xlu0 %2854, %v2773
    %v2856 = vpop.permute.xlu0 %2855
    %2859 = vset.pattern.permute.xlu0 0
    %2860 = vperm.xlu0 %2859, %v2774
    %v2861 = vpop.permute.xlu0 %2860
    %2864 = vset.pattern.permute.xlu0 0
    %2865 = vperm.xlu0 %2864, %v2775
    %v2866 = vpop.permute.xlu0 %2865
    %2869 = vset.pattern.permute.xlu0 0
    %2870 = vperm.xlu0 %2869, %v2776
    %v2871 = vpop.permute.xlu0 %2870
    %2874 = vset.pattern.permute.xlu0 0
    %2875 = vperm.xlu0 %2874, %v2777
    %v2876 = vpop.permute.xlu0 %2875
    %2879 = vset.pattern.permute.xlu0 0
    %2880 = vperm.xlu0 %2879, %v2778
    %v2881 = vpop.permute.xlu0 %2880
    %v2883 = vmul.f32 %v2787, %v2806
    %v2884 = vmul.f32 %v2788, %v2811
    %v2885 = vmul.f32 %v2789, %v2816
    %v2886 = vmul.f32 %v2790, %v2821
    %v2887 = vmul.f32 %v2791, %v2826
    %v2888 = vmul.f32 %v2792, %v2831
    %v2889 = vmul.f32 %v2793, %v2836
    %v2890 = vmul.f32 %v2794, %v2841
    %v2891 = vmul.f32 %v2795, %v2846
    %v2892 = vmul.f32 %v2796, %v2851
    %v2893 = vmul.f32 %v2797, %v2856
    %v2894 = vmul.f32 %v2798, %v2861
    %v2895 = vmul.f32 %v2799, %v2866
    %v2896 = vmul.f32 %v2800, %v2871
    %v2897 = vmul.f32 %v2801, %v2876
    %v2898 = vmul.f32 %v2802, %v2881
    %v2899 = vadd.f32 %v2714, %v2883
    %v2900 = vadd.f32 %v2715, %v2884
    %v2901 = vadd.f32 %v2716, %v2885
    %v2902 = vadd.f32 %v2717, %v2886
    %v2903 = vadd.f32 %v2718, %v2887
    %v2904 = vadd.f32 %v2719, %v2888
    %v2905 = vadd.f32 %v2720, %v2889
    %v2906 = vadd.f32 %v2721, %v2890
    %v2907 = vadd.f32 %v2722, %v2891
    %v2908 = vadd.f32 %v2723, %v2892
    %v2909 = vadd.f32 %v2724, %v2893
    %v2910 = vadd.f32 %v2725, %v2894
    %v2911 = vadd.f32 %v2726, %v2895
    %v2912 = vadd.f32 %v2727, %v2896
    %v2913 = vadd.f32 %v2728, %v2897
    %v2914 = vadd.f32 %v2729, %v2898
    %v2915 = vmul.f32 %v708, %v1172
    %v2916 = vmul.f32 %v709, %v1173
    %v2917 = vmul.f32 %v710, %v1174
    %v2918 = vmul.f32 %v711, %v1175
    %v2919 = vmul.f32 %v712, %v1176
    %v2920 = vmul.f32 %v713, %v1177
    %v2921 = vmul.f32 %v714, %v1178
    %v2922 = vmul.f32 %v715, %v1179
    %v2923 = vmul.f32 %v716, %v1180
    %v2924 = vmul.f32 %v717, %v1181
    %v2925 = vmul.f32 %v718, %v1182
    %v2926 = vmul.f32 %v719, %v1183
    %v2927 = vmul.f32 %v720, %v1184
    %v2928 = vmul.f32 %v721, %v1185
    %v2929 = vmul.f32 %v722, %v1186
    %v2930 = vmul.f32 %v723, %v1187
    %s2931 = scalar_lea.vmem %s7, 7
    %v2932 = vld [vmem:[%s2931] sm:$0x1]
    %v2934 = vlaneseq
    %v2935 = vshrl.u32 %v2934, 7
    %v2936 = vsub.s32 0, %v2935
    %v2937 = vrot.slane %v2932, %v2936
    %v2939 = vmul.f32 %v1672, %v2937
    %v2940 = vmul.f32 %v1671, %v2937
    %v2941 = vmul.f32 %v1686, %v2937
    %v2942 = vmul.f32 %v1685, %v2937
    %v2943 = vmul.f32 %v1684, %v2937
    %v2944 = vmul.f32 %v1683, %v2937
    %v2945 = vmul.f32 %v1682, %v2937
    %v2946 = vmul.f32 %v1681, %v2937
    %v2947 = vmul.f32 %v1680, %v2937
    %v2948 = vmul.f32 %v1679, %v2937
    %v2949 = vmul.f32 %v1678, %v2937
    %v2950 = vmul.f32 %v1677, %v2937
    %v2951 = vmul.f32 %v1676, %v2937
    %v2952 = vmul.f32 %v1675, %v2937
    %v2953 = vmul.f32 %v1674, %v2937
    %v2954 = vmul.f32 %v1673, %v2937
    %2956 = vset.pattern.permute.xlu0 0
    %2957 = vperm.xlu0 %2956, %v2915
    %v2958 = vpop.permute.xlu0 %2957
    %2961 = vset.pattern.permute.xlu0 0
    %2962 = vperm.xlu0 %2961, %v2916
    %v2963 = vpop.permute.xlu0 %2962
    %2966 = vset.pattern.permute.xlu0 0
    %2967 = vperm.xlu0 %2966, %v2917
    %v2968 = vpop.permute.xlu0 %2967
    %2971 = vset.pattern.permute.xlu0 0
    %2972 = vperm.xlu0 %2971, %v2918
    %v2973 = vpop.permute.xlu0 %2972
    %2976 = vset.pattern.permute.xlu0 0
    %2977 = vperm.xlu0 %2976, %v2919
    %v2978 = vpop.permute.xlu0 %2977
    %2981 = vset.pattern.permute.xlu0 0
    %2982 = vperm.xlu0 %2981, %v2920
    %v2983 = vpop.permute.xlu0 %2982
    %2986 = vset.pattern.permute.xlu0 0
    %2987 = vperm.xlu0 %2986, %v2921
    %v2988 = vpop.permute.xlu0 %2987
    %2991 = vset.pattern.permute.xlu0 0
    %2992 = vperm.xlu0 %2991, %v2922
    %v2993 = vpop.permute.xlu0 %2992
    %2996 = vset.pattern.permute.xlu0 0
    %2997 = vperm.xlu0 %2996, %v2923
    %v2998 = vpop.permute.xlu0 %2997
    %3001 = vset.pattern.permute.xlu0 0
    %3002 = vperm.xlu0 %3001, %v2924
    %v3003 = vpop.permute.xlu0 %3002
    %3006 = vset.pattern.permute.xlu0 0
    %3007 = vperm.xlu0 %3006, %v2925
    %v3008 = vpop.permute.xlu0 %3007
    %3011 = vset.pattern.permute.xlu0 0
    %3012 = vperm.xlu0 %3011, %v2926
    %v3013 = vpop.permute.xlu0 %3012
    %3016 = vset.pattern.permute.xlu0 0
    %3017 = vperm.xlu0 %3016, %v2927
    %v3018 = vpop.permute.xlu0 %3017
    %3021 = vset.pattern.permute.xlu0 0
    %3022 = vperm.xlu0 %3021, %v2928
    %v3023 = vpop.permute.xlu0 %3022
    %3026 = vset.pattern.permute.xlu0 0
    %3027 = vperm.xlu0 %3026, %v2929
    %v3028 = vpop.permute.xlu0 %3027
    %3031 = vset.pattern.permute.xlu0 0
    %3032 = vperm.xlu0 %3031, %v2930
    %v3033 = vpop.permute.xlu0 %3032
    %v3035 = vmul.f32 %v2939, %v2958
    %v3036 = vmul.f32 %v2940, %v2963
    %v3037 = vmul.f32 %v2941, %v2968
    %v3038 = vmul.f32 %v2942, %v2973
    %v3039 = vmul.f32 %v2943, %v2978
    %v3040 = vmul.f32 %v2944, %v2983
    %v3041 = vmul.f32 %v2945, %v2988
    %v3042 = vmul.f32 %v2946, %v2993
    %v3043 = vmul.f32 %v2947, %v2998
    %v3044 = vmul.f32 %v2948, %v3003
    %v3045 = vmul.f32 %v2949, %v3008
    %v3046 = vmul.f32 %v2950, %v3013
    %v3047 = vmul.f32 %v2951, %v3018
    %v3048 = vmul.f32 %v2952, %v3023
    %v3049 = vmul.f32 %v2953, %v3028
    %v3050 = vmul.f32 %v2954, %v3033
    %v3051 = vadd.f32 %v2899, %v3035
    %v3052 = vadd.f32 %v2900, %v3036
    %v3053 = vadd.f32 %v2901, %v3037
    %v3054 = vadd.f32 %v2902, %v3038
    %v3055 = vadd.f32 %v2903, %v3039
    %v3056 = vadd.f32 %v2904, %v3040
    %v3057 = vadd.f32 %v2905, %v3041
    %v3058 = vadd.f32 %v2906, %v3042
    %v3059 = vadd.f32 %v2907, %v3043
    %v3060 = vadd.f32 %v2908, %v3044
    %v3061 = vadd.f32 %v2909, %v3045
    %v3062 = vadd.f32 %v2910, %v3046
    %v3063 = vadd.f32 %v2911, %v3047
    %v3064 = vadd.f32 %v2912, %v3048
    %v3065 = vadd.f32 %v2913, %v3049
    %v3066 = vadd.f32 %v2914, %v3050
    %v3067 = vmul.f32 %v708, %v1252
    %v3068 = vmul.f32 %v709, %v1253
    %v3069 = vmul.f32 %v710, %v1254
    %v3070 = vmul.f32 %v711, %v1255
    %v3071 = vmul.f32 %v712, %v1256
    %v3072 = vmul.f32 %v713, %v1257
    %v3073 = vmul.f32 %v714, %v1258
    %v3074 = vmul.f32 %v715, %v1259
    %v3075 = vmul.f32 %v716, %v1260
    %v3076 = vmul.f32 %v717, %v1261
    %v3077 = vmul.f32 %v718, %v1262
    %v3078 = vmul.f32 %v719, %v1263
    %v3079 = vmul.f32 %v720, %v1264
    %v3080 = vmul.f32 %v721, %v1265
    %v3081 = vmul.f32 %v722, %v1266
    %v3082 = vmul.f32 %v723, %v1267
    %s3083 = scalar_lea.vmem %s7, 8
    %v3084 = vld [vmem:[%s3083] sm:$0x1]
    %v3086 = vlaneseq
    %v3087 = vshrl.u32 %v3086, 7
    %v3088 = vsub.s32 0, %v3087
    %v3089 = vrot.slane %v3084, %v3088
    %v3091 = vmul.f32 %v1856, %v3089
    %v3092 = vmul.f32 %v1855, %v3089
    %v3093 = vmul.f32 %v1870, %v3089
    %v3094 = vmul.f32 %v1869, %v3089
    %v3095 = vmul.f32 %v1868, %v3089
    %v3096 = vmul.f32 %v1867, %v3089
    %v3097 = vmul.f32 %v1866, %v3089
    %v3098 = vmul.f32 %v1865, %v3089
    %v3099 = vmul.f32 %v1864, %v3089
    %v3100 = vmul.f32 %v1863, %v3089
    %v3101 = vmul.f32 %v1862, %v3089
    %v3102 = vmul.f32 %v1861, %v3089
    %v3103 = vmul.f32 %v1860, %v3089
    %v3104 = vmul.f32 %v1859, %v3089
    %v3105 = vmul.f32 %v1858, %v3089
    %v3106 = vmul.f32 %v1857, %v3089
    %3108 = vset.pattern.permute.xlu0 0
    %3109 = vperm.xlu0 %3108, %v3067
    %v3110 = vpop.permute.xlu0 %3109
    %3113 = vset.pattern.permute.xlu0 0
    %3114 = vperm.xlu0 %3113, %v3068
    %v3115 = vpop.permute.xlu0 %3114
    %3118 = vset.pattern.permute.xlu0 0
    %3119 = vperm.xlu0 %3118, %v3069
    %v3120 = vpop.permute.xlu0 %3119
    %3123 = vset.pattern.permute.xlu0 0
    %3124 = vperm.xlu0 %3123, %v3070
    %v3125 = vpop.permute.xlu0 %3124
    %3128 = vset.pattern.permute.xlu0 0
    %3129 = vperm.xlu0 %3128, %v3071
    %v3130 = vpop.permute.xlu0 %3129
    %3133 = vset.pattern.permute.xlu0 0
    %3134 = vperm.xlu0 %3133, %v3072
    %v3135 = vpop.permute.xlu0 %3134
    %3138 = vset.pattern.permute.xlu0 0
    %3139 = vperm.xlu0 %3138, %v3073
    %v3140 = vpop.permute.xlu0 %3139
    %3143 = vset.pattern.permute.xlu0 0
    %3144 = vperm.xlu0 %3143, %v3074
    %v3145 = vpop.permute.xlu0 %3144
    %3148 = vset.pattern.permute.xlu0 0
    %3149 = vperm.xlu0 %3148, %v3075
    %v3150 = vpop.permute.xlu0 %3149
    %3153 = vset.pattern.permute.xlu0 0
    %3154 = vperm.xlu0 %3153, %v3076
    %v3155 = vpop.permute.xlu0 %3154
    %3158 = vset.pattern.permute.xlu0 0
    %3159 = vperm.xlu0 %3158, %v3077
    %v3160 = vpop.permute.xlu0 %3159
    %3163 = vset.pattern.permute.xlu0 0
    %3164 = vperm.xlu0 %3163, %v3078
    %v3165 = vpop.permute.xlu0 %3164
    %3168 = vset.pattern.permute.xlu0 0
    %3169 = vperm.xlu0 %3168, %v3079
    %v3170 = vpop.permute.xlu0 %3169
    %3173 = vset.pattern.permute.xlu0 0
    %3174 = vperm.xlu0 %3173, %v3080
    %v3175 = vpop.permute.xlu0 %3174
    %3178 = vset.pattern.permute.xlu0 0
    %3179 = vperm.xlu0 %3178, %v3081
    %v3180 = vpop.permute.xlu0 %3179
    %3183 = vset.pattern.permute.xlu0 0
    %3184 = vperm.xlu0 %3183, %v3082
    %v3185 = vpop.permute.xlu0 %3184
    %v3187 = vmul.f32 %v3091, %v3110
    %v3188 = vmul.f32 %v3092, %v3115
    %v3189 = vmul.f32 %v3093, %v3120
    %v3190 = vmul.f32 %v3094, %v3125
    %v3191 = vmul.f32 %v3095, %v3130
    %v3192 = vmul.f32 %v3096, %v3135
    %v3193 = vmul.f32 %v3097, %v3140
    %v3194 = vmul.f32 %v3098, %v3145
    %v3195 = vmul.f32 %v3099, %v3150
    %v3196 = vmul.f32 %v3100, %v3155
    %v3197 = vmul.f32 %v3101, %v3160
    %v3198 = vmul.f32 %v3102, %v3165
    %v3199 = vmul.f32 %v3103, %v3170
    %v3200 = vmul.f32 %v3104, %v3175
    %v3201 = vmul.f32 %v3105, %v3180
    %v3202 = vmul.f32 %v3106, %v3185
    %v3203 = vadd.f32 %v3051, %v3187
    %v3204 = vadd.f32 %v3052, %v3188
    %v3205 = vadd.f32 %v3053, %v3189
    %v3206 = vadd.f32 %v3054, %v3190
    %v3207 = vadd.f32 %v3055, %v3191
    %v3208 = vadd.f32 %v3056, %v3192
    %v3209 = vadd.f32 %v3057, %v3193
    %v3210 = vadd.f32 %v3058, %v3194
    %v3211 = vadd.f32 %v3059, %v3195
    %v3212 = vadd.f32 %v3060, %v3196
    %v3213 = vadd.f32 %v3061, %v3197
    %v3214 = vadd.f32 %v3062, %v3198
    %v3215 = vadd.f32 %v3063, %v3199
    %v3216 = vadd.f32 %v3064, %v3200
    %v3217 = vadd.f32 %v3065, %v3201
    %v3218 = vadd.f32 %v3066, %v3202
    %v3219 = vmul.f32 %v708, %v1332
    %v3220 = vmul.f32 %v709, %v1333
    %v3221 = vmul.f32 %v710, %v1334
    %v3222 = vmul.f32 %v711, %v1335
    %v3223 = vmul.f32 %v712, %v1336
    %v3224 = vmul.f32 %v713, %v1337
    %v3225 = vmul.f32 %v714, %v1338
    %v3226 = vmul.f32 %v715, %v1339
    %v3227 = vmul.f32 %v716, %v1340
    %v3228 = vmul.f32 %v717, %v1341
    %v3229 = vmul.f32 %v718, %v1342
    %v3230 = vmul.f32 %v719, %v1343
    %v3231 = vmul.f32 %v720, %v1344
    %v3232 = vmul.f32 %v721, %v1345
    %v3233 = vmul.f32 %v722, %v1346
    %v3234 = vmul.f32 %v723, %v1347
    %s3235 = scalar_lea.vmem %s7, 9
    %v3236 = vld [vmem:[%s3235] sm:$0x1]
    %v3238 = vlaneseq
    %v3239 = vshrl.u32 %v3238, 7
    %v3240 = vsub.s32 0, %v3239
    %v3241 = vrot.slane %v3236, %v3240
    %v3243 = vmul.f32 %v2041, %v3241
    %v3244 = vmul.f32 %v2040, %v3241
    %v3245 = vmul.f32 %v2055, %v3241
    %v3246 = vmul.f32 %v2054, %v3241
    %v3247 = vmul.f32 %v2053, %v3241
    %v3248 = vmul.f32 %v2052, %v3241
    %v3249 = vmul.f32 %v2051, %v3241
    %v3250 = vmul.f32 %v2050, %v3241
    %v3251 = vmul.f32 %v2049, %v3241
    %v3252 = vmul.f32 %v2048, %v3241
    %v3253 = vmul.f32 %v2047, %v3241
    %v3254 = vmul.f32 %v2046, %v3241
    %v3255 = vmul.f32 %v2045, %v3241
    %v3256 = vmul.f32 %v2044, %v3241
    %v3257 = vmul.f32 %v2043, %v3241
    %v3258 = vmul.f32 %v2042, %v3241
    %3260 = vset.pattern.permute.xlu0 0
    %3261 = vperm.xlu0 %3260, %v3219
    %v3262 = vpop.permute.xlu0 %3261
    %3265 = vset.pattern.permute.xlu0 0
    %3266 = vperm.xlu0 %3265, %v3220
    %v3267 = vpop.permute.xlu0 %3266
    %3270 = vset.pattern.permute.xlu0 0
    %3271 = vperm.xlu0 %3270, %v3221
    %v3272 = vpop.permute.xlu0 %3271
    %3275 = vset.pattern.permute.xlu0 0
    %3276 = vperm.xlu0 %3275, %v3222
    %v3277 = vpop.permute.xlu0 %3276
    %3280 = vset.pattern.permute.xlu0 0
    %3281 = vperm.xlu0 %3280, %v3223
    %v3282 = vpop.permute.xlu0 %3281
    %3285 = vset.pattern.permute.xlu0 0
    %3286 = vperm.xlu0 %3285, %v3224
    %v3287 = vpop.permute.xlu0 %3286
    %3290 = vset.pattern.permute.xlu0 0
    %3291 = vperm.xlu0 %3290, %v3225
    %v3292 = vpop.permute.xlu0 %3291
    %3295 = vset.pattern.permute.xlu0 0
    %3296 = vperm.xlu0 %3295, %v3226
    %v3297 = vpop.permute.xlu0 %3296
    %3300 = vset.pattern.permute.xlu0 0
    %3301 = vperm.xlu0 %3300, %v3227
    %v3302 = vpop.permute.xlu0 %3301
    %3305 = vset.pattern.permute.xlu0 0
    %3306 = vperm.xlu0 %3305, %v3228
    %v3307 = vpop.permute.xlu0 %3306
    %3310 = vset.pattern.permute.xlu0 0
    %3311 = vperm.xlu0 %3310, %v3229
    %v3312 = vpop.permute.xlu0 %3311
    %3315 = vset.pattern.permute.xlu0 0
    %3316 = vperm.xlu0 %3315, %v3230
    %v3317 = vpop.permute.xlu0 %3316
    %3320 = vset.pattern.permute.xlu0 0
    %3321 = vperm.xlu0 %3320, %v3231
    %v3322 = vpop.permute.xlu0 %3321
    %3325 = vset.pattern.permute.xlu0 0
    %3326 = vperm.xlu0 %3325, %v3232
    %v3327 = vpop.permute.xlu0 %3326
    %3330 = vset.pattern.permute.xlu0 0
    %3331 = vperm.xlu0 %3330, %v3233
    %v3332 = vpop.permute.xlu0 %3331
    %3335 = vset.pattern.permute.xlu0 0
    %3336 = vperm.xlu0 %3335, %v3234
    %v3337 = vpop.permute.xlu0 %3336
    %v3339 = vmul.f32 %v3243, %v3262
    %v3340 = vmul.f32 %v3244, %v3267
    %v3341 = vmul.f32 %v3245, %v3272
    %v3342 = vmul.f32 %v3246, %v3277
    %v3343 = vmul.f32 %v3247, %v3282
    %v3344 = vmul.f32 %v3248, %v3287
    %v3345 = vmul.f32 %v3249, %v3292
    %v3346 = vmul.f32 %v3250, %v3297
    %v3347 = vmul.f32 %v3251, %v3302
    %v3348 = vmul.f32 %v3252, %v3307
    %v3349 = vmul.f32 %v3253, %v3312
    %v3350 = vmul.f32 %v3254, %v3317
    %v3351 = vmul.f32 %v3255, %v3322
    %v3352 = vmul.f32 %v3256, %v3327
    %v3353 = vmul.f32 %v3257, %v3332
    %v3354 = vmul.f32 %v3258, %v3337
    %v3355 = vadd.f32 %v3203, %v3339
    %v3356 = vadd.f32 %v3204, %v3340
    %v3357 = vadd.f32 %v3205, %v3341
    %v3358 = vadd.f32 %v3206, %v3342
    %v3359 = vadd.f32 %v3207, %v3343
    %v3360 = vadd.f32 %v3208, %v3344
    %v3361 = vadd.f32 %v3209, %v3345
    %v3362 = vadd.f32 %v3210, %v3346
    %v3363 = vadd.f32 %v3211, %v3347
    %v3364 = vadd.f32 %v3212, %v3348
    %v3365 = vadd.f32 %v3213, %v3349
    %v3366 = vadd.f32 %v3214, %v3350
    %v3367 = vadd.f32 %v3215, %v3351
    %v3368 = vadd.f32 %v3216, %v3352
    %v3369 = vadd.f32 %v3217, %v3353
    %v3370 = vadd.f32 %v3218, %v3354
    %v3371 = vmul.f32 %v708, %v1396
    %v3372 = vmul.f32 %v709, %v1397
    %v3373 = vmul.f32 %v710, %v1398
    %v3374 = vmul.f32 %v711, %v1399
    %v3375 = vmul.f32 %v712, %v1400
    %v3376 = vmul.f32 %v713, %v1401
    %v3377 = vmul.f32 %v714, %v1402
    %v3378 = vmul.f32 %v715, %v1403
    %v3379 = vmul.f32 %v716, %v1404
    %v3380 = vmul.f32 %v717, %v1405
    %v3381 = vmul.f32 %v718, %v1406
    %v3382 = vmul.f32 %v719, %v1407
    %v3383 = vmul.f32 %v720, %v1408
    %v3384 = vmul.f32 %v721, %v1409
    %v3385 = vmul.f32 %v722, %v1410
    %v3386 = vmul.f32 %v723, %v1411
    %s3387 = scalar_lea.vmem %s7, 10
    %v3388 = vld [vmem:[%s3387] sm:$0x1]
    %v3390 = vlaneseq
    %v3391 = vshrl.u32 %v3390, 7
    %v3392 = vsub.s32 0, %v3391
    %v3393 = vrot.slane %v3388, %v3392
    %v3395 = vmul.f32 %v530, %v3393
    %v3396 = vmul.f32 %v531, %v3393
    %v3397 = vmul.f32 %v516, %v3393
    %v3398 = vmul.f32 %v517, %v3393
    %v3399 = vmul.f32 %v518, %v3393
    %v3400 = vmul.f32 %v519, %v3393
    %v3401 = vmul.f32 %v520, %v3393
    %v3402 = vmul.f32 %v521, %v3393
    %v3403 = vmul.f32 %v522, %v3393
    %v3404 = vmul.f32 %v523, %v3393
    %v3405 = vmul.f32 %v524, %v3393
    %v3406 = vmul.f32 %v525, %v3393
    %v3407 = vmul.f32 %v526, %v3393
    %v3408 = vmul.f32 %v527, %v3393
    %v3409 = vmul.f32 %v528, %v3393
    %v3410 = vmul.f32 %v529, %v3393
    %3412 = vset.pattern.permute.xlu0 0
    %3413 = vperm.xlu0 %3412, %v3371
    %v3414 = vpop.permute.xlu0 %3413
    %3417 = vset.pattern.permute.xlu0 0
    %3418 = vperm.xlu0 %3417, %v3372
    %v3419 = vpop.permute.xlu0 %3418
    %3422 = vset.pattern.permute.xlu0 0
    %3423 = vperm.xlu0 %3422, %v3373
    %v3424 = vpop.permute.xlu0 %3423
    %3427 = vset.pattern.permute.xlu0 0
    %3428 = vperm.xlu0 %3427, %v3374
    %v3429 = vpop.permute.xlu0 %3428
    %3432 = vset.pattern.permute.xlu0 0
    %3433 = vperm.xlu0 %3432, %v3375
    %v3434 = vpop.permute.xlu0 %3433
    %3437 = vset.pattern.permute.xlu0 0
    %3438 = vperm.xlu0 %3437, %v3376
    %v3439 = vpop.permute.xlu0 %3438
    %3442 = vset.pattern.permute.xlu0 0
    %3443 = vperm.xlu0 %3442, %v3377
    %v3444 = vpop.permute.xlu0 %3443
    %3447 = vset.pattern.permute.xlu0 0
    %3448 = vperm.xlu0 %3447, %v3378
    %v3449 = vpop.permute.xlu0 %3448
    %3452 = vset.pattern.permute.xlu0 0
    %3453 = vperm.xlu0 %3452, %v3379
    %v3454 = vpop.permute.xlu0 %3453
    %3457 = vset.pattern.permute.xlu0 0
    %3458 = vperm.xlu0 %3457, %v3380
    %v3459 = vpop.permute.xlu0 %3458
    %3462 = vset.pattern.permute.xlu0 0
    %3463 = vperm.xlu0 %3462, %v3381
    %v3464 = vpop.permute.xlu0 %3463
    %3467 = vset.pattern.permute.xlu0 0
    %3468 = vperm.xlu0 %3467, %v3382
    %v3469 = vpop.permute.xlu0 %3468
    %3472 = vset.pattern.permute.xlu0 0
    %3473 = vperm.xlu0 %3472, %v3383
    %v3474 = vpop.permute.xlu0 %3473
    %3477 = vset.pattern.permute.xlu0 0
    %3478 = vperm.xlu0 %3477, %v3384
    %v3479 = vpop.permute.xlu0 %3478
    %3482 = vset.pattern.permute.xlu0 0
    %3483 = vperm.xlu0 %3482, %v3385
    %v3484 = vpop.permute.xlu0 %3483
    %3487 = vset.pattern.permute.xlu0 0
    %3488 = vperm.xlu0 %3487, %v3386
    %v3489 = vpop.permute.xlu0 %3488
    %v3491 = vmul.f32 %v3395, %v3414
    %v3492 = vmul.f32 %v3396, %v3419
    %v3493 = vmul.f32 %v3397, %v3424
    %v3494 = vmul.f32 %v3398, %v3429
    %v3495 = vmul.f32 %v3399, %v3434
    %v3496 = vmul.f32 %v3400, %v3439
    %v3497 = vmul.f32 %v3401, %v3444
    %v3498 = vmul.f32 %v3402, %v3449
    %v3499 = vmul.f32 %v3403, %v3454
    %v3500 = vmul.f32 %v3404, %v3459
    %v3501 = vmul.f32 %v3405, %v3464
    %v3502 = vmul.f32 %v3406, %v3469
    %v3503 = vmul.f32 %v3407, %v3474
    %v3504 = vmul.f32 %v3408, %v3479
    %v3505 = vmul.f32 %v3409, %v3484
    %v3506 = vmul.f32 %v3410, %v3489
    %v3507 = vadd.f32 %v3355, %v3491
    %v3508 = vadd.f32 %v3356, %v3492
    %v3509 = vadd.f32 %v3357, %v3493
    %v3510 = vadd.f32 %v3358, %v3494
    %v3511 = vadd.f32 %v3359, %v3495
    %v3512 = vadd.f32 %v3360, %v3496
    %v3513 = vadd.f32 %v3361, %v3497
    %v3514 = vadd.f32 %v3362, %v3498
    %v3515 = vadd.f32 %v3363, %v3499
    %v3516 = vadd.f32 %v3364, %v3500
    %v3517 = vadd.f32 %v3365, %v3501
    %v3518 = vadd.f32 %v3366, %v3502
    %v3519 = vadd.f32 %v3367, %v3503
    %v3520 = vadd.f32 %v3368, %v3504
    %v3521 = vadd.f32 %v3369, %v3505
    %v3522 = vadd.f32 %v3370, %v3506
    %v3523 = vmul.f32 %v708, %v1476
    %v3524 = vmul.f32 %v709, %v1477
    %v3525 = vmul.f32 %v710, %v1478
    %v3526 = vmul.f32 %v711, %v1479
    %v3527 = vmul.f32 %v712, %v1480
    %v3528 = vmul.f32 %v713, %v1481
    %v3529 = vmul.f32 %v714, %v1482
    %v3530 = vmul.f32 %v715, %v1483
    %v3531 = vmul.f32 %v716, %v1484
    %v3532 = vmul.f32 %v717, %v1485
    %v3533 = vmul.f32 %v718, %v1486
    %v3534 = vmul.f32 %v719, %v1487
    %v3535 = vmul.f32 %v720, %v1488
    %v3536 = vmul.f32 %v721, %v1489
    %v3537 = vmul.f32 %v722, %v1490
    %v3538 = vmul.f32 %v723, %v1491
    %s3539 = scalar_lea.vmem %s7, 11
    %v3540 = vld [vmem:[%s3539] sm:$0x1]
    %v3542 = vlaneseq
    %v3543 = vshrl.u32 %v3542, 7
    %v3544 = vsub.s32 0, %v3543
    %v3545 = vrot.slane %v3540, %v3544
    %v3547 = vmul.f32 %v2377, %v3545
    %v3548 = vmul.f32 %v2392, %v3545
    %v3549 = vmul.f32 %v2391, %v3545
    %v3550 = vmul.f32 %v2390, %v3545
    %v3551 = vmul.f32 %v2389, %v3545
    %v3552 = vmul.f32 %v2388, %v3545
    %v3553 = vmul.f32 %v2387, %v3545
    %v3554 = vmul.f32 %v2386, %v3545
    %v3555 = vmul.f32 %v2385, %v3545
    %v3556 = vmul.f32 %v2384, %v3545
    %v3557 = vmul.f32 %v2383, %v3545
    %v3558 = vmul.f32 %v2382, %v3545
    %v3559 = vmul.f32 %v2381, %v3545
    %v3560 = vmul.f32 %v2380, %v3545
    %v3561 = vmul.f32 %v2379, %v3545
    %v3562 = vmul.f32 %v2378, %v3545
    %3564 = vset.pattern.permute.xlu0 0
    %3565 = vperm.xlu0 %3564, %v3523
    %v3566 = vpop.permute.xlu0 %3565
    %3569 = vset.pattern.permute.xlu0 0
    %3570 = vperm.xlu0 %3569, %v3524
    %v3571 = vpop.permute.xlu0 %3570
    %3574 = vset.pattern.permute.xlu0 0
    %3575 = vperm.xlu0 %3574, %v3525
    %v3576 = vpop.permute.xlu0 %3575
    %3579 = vset.pattern.permute.xlu0 0
    %3580 = vperm.xlu0 %3579, %v3526
    %v3581 = vpop.permute.xlu0 %3580
    %3584 = vset.pattern.permute.xlu0 0
    %3585 = vperm.xlu0 %3584, %v3527
    %v3586 = vpop.permute.xlu0 %3585
    %3589 = vset.pattern.permute.xlu0 0
    %3590 = vperm.xlu0 %3589, %v3528
    %v3591 = vpop.permute.xlu0 %3590
    %3594 = vset.pattern.permute.xlu0 0
    %3595 = vperm.xlu0 %3594, %v3529
    %v3596 = vpop.permute.xlu0 %3595
    %3599 = vset.pattern.permute.xlu0 0
    %3600 = vperm.xlu0 %3599, %v3530
    %v3601 = vpop.permute.xlu0 %3600
    %3604 = vset.pattern.permute.xlu0 0
    %3605 = vperm.xlu0 %3604, %v3531
    %v3606 = vpop.permute.xlu0 %3605
    %3609 = vset.pattern.permute.xlu0 0
    %3610 = vperm.xlu0 %3609, %v3532
    %v3611 = vpop.permute.xlu0 %3610
    %3614 = vset.pattern.permute.xlu0 0
    %3615 = vperm.xlu0 %3614, %v3533
    %v3616 = vpop.permute.xlu0 %3615
    %3619 = vset.pattern.permute.xlu0 0
    %3620 = vperm.xlu0 %3619, %v3534
    %v3621 = vpop.permute.xlu0 %3620
    %3624 = vset.pattern.permute.xlu0 0
    %3625 = vperm.xlu0 %3624, %v3535
    %v3626 = vpop.permute.xlu0 %3625
    %3629 = vset.pattern.permute.xlu0 0
    %3630 = vperm.xlu0 %3629, %v3536
    %v3631 = vpop.permute.xlu0 %3630
    %3634 = vset.pattern.permute.xlu0 0
    %3635 = vperm.xlu0 %3634, %v3537
    %v3636 = vpop.permute.xlu0 %3635
    %3639 = vset.pattern.permute.xlu0 0
    %3640 = vperm.xlu0 %3639, %v3538
    %v3641 = vpop.permute.xlu0 %3640
    %v3643 = vmul.f32 %v3547, %v3566
    %v3644 = vmul.f32 %v3548, %v3571
    %v3645 = vmul.f32 %v3549, %v3576
    %v3646 = vmul.f32 %v3550, %v3581
    %v3647 = vmul.f32 %v3551, %v3586
    %v3648 = vmul.f32 %v3552, %v3591
    %v3649 = vmul.f32 %v3553, %v3596
    %v3650 = vmul.f32 %v3554, %v3601
    %v3651 = vmul.f32 %v3555, %v3606
    %v3652 = vmul.f32 %v3556, %v3611
    %v3653 = vmul.f32 %v3557, %v3616
    %v3654 = vmul.f32 %v3558, %v3621
    %v3655 = vmul.f32 %v3559, %v3626
    %v3656 = vmul.f32 %v3560, %v3631
    %v3657 = vmul.f32 %v3561, %v3636
    %v3658 = vmul.f32 %v3562, %v3641
    %v3659 = vadd.f32 %v3507, %v3643
    %v3660 = vadd.f32 %v3508, %v3644
    %v3661 = vadd.f32 %v3509, %v3645
    %v3662 = vadd.f32 %v3510, %v3646
    %v3663 = vadd.f32 %v3511, %v3647
    %v3664 = vadd.f32 %v3512, %v3648
    %v3665 = vadd.f32 %v3513, %v3649
    %v3666 = vadd.f32 %v3514, %v3650
    %v3667 = vadd.f32 %v3515, %v3651
    %v3668 = vadd.f32 %v3516, %v3652
    %v3669 = vadd.f32 %v3517, %v3653
    %v3670 = vadd.f32 %v3518, %v3654
    %v3671 = vadd.f32 %v3519, %v3655
    %v3672 = vadd.f32 %v3520, %v3656
    %v3673 = vadd.f32 %v3521, %v3657
    %v3674 = vadd.f32 %v3522, %v3658
    %v3675 = vmul.f32 %v708, %v1556
    %v3676 = vmul.f32 %v709, %v1557
    %v3677 = vmul.f32 %v710, %v1558
    %v3678 = vmul.f32 %v711, %v1559
    %v3679 = vmul.f32 %v712, %v1560
    %v3680 = vmul.f32 %v713, %v1561
    %v3681 = vmul.f32 %v714, %v1562
    %v3682 = vmul.f32 %v715, %v1563
    %v3683 = vmul.f32 %v716, %v1564
    %v3684 = vmul.f32 %v717, %v1565
    %v3685 = vmul.f32 %v718, %v1566
    %v3686 = vmul.f32 %v719, %v1567
    %v3687 = vmul.f32 %v720, %v1568
    %v3688 = vmul.f32 %v721, %v1569
    %v3689 = vmul.f32 %v722, %v1570
    %v3690 = vmul.f32 %v723, %v1571
    %s3691 = scalar_lea.vmem %s7, 12
    %v3692 = vld [vmem:[%s3691] sm:$0x1]
    %v3694 = vlaneseq
    %v3695 = vshrl.u32 %v3694, 7
    %v3696 = vsub.s32 0, %v3695
    %v3697 = vrot.slane %v3692, %v3696
    %v3699 = vmul.f32 %v2562, %v3697
    %v3700 = vmul.f32 %v2577, %v3697
    %v3701 = vmul.f32 %v2576, %v3697
    %v3702 = vmul.f32 %v2575, %v3697
    %v3703 = vmul.f32 %v2574, %v3697
    %v3704 = vmul.f32 %v2573, %v3697
    %v3705 = vmul.f32 %v2572, %v3697
    %v3706 = vmul.f32 %v2571, %v3697
    %v3707 = vmul.f32 %v2570, %v3697
    %v3708 = vmul.f32 %v2569, %v3697
    %v3709 = vmul.f32 %v2568, %v3697
    %v3710 = vmul.f32 %v2567, %v3697
    %v3711 = vmul.f32 %v2566, %v3697
    %v3712 = vmul.f32 %v2565, %v3697
    %v3713 = vmul.f32 %v2564, %v3697
    %v3714 = vmul.f32 %v2563, %v3697
    %3716 = vset.pattern.permute.xlu0 0
    %3717 = vperm.xlu0 %3716, %v3675
    %v3718 = vpop.permute.xlu0 %3717
    %3721 = vset.pattern.permute.xlu0 0
    %3722 = vperm.xlu0 %3721, %v3676
    %v3723 = vpop.permute.xlu0 %3722
    %3726 = vset.pattern.permute.xlu0 0
    %3727 = vperm.xlu0 %3726, %v3677
    %v3728 = vpop.permute.xlu0 %3727
    %3731 = vset.pattern.permute.xlu0 0
    %3732 = vperm.xlu0 %3731, %v3678
    %v3733 = vpop.permute.xlu0 %3732
    %3736 = vset.pattern.permute.xlu0 0
    %3737 = vperm.xlu0 %3736, %v3679
    %v3738 = vpop.permute.xlu0 %3737
    %3741 = vset.pattern.permute.xlu0 0
    %3742 = vperm.xlu0 %3741, %v3680
    %v3743 = vpop.permute.xlu0 %3742
    %3746 = vset.pattern.permute.xlu0 0
    %3747 = vperm.xlu0 %3746, %v3681
    %v3748 = vpop.permute.xlu0 %3747
    %3751 = vset.pattern.permute.xlu0 0
    %3752 = vperm.xlu0 %3751, %v3682
    %v3753 = vpop.permute.xlu0 %3752
    %3756 = vset.pattern.permute.xlu0 0
    %3757 = vperm.xlu0 %3756, %v3683
    %v3758 = vpop.permute.xlu0 %3757
    %3761 = vset.pattern.permute.xlu0 0
    %3762 = vperm.xlu0 %3761, %v3684
    %v3763 = vpop.permute.xlu0 %3762
    %3766 = vset.pattern.permute.xlu0 0
    %3767 = vperm.xlu0 %3766, %v3685
    %v3768 = vpop.permute.xlu0 %3767
    %3771 = vset.pattern.permute.xlu0 0
    %3772 = vperm.xlu0 %3771, %v3686
    %v3773 = vpop.permute.xlu0 %3772
    %3776 = vset.pattern.permute.xlu0 0
    %3777 = vperm.xlu0 %3776, %v3687
    %v3778 = vpop.permute.xlu0 %3777
    %3781 = vset.pattern.permute.xlu0 0
    %3782 = vperm.xlu0 %3781, %v3688
    %v3783 = vpop.permute.xlu0 %3782
    %3786 = vset.pattern.permute.xlu0 0
    %3787 = vperm.xlu0 %3786, %v3689
    %v3788 = vpop.permute.xlu0 %3787
    %3791 = vset.pattern.permute.xlu0 0
    %3792 = vperm.xlu0 %3791, %v3690
    %v3793 = vpop.permute.xlu0 %3792
    %v3795 = vmul.f32 %v3699, %v3718
    %v3796 = vmul.f32 %v3700, %v3723
    %v3797 = vmul.f32 %v3701, %v3728
    %v3798 = vmul.f32 %v3702, %v3733
    %v3799 = vmul.f32 %v3703, %v3738
    %v3800 = vmul.f32 %v3704, %v3743
    %v3801 = vmul.f32 %v3705, %v3748
    %v3802 = vmul.f32 %v3706, %v3753
    %v3803 = vmul.f32 %v3707, %v3758
    %v3804 = vmul.f32 %v3708, %v3763
    %v3805 = vmul.f32 %v3709, %v3768
    %v3806 = vmul.f32 %v3710, %v3773
    %v3807 = vmul.f32 %v3711, %v3778
    %v3808 = vmul.f32 %v3712, %v3783
    %v3809 = vmul.f32 %v3713, %v3788
    %v3810 = vmul.f32 %v3714, %v3793
    %v3811 = vadd.f32 %v3659, %v3795
    %v3812 = vadd.f32 %v3660, %v3796
    %v3813 = vadd.f32 %v3661, %v3797
    %v3814 = vadd.f32 %v3662, %v3798
    %v3815 = vadd.f32 %v3663, %v3799
    %v3816 = vadd.f32 %v3664, %v3800
    %v3817 = vadd.f32 %v3665, %v3801
    %v3818 = vadd.f32 %v3666, %v3802
    %v3819 = vadd.f32 %v3667, %v3803
    %v3820 = vadd.f32 %v3668, %v3804
    %v3821 = vadd.f32 %v3669, %v3805
    %v3822 = vadd.f32 %v3670, %v3806
    %v3823 = vadd.f32 %v3671, %v3807
    %v3824 = vadd.f32 %v3672, %v3808
    %v3825 = vadd.f32 %v3673, %v3809
    %v3826 = vadd.f32 %v3674, %v3810
    %v3827 = vmul.f32 %v708, %v1636
    %v3828 = vmul.f32 %v709, %v1637
    %v3829 = vmul.f32 %v710, %v1638
    %v3830 = vmul.f32 %v711, %v1639
    %v3831 = vmul.f32 %v712, %v1640
    %v3832 = vmul.f32 %v713, %v1641
    %v3833 = vmul.f32 %v714, %v1642
    %v3834 = vmul.f32 %v715, %v1643
    %v3835 = vmul.f32 %v716, %v1644
    %v3836 = vmul.f32 %v717, %v1645
    %v3837 = vmul.f32 %v718, %v1646
    %v3838 = vmul.f32 %v719, %v1647
    %v3839 = vmul.f32 %v720, %v1648
    %v3840 = vmul.f32 %v721, %v1649
    %v3841 = vmul.f32 %v722, %v1650
    %v3842 = vmul.f32 %v723, %v1651
    %s3843 = scalar_lea.vmem %s7, 13
    %v3844 = vld [vmem:[%s3843] sm:$0x1]
    %v3846 = vlaneseq
    %v3847 = vshrl.u32 %v3846, 7
    %v3848 = vsub.s32 0, %v3847
    %v3849 = vrot.slane %v3844, %v3848
    %v3851 = vmul.f32 %v2747, %v3849
    %v3852 = vmul.f32 %v2762, %v3849
    %v3853 = vmul.f32 %v2761, %v3849
    %v3854 = vmul.f32 %v2760, %v3849
    %v3855 = vmul.f32 %v2759, %v3849
    %v3856 = vmul.f32 %v2758, %v3849
    %v3857 = vmul.f32 %v2757, %v3849
    %v3858 = vmul.f32 %v2756, %v3849
    %v3859 = vmul.f32 %v2755, %v3849
    %v3860 = vmul.f32 %v2754, %v3849
    %v3861 = vmul.f32 %v2753, %v3849
    %v3862 = vmul.f32 %v2752, %v3849
    %v3863 = vmul.f32 %v2751, %v3849
    %v3864 = vmul.f32 %v2750, %v3849
    %v3865 = vmul.f32 %v2749, %v3849
    %v3866 = vmul.f32 %v2748, %v3849
    %3868 = vset.pattern.permute.xlu0 0
    %3869 = vperm.xlu0 %3868, %v3827
    %v3870 = vpop.permute.xlu0 %3869
    %3873 = vset.pattern.permute.xlu0 0
    %3874 = vperm.xlu0 %3873, %v3828
    %v3875 = vpop.permute.xlu0 %3874
    %3878 = vset.pattern.permute.xlu0 0
    %3879 = vperm.xlu0 %3878, %v3829
    %v3880 = vpop.permute.xlu0 %3879
    %3883 = vset.pattern.permute.xlu0 0
    %3884 = vperm.xlu0 %3883, %v3830
    %v3885 = vpop.permute.xlu0 %3884
    %3888 = vset.pattern.permute.xlu0 0
    %3889 = vperm.xlu0 %3888, %v3831
    %v3890 = vpop.permute.xlu0 %3889
    %3893 = vset.pattern.permute.xlu0 0
    %3894 = vperm.xlu0 %3893, %v3832
    %v3895 = vpop.permute.xlu0 %3894
    %3898 = vset.pattern.permute.xlu0 0
    %3899 = vperm.xlu0 %3898, %v3833
    %v3900 = vpop.permute.xlu0 %3899
    %3903 = vset.pattern.permute.xlu0 0
    %3904 = vperm.xlu0 %3903, %v3834
    %v3905 = vpop.permute.xlu0 %3904
    %3908 = vset.pattern.permute.xlu0 0
    %3909 = vperm.xlu0 %3908, %v3835
    %v3910 = vpop.permute.xlu0 %3909
    %3913 = vset.pattern.permute.xlu0 0
    %3914 = vperm.xlu0 %3913, %v3836
    %v3915 = vpop.permute.xlu0 %3914
    %3918 = vset.pattern.permute.xlu0 0
    %3919 = vperm.xlu0 %3918, %v3837
    %v3920 = vpop.permute.xlu0 %3919
    %3923 = vset.pattern.permute.xlu0 0
    %3924 = vperm.xlu0 %3923, %v3838
    %v3925 = vpop.permute.xlu0 %3924
    %3928 = vset.pattern.permute.xlu0 0
    %3929 = vperm.xlu0 %3928, %v3839
    %v3930 = vpop.permute.xlu0 %3929
    %3933 = vset.pattern.permute.xlu0 0
    %3934 = vperm.xlu0 %3933, %v3840
    %v3935 = vpop.permute.xlu0 %3934
    %3938 = vset.pattern.permute.xlu0 0
    %3939 = vperm.xlu0 %3938, %v3841
    %v3940 = vpop.permute.xlu0 %3939
    %3943 = vset.pattern.permute.xlu0 0
    %3944 = vperm.xlu0 %3943, %v3842
    %v3945 = vpop.permute.xlu0 %3944
    %v3947 = vmul.f32 %v3851, %v3870
    %v3948 = vmul.f32 %v3852, %v3875
    %v3949 = vmul.f32 %v3853, %v3880
    %v3950 = vmul.f32 %v3854, %v3885
    %v3951 = vmul.f32 %v3855, %v3890
    %v3952 = vmul.f32 %v3856, %v3895
    %v3953 = vmul.f32 %v3857, %v3900
    %v3954 = vmul.f32 %v3858, %v3905
    %v3955 = vmul.f32 %v3859, %v3910
    %v3956 = vmul.f32 %v3860, %v3915
    %v3957 = vmul.f32 %v3861, %v3920
    %v3958 = vmul.f32 %v3862, %v3925
    %v3959 = vmul.f32 %v3863, %v3930
    %v3960 = vmul.f32 %v3864, %v3935
    %v3961 = vmul.f32 %v3865, %v3940
    %v3962 = vmul.f32 %v3866, %v3945
    %v3963 = vadd.f32 %v3811, %v3947
    %v3964 = vadd.f32 %v3812, %v3948
    %v3965 = vadd.f32 %v3813, %v3949
    %v3966 = vadd.f32 %v3814, %v3950
    %v3967 = vadd.f32 %v3815, %v3951
    %v3968 = vadd.f32 %v3816, %v3952
    %v3969 = vadd.f32 %v3817, %v3953
    %v3970 = vadd.f32 %v3818, %v3954
    %v3971 = vadd.f32 %v3819, %v3955
    %v3972 = vadd.f32 %v3820, %v3956
    %v3973 = vadd.f32 %v3821, %v3957
    %v3974 = vadd.f32 %v3822, %v3958
    %v3975 = vadd.f32 %v3823, %v3959
    %v3976 = vadd.f32 %v3824, %v3960
    %v3977 = vadd.f32 %v3825, %v3961
    %v3978 = vadd.f32 %v3826, %v3962
    %v3979 = vmul.f32 %v788, %v1172
    %v3980 = vmul.f32 %v789, %v1173
    %v3981 = vmul.f32 %v790, %v1174
    %v3982 = vmul.f32 %v791, %v1175
    %v3983 = vmul.f32 %v792, %v1176
    %v3984 = vmul.f32 %v793, %v1177
    %v3985 = vmul.f32 %v794, %v1178
    %v3986 = vmul.f32 %v795, %v1179
    %v3987 = vmul.f32 %v796, %v1180
    %v3988 = vmul.f32 %v797, %v1181
    %v3989 = vmul.f32 %v798, %v1182
    %v3990 = vmul.f32 %v799, %v1183
    %v3991 = vmul.f32 %v800, %v1184
    %v3992 = vmul.f32 %v801, %v1185
    %v3993 = vmul.f32 %v802, %v1186
    %v3994 = vmul.f32 %v803, %v1187
    %s3995 = scalar_lea.vmem %s7, 14
    %v3996 = vld [vmem:[%s3995] sm:$0x1]
    %v3998 = vlaneseq
    %v3999 = vshrl.u32 %v3998, 7
    %v4000 = vsub.s32 0, %v3999
    %v4001 = vrot.slane %v3996, %v4000
    %v4003 = vmul.f32 %v1671, %v4001
    %v4004 = vmul.f32 %v1686, %v4001
    %v4005 = vmul.f32 %v1685, %v4001
    %v4006 = vmul.f32 %v1684, %v4001
    %v4007 = vmul.f32 %v1683, %v4001
    %v4008 = vmul.f32 %v1682, %v4001
    %v4009 = vmul.f32 %v1681, %v4001
    %v4010 = vmul.f32 %v1680, %v4001
    %v4011 = vmul.f32 %v1679, %v4001
    %v4012 = vmul.f32 %v1678, %v4001
    %v4013 = vmul.f32 %v1677, %v4001
    %v4014 = vmul.f32 %v1676, %v4001
    %v4015 = vmul.f32 %v1675, %v4001
    %v4016 = vmul.f32 %v1674, %v4001
    %v4017 = vmul.f32 %v1673, %v4001
    %v4018 = vmul.f32 %v1672, %v4001
    %4020 = vset.pattern.permute.xlu0 0
    %4021 = vperm.xlu0 %4020, %v3979
    %v4022 = vpop.permute.xlu0 %4021
    %4025 = vset.pattern.permute.xlu0 0
    %4026 = vperm.xlu0 %4025, %v3980
    %v4027 = vpop.permute.xlu0 %4026
    %4030 = vset.pattern.permute.xlu0 0
    %4031 = vperm.xlu0 %4030, %v3981
    %v4032 = vpop.permute.xlu0 %4031
    %4035 = vset.pattern.permute.xlu0 0
    %4036 = vperm.xlu0 %4035, %v3982
    %v4037 = vpop.permute.xlu0 %4036
    %4040 = vset.pattern.permute.xlu0 0
    %4041 = vperm.xlu0 %4040, %v3983
    %v4042 = vpop.permute.xlu0 %4041
    %4045 = vset.pattern.permute.xlu0 0
    %4046 = vperm.xlu0 %4045, %v3984
    %v4047 = vpop.permute.xlu0 %4046
    %4050 = vset.pattern.permute.xlu0 0
    %4051 = vperm.xlu0 %4050, %v3985
    %v4052 = vpop.permute.xlu0 %4051
    %4055 = vset.pattern.permute.xlu0 0
    %4056 = vperm.xlu0 %4055, %v3986
    %v4057 = vpop.permute.xlu0 %4056
    %4060 = vset.pattern.permute.xlu0 0
    %4061 = vperm.xlu0 %4060, %v3987
    %v4062 = vpop.permute.xlu0 %4061
    %4065 = vset.pattern.permute.xlu0 0
    %4066 = vperm.xlu0 %4065, %v3988
    %v4067 = vpop.permute.xlu0 %4066
    %4070 = vset.pattern.permute.xlu0 0
    %4071 = vperm.xlu0 %4070, %v3989
    %v4072 = vpop.permute.xlu0 %4071
    %4075 = vset.pattern.permute.xlu0 0
    %4076 = vperm.xlu0 %4075, %v3990
    %v4077 = vpop.permute.xlu0 %4076
    %4080 = vset.pattern.permute.xlu0 0
    %4081 = vperm.xlu0 %4080, %v3991
    %v4082 = vpop.permute.xlu0 %4081
    %4085 = vset.pattern.permute.xlu0 0
    %4086 = vperm.xlu0 %4085, %v3992
    %v4087 = vpop.permute.xlu0 %4086
    %4090 = vset.pattern.permute.xlu0 0
    %4091 = vperm.xlu0 %4090, %v3993
    %v4092 = vpop.permute.xlu0 %4091
    %4095 = vset.pattern.permute.xlu0 0
    %4096 = vperm.xlu0 %4095, %v3994
    %v4097 = vpop.permute.xlu0 %4096
    %v4099 = vmul.f32 %v4003, %v4022
    %v4100 = vmul.f32 %v4004, %v4027
    %v4101 = vmul.f32 %v4005, %v4032
    %v4102 = vmul.f32 %v4006, %v4037
    %v4103 = vmul.f32 %v4007, %v4042
    %v4104 = vmul.f32 %v4008, %v4047
    %v4105 = vmul.f32 %v4009, %v4052
    %v4106 = vmul.f32 %v4010, %v4057
    %v4107 = vmul.f32 %v4011, %v4062
    %v4108 = vmul.f32 %v4012, %v4067
    %v4109 = vmul.f32 %v4013, %v4072
    %v4110 = vmul.f32 %v4014, %v4077
    %v4111 = vmul.f32 %v4015, %v4082
    %v4112 = vmul.f32 %v4016, %v4087
    %v4113 = vmul.f32 %v4017, %v4092
    %v4114 = vmul.f32 %v4018, %v4097
    %v4115 = vadd.f32 %v3963, %v4099
    %v4116 = vadd.f32 %v3964, %v4100
    %v4117 = vadd.f32 %v3965, %v4101
    %v4118 = vadd.f32 %v3966, %v4102
    %v4119 = vadd.f32 %v3967, %v4103
    %v4120 = vadd.f32 %v3968, %v4104
    %v4121 = vadd.f32 %v3969, %v4105
    %v4122 = vadd.f32 %v3970, %v4106
    %v4123 = vadd.f32 %v3971, %v4107
    %v4124 = vadd.f32 %v3972, %v4108
    %v4125 = vadd.f32 %v3973, %v4109
    %v4126 = vadd.f32 %v3974, %v4110
    %v4127 = vadd.f32 %v3975, %v4111
    %v4128 = vadd.f32 %v3976, %v4112
    %v4129 = vadd.f32 %v3977, %v4113
    %v4130 = vadd.f32 %v3978, %v4114
    %v4131 = vmul.f32 %v788, %v1252
    %v4132 = vmul.f32 %v789, %v1253
    %v4133 = vmul.f32 %v790, %v1254
    %v4134 = vmul.f32 %v791, %v1255
    %v4135 = vmul.f32 %v792, %v1256
    %v4136 = vmul.f32 %v793, %v1257
    %v4137 = vmul.f32 %v794, %v1258
    %v4138 = vmul.f32 %v795, %v1259
    %v4139 = vmul.f32 %v796, %v1260
    %v4140 = vmul.f32 %v797, %v1261
    %v4141 = vmul.f32 %v798, %v1262
    %v4142 = vmul.f32 %v799, %v1263
    %v4143 = vmul.f32 %v800, %v1264
    %v4144 = vmul.f32 %v801, %v1265
    %v4145 = vmul.f32 %v802, %v1266
    %v4146 = vmul.f32 %v803, %v1267
    %s4147 = scalar_lea.vmem %s7, 15
    %v4148 = vld [vmem:[%s4147] sm:$0x1]
    %v4150 = vlaneseq
    %v4151 = vshrl.u32 %v4150, 7
    %v4152 = vsub.s32 0, %v4151
    %v4153 = vrot.slane %v4148, %v4152
    %v4155 = vmul.f32 %v1855, %v4153
    %v4156 = vmul.f32 %v1870, %v4153
    %v4157 = vmul.f32 %v1869, %v4153
    %v4158 = vmul.f32 %v1868, %v4153
    %v4159 = vmul.f32 %v1867, %v4153
    %v4160 = vmul.f32 %v1866, %v4153
    %v4161 = vmul.f32 %v1865, %v4153
    %v4162 = vmul.f32 %v1864, %v4153
    %v4163 = vmul.f32 %v1863, %v4153
    %v4164 = vmul.f32 %v1862, %v4153
    %v4165 = vmul.f32 %v1861, %v4153
    %v4166 = vmul.f32 %v1860, %v4153
    %v4167 = vmul.f32 %v1859, %v4153
    %v4168 = vmul.f32 %v1858, %v4153
    %v4169 = vmul.f32 %v1857, %v4153
    %v4170 = vmul.f32 %v1856, %v4153
    %4172 = vset.pattern.permute.xlu0 0
    %4173 = vperm.xlu0 %4172, %v4131
    %v4174 = vpop.permute.xlu0 %4173
    %4177 = vset.pattern.permute.xlu0 0
    %4178 = vperm.xlu0 %4177, %v4132
    %v4179 = vpop.permute.xlu0 %4178
    %4182 = vset.pattern.permute.xlu0 0
    %4183 = vperm.xlu0 %4182, %v4133
    %v4184 = vpop.permute.xlu0 %4183
    %4187 = vset.pattern.permute.xlu0 0
    %4188 = vperm.xlu0 %4187, %v4134
    %v4189 = vpop.permute.xlu0 %4188
    %4192 = vset.pattern.permute.xlu0 0
    %4193 = vperm.xlu0 %4192, %v4135
    %v4194 = vpop.permute.xlu0 %4193
    %4197 = vset.pattern.permute.xlu0 0
    %4198 = vperm.xlu0 %4197, %v4136
    %v4199 = vpop.permute.xlu0 %4198
    %4202 = vset.pattern.permute.xlu0 0
    %4203 = vperm.xlu0 %4202, %v4137
    %v4204 = vpop.permute.xlu0 %4203
    %4207 = vset.pattern.permute.xlu0 0
    %4208 = vperm.xlu0 %4207, %v4138
    %v4209 = vpop.permute.xlu0 %4208
    %4212 = vset.pattern.permute.xlu0 0
    %4213 = vperm.xlu0 %4212, %v4139
    %v4214 = vpop.permute.xlu0 %4213
    %4217 = vset.pattern.permute.xlu0 0
    %4218 = vperm.xlu0 %4217, %v4140
    %v4219 = vpop.permute.xlu0 %4218
    %4222 = vset.pattern.permute.xlu0 0
    %4223 = vperm.xlu0 %4222, %v4141
    %v4224 = vpop.permute.xlu0 %4223
    %4227 = vset.pattern.permute.xlu0 0
    %4228 = vperm.xlu0 %4227, %v4142
    %v4229 = vpop.permute.xlu0 %4228
    %4232 = vset.pattern.permute.xlu0 0
    %4233 = vperm.xlu0 %4232, %v4143
    %v4234 = vpop.permute.xlu0 %4233
    %4237 = vset.pattern.permute.xlu0 0
    %4238 = vperm.xlu0 %4237, %v4144
    %v4239 = vpop.permute.xlu0 %4238
    %4242 = vset.pattern.permute.xlu0 0
    %4243 = vperm.xlu0 %4242, %v4145
    %v4244 = vpop.permute.xlu0 %4243
    %4247 = vset.pattern.permute.xlu0 0
    %4248 = vperm.xlu0 %4247, %v4146
    %v4249 = vpop.permute.xlu0 %4248
    %v4251 = vmul.f32 %v4155, %v4174
    %v4252 = vmul.f32 %v4156, %v4179
    %v4253 = vmul.f32 %v4157, %v4184
    %v4254 = vmul.f32 %v4158, %v4189
    %v4255 = vmul.f32 %v4159, %v4194
    %v4256 = vmul.f32 %v4160, %v4199
    %v4257 = vmul.f32 %v4161, %v4204
    %v4258 = vmul.f32 %v4162, %v4209
    %v4259 = vmul.f32 %v4163, %v4214
    %v4260 = vmul.f32 %v4164, %v4219
    %v4261 = vmul.f32 %v4165, %v4224
    %v4262 = vmul.f32 %v4166, %v4229
    %v4263 = vmul.f32 %v4167, %v4234
    %v4264 = vmul.f32 %v4168, %v4239
    %v4265 = vmul.f32 %v4169, %v4244
    %v4266 = vmul.f32 %v4170, %v4249
    %v4267 = vadd.f32 %v4115, %v4251
    %v4268 = vadd.f32 %v4116, %v4252
    %v4269 = vadd.f32 %v4117, %v4253
    %v4270 = vadd.f32 %v4118, %v4254
    %v4271 = vadd.f32 %v4119, %v4255
    %v4272 = vadd.f32 %v4120, %v4256
    %v4273 = vadd.f32 %v4121, %v4257
    %v4274 = vadd.f32 %v4122, %v4258
    %v4275 = vadd.f32 %v4123, %v4259
    %v4276 = vadd.f32 %v4124, %v4260
    %v4277 = vadd.f32 %v4125, %v4261
    %v4278 = vadd.f32 %v4126, %v4262
    %v4279 = vadd.f32 %v4127, %v4263
    %v4280 = vadd.f32 %v4128, %v4264
    %v4281 = vadd.f32 %v4129, %v4265
    %v4282 = vadd.f32 %v4130, %v4266
    %v4283 = vmul.f32 %v788, %v1332
    %v4284 = vmul.f32 %v789, %v1333
    %v4285 = vmul.f32 %v790, %v1334
    %v4286 = vmul.f32 %v791, %v1335
    %v4287 = vmul.f32 %v792, %v1336
    %v4288 = vmul.f32 %v793, %v1337
    %v4289 = vmul.f32 %v794, %v1338
    %v4290 = vmul.f32 %v795, %v1339
    %v4291 = vmul.f32 %v796, %v1340
    %v4292 = vmul.f32 %v797, %v1341
    %v4293 = vmul.f32 %v798, %v1342
    %v4294 = vmul.f32 %v799, %v1343
    %v4295 = vmul.f32 %v800, %v1344
    %v4296 = vmul.f32 %v801, %v1345
    %v4297 = vmul.f32 %v802, %v1346
    %v4298 = vmul.f32 %v803, %v1347
    %s4299 = scalar_lea.vmem %s7, 16
    %v4300 = vld [vmem:[%s4299] sm:$0x1]
    %v4302 = vlaneseq
    %v4303 = vshrl.u32 %v4302, 7
    %v4304 = vsub.s32 0, %v4303
    %v4305 = vrot.slane %v4300, %v4304
    %v4307 = vmul.f32 %v2040, %v4305
    %v4308 = vmul.f32 %v2055, %v4305
    %v4309 = vmul.f32 %v2054, %v4305
    %v4310 = vmul.f32 %v2053, %v4305
    %v4311 = vmul.f32 %v2052, %v4305
    %v4312 = vmul.f32 %v2051, %v4305
    %v4313 = vmul.f32 %v2050, %v4305
    %v4314 = vmul.f32 %v2049, %v4305
    %v4315 = vmul.f32 %v2048, %v4305
    %v4316 = vmul.f32 %v2047, %v4305
    %v4317 = vmul.f32 %v2046, %v4305
    %v4318 = vmul.f32 %v2045, %v4305
    %v4319 = vmul.f32 %v2044, %v4305
    %v4320 = vmul.f32 %v2043, %v4305
    %v4321 = vmul.f32 %v2042, %v4305
    %v4322 = vmul.f32 %v2041, %v4305
    %4324 = vset.pattern.permute.xlu0 0
    %4325 = vperm.xlu0 %4324, %v4283
    %v4326 = vpop.permute.xlu0 %4325
    %4329 = vset.pattern.permute.xlu0 0
    %4330 = vperm.xlu0 %4329, %v4284
    %v4331 = vpop.permute.xlu0 %4330
    %4334 = vset.pattern.permute.xlu0 0
    %4335 = vperm.xlu0 %4334, %v4285
    %v4336 = vpop.permute.xlu0 %4335
    %4339 = vset.pattern.permute.xlu0 0
    %4340 = vperm.xlu0 %4339, %v4286
    %v4341 = vpop.permute.xlu0 %4340
    %4344 = vset.pattern.permute.xlu0 0
    %4345 = vperm.xlu0 %4344, %v4287
    %v4346 = vpop.permute.xlu0 %4345
    %4349 = vset.pattern.permute.xlu0 0
    %4350 = vperm.xlu0 %4349, %v4288
    %v4351 = vpop.permute.xlu0 %4350
    %4354 = vset.pattern.permute.xlu0 0
    %4355 = vperm.xlu0 %4354, %v4289
    %v4356 = vpop.permute.xlu0 %4355
    %4359 = vset.pattern.permute.xlu0 0
    %4360 = vperm.xlu0 %4359, %v4290
    %v4361 = vpop.permute.xlu0 %4360
    %4364 = vset.pattern.permute.xlu0 0
    %4365 = vperm.xlu0 %4364, %v4291
    %v4366 = vpop.permute.xlu0 %4365
    %4369 = vset.pattern.permute.xlu0 0
    %4370 = vperm.xlu0 %4369, %v4292
    %v4371 = vpop.permute.xlu0 %4370
    %4374 = vset.pattern.permute.xlu0 0
    %4375 = vperm.xlu0 %4374, %v4293
    %v4376 = vpop.permute.xlu0 %4375
    %4379 = vset.pattern.permute.xlu0 0
    %4380 = vperm.xlu0 %4379, %v4294
    %v4381 = vpop.permute.xlu0 %4380
    %4384 = vset.pattern.permute.xlu0 0
    %4385 = vperm.xlu0 %4384, %v4295
    %v4386 = vpop.permute.xlu0 %4385
    %4389 = vset.pattern.permute.xlu0 0
    %4390 = vperm.xlu0 %4389, %v4296
    %v4391 = vpop.permute.xlu0 %4390
    %4394 = vset.pattern.permute.xlu0 0
    %4395 = vperm.xlu0 %4394, %v4297
    %v4396 = vpop.permute.xlu0 %4395
    %4399 = vset.pattern.permute.xlu0 0
    %4400 = vperm.xlu0 %4399, %v4298
    %v4401 = vpop.permute.xlu0 %4400
    %v4403 = vmul.f32 %v4307, %v4326
    %v4404 = vmul.f32 %v4308, %v4331
    %v4405 = vmul.f32 %v4309, %v4336
    %v4406 = vmul.f32 %v4310, %v4341
    %v4407 = vmul.f32 %v4311, %v4346
    %v4408 = vmul.f32 %v4312, %v4351
    %v4409 = vmul.f32 %v4313, %v4356
    %v4410 = vmul.f32 %v4314, %v4361
    %v4411 = vmul.f32 %v4315, %v4366
    %v4412 = vmul.f32 %v4316, %v4371
    %v4413 = vmul.f32 %v4317, %v4376
    %v4414 = vmul.f32 %v4318, %v4381
    %v4415 = vmul.f32 %v4319, %v4386
    %v4416 = vmul.f32 %v4320, %v4391
    %v4417 = vmul.f32 %v4321, %v4396
    %v4418 = vmul.f32 %v4322, %v4401
    %v4419 = vadd.f32 %v4267, %v4403
    %v4420 = vadd.f32 %v4268, %v4404
    %v4421 = vadd.f32 %v4269, %v4405
    %v4422 = vadd.f32 %v4270, %v4406
    %v4423 = vadd.f32 %v4271, %v4407
    %v4424 = vadd.f32 %v4272, %v4408
    %v4425 = vadd.f32 %v4273, %v4409
    %v4426 = vadd.f32 %v4274, %v4410
    %v4427 = vadd.f32 %v4275, %v4411
    %v4428 = vadd.f32 %v4276, %v4412
    %v4429 = vadd.f32 %v4277, %v4413
    %v4430 = vadd.f32 %v4278, %v4414
    %v4431 = vadd.f32 %v4279, %v4415
    %v4432 = vadd.f32 %v4280, %v4416
    %v4433 = vadd.f32 %v4281, %v4417
    %v4434 = vadd.f32 %v4282, %v4418
    %v4435 = vmul.f32 %v788, %v1396
    %v4436 = vmul.f32 %v789, %v1397
    %v4437 = vmul.f32 %v790, %v1398
    %v4438 = vmul.f32 %v791, %v1399
    %v4439 = vmul.f32 %v792, %v1400
    %v4440 = vmul.f32 %v793, %v1401
    %v4441 = vmul.f32 %v794, %v1402
    %v4442 = vmul.f32 %v795, %v1403
    %v4443 = vmul.f32 %v796, %v1404
    %v4444 = vmul.f32 %v797, %v1405
    %v4445 = vmul.f32 %v798, %v1406
    %v4446 = vmul.f32 %v799, %v1407
    %v4447 = vmul.f32 %v800, %v1408
    %v4448 = vmul.f32 %v801, %v1409
    %v4449 = vmul.f32 %v802, %v1410
    %v4450 = vmul.f32 %v803, %v1411
    %s4451 = scalar_lea.vmem %s7, 17
    %v4452 = vld [vmem:[%s4451] sm:$0x1]
    %v4454 = vlaneseq
    %v4455 = vshrl.u32 %v4454, 7
    %v4456 = vsub.s32 0, %v4455
    %v4457 = vrot.slane %v4452, %v4456
    %v4459 = vmul.f32 %v531, %v4457
    %v4460 = vmul.f32 %v516, %v4457
    %v4461 = vmul.f32 %v517, %v4457
    %v4462 = vmul.f32 %v518, %v4457
    %v4463 = vmul.f32 %v519, %v4457
    %v4464 = vmul.f32 %v520, %v4457
    %v4465 = vmul.f32 %v521, %v4457
    %v4466 = vmul.f32 %v522, %v4457
    %v4467 = vmul.f32 %v523, %v4457
    %v4468 = vmul.f32 %v524, %v4457
    %v4469 = vmul.f32 %v525, %v4457
    %v4470 = vmul.f32 %v526, %v4457
    %v4471 = vmul.f32 %v527, %v4457
    %v4472 = vmul.f32 %v528, %v4457
    %v4473 = vmul.f32 %v529, %v4457
    %v4474 = vmul.f32 %v530, %v4457
    %4476 = vset.pattern.permute.xlu0 0
    %4477 = vperm.xlu0 %4476, %v4435
    %v4478 = vpop.permute.xlu0 %4477
    %4481 = vset.pattern.permute.xlu0 0
    %4482 = vperm.xlu0 %4481, %v4436
    %v4483 = vpop.permute.xlu0 %4482
    %4486 = vset.pattern.permute.xlu0 0
    %4487 = vperm.xlu0 %4486, %v4437
    %v4488 = vpop.permute.xlu0 %4487
    %4491 = vset.pattern.permute.xlu0 0
    %4492 = vperm.xlu0 %4491, %v4438
    %v4493 = vpop.permute.xlu0 %4492
    %4496 = vset.pattern.permute.xlu0 0
    %4497 = vperm.xlu0 %4496, %v4439
    %v4498 = vpop.permute.xlu0 %4497
    %4501 = vset.pattern.permute.xlu0 0
    %4502 = vperm.xlu0 %4501, %v4440
    %v4503 = vpop.permute.xlu0 %4502
    %4506 = vset.pattern.permute.xlu0 0
    %4507 = vperm.xlu0 %4506, %v4441
    %v4508 = vpop.permute.xlu0 %4507
    %4511 = vset.pattern.permute.xlu0 0
    %4512 = vperm.xlu0 %4511, %v4442
    %v4513 = vpop.permute.xlu0 %4512
    %4516 = vset.pattern.permute.xlu0 0
    %4517 = vperm.xlu0 %4516, %v4443
    %v4518 = vpop.permute.xlu0 %4517
    %4521 = vset.pattern.permute.xlu0 0
    %4522 = vperm.xlu0 %4521, %v4444
    %v4523 = vpop.permute.xlu0 %4522
    %4526 = vset.pattern.permute.xlu0 0
    %4527 = vperm.xlu0 %4526, %v4445
    %v4528 = vpop.permute.xlu0 %4527
    %4531 = vset.pattern.permute.xlu0 0
    %4532 = vperm.xlu0 %4531, %v4446
    %v4533 = vpop.permute.xlu0 %4532
    %4536 = vset.pattern.permute.xlu0 0
    %4537 = vperm.xlu0 %4536, %v4447
    %v4538 = vpop.permute.xlu0 %4537
    %4541 = vset.pattern.permute.xlu0 0
    %4542 = vperm.xlu0 %4541, %v4448
    %v4543 = vpop.permute.xlu0 %4542
    %4546 = vset.pattern.permute.xlu0 0
    %4547 = vperm.xlu0 %4546, %v4449
    %v4548 = vpop.permute.xlu0 %4547
    %4551 = vset.pattern.permute.xlu0 0
    %4552 = vperm.xlu0 %4551, %v4450
    %v4553 = vpop.permute.xlu0 %4552
    %v4555 = vmul.f32 %v4459, %v4478
    %v4556 = vmul.f32 %v4460, %v4483
    %v4557 = vmul.f32 %v4461, %v4488
    %v4558 = vmul.f32 %v4462, %v4493
    %v4559 = vmul.f32 %v4463, %v4498
    %v4560 = vmul.f32 %v4464, %v4503
    %v4561 = vmul.f32 %v4465, %v4508
    %v4562 = vmul.f32 %v4466, %v4513
    %v4563 = vmul.f32 %v4467, %v4518
    %v4564 = vmul.f32 %v4468, %v4523
    %v4565 = vmul.f32 %v4469, %v4528
    %v4566 = vmul.f32 %v4470, %v4533
    %v4567 = vmul.f32 %v4471, %v4538
    %v4568 = vmul.f32 %v4472, %v4543
    %v4569 = vmul.f32 %v4473, %v4548
    %v4570 = vmul.f32 %v4474, %v4553
    %v4571 = vadd.f32 %v4419, %v4555
    %v4572 = vadd.f32 %v4420, %v4556
    %v4573 = vadd.f32 %v4421, %v4557
    %v4574 = vadd.f32 %v4422, %v4558
    %v4575 = vadd.f32 %v4423, %v4559
    %v4576 = vadd.f32 %v4424, %v4560
    %v4577 = vadd.f32 %v4425, %v4561
    %v4578 = vadd.f32 %v4426, %v4562
    %v4579 = vadd.f32 %v4427, %v4563
    %v4580 = vadd.f32 %v4428, %v4564
    %v4581 = vadd.f32 %v4429, %v4565
    %v4582 = vadd.f32 %v4430, %v4566
    %v4583 = vadd.f32 %v4431, %v4567
    %v4584 = vadd.f32 %v4432, %v4568
    %v4585 = vadd.f32 %v4433, %v4569
    %v4586 = vadd.f32 %v4434, %v4570
    %v4587 = vmul.f32 %v788, %v1476
    %v4588 = vmul.f32 %v789, %v1477
    %v4589 = vmul.f32 %v790, %v1478
    %v4590 = vmul.f32 %v791, %v1479
    %v4591 = vmul.f32 %v792, %v1480
    %v4592 = vmul.f32 %v793, %v1481
    %v4593 = vmul.f32 %v794, %v1482
    %v4594 = vmul.f32 %v795, %v1483
    %v4595 = vmul.f32 %v796, %v1484
    %v4596 = vmul.f32 %v797, %v1485
    %v4597 = vmul.f32 %v798, %v1486
    %v4598 = vmul.f32 %v799, %v1487
    %v4599 = vmul.f32 %v800, %v1488
    %v4600 = vmul.f32 %v801, %v1489
    %v4601 = vmul.f32 %v802, %v1490
    %v4602 = vmul.f32 %v803, %v1491
    %s4603 = scalar_lea.vmem %s7, 18
    %v4604 = vld [vmem:[%s4603] sm:$0x1]
    %v4606 = vlaneseq
    %v4607 = vshrl.u32 %v4606, 7
    %v4608 = vsub.s32 0, %v4607
    %v4609 = vrot.slane %v4604, %v4608
    %v4611 = vmul.f32 %v2392, %v4609
    %v4612 = vmul.f32 %v2391, %v4609
    %v4613 = vmul.f32 %v2390, %v4609
    %v4614 = vmul.f32 %v2389, %v4609
    %v4615 = vmul.f32 %v2388, %v4609
    %v4616 = vmul.f32 %v2387, %v4609
    %v4617 = vmul.f32 %v2386, %v4609
    %v4618 = vmul.f32 %v2385, %v4609
    %v4619 = vmul.f32 %v2384, %v4609
    %v4620 = vmul.f32 %v2383, %v4609
    %v4621 = vmul.f32 %v2382, %v4609
    %v4622 = vmul.f32 %v2381, %v4609
    %v4623 = vmul.f32 %v2380, %v4609
    %v4624 = vmul.f32 %v2379, %v4609
    %v4625 = vmul.f32 %v2378, %v4609
    %v4626 = vmul.f32 %v2377, %v4609
    %4628 = vset.pattern.permute.xlu0 0
    %4629 = vperm.xlu0 %4628, %v4587
    %v4630 = vpop.permute.xlu0 %4629
    %4633 = vset.pattern.permute.xlu0 0
    %4634 = vperm.xlu0 %4633, %v4588
    %v4635 = vpop.permute.xlu0 %4634
    %4638 = vset.pattern.permute.xlu0 0
    %4639 = vperm.xlu0 %4638, %v4589
    %v4640 = vpop.permute.xlu0 %4639
    %4643 = vset.pattern.permute.xlu0 0
    %4644 = vperm.xlu0 %4643, %v4590
    %v4645 = vpop.permute.xlu0 %4644
    %4648 = vset.pattern.permute.xlu0 0
    %4649 = vperm.xlu0 %4648, %v4591
    %v4650 = vpop.permute.xlu0 %4649
    %4653 = vset.pattern.permute.xlu0 0
    %4654 = vperm.xlu0 %4653, %v4592
    %v4655 = vpop.permute.xlu0 %4654
    %4658 = vset.pattern.permute.xlu0 0
    %4659 = vperm.xlu0 %4658, %v4593
    %v4660 = vpop.permute.xlu0 %4659
    %4663 = vset.pattern.permute.xlu0 0
    %4664 = vperm.xlu0 %4663, %v4594
    %v4665 = vpop.permute.xlu0 %4664
    %4668 = vset.pattern.permute.xlu0 0
    %4669 = vperm.xlu0 %4668, %v4595
    %v4670 = vpop.permute.xlu0 %4669
    %4673 = vset.pattern.permute.xlu0 0
    %4674 = vperm.xlu0 %4673, %v4596
    %v4675 = vpop.permute.xlu0 %4674
    %4678 = vset.pattern.permute.xlu0 0
    %4679 = vperm.xlu0 %4678, %v4597
    %v4680 = vpop.permute.xlu0 %4679
    %4683 = vset.pattern.permute.xlu0 0
    %4684 = vperm.xlu0 %4683, %v4598
    %v4685 = vpop.permute.xlu0 %4684
    %4688 = vset.pattern.permute.xlu0 0
    %4689 = vperm.xlu0 %4688, %v4599
    %v4690 = vpop.permute.xlu0 %4689
    %4693 = vset.pattern.permute.xlu0 0
    %4694 = vperm.xlu0 %4693, %v4600
    %v4695 = vpop.permute.xlu0 %4694
    %4698 = vset.pattern.permute.xlu0 0
    %4699 = vperm.xlu0 %4698, %v4601
    %v4700 = vpop.permute.xlu0 %4699
    %4703 = vset.pattern.permute.xlu0 0
    %4704 = vperm.xlu0 %4703, %v4602
    %v4705 = vpop.permute.xlu0 %4704
    %v4707 = vmul.f32 %v4611, %v4630
    %v4708 = vmul.f32 %v4612, %v4635
    %v4709 = vmul.f32 %v4613, %v4640
    %v4710 = vmul.f32 %v4614, %v4645
    %v4711 = vmul.f32 %v4615, %v4650
    %v4712 = vmul.f32 %v4616, %v4655
    %v4713 = vmul.f32 %v4617, %v4660
    %v4714 = vmul.f32 %v4618, %v4665
    %v4715 = vmul.f32 %v4619, %v4670
    %v4716 = vmul.f32 %v4620, %v4675
    %v4717 = vmul.f32 %v4621, %v4680
    %v4718 = vmul.f32 %v4622, %v4685
    %v4719 = vmul.f32 %v4623, %v4690
    %v4720 = vmul.f32 %v4624, %v4695
    %v4721 = vmul.f32 %v4625, %v4700
    %v4722 = vmul.f32 %v4626, %v4705
    %v4723 = vadd.f32 %v4571, %v4707
    %v4724 = vadd.f32 %v4572, %v4708
    %v4725 = vadd.f32 %v4573, %v4709
    %v4726 = vadd.f32 %v4574, %v4710
    %v4727 = vadd.f32 %v4575, %v4711
    %v4728 = vadd.f32 %v4576, %v4712
    %v4729 = vadd.f32 %v4577, %v4713
    %v4730 = vadd.f32 %v4578, %v4714
    %v4731 = vadd.f32 %v4579, %v4715
    %v4732 = vadd.f32 %v4580, %v4716
    %v4733 = vadd.f32 %v4581, %v4717
    %v4734 = vadd.f32 %v4582, %v4718
    %v4735 = vadd.f32 %v4583, %v4719
    %v4736 = vadd.f32 %v4584, %v4720
    %v4737 = vadd.f32 %v4585, %v4721
    %v4738 = vadd.f32 %v4586, %v4722
    %v4739 = vmul.f32 %v788, %v1556
    %v4740 = vmul.f32 %v789, %v1557
    %v4741 = vmul.f32 %v790, %v1558
    %v4742 = vmul.f32 %v791, %v1559
    %v4743 = vmul.f32 %v792, %v1560
    %v4744 = vmul.f32 %v793, %v1561
    %v4745 = vmul.f32 %v794, %v1562
    %v4746 = vmul.f32 %v795, %v1563
    %v4747 = vmul.f32 %v796, %v1564
    %v4748 = vmul.f32 %v797, %v1565
    %v4749 = vmul.f32 %v798, %v1566
    %v4750 = vmul.f32 %v799, %v1567
    %v4751 = vmul.f32 %v800, %v1568
    %v4752 = vmul.f32 %v801, %v1569
    %v4753 = vmul.f32 %v802, %v1570
    %v4754 = vmul.f32 %v803, %v1571
    %s4755 = scalar_lea.vmem %s7, 19
    %v4756 = vld [vmem:[%s4755] sm:$0x1]
    %v4758 = vlaneseq
    %v4759 = vshrl.u32 %v4758, 7
    %v4760 = vsub.s32 0, %v4759
    %v4761 = vrot.slane %v4756, %v4760
    %v4763 = vmul.f32 %v2577, %v4761
    %v4764 = vmul.f32 %v2576, %v4761
    %v4765 = vmul.f32 %v2575, %v4761
    %v4766 = vmul.f32 %v2574, %v4761
    %v4767 = vmul.f32 %v2573, %v4761
    %v4768 = vmul.f32 %v2572, %v4761
    %v4769 = vmul.f32 %v2571, %v4761
    %v4770 = vmul.f32 %v2570, %v4761
    %v4771 = vmul.f32 %v2569, %v4761
    %v4772 = vmul.f32 %v2568, %v4761
    %v4773 = vmul.f32 %v2567, %v4761
    %v4774 = vmul.f32 %v2566, %v4761
    %v4775 = vmul.f32 %v2565, %v4761
    %v4776 = vmul.f32 %v2564, %v4761
    %v4777 = vmul.f32 %v2563, %v4761
    %v4778 = vmul.f32 %v2562, %v4761
    %4780 = vset.pattern.permute.xlu0 0
    %4781 = vperm.xlu0 %4780, %v4739
    %v4782 = vpop.permute.xlu0 %4781
    %4785 = vset.pattern.permute.xlu0 0
    %4786 = vperm.xlu0 %4785, %v4740
    %v4787 = vpop.permute.xlu0 %4786
    %4790 = vset.pattern.permute.xlu0 0
    %4791 = vperm.xlu0 %4790, %v4741
    %v4792 = vpop.permute.xlu0 %4791
    %4795 = vset.pattern.permute.xlu0 0
    %4796 = vperm.xlu0 %4795, %v4742
    %v4797 = vpop.permute.xlu0 %4796
    %4800 = vset.pattern.permute.xlu0 0
    %4801 = vperm.xlu0 %4800, %v4743
    %v4802 = vpop.permute.xlu0 %4801
    %4805 = vset.pattern.permute.xlu0 0
    %4806 = vperm.xlu0 %4805, %v4744
    %v4807 = vpop.permute.xlu0 %4806
    %4810 = vset.pattern.permute.xlu0 0
    %4811 = vperm.xlu0 %4810, %v4745
    %v4812 = vpop.permute.xlu0 %4811
    %4815 = vset.pattern.permute.xlu0 0
    %4816 = vperm.xlu0 %4815, %v4746
    %v4817 = vpop.permute.xlu0 %4816
    %4820 = vset.pattern.permute.xlu0 0
    %4821 = vperm.xlu0 %4820, %v4747
    %v4822 = vpop.permute.xlu0 %4821
    %4825 = vset.pattern.permute.xlu0 0
    %4826 = vperm.xlu0 %4825, %v4748
    %v4827 = vpop.permute.xlu0 %4826
    %4830 = vset.pattern.permute.xlu0 0
    %4831 = vperm.xlu0 %4830, %v4749
    %v4832 = vpop.permute.xlu0 %4831
    %4835 = vset.pattern.permute.xlu0 0
    %4836 = vperm.xlu0 %4835, %v4750
    %v4837 = vpop.permute.xlu0 %4836
    %4840 = vset.pattern.permute.xlu0 0
    %4841 = vperm.xlu0 %4840, %v4751
    %v4842 = vpop.permute.xlu0 %4841
    %4845 = vset.pattern.permute.xlu0 0
    %4846 = vperm.xlu0 %4845, %v4752
    %v4847 = vpop.permute.xlu0 %4846
    %4850 = vset.pattern.permute.xlu0 0
    %4851 = vperm.xlu0 %4850, %v4753
    %v4852 = vpop.permute.xlu0 %4851
    %4855 = vset.pattern.permute.xlu0 0
    %4856 = vperm.xlu0 %4855, %v4754
    %v4857 = vpop.permute.xlu0 %4856
    %v4859 = vmul.f32 %v4763, %v4782
    %v4860 = vmul.f32 %v4764, %v4787
    %v4861 = vmul.f32 %v4765, %v4792
    %v4862 = vmul.f32 %v4766, %v4797
    %v4863 = vmul.f32 %v4767, %v4802
    %v4864 = vmul.f32 %v4768, %v4807
    %v4865 = vmul.f32 %v4769, %v4812
    %v4866 = vmul.f32 %v4770, %v4817
    %v4867 = vmul.f32 %v4771, %v4822
    %v4868 = vmul.f32 %v4772, %v4827
    %v4869 = vmul.f32 %v4773, %v4832
    %v4870 = vmul.f32 %v4774, %v4837
    %v4871 = vmul.f32 %v4775, %v4842
    %v4872 = vmul.f32 %v4776, %v4847
    %v4873 = vmul.f32 %v4777, %v4852
    %v4874 = vmul.f32 %v4778, %v4857
    %v4875 = vadd.f32 %v4723, %v4859
    %v4876 = vadd.f32 %v4724, %v4860
    %v4877 = vadd.f32 %v4725, %v4861
    %v4878 = vadd.f32 %v4726, %v4862
    %v4879 = vadd.f32 %v4727, %v4863
    %v4880 = vadd.f32 %v4728, %v4864
    %v4881 = vadd.f32 %v4729, %v4865
    %v4882 = vadd.f32 %v4730, %v4866
    %v4883 = vadd.f32 %v4731, %v4867
    %v4884 = vadd.f32 %v4732, %v4868
    %v4885 = vadd.f32 %v4733, %v4869
    %v4886 = vadd.f32 %v4734, %v4870
    %v4887 = vadd.f32 %v4735, %v4871
    %v4888 = vadd.f32 %v4736, %v4872
    %v4889 = vadd.f32 %v4737, %v4873
    %v4890 = vadd.f32 %v4738, %v4874
    %v4891 = vmul.f32 %v788, %v1636
    %v4892 = vmul.f32 %v789, %v1637
    %v4893 = vmul.f32 %v790, %v1638
    %v4894 = vmul.f32 %v791, %v1639
    %v4895 = vmul.f32 %v792, %v1640
    %v4896 = vmul.f32 %v793, %v1641
    %v4897 = vmul.f32 %v794, %v1642
    %v4898 = vmul.f32 %v795, %v1643
    %v4899 = vmul.f32 %v796, %v1644
    %v4900 = vmul.f32 %v797, %v1645
    %v4901 = vmul.f32 %v798, %v1646
    %v4902 = vmul.f32 %v799, %v1647
    %v4903 = vmul.f32 %v800, %v1648
    %v4904 = vmul.f32 %v801, %v1649
    %v4905 = vmul.f32 %v802, %v1650
    %v4906 = vmul.f32 %v803, %v1651
    %s4907 = scalar_lea.vmem %s7, 20
    %v4908 = vld [vmem:[%s4907] sm:$0x1]
    %v4910 = vlaneseq
    %v4911 = vshrl.u32 %v4910, 7
    %v4912 = vsub.s32 0, %v4911
    %v4913 = vrot.slane %v4908, %v4912
    %v4915 = vmul.f32 %v2762, %v4913
    %v4916 = vmul.f32 %v2761, %v4913
    %v4917 = vmul.f32 %v2760, %v4913
    %v4918 = vmul.f32 %v2759, %v4913
    %v4919 = vmul.f32 %v2758, %v4913
    %v4920 = vmul.f32 %v2757, %v4913
    %v4921 = vmul.f32 %v2756, %v4913
    %v4922 = vmul.f32 %v2755, %v4913
    %v4923 = vmul.f32 %v2754, %v4913
    %v4924 = vmul.f32 %v2753, %v4913
    %v4925 = vmul.f32 %v2752, %v4913
    %v4926 = vmul.f32 %v2751, %v4913
    %v4927 = vmul.f32 %v2750, %v4913
    %v4928 = vmul.f32 %v2749, %v4913
    %v4929 = vmul.f32 %v2748, %v4913
    %v4930 = vmul.f32 %v2747, %v4913
    %4932 = vset.pattern.permute.xlu0 0
    %4933 = vperm.xlu0 %4932, %v4891
    %v4934 = vpop.permute.xlu0 %4933
    %4937 = vset.pattern.permute.xlu0 0
    %4938 = vperm.xlu0 %4937, %v4892
    %v4939 = vpop.permute.xlu0 %4938
    %4942 = vset.pattern.permute.xlu0 0
    %4943 = vperm.xlu0 %4942, %v4893
    %v4944 = vpop.permute.xlu0 %4943
    %4947 = vset.pattern.permute.xlu0 0
    %4948 = vperm.xlu0 %4947, %v4894
    %v4949 = vpop.permute.xlu0 %4948
    %4952 = vset.pattern.permute.xlu0 0
    %4953 = vperm.xlu0 %4952, %v4895
    %v4954 = vpop.permute.xlu0 %4953
    %4957 = vset.pattern.permute.xlu0 0
    %4958 = vperm.xlu0 %4957, %v4896
    %v4959 = vpop.permute.xlu0 %4958
    %4962 = vset.pattern.permute.xlu0 0
    %4963 = vperm.xlu0 %4962, %v4897
    %v4964 = vpop.permute.xlu0 %4963
    %4967 = vset.pattern.permute.xlu0 0
    %4968 = vperm.xlu0 %4967, %v4898
    %v4969 = vpop.permute.xlu0 %4968
    %4972 = vset.pattern.permute.xlu0 0
    %4973 = vperm.xlu0 %4972, %v4899
    %v4974 = vpop.permute.xlu0 %4973
    %4977 = vset.pattern.permute.xlu0 0
    %4978 = vperm.xlu0 %4977, %v4900
    %v4979 = vpop.permute.xlu0 %4978
    %4982 = vset.pattern.permute.xlu0 0
    %4983 = vperm.xlu0 %4982, %v4901
    %v4984 = vpop.permute.xlu0 %4983
    %4987 = vset.pattern.permute.xlu0 0
    %4988 = vperm.xlu0 %4987, %v4902
    %v4989 = vpop.permute.xlu0 %4988
    %4992 = vset.pattern.permute.xlu0 0
    %4993 = vperm.xlu0 %4992, %v4903
    %v4994 = vpop.permute.xlu0 %4993
    %4997 = vset.pattern.permute.xlu0 0
    %4998 = vperm.xlu0 %4997, %v4904
    %v4999 = vpop.permute.xlu0 %4998
    %5002 = vset.pattern.permute.xlu0 0
    %5003 = vperm.xlu0 %5002, %v4905
    %v5004 = vpop.permute.xlu0 %5003
    %5007 = vset.pattern.permute.xlu0 0
    %5008 = vperm.xlu0 %5007, %v4906
    %v5009 = vpop.permute.xlu0 %5008
    %v5011 = vmul.f32 %v4915, %v4934
    %v5012 = vmul.f32 %v4916, %v4939
    %v5013 = vmul.f32 %v4917, %v4944
    %v5014 = vmul.f32 %v4918, %v4949
    %v5015 = vmul.f32 %v4919, %v4954
    %v5016 = vmul.f32 %v4920, %v4959
    %v5017 = vmul.f32 %v4921, %v4964
    %v5018 = vmul.f32 %v4922, %v4969
    %v5019 = vmul.f32 %v4923, %v4974
    %v5020 = vmul.f32 %v4924, %v4979
    %v5021 = vmul.f32 %v4925, %v4984
    %v5022 = vmul.f32 %v4926, %v4989
    %v5023 = vmul.f32 %v4927, %v4994
    %v5024 = vmul.f32 %v4928, %v4999
    %v5025 = vmul.f32 %v4929, %v5004
    %v5026 = vmul.f32 %v4930, %v5009
    %v5027 = vadd.f32 %v4875, %v5011
    %v5028 = vadd.f32 %v4876, %v5012
    %v5029 = vadd.f32 %v4877, %v5013
    %v5030 = vadd.f32 %v4878, %v5014
    %v5031 = vadd.f32 %v4879, %v5015
    %v5032 = vadd.f32 %v4880, %v5016
    %v5033 = vadd.f32 %v4881, %v5017
    %v5034 = vadd.f32 %v4882, %v5018
    %v5035 = vadd.f32 %v4883, %v5019
    %v5036 = vadd.f32 %v4884, %v5020
    %v5037 = vadd.f32 %v4885, %v5021
    %v5038 = vadd.f32 %v4886, %v5022
    %v5039 = vadd.f32 %v4887, %v5023
    %v5040 = vadd.f32 %v4888, %v5024
    %v5041 = vadd.f32 %v4889, %v5025
    %v5042 = vadd.f32 %v4890, %v5026
    %v5043 = vmul.f32 %v852, %v1172
    %v5044 = vmul.f32 %v853, %v1173
    %v5045 = vmul.f32 %v854, %v1174
    %v5046 = vmul.f32 %v855, %v1175
    %v5047 = vmul.f32 %v856, %v1176
    %v5048 = vmul.f32 %v857, %v1177
    %v5049 = vmul.f32 %v858, %v1178
    %v5050 = vmul.f32 %v859, %v1179
    %v5051 = vmul.f32 %v860, %v1180
    %v5052 = vmul.f32 %v861, %v1181
    %v5053 = vmul.f32 %v862, %v1182
    %v5054 = vmul.f32 %v863, %v1183
    %v5055 = vmul.f32 %v864, %v1184
    %v5056 = vmul.f32 %v865, %v1185
    %v5057 = vmul.f32 %v866, %v1186
    %v5058 = vmul.f32 %v867, %v1187
    %s5059 = scalar_lea.vmem %s7, 21
    %v5060 = vld [vmem:[%s5059] sm:$0x1]
    %v5062 = vlaneseq
    %v5063 = vshrl.u32 %v5062, 7
    %v5064 = vsub.s32 0, %v5063
    %v5065 = vrot.slane %v5060, %v5064
    %v5067 = vmul.f32 %v1686, %v5065
    %v5068 = vmul.f32 %v1685, %v5065
    %v5069 = vmul.f32 %v1684, %v5065
    %v5070 = vmul.f32 %v1683, %v5065
    %v5071 = vmul.f32 %v1682, %v5065
    %v5072 = vmul.f32 %v1681, %v5065
    %v5073 = vmul.f32 %v1680, %v5065
    %v5074 = vmul.f32 %v1679, %v5065
    %v5075 = vmul.f32 %v1678, %v5065
    %v5076 = vmul.f32 %v1677, %v5065
    %v5077 = vmul.f32 %v1676, %v5065
    %v5078 = vmul.f32 %v1675, %v5065
    %v5079 = vmul.f32 %v1674, %v5065
    %v5080 = vmul.f32 %v1673, %v5065
    %v5081 = vmul.f32 %v1672, %v5065
    %v5082 = vmul.f32 %v1671, %v5065
    %5084 = vset.pattern.permute.xlu0 0
    %5085 = vperm.xlu0 %5084, %v5043
    %v5086 = vpop.permute.xlu0 %5085
    %5089 = vset.pattern.permute.xlu0 0
    %5090 = vperm.xlu0 %5089, %v5044
    %v5091 = vpop.permute.xlu0 %5090
    %5094 = vset.pattern.permute.xlu0 0
    %5095 = vperm.xlu0 %5094, %v5045
    %v5096 = vpop.permute.xlu0 %5095
    %5099 = vset.pattern.permute.xlu0 0
    %5100 = vperm.xlu0 %5099, %v5046
    %v5101 = vpop.permute.xlu0 %5100
    %5104 = vset.pattern.permute.xlu0 0
    %5105 = vperm.xlu0 %5104, %v5047
    %v5106 = vpop.permute.xlu0 %5105
    %5109 = vset.pattern.permute.xlu0 0
    %5110 = vperm.xlu0 %5109, %v5048
    %v5111 = vpop.permute.xlu0 %5110
    %5114 = vset.pattern.permute.xlu0 0
    %5115 = vperm.xlu0 %5114, %v5049
    %v5116 = vpop.permute.xlu0 %5115
    %5119 = vset.pattern.permute.xlu0 0
    %5120 = vperm.xlu0 %5119, %v5050
    %v5121 = vpop.permute.xlu0 %5120
    %5124 = vset.pattern.permute.xlu0 0
    %5125 = vperm.xlu0 %5124, %v5051
    %v5126 = vpop.permute.xlu0 %5125
    %5129 = vset.pattern.permute.xlu0 0
    %5130 = vperm.xlu0 %5129, %v5052
    %v5131 = vpop.permute.xlu0 %5130
    %5134 = vset.pattern.permute.xlu0 0
    %5135 = vperm.xlu0 %5134, %v5053
    %v5136 = vpop.permute.xlu0 %5135
    %5139 = vset.pattern.permute.xlu0 0
    %5140 = vperm.xlu0 %5139, %v5054
    %v5141 = vpop.permute.xlu0 %5140
    %5144 = vset.pattern.permute.xlu0 0
    %5145 = vperm.xlu0 %5144, %v5055
    %v5146 = vpop.permute.xlu0 %5145
    %5149 = vset.pattern.permute.xlu0 0
    %5150 = vperm.xlu0 %5149, %v5056
    %v5151 = vpop.permute.xlu0 %5150
    %5154 = vset.pattern.permute.xlu0 0
    %5155 = vperm.xlu0 %5154, %v5057
    %v5156 = vpop.permute.xlu0 %5155
    %5159 = vset.pattern.permute.xlu0 0
    %5160 = vperm.xlu0 %5159, %v5058
    %v5161 = vpop.permute.xlu0 %5160
    %v5163 = vmul.f32 %v5067, %v5086
    %v5164 = vmul.f32 %v5068, %v5091
    %v5165 = vmul.f32 %v5069, %v5096
    %v5166 = vmul.f32 %v5070, %v5101
    %v5167 = vmul.f32 %v5071, %v5106
    %v5168 = vmul.f32 %v5072, %v5111
    %v5169 = vmul.f32 %v5073, %v5116
    %v5170 = vmul.f32 %v5074, %v5121
    %v5171 = vmul.f32 %v5075, %v5126
    %v5172 = vmul.f32 %v5076, %v5131
    %v5173 = vmul.f32 %v5077, %v5136
    %v5174 = vmul.f32 %v5078, %v5141
    %v5175 = vmul.f32 %v5079, %v5146
    %v5176 = vmul.f32 %v5080, %v5151
    %v5177 = vmul.f32 %v5081, %v5156
    %v5178 = vmul.f32 %v5082, %v5161
    %v5179 = vadd.f32 %v5027, %v5163
    %v5180 = vadd.f32 %v5028, %v5164
    %v5181 = vadd.f32 %v5029, %v5165
    %v5182 = vadd.f32 %v5030, %v5166
    %v5183 = vadd.f32 %v5031, %v5167
    %v5184 = vadd.f32 %v5032, %v5168
    %v5185 = vadd.f32 %v5033, %v5169
    %v5186 = vadd.f32 %v5034, %v5170
    %v5187 = vadd.f32 %v5035, %v5171
    %v5188 = vadd.f32 %v5036, %v5172
    %v5189 = vadd.f32 %v5037, %v5173
    %v5190 = vadd.f32 %v5038, %v5174
    %v5191 = vadd.f32 %v5039, %v5175
    %v5192 = vadd.f32 %v5040, %v5176
    %v5193 = vadd.f32 %v5041, %v5177
    %v5194 = vadd.f32 %v5042, %v5178
    %v5195 = vmul.f32 %v852, %v1252
    %v5196 = vmul.f32 %v853, %v1253
    %v5197 = vmul.f32 %v854, %v1254
    %v5198 = vmul.f32 %v855, %v1255
    %v5199 = vmul.f32 %v856, %v1256
    %v5200 = vmul.f32 %v857, %v1257
    %v5201 = vmul.f32 %v858, %v1258
    %v5202 = vmul.f32 %v859, %v1259
    %v5203 = vmul.f32 %v860, %v1260
    %v5204 = vmul.f32 %v861, %v1261
    %v5205 = vmul.f32 %v862, %v1262
    %v5206 = vmul.f32 %v863, %v1263
    %v5207 = vmul.f32 %v864, %v1264
    %v5208 = vmul.f32 %v865, %v1265
    %v5209 = vmul.f32 %v866, %v1266
    %v5210 = vmul.f32 %v867, %v1267
    %s5211 = scalar_lea.vmem %s7, 22
    %v5212 = vld [vmem:[%s5211] sm:$0x1]
    %v5214 = vlaneseq
    %v5215 = vshrl.u32 %v5214, 7
    %v5216 = vsub.s32 0, %v5215
    %v5217 = vrot.slane %v5212, %v5216
    %v5219 = vmul.f32 %v1870, %v5217
    %v5220 = vmul.f32 %v1869, %v5217
    %v5221 = vmul.f32 %v1868, %v5217
    %v5222 = vmul.f32 %v1867, %v5217
    %v5223 = vmul.f32 %v1866, %v5217
    %v5224 = vmul.f32 %v1865, %v5217
    %v5225 = vmul.f32 %v1864, %v5217
    %v5226 = vmul.f32 %v1863, %v5217
    %v5227 = vmul.f32 %v1862, %v5217
    %v5228 = vmul.f32 %v1861, %v5217
    %v5229 = vmul.f32 %v1860, %v5217
    %v5230 = vmul.f32 %v1859, %v5217
    %v5231 = vmul.f32 %v1858, %v5217
    %v5232 = vmul.f32 %v1857, %v5217
    %v5233 = vmul.f32 %v1856, %v5217
    %v5234 = vmul.f32 %v1855, %v5217
    %5236 = vset.pattern.permute.xlu0 0
    %5237 = vperm.xlu0 %5236, %v5195
    %v5238 = vpop.permute.xlu0 %5237
    %5241 = vset.pattern.permute.xlu0 0
    %5242 = vperm.xlu0 %5241, %v5196
    %v5243 = vpop.permute.xlu0 %5242
    %5246 = vset.pattern.permute.xlu0 0
    %5247 = vperm.xlu0 %5246, %v5197
    %v5248 = vpop.permute.xlu0 %5247
    %5251 = vset.pattern.permute.xlu0 0
    %5252 = vperm.xlu0 %5251, %v5198
    %v5253 = vpop.permute.xlu0 %5252
    %5256 = vset.pattern.permute.xlu0 0
    %5257 = vperm.xlu0 %5256, %v5199
    %v5258 = vpop.permute.xlu0 %5257
    %5261 = vset.pattern.permute.xlu0 0
    %5262 = vperm.xlu0 %5261, %v5200
    %v5263 = vpop.permute.xlu0 %5262
    %5266 = vset.pattern.permute.xlu0 0
    %5267 = vperm.xlu0 %5266, %v5201
    %v5268 = vpop.permute.xlu0 %5267
    %5271 = vset.pattern.permute.xlu0 0
    %5272 = vperm.xlu0 %5271, %v5202
    %v5273 = vpop.permute.xlu0 %5272
    %5276 = vset.pattern.permute.xlu0 0
    %5277 = vperm.xlu0 %5276, %v5203
    %v5278 = vpop.permute.xlu0 %5277
    %5281 = vset.pattern.permute.xlu0 0
    %5282 = vperm.xlu0 %5281, %v5204
    %v5283 = vpop.permute.xlu0 %5282
    %5286 = vset.pattern.permute.xlu0 0
    %5287 = vperm.xlu0 %5286, %v5205
    %v5288 = vpop.permute.xlu0 %5287
    %5291 = vset.pattern.permute.xlu0 0
    %5292 = vperm.xlu0 %5291, %v5206
    %v5293 = vpop.permute.xlu0 %5292
    %5296 = vset.pattern.permute.xlu0 0
    %5297 = vperm.xlu0 %5296, %v5207
    %v5298 = vpop.permute.xlu0 %5297
    %5301 = vset.pattern.permute.xlu0 0
    %5302 = vperm.xlu0 %5301, %v5208
    %v5303 = vpop.permute.xlu0 %5302
    %5306 = vset.pattern.permute.xlu0 0
    %5307 = vperm.xlu0 %5306, %v5209
    %v5308 = vpop.permute.xlu0 %5307
    %5311 = vset.pattern.permute.xlu0 0
    %5312 = vperm.xlu0 %5311, %v5210
    %v5313 = vpop.permute.xlu0 %5312
    %v5315 = vmul.f32 %v5219, %v5238
    %v5316 = vmul.f32 %v5220, %v5243
    %v5317 = vmul.f32 %v5221, %v5248
    %v5318 = vmul.f32 %v5222, %v5253
    %v5319 = vmul.f32 %v5223, %v5258
    %v5320 = vmul.f32 %v5224, %v5263
    %v5321 = vmul.f32 %v5225, %v5268
    %v5322 = vmul.f32 %v5226, %v5273
    %v5323 = vmul.f32 %v5227, %v5278
    %v5324 = vmul.f32 %v5228, %v5283
    %v5325 = vmul.f32 %v5229, %v5288
    %v5326 = vmul.f32 %v5230, %v5293
    %v5327 = vmul.f32 %v5231, %v5298
    %v5328 = vmul.f32 %v5232, %v5303
    %v5329 = vmul.f32 %v5233, %v5308
    %v5330 = vmul.f32 %v5234, %v5313
    %v5331 = vadd.f32 %v5179, %v5315
    %v5332 = vadd.f32 %v5180, %v5316
    %v5333 = vadd.f32 %v5181, %v5317
    %v5334 = vadd.f32 %v5182, %v5318
    %v5335 = vadd.f32 %v5183, %v5319
    %v5336 = vadd.f32 %v5184, %v5320
    %v5337 = vadd.f32 %v5185, %v5321
    %v5338 = vadd.f32 %v5186, %v5322
    %v5339 = vadd.f32 %v5187, %v5323
    %v5340 = vadd.f32 %v5188, %v5324
    %v5341 = vadd.f32 %v5189, %v5325
    %v5342 = vadd.f32 %v5190, %v5326
    %v5343 = vadd.f32 %v5191, %v5327
    %v5344 = vadd.f32 %v5192, %v5328
    %v5345 = vadd.f32 %v5193, %v5329
    %v5346 = vadd.f32 %v5194, %v5330
    %v5347 = vmul.f32 %v852, %v1332
    %v5348 = vmul.f32 %v853, %v1333
    %v5349 = vmul.f32 %v854, %v1334
    %v5350 = vmul.f32 %v855, %v1335
    %v5351 = vmul.f32 %v856, %v1336
    %v5352 = vmul.f32 %v857, %v1337
    %v5353 = vmul.f32 %v858, %v1338
    %v5354 = vmul.f32 %v859, %v1339
    %v5355 = vmul.f32 %v860, %v1340
    %v5356 = vmul.f32 %v861, %v1341
    %v5357 = vmul.f32 %v862, %v1342
    %v5358 = vmul.f32 %v863, %v1343
    %v5359 = vmul.f32 %v864, %v1344
    %v5360 = vmul.f32 %v865, %v1345
    %v5361 = vmul.f32 %v866, %v1346
    %v5362 = vmul.f32 %v867, %v1347
    %s5363 = scalar_lea.vmem %s7, 23
    %v5364 = vld [vmem:[%s5363] sm:$0x1]
    %v5366 = vlaneseq
    %v5367 = vshrl.u32 %v5366, 7
    %v5368 = vsub.s32 0, %v5367
    %v5369 = vrot.slane %v5364, %v5368
    %v5371 = vmul.f32 %v2055, %v5369
    %v5372 = vmul.f32 %v2054, %v5369
    %v5373 = vmul.f32 %v2053, %v5369
    %v5374 = vmul.f32 %v2052, %v5369
    %v5375 = vmul.f32 %v2051, %v5369
    %v5376 = vmul.f32 %v2050, %v5369
    %v5377 = vmul.f32 %v2049, %v5369
    %v5378 = vmul.f32 %v2048, %v5369
    %v5379 = vmul.f32 %v2047, %v5369
    %v5380 = vmul.f32 %v2046, %v5369
    %v5381 = vmul.f32 %v2045, %v5369
    %v5382 = vmul.f32 %v2044, %v5369
    %v5383 = vmul.f32 %v2043, %v5369
    %v5384 = vmul.f32 %v2042, %v5369
    %v5385 = vmul.f32 %v2041, %v5369
    %v5386 = vmul.f32 %v2040, %v5369
    %5388 = vset.pattern.permute.xlu0 0
    %5389 = vperm.xlu0 %5388, %v5347
    %v5390 = vpop.permute.xlu0 %5389
    %5393 = vset.pattern.permute.xlu0 0
    %5394 = vperm.xlu0 %5393, %v5348
    %v5395 = vpop.permute.xlu0 %5394
    %5398 = vset.pattern.permute.xlu0 0
    %5399 = vperm.xlu0 %5398, %v5349
    %v5400 = vpop.permute.xlu0 %5399
    %5403 = vset.pattern.permute.xlu0 0
    %5404 = vperm.xlu0 %5403, %v5350
    %v5405 = vpop.permute.xlu0 %5404
    %5408 = vset.pattern.permute.xlu0 0
    %5409 = vperm.xlu0 %5408, %v5351
    %v5410 = vpop.permute.xlu0 %5409
    %5413 = vset.pattern.permute.xlu0 0
    %5414 = vperm.xlu0 %5413, %v5352
    %v5415 = vpop.permute.xlu0 %5414
    %5418 = vset.pattern.permute.xlu0 0
    %5419 = vperm.xlu0 %5418, %v5353
    %v5420 = vpop.permute.xlu0 %5419
    %5423 = vset.pattern.permute.xlu0 0
    %5424 = vperm.xlu0 %5423, %v5354
    %v5425 = vpop.permute.xlu0 %5424
    %5428 = vset.pattern.permute.xlu0 0
    %5429 = vperm.xlu0 %5428, %v5355
    %v5430 = vpop.permute.xlu0 %5429
    %5433 = vset.pattern.permute.xlu0 0
    %5434 = vperm.xlu0 %5433, %v5356
    %v5435 = vpop.permute.xlu0 %5434
    %5438 = vset.pattern.permute.xlu0 0
    %5439 = vperm.xlu0 %5438, %v5357
    %v5440 = vpop.permute.xlu0 %5439
    %5443 = vset.pattern.permute.xlu0 0
    %5444 = vperm.xlu0 %5443, %v5358
    %v5445 = vpop.permute.xlu0 %5444
    %5448 = vset.pattern.permute.xlu0 0
    %5449 = vperm.xlu0 %5448, %v5359
    %v5450 = vpop.permute.xlu0 %5449
    %5453 = vset.pattern.permute.xlu0 0
    %5454 = vperm.xlu0 %5453, %v5360
    %v5455 = vpop.permute.xlu0 %5454
    %5458 = vset.pattern.permute.xlu0 0
    %5459 = vperm.xlu0 %5458, %v5361
    %v5460 = vpop.permute.xlu0 %5459
    %5463 = vset.pattern.permute.xlu0 0
    %5464 = vperm.xlu0 %5463, %v5362
    %v5465 = vpop.permute.xlu0 %5464
    %v5467 = vmul.f32 %v5371, %v5390
    %v5468 = vmul.f32 %v5372, %v5395
    %v5469 = vmul.f32 %v5373, %v5400
    %v5470 = vmul.f32 %v5374, %v5405
    %v5471 = vmul.f32 %v5375, %v5410
    %v5472 = vmul.f32 %v5376, %v5415
    %v5473 = vmul.f32 %v5377, %v5420
    %v5474 = vmul.f32 %v5378, %v5425
    %v5475 = vmul.f32 %v5379, %v5430
    %v5476 = vmul.f32 %v5380, %v5435
    %v5477 = vmul.f32 %v5381, %v5440
    %v5478 = vmul.f32 %v5382, %v5445
    %v5479 = vmul.f32 %v5383, %v5450
    %v5480 = vmul.f32 %v5384, %v5455
    %v5481 = vmul.f32 %v5385, %v5460
    %v5482 = vmul.f32 %v5386, %v5465
    %v5483 = vadd.f32 %v5331, %v5467
    %v5484 = vadd.f32 %v5332, %v5468
    %v5485 = vadd.f32 %v5333, %v5469
    %v5486 = vadd.f32 %v5334, %v5470
    %v5487 = vadd.f32 %v5335, %v5471
    %v5488 = vadd.f32 %v5336, %v5472
    %v5489 = vadd.f32 %v5337, %v5473
    %v5490 = vadd.f32 %v5338, %v5474
    %v5491 = vadd.f32 %v5339, %v5475
    %v5492 = vadd.f32 %v5340, %v5476
    %v5493 = vadd.f32 %v5341, %v5477
    %v5494 = vadd.f32 %v5342, %v5478
    %v5495 = vadd.f32 %v5343, %v5479
    %v5496 = vadd.f32 %v5344, %v5480
    %v5497 = vadd.f32 %v5345, %v5481
    %v5498 = vadd.f32 %v5346, %v5482
    %v5499 = vmul.f32 %v852, %v1396
    %v5500 = vmul.f32 %v853, %v1397
    %v5501 = vmul.f32 %v854, %v1398
    %v5502 = vmul.f32 %v855, %v1399
    %v5503 = vmul.f32 %v856, %v1400
    %v5504 = vmul.f32 %v857, %v1401
    %v5505 = vmul.f32 %v858, %v1402
    %v5506 = vmul.f32 %v859, %v1403
    %v5507 = vmul.f32 %v860, %v1404
    %v5508 = vmul.f32 %v861, %v1405
    %v5509 = vmul.f32 %v862, %v1406
    %v5510 = vmul.f32 %v863, %v1407
    %v5511 = vmul.f32 %v864, %v1408
    %v5512 = vmul.f32 %v865, %v1409
    %v5513 = vmul.f32 %v866, %v1410
    %v5514 = vmul.f32 %v867, %v1411
    %s5515 = scalar_lea.vmem %s7, 24
    %v5516 = vld [vmem:[%s5515] sm:$0x1]
    %v5518 = vlaneseq
    %v5519 = vshrl.u32 %v5518, 7
    %v5520 = vsub.s32 0, %v5519
    %v5521 = vrot.slane %v5516, %v5520
    %v5523 = vmul.f32 %v516, %v5521
    %v5524 = vmul.f32 %v517, %v5521
    %v5525 = vmul.f32 %v518, %v5521
    %v5526 = vmul.f32 %v519, %v5521
    %v5527 = vmul.f32 %v520, %v5521
    %v5528 = vmul.f32 %v521, %v5521
    %v5529 = vmul.f32 %v522, %v5521
    %v5530 = vmul.f32 %v523, %v5521
    %v5531 = vmul.f32 %v524, %v5521
    %v5532 = vmul.f32 %v525, %v5521
    %v5533 = vmul.f32 %v526, %v5521
    %v5534 = vmul.f32 %v527, %v5521
    %v5535 = vmul.f32 %v528, %v5521
    %v5536 = vmul.f32 %v529, %v5521
    %v5537 = vmul.f32 %v530, %v5521
    %v5538 = vmul.f32 %v531, %v5521
    %5540 = vset.pattern.permute.xlu0 0
    %5541 = vperm.xlu0 %5540, %v5499
    %v5542 = vpop.permute.xlu0 %5541
    %5545 = vset.pattern.permute.xlu0 0
    %5546 = vperm.xlu0 %5545, %v5500
    %v5547 = vpop.permute.xlu0 %5546
    %5550 = vset.pattern.permute.xlu0 0
    %5551 = vperm.xlu0 %5550, %v5501
    %v5552 = vpop.permute.xlu0 %5551
    %5555 = vset.pattern.permute.xlu0 0
    %5556 = vperm.xlu0 %5555, %v5502
    %v5557 = vpop.permute.xlu0 %5556
    %5560 = vset.pattern.permute.xlu0 0
    %5561 = vperm.xlu0 %5560, %v5503
    %v5562 = vpop.permute.xlu0 %5561
    %5565 = vset.pattern.permute.xlu0 0
    %5566 = vperm.xlu0 %5565, %v5504
    %v5567 = vpop.permute.xlu0 %5566
    %5570 = vset.pattern.permute.xlu0 0
    %5571 = vperm.xlu0 %5570, %v5505
    %v5572 = vpop.permute.xlu0 %5571
    %5575 = vset.pattern.permute.xlu0 0
    %5576 = vperm.xlu0 %5575, %v5506
    %v5577 = vpop.permute.xlu0 %5576
    %5580 = vset.pattern.permute.xlu0 0
    %5581 = vperm.xlu0 %5580, %v5507
    %v5582 = vpop.permute.xlu0 %5581
    %5585 = vset.pattern.permute.xlu0 0
    %5586 = vperm.xlu0 %5585, %v5508
    %v5587 = vpop.permute.xlu0 %5586
    %5590 = vset.pattern.permute.xlu0 0
    %5591 = vperm.xlu0 %5590, %v5509
    %v5592 = vpop.permute.xlu0 %5591
    %5595 = vset.pattern.permute.xlu0 0
    %5596 = vperm.xlu0 %5595, %v5510
    %v5597 = vpop.permute.xlu0 %5596
    %5600 = vset.pattern.permute.xlu0 0
    %5601 = vperm.xlu0 %5600, %v5511
    %v5602 = vpop.permute.xlu0 %5601
    %5605 = vset.pattern.permute.xlu0 0
    %5606 = vperm.xlu0 %5605, %v5512
    %v5607 = vpop.permute.xlu0 %5606
    %5610 = vset.pattern.permute.xlu0 0
    %5611 = vperm.xlu0 %5610, %v5513
    %v5612 = vpop.permute.xlu0 %5611
    %5615 = vset.pattern.permute.xlu0 0
    %5616 = vperm.xlu0 %5615, %v5514
    %v5617 = vpop.permute.xlu0 %5616
    %v5619 = vmul.f32 %v5523, %v5542
    %v5620 = vmul.f32 %v5524, %v5547
    %v5621 = vmul.f32 %v5525, %v5552
    %v5622 = vmul.f32 %v5526, %v5557
    %v5623 = vmul.f32 %v5527, %v5562
    %v5624 = vmul.f32 %v5528, %v5567
    %v5625 = vmul.f32 %v5529, %v5572
    %v5626 = vmul.f32 %v5530, %v5577
    %v5627 = vmul.f32 %v5531, %v5582
    %v5628 = vmul.f32 %v5532, %v5587
    %v5629 = vmul.f32 %v5533, %v5592
    %v5630 = vmul.f32 %v5534, %v5597
    %v5631 = vmul.f32 %v5535, %v5602
    %v5632 = vmul.f32 %v5536, %v5607
    %v5633 = vmul.f32 %v5537, %v5612
    %v5634 = vmul.f32 %v5538, %v5617
    %v5635 = vadd.f32 %v5483, %v5619
    %v5636 = vadd.f32 %v5484, %v5620
    %v5637 = vadd.f32 %v5485, %v5621
    %v5638 = vadd.f32 %v5486, %v5622
    %v5639 = vadd.f32 %v5487, %v5623
    %v5640 = vadd.f32 %v5488, %v5624
    %v5641 = vadd.f32 %v5489, %v5625
    %v5642 = vadd.f32 %v5490, %v5626
    %v5643 = vadd.f32 %v5491, %v5627
    %v5644 = vadd.f32 %v5492, %v5628
    %v5645 = vadd.f32 %v5493, %v5629
    %v5646 = vadd.f32 %v5494, %v5630
    %v5647 = vadd.f32 %v5495, %v5631
    %v5648 = vadd.f32 %v5496, %v5632
    %v5649 = vadd.f32 %v5497, %v5633
    %v5650 = vadd.f32 %v5498, %v5634
    %v5651 = vmul.f32 %v852, %v1476
    %v5652 = vmul.f32 %v853, %v1477
    %v5653 = vmul.f32 %v854, %v1478
    %v5654 = vmul.f32 %v855, %v1479
    %v5655 = vmul.f32 %v856, %v1480
    %v5656 = vmul.f32 %v857, %v1481
    %v5657 = vmul.f32 %v858, %v1482
    %v5658 = vmul.f32 %v859, %v1483
    %v5659 = vmul.f32 %v860, %v1484
    %v5660 = vmul.f32 %v861, %v1485
    %v5661 = vmul.f32 %v862, %v1486
    %v5662 = vmul.f32 %v863, %v1487
    %v5663 = vmul.f32 %v864, %v1488
    %v5664 = vmul.f32 %v865, %v1489
    %v5665 = vmul.f32 %v866, %v1490
    %v5666 = vmul.f32 %v867, %v1491
    %s5667 = scalar_lea.vmem %s7, 25
    %v5668 = vld [vmem:[%s5667] sm:$0x1]
    %v5670 = vlaneseq
    %v5671 = vshrl.u32 %v5670, 7
    %v5672 = vsub.s32 0, %v5671
    %v5673 = vrot.slane %v5668, %v5672
    %v5675 = vmul.f32 %v2391, %v5673
    %v5676 = vmul.f32 %v2390, %v5673
    %v5677 = vmul.f32 %v2389, %v5673
    %v5678 = vmul.f32 %v2388, %v5673
    %v5679 = vmul.f32 %v2387, %v5673
    %v5680 = vmul.f32 %v2386, %v5673
    %v5681 = vmul.f32 %v2385, %v5673
    %v5682 = vmul.f32 %v2384, %v5673
    %v5683 = vmul.f32 %v2383, %v5673
    %v5684 = vmul.f32 %v2382, %v5673
    %v5685 = vmul.f32 %v2381, %v5673
    %v5686 = vmul.f32 %v2380, %v5673
    %v5687 = vmul.f32 %v2379, %v5673
    %v5688 = vmul.f32 %v2378, %v5673
    %v5689 = vmul.f32 %v2377, %v5673
    %v5690 = vmul.f32 %v2392, %v5673
    %5692 = vset.pattern.permute.xlu0 0
    %5693 = vperm.xlu0 %5692, %v5651
    %v5694 = vpop.permute.xlu0 %5693
    %5697 = vset.pattern.permute.xlu0 0
    %5698 = vperm.xlu0 %5697, %v5652
    %v5699 = vpop.permute.xlu0 %5698
    %5702 = vset.pattern.permute.xlu0 0
    %5703 = vperm.xlu0 %5702, %v5653
    %v5704 = vpop.permute.xlu0 %5703
    %5707 = vset.pattern.permute.xlu0 0
    %5708 = vperm.xlu0 %5707, %v5654
    %v5709 = vpop.permute.xlu0 %5708
    %5712 = vset.pattern.permute.xlu0 0
    %5713 = vperm.xlu0 %5712, %v5655
    %v5714 = vpop.permute.xlu0 %5713
    %5717 = vset.pattern.permute.xlu0 0
    %5718 = vperm.xlu0 %5717, %v5656
    %v5719 = vpop.permute.xlu0 %5718
    %5722 = vset.pattern.permute.xlu0 0
    %5723 = vperm.xlu0 %5722, %v5657
    %v5724 = vpop.permute.xlu0 %5723
    %5727 = vset.pattern.permute.xlu0 0
    %5728 = vperm.xlu0 %5727, %v5658
    %v5729 = vpop.permute.xlu0 %5728
    %5732 = vset.pattern.permute.xlu0 0
    %5733 = vperm.xlu0 %5732, %v5659
    %v5734 = vpop.permute.xlu0 %5733
    %5737 = vset.pattern.permute.xlu0 0
    %5738 = vperm.xlu0 %5737, %v5660
    %v5739 = vpop.permute.xlu0 %5738
    %5742 = vset.pattern.permute.xlu0 0
    %5743 = vperm.xlu0 %5742, %v5661
    %v5744 = vpop.permute.xlu0 %5743
    %5747 = vset.pattern.permute.xlu0 0
    %5748 = vperm.xlu0 %5747, %v5662
    %v5749 = vpop.permute.xlu0 %5748
    %5752 = vset.pattern.permute.xlu0 0
    %5753 = vperm.xlu0 %5752, %v5663
    %v5754 = vpop.permute.xlu0 %5753
    %5757 = vset.pattern.permute.xlu0 0
    %5758 = vperm.xlu0 %5757, %v5664
    %v5759 = vpop.permute.xlu0 %5758
    %5762 = vset.pattern.permute.xlu0 0
    %5763 = vperm.xlu0 %5762, %v5665
    %v5764 = vpop.permute.xlu0 %5763
    %5767 = vset.pattern.permute.xlu0 0
    %5768 = vperm.xlu0 %5767, %v5666
    %v5769 = vpop.permute.xlu0 %5768
    %v5771 = vmul.f32 %v5675, %v5694
    %v5772 = vmul.f32 %v5676, %v5699
    %v5773 = vmul.f32 %v5677, %v5704
    %v5774 = vmul.f32 %v5678, %v5709
    %v5775 = vmul.f32 %v5679, %v5714
    %v5776 = vmul.f32 %v5680, %v5719
    %v5777 = vmul.f32 %v5681, %v5724
    %v5778 = vmul.f32 %v5682, %v5729
    %v5779 = vmul.f32 %v5683, %v5734
    %v5780 = vmul.f32 %v5684, %v5739
    %v5781 = vmul.f32 %v5685, %v5744
    %v5782 = vmul.f32 %v5686, %v5749
    %v5783 = vmul.f32 %v5687, %v5754
    %v5784 = vmul.f32 %v5688, %v5759
    %v5785 = vmul.f32 %v5689, %v5764
    %v5786 = vmul.f32 %v5690, %v5769
    %v5787 = vadd.f32 %v5635, %v5771
    %v5788 = vadd.f32 %v5636, %v5772
    %v5789 = vadd.f32 %v5637, %v5773
    %v5790 = vadd.f32 %v5638, %v5774
    %v5791 = vadd.f32 %v5639, %v5775
    %v5792 = vadd.f32 %v5640, %v5776
    %v5793 = vadd.f32 %v5641, %v5777
    %v5794 = vadd.f32 %v5642, %v5778
    %v5795 = vadd.f32 %v5643, %v5779
    %v5796 = vadd.f32 %v5644, %v5780
    %v5797 = vadd.f32 %v5645, %v5781
    %v5798 = vadd.f32 %v5646, %v5782
    %v5799 = vadd.f32 %v5647, %v5783
    %v5800 = vadd.f32 %v5648, %v5784
    %v5801 = vadd.f32 %v5649, %v5785
    %v5802 = vadd.f32 %v5650, %v5786
    %v5803 = vmul.f32 %v852, %v1556
    %v5804 = vmul.f32 %v853, %v1557
    %v5805 = vmul.f32 %v854, %v1558
    %v5806 = vmul.f32 %v855, %v1559
    %v5807 = vmul.f32 %v856, %v1560
    %v5808 = vmul.f32 %v857, %v1561
    %v5809 = vmul.f32 %v858, %v1562
    %v5810 = vmul.f32 %v859, %v1563
    %v5811 = vmul.f32 %v860, %v1564
    %v5812 = vmul.f32 %v861, %v1565
    %v5813 = vmul.f32 %v862, %v1566
    %v5814 = vmul.f32 %v863, %v1567
    %v5815 = vmul.f32 %v864, %v1568
    %v5816 = vmul.f32 %v865, %v1569
    %v5817 = vmul.f32 %v866, %v1570
    %v5818 = vmul.f32 %v867, %v1571
    %s5819 = scalar_lea.vmem %s7, 26
    %v5820 = vld [vmem:[%s5819] sm:$0x1]
    %v5822 = vlaneseq
    %v5823 = vshrl.u32 %v5822, 7
    %v5824 = vsub.s32 0, %v5823
    %v5825 = vrot.slane %v5820, %v5824
    %v5827 = vmul.f32 %v2576, %v5825
    %v5828 = vmul.f32 %v2575, %v5825
    %v5829 = vmul.f32 %v2574, %v5825
    %v5830 = vmul.f32 %v2573, %v5825
    %v5831 = vmul.f32 %v2572, %v5825
    %v5832 = vmul.f32 %v2571, %v5825
    %v5833 = vmul.f32 %v2570, %v5825
    %v5834 = vmul.f32 %v2569, %v5825
    %v5835 = vmul.f32 %v2568, %v5825
    %v5836 = vmul.f32 %v2567, %v5825
    %v5837 = vmul.f32 %v2566, %v5825
    %v5838 = vmul.f32 %v2565, %v5825
    %v5839 = vmul.f32 %v2564, %v5825
    %v5840 = vmul.f32 %v2563, %v5825
    %v5841 = vmul.f32 %v2562, %v5825
    %v5842 = vmul.f32 %v2577, %v5825
    %5844 = vset.pattern.permute.xlu0 0
    %5845 = vperm.xlu0 %5844, %v5803
    %v5846 = vpop.permute.xlu0 %5845
    %5849 = vset.pattern.permute.xlu0 0
    %5850 = vperm.xlu0 %5849, %v5804
    %v5851 = vpop.permute.xlu0 %5850
    %5854 = vset.pattern.permute.xlu0 0
    %5855 = vperm.xlu0 %5854, %v5805
    %v5856 = vpop.permute.xlu0 %5855
    %5859 = vset.pattern.permute.xlu0 0
    %5860 = vperm.xlu0 %5859, %v5806
    %v5861 = vpop.permute.xlu0 %5860
    %5864 = vset.pattern.permute.xlu0 0
    %5865 = vperm.xlu0 %5864, %v5807
    %v5866 = vpop.permute.xlu0 %5865
    %5869 = vset.pattern.permute.xlu0 0
    %5870 = vperm.xlu0 %5869, %v5808
    %v5871 = vpop.permute.xlu0 %5870
    %5874 = vset.pattern.permute.xlu0 0
    %5875 = vperm.xlu0 %5874, %v5809
    %v5876 = vpop.permute.xlu0 %5875
    %5879 = vset.pattern.permute.xlu0 0
    %5880 = vperm.xlu0 %5879, %v5810
    %v5881 = vpop.permute.xlu0 %5880
    %5884 = vset.pattern.permute.xlu0 0
    %5885 = vperm.xlu0 %5884, %v5811
    %v5886 = vpop.permute.xlu0 %5885
    %5889 = vset.pattern.permute.xlu0 0
    %5890 = vperm.xlu0 %5889, %v5812
    %v5891 = vpop.permute.xlu0 %5890
    %5894 = vset.pattern.permute.xlu0 0
    %5895 = vperm.xlu0 %5894, %v5813
    %v5896 = vpop.permute.xlu0 %5895
    %5899 = vset.pattern.permute.xlu0 0
    %5900 = vperm.xlu0 %5899, %v5814
    %v5901 = vpop.permute.xlu0 %5900
    %5904 = vset.pattern.permute.xlu0 0
    %5905 = vperm.xlu0 %5904, %v5815
    %v5906 = vpop.permute.xlu0 %5905
    %5909 = vset.pattern.permute.xlu0 0
    %5910 = vperm.xlu0 %5909, %v5816
    %v5911 = vpop.permute.xlu0 %5910
    %5914 = vset.pattern.permute.xlu0 0
    %5915 = vperm.xlu0 %5914, %v5817
    %v5916 = vpop.permute.xlu0 %5915
    %5919 = vset.pattern.permute.xlu0 0
    %5920 = vperm.xlu0 %5919, %v5818
    %v5921 = vpop.permute.xlu0 %5920
    %v5923 = vmul.f32 %v5827, %v5846
    %v5924 = vmul.f32 %v5828, %v5851
    %v5925 = vmul.f32 %v5829, %v5856
    %v5926 = vmul.f32 %v5830, %v5861
    %v5927 = vmul.f32 %v5831, %v5866
    %v5928 = vmul.f32 %v5832, %v5871
    %v5929 = vmul.f32 %v5833, %v5876
    %v5930 = vmul.f32 %v5834, %v5881
    %v5931 = vmul.f32 %v5835, %v5886
    %v5932 = vmul.f32 %v5836, %v5891
    %v5933 = vmul.f32 %v5837, %v5896
    %v5934 = vmul.f32 %v5838, %v5901
    %v5935 = vmul.f32 %v5839, %v5906
    %v5936 = vmul.f32 %v5840, %v5911
    %v5937 = vmul.f32 %v5841, %v5916
    %v5938 = vmul.f32 %v5842, %v5921
    %v5939 = vadd.f32 %v5787, %v5923
    %v5940 = vadd.f32 %v5788, %v5924
    %v5941 = vadd.f32 %v5789, %v5925
    %v5942 = vadd.f32 %v5790, %v5926
    %v5943 = vadd.f32 %v5791, %v5927
    %v5944 = vadd.f32 %v5792, %v5928
    %v5945 = vadd.f32 %v5793, %v5929
    %v5946 = vadd.f32 %v5794, %v5930
    %v5947 = vadd.f32 %v5795, %v5931
    %v5948 = vadd.f32 %v5796, %v5932
    %v5949 = vadd.f32 %v5797, %v5933
    %v5950 = vadd.f32 %v5798, %v5934
    %v5951 = vadd.f32 %v5799, %v5935
    %v5952 = vadd.f32 %v5800, %v5936
    %v5953 = vadd.f32 %v5801, %v5937
    %v5954 = vadd.f32 %v5802, %v5938
    %v5955 = vmul.f32 %v852, %v1636
    %v5956 = vmul.f32 %v853, %v1637
    %v5957 = vmul.f32 %v854, %v1638
    %v5958 = vmul.f32 %v855, %v1639
    %v5959 = vmul.f32 %v856, %v1640
    %v5960 = vmul.f32 %v857, %v1641
    %v5961 = vmul.f32 %v858, %v1642
    %v5962 = vmul.f32 %v859, %v1643
    %v5963 = vmul.f32 %v860, %v1644
    %v5964 = vmul.f32 %v861, %v1645
    %v5965 = vmul.f32 %v862, %v1646
    %v5966 = vmul.f32 %v863, %v1647
    %v5967 = vmul.f32 %v864, %v1648
    %v5968 = vmul.f32 %v865, %v1649
    %v5969 = vmul.f32 %v866, %v1650
    %v5970 = vmul.f32 %v867, %v1651
    %s5971 = scalar_lea.vmem %s7, 27
    %v5972 = vld [vmem:[%s5971] sm:$0x1]
    %v5974 = vlaneseq
    %v5975 = vshrl.u32 %v5974, 7
    %v5976 = vsub.s32 0, %v5975
    %v5977 = vrot.slane %v5972, %v5976
    %v5979 = vmul.f32 %v2761, %v5977
    %v5980 = vmul.f32 %v2760, %v5977
    %v5981 = vmul.f32 %v2759, %v5977
    %v5982 = vmul.f32 %v2758, %v5977
    %v5983 = vmul.f32 %v2757, %v5977
    %v5984 = vmul.f32 %v2756, %v5977
    %v5985 = vmul.f32 %v2755, %v5977
    %v5986 = vmul.f32 %v2754, %v5977
    %v5987 = vmul.f32 %v2753, %v5977
    %v5988 = vmul.f32 %v2752, %v5977
    %v5989 = vmul.f32 %v2751, %v5977
    %v5990 = vmul.f32 %v2750, %v5977
    %v5991 = vmul.f32 %v2749, %v5977
    %v5992 = vmul.f32 %v2748, %v5977
    %v5993 = vmul.f32 %v2747, %v5977
    %v5994 = vmul.f32 %v2762, %v5977
    %5996 = vset.pattern.permute.xlu0 0
    %5997 = vperm.xlu0 %5996, %v5955
    %v5998 = vpop.permute.xlu0 %5997
    %6001 = vset.pattern.permute.xlu0 0
    %6002 = vperm.xlu0 %6001, %v5956
    %v6003 = vpop.permute.xlu0 %6002
    %6006 = vset.pattern.permute.xlu0 0
    %6007 = vperm.xlu0 %6006, %v5957
    %v6008 = vpop.permute.xlu0 %6007
    %6011 = vset.pattern.permute.xlu0 0
    %6012 = vperm.xlu0 %6011, %v5958
    %v6013 = vpop.permute.xlu0 %6012
    %6016 = vset.pattern.permute.xlu0 0
    %6017 = vperm.xlu0 %6016, %v5959
    %v6018 = vpop.permute.xlu0 %6017
    %6021 = vset.pattern.permute.xlu0 0
    %6022 = vperm.xlu0 %6021, %v5960
    %v6023 = vpop.permute.xlu0 %6022
    %6026 = vset.pattern.permute.xlu0 0
    %6027 = vperm.xlu0 %6026, %v5961
    %v6028 = vpop.permute.xlu0 %6027
    %6031 = vset.pattern.permute.xlu0 0
    %6032 = vperm.xlu0 %6031, %v5962
    %v6033 = vpop.permute.xlu0 %6032
    %6036 = vset.pattern.permute.xlu0 0
    %6037 = vperm.xlu0 %6036, %v5963
    %v6038 = vpop.permute.xlu0 %6037
    %6041 = vset.pattern.permute.xlu0 0
    %6042 = vperm.xlu0 %6041, %v5964
    %v6043 = vpop.permute.xlu0 %6042
    %6046 = vset.pattern.permute.xlu0 0
    %6047 = vperm.xlu0 %6046, %v5965
    %v6048 = vpop.permute.xlu0 %6047
    %6051 = vset.pattern.permute.xlu0 0
    %6052 = vperm.xlu0 %6051, %v5966
    %v6053 = vpop.permute.xlu0 %6052
    %6056 = vset.pattern.permute.xlu0 0
    %6057 = vperm.xlu0 %6056, %v5967
    %v6058 = vpop.permute.xlu0 %6057
    %6061 = vset.pattern.permute.xlu0 0
    %6062 = vperm.xlu0 %6061, %v5968
    %v6063 = vpop.permute.xlu0 %6062
    %6066 = vset.pattern.permute.xlu0 0
    %6067 = vperm.xlu0 %6066, %v5969
    %v6068 = vpop.permute.xlu0 %6067
    %6071 = vset.pattern.permute.xlu0 0
    %6072 = vperm.xlu0 %6071, %v5970
    %v6073 = vpop.permute.xlu0 %6072
    %v6075 = vmul.f32 %v5979, %v5998
    %v6076 = vmul.f32 %v5980, %v6003
    %v6077 = vmul.f32 %v5981, %v6008
    %v6078 = vmul.f32 %v5982, %v6013
    %v6079 = vmul.f32 %v5983, %v6018
    %v6080 = vmul.f32 %v5984, %v6023
    %v6081 = vmul.f32 %v5985, %v6028
    %v6082 = vmul.f32 %v5986, %v6033
    %v6083 = vmul.f32 %v5987, %v6038
    %v6084 = vmul.f32 %v5988, %v6043
    %v6085 = vmul.f32 %v5989, %v6048
    %v6086 = vmul.f32 %v5990, %v6053
    %v6087 = vmul.f32 %v5991, %v6058
    %v6088 = vmul.f32 %v5992, %v6063
    %v6089 = vmul.f32 %v5993, %v6068
    %v6090 = vmul.f32 %v5994, %v6073
    %v6091 = vadd.f32 %v5939, %v6075
    %v6092 = vadd.f32 %v5940, %v6076
    %v6093 = vadd.f32 %v5941, %v6077
    %v6094 = vadd.f32 %v5942, %v6078
    %v6095 = vadd.f32 %v5943, %v6079
    %v6096 = vadd.f32 %v5944, %v6080
    %v6097 = vadd.f32 %v5945, %v6081
    %v6098 = vadd.f32 %v5946, %v6082
    %v6099 = vadd.f32 %v5947, %v6083
    %v6100 = vadd.f32 %v5948, %v6084
    %v6101 = vadd.f32 %v5949, %v6085
    %v6102 = vadd.f32 %v5950, %v6086
    %v6103 = vadd.f32 %v5951, %v6087
    %v6104 = vadd.f32 %v5952, %v6088
    %v6105 = vadd.f32 %v5953, %v6089
    %v6106 = vadd.f32 %v5954, %v6090
    %v6107 = vmul.f32 %v932, %v1172
    %v6108 = vmul.f32 %v933, %v1173
    %v6109 = vmul.f32 %v934, %v1174
    %v6110 = vmul.f32 %v935, %v1175
    %v6111 = vmul.f32 %v936, %v1176
    %v6112 = vmul.f32 %v937, %v1177
    %v6113 = vmul.f32 %v938, %v1178
    %v6114 = vmul.f32 %v939, %v1179
    %v6115 = vmul.f32 %v940, %v1180
    %v6116 = vmul.f32 %v941, %v1181
    %v6117 = vmul.f32 %v942, %v1182
    %v6118 = vmul.f32 %v943, %v1183
    %v6119 = vmul.f32 %v944, %v1184
    %v6120 = vmul.f32 %v945, %v1185
    %v6121 = vmul.f32 %v946, %v1186
    %v6122 = vmul.f32 %v947, %v1187
    %s6123 = scalar_lea.vmem %s7, 28
    %v6124 = vld [vmem:[%s6123] sm:$0x1]
    %v6126 = vlaneseq
    %v6127 = vshrl.u32 %v6126, 7
    %v6128 = vsub.s32 0, %v6127
    %v6129 = vrot.slane %v6124, %v6128
    %v6131 = vmul.f32 %v1685, %v6129
    %v6132 = vmul.f32 %v1684, %v6129
    %v6133 = vmul.f32 %v1683, %v6129
    %v6134 = vmul.f32 %v1682, %v6129
    %v6135 = vmul.f32 %v1681, %v6129
    %v6136 = vmul.f32 %v1680, %v6129
    %v6137 = vmul.f32 %v1679, %v6129
    %v6138 = vmul.f32 %v1678, %v6129
    %v6139 = vmul.f32 %v1677, %v6129
    %v6140 = vmul.f32 %v1676, %v6129
    %v6141 = vmul.f32 %v1675, %v6129
    %v6142 = vmul.f32 %v1674, %v6129
    %v6143 = vmul.f32 %v1673, %v6129
    %v6144 = vmul.f32 %v1672, %v6129
    %v6145 = vmul.f32 %v1671, %v6129
    %v6146 = vmul.f32 %v1686, %v6129
    %6148 = vset.pattern.permute.xlu0 0
    %6149 = vperm.xlu0 %6148, %v6107
    %v6150 = vpop.permute.xlu0 %6149
    %6153 = vset.pattern.permute.xlu0 0
    %6154 = vperm.xlu0 %6153, %v6108
    %v6155 = vpop.permute.xlu0 %6154
    %6158 = vset.pattern.permute.xlu0 0
    %6159 = vperm.xlu0 %6158, %v6109
    %v6160 = vpop.permute.xlu0 %6159
    %6163 = vset.pattern.permute.xlu0 0
    %6164 = vperm.xlu0 %6163, %v6110
    %v6165 = vpop.permute.xlu0 %6164
    %6168 = vset.pattern.permute.xlu0 0
    %6169 = vperm.xlu0 %6168, %v6111
    %v6170 = vpop.permute.xlu0 %6169
    %6173 = vset.pattern.permute.xlu0 0
    %6174 = vperm.xlu0 %6173, %v6112
    %v6175 = vpop.permute.xlu0 %6174
    %6178 = vset.pattern.permute.xlu0 0
    %6179 = vperm.xlu0 %6178, %v6113
    %v6180 = vpop.permute.xlu0 %6179
    %6183 = vset.pattern.permute.xlu0 0
    %6184 = vperm.xlu0 %6183, %v6114
    %v6185 = vpop.permute.xlu0 %6184
    %6188 = vset.pattern.permute.xlu0 0
    %6189 = vperm.xlu0 %6188, %v6115
    %v6190 = vpop.permute.xlu0 %6189
    %6193 = vset.pattern.permute.xlu0 0
    %6194 = vperm.xlu0 %6193, %v6116
    %v6195 = vpop.permute.xlu0 %6194
    %6198 = vset.pattern.permute.xlu0 0
    %6199 = vperm.xlu0 %6198, %v6117
    %v6200 = vpop.permute.xlu0 %6199
    %6203 = vset.pattern.permute.xlu0 0
    %6204 = vperm.xlu0 %6203, %v6118
    %v6205 = vpop.permute.xlu0 %6204
    %6208 = vset.pattern.permute.xlu0 0
    %6209 = vperm.xlu0 %6208, %v6119
    %v6210 = vpop.permute.xlu0 %6209
    %6213 = vset.pattern.permute.xlu0 0
    %6214 = vperm.xlu0 %6213, %v6120
    %v6215 = vpop.permute.xlu0 %6214
    %6218 = vset.pattern.permute.xlu0 0
    %6219 = vperm.xlu0 %6218, %v6121
    %v6220 = vpop.permute.xlu0 %6219
    %6223 = vset.pattern.permute.xlu0 0
    %6224 = vperm.xlu0 %6223, %v6122
    %v6225 = vpop.permute.xlu0 %6224
    %v6227 = vmul.f32 %v6131, %v6150
    %v6228 = vmul.f32 %v6132, %v6155
    %v6229 = vmul.f32 %v6133, %v6160
    %v6230 = vmul.f32 %v6134, %v6165
    %v6231 = vmul.f32 %v6135, %v6170
    %v6232 = vmul.f32 %v6136, %v6175
    %v6233 = vmul.f32 %v6137, %v6180
    %v6234 = vmul.f32 %v6138, %v6185
    %v6235 = vmul.f32 %v6139, %v6190
    %v6236 = vmul.f32 %v6140, %v6195
    %v6237 = vmul.f32 %v6141, %v6200
    %v6238 = vmul.f32 %v6142, %v6205
    %v6239 = vmul.f32 %v6143, %v6210
    %v6240 = vmul.f32 %v6144, %v6215
    %v6241 = vmul.f32 %v6145, %v6220
    %v6242 = vmul.f32 %v6146, %v6225
    %v6243 = vadd.f32 %v6091, %v6227
    %v6244 = vadd.f32 %v6092, %v6228
    %v6245 = vadd.f32 %v6093, %v6229
    %v6246 = vadd.f32 %v6094, %v6230
    %v6247 = vadd.f32 %v6095, %v6231
    %v6248 = vadd.f32 %v6096, %v6232
    %v6249 = vadd.f32 %v6097, %v6233
    %v6250 = vadd.f32 %v6098, %v6234
    %v6251 = vadd.f32 %v6099, %v6235
    %v6252 = vadd.f32 %v6100, %v6236
    %v6253 = vadd.f32 %v6101, %v6237
    %v6254 = vadd.f32 %v6102, %v6238
    %v6255 = vadd.f32 %v6103, %v6239
    %v6256 = vadd.f32 %v6104, %v6240
    %v6257 = vadd.f32 %v6105, %v6241
    %v6258 = vadd.f32 %v6106, %v6242
    %v6259 = vmul.f32 %v932, %v1252
    %v6260 = vmul.f32 %v933, %v1253
    %v6261 = vmul.f32 %v934, %v1254
    %v6262 = vmul.f32 %v935, %v1255
    %v6263 = vmul.f32 %v936, %v1256
    %v6264 = vmul.f32 %v937, %v1257
    %v6265 = vmul.f32 %v938, %v1258
    %v6266 = vmul.f32 %v939, %v1259
    %v6267 = vmul.f32 %v940, %v1260
    %v6268 = vmul.f32 %v941, %v1261
    %v6269 = vmul.f32 %v942, %v1262
    %v6270 = vmul.f32 %v943, %v1263
    %v6271 = vmul.f32 %v944, %v1264
    %v6272 = vmul.f32 %v945, %v1265
    %v6273 = vmul.f32 %v946, %v1266
    %v6274 = vmul.f32 %v947, %v1267
    %s6275 = scalar_lea.vmem %s7, 29
    %v6276 = vld [vmem:[%s6275] sm:$0x1]
    %v6278 = vlaneseq
    %v6279 = vshrl.u32 %v6278, 7
    %v6280 = vsub.s32 0, %v6279
    %v6281 = vrot.slane %v6276, %v6280
    %v6283 = vmul.f32 %v1869, %v6281
    %v6284 = vmul.f32 %v1868, %v6281
    %v6285 = vmul.f32 %v1867, %v6281
    %v6286 = vmul.f32 %v1866, %v6281
    %v6287 = vmul.f32 %v1865, %v6281
    %v6288 = vmul.f32 %v1864, %v6281
    %v6289 = vmul.f32 %v1863, %v6281
    %v6290 = vmul.f32 %v1862, %v6281
    %v6291 = vmul.f32 %v1861, %v6281
    %v6292 = vmul.f32 %v1860, %v6281
    %v6293 = vmul.f32 %v1859, %v6281
    %v6294 = vmul.f32 %v1858, %v6281
    %v6295 = vmul.f32 %v1857, %v6281
    %v6296 = vmul.f32 %v1856, %v6281
    %v6297 = vmul.f32 %v1855, %v6281
    %v6298 = vmul.f32 %v1870, %v6281
    %6300 = vset.pattern.permute.xlu0 0
    %6301 = vperm.xlu0 %6300, %v6259
    %v6302 = vpop.permute.xlu0 %6301
    %6305 = vset.pattern.permute.xlu0 0
    %6306 = vperm.xlu0 %6305, %v6260
    %v6307 = vpop.permute.xlu0 %6306
    %6310 = vset.pattern.permute.xlu0 0
    %6311 = vperm.xlu0 %6310, %v6261
    %v6312 = vpop.permute.xlu0 %6311
    %6315 = vset.pattern.permute.xlu0 0
    %6316 = vperm.xlu0 %6315, %v6262
    %v6317 = vpop.permute.xlu0 %6316
    %6320 = vset.pattern.permute.xlu0 0
    %6321 = vperm.xlu0 %6320, %v6263
    %v6322 = vpop.permute.xlu0 %6321
    %6325 = vset.pattern.permute.xlu0 0
    %6326 = vperm.xlu0 %6325, %v6264
    %v6327 = vpop.permute.xlu0 %6326
    %6330 = vset.pattern.permute.xlu0 0
    %6331 = vperm.xlu0 %6330, %v6265
    %v6332 = vpop.permute.xlu0 %6331
    %6335 = vset.pattern.permute.xlu0 0
    %6336 = vperm.xlu0 %6335, %v6266
    %v6337 = vpop.permute.xlu0 %6336
    %6340 = vset.pattern.permute.xlu0 0
    %6341 = vperm.xlu0 %6340, %v6267
    %v6342 = vpop.permute.xlu0 %6341
    %6345 = vset.pattern.permute.xlu0 0
    %6346 = vperm.xlu0 %6345, %v6268
    %v6347 = vpop.permute.xlu0 %6346
    %6350 = vset.pattern.permute.xlu0 0
    %6351 = vperm.xlu0 %6350, %v6269
    %v6352 = vpop.permute.xlu0 %6351
    %6355 = vset.pattern.permute.xlu0 0
    %6356 = vperm.xlu0 %6355, %v6270
    %v6357 = vpop.permute.xlu0 %6356
    %6360 = vset.pattern.permute.xlu0 0
    %6361 = vperm.xlu0 %6360, %v6271
    %v6362 = vpop.permute.xlu0 %6361
    %6365 = vset.pattern.permute.xlu0 0
    %6366 = vperm.xlu0 %6365, %v6272
    %v6367 = vpop.permute.xlu0 %6366
    %6370 = vset.pattern.permute.xlu0 0
    %6371 = vperm.xlu0 %6370, %v6273
    %v6372 = vpop.permute.xlu0 %6371
    %6375 = vset.pattern.permute.xlu0 0
    %6376 = vperm.xlu0 %6375, %v6274
    %v6377 = vpop.permute.xlu0 %6376
    %v6379 = vmul.f32 %v6283, %v6302
    %v6380 = vmul.f32 %v6284, %v6307
    %v6381 = vmul.f32 %v6285, %v6312
    %v6382 = vmul.f32 %v6286, %v6317
    %v6383 = vmul.f32 %v6287, %v6322
    %v6384 = vmul.f32 %v6288, %v6327
    %v6385 = vmul.f32 %v6289, %v6332
    %v6386 = vmul.f32 %v6290, %v6337
    %v6387 = vmul.f32 %v6291, %v6342
    %v6388 = vmul.f32 %v6292, %v6347
    %v6389 = vmul.f32 %v6293, %v6352
    %v6390 = vmul.f32 %v6294, %v6357
    %v6391 = vmul.f32 %v6295, %v6362
    %v6392 = vmul.f32 %v6296, %v6367
    %v6393 = vmul.f32 %v6297, %v6372
    %v6394 = vmul.f32 %v6298, %v6377
    %v6395 = vadd.f32 %v6243, %v6379
    %v6396 = vadd.f32 %v6244, %v6380
    %v6397 = vadd.f32 %v6245, %v6381
    %v6398 = vadd.f32 %v6246, %v6382
    %v6399 = vadd.f32 %v6247, %v6383
    %v6400 = vadd.f32 %v6248, %v6384
    %v6401 = vadd.f32 %v6249, %v6385
    %v6402 = vadd.f32 %v6250, %v6386
    %v6403 = vadd.f32 %v6251, %v6387
    %v6404 = vadd.f32 %v6252, %v6388
    %v6405 = vadd.f32 %v6253, %v6389
    %v6406 = vadd.f32 %v6254, %v6390
    %v6407 = vadd.f32 %v6255, %v6391
    %v6408 = vadd.f32 %v6256, %v6392
    %v6409 = vadd.f32 %v6257, %v6393
    %v6410 = vadd.f32 %v6258, %v6394
    %v6411 = vmul.f32 %v932, %v1332
    %v6412 = vmul.f32 %v933, %v1333
    %v6413 = vmul.f32 %v934, %v1334
    %v6414 = vmul.f32 %v935, %v1335
    %v6415 = vmul.f32 %v936, %v1336
    %v6416 = vmul.f32 %v937, %v1337
    %v6417 = vmul.f32 %v938, %v1338
    %v6418 = vmul.f32 %v939, %v1339
    %v6419 = vmul.f32 %v940, %v1340
    %v6420 = vmul.f32 %v941, %v1341
    %v6421 = vmul.f32 %v942, %v1342
    %v6422 = vmul.f32 %v943, %v1343
    %v6423 = vmul.f32 %v944, %v1344
    %v6424 = vmul.f32 %v945, %v1345
    %v6425 = vmul.f32 %v946, %v1346
    %v6426 = vmul.f32 %v947, %v1347
    %s6427 = scalar_lea.vmem %s7, 30
    %v6428 = vld [vmem:[%s6427] sm:$0x1]
    %v6430 = vlaneseq
    %v6431 = vshrl.u32 %v6430, 7
    %v6432 = vsub.s32 0, %v6431
    %v6433 = vrot.slane %v6428, %v6432
    %v6435 = vmul.f32 %v2054, %v6433
    %v6436 = vmul.f32 %v2053, %v6433
    %v6437 = vmul.f32 %v2052, %v6433
    %v6438 = vmul.f32 %v2051, %v6433
    %v6439 = vmul.f32 %v2050, %v6433
    %v6440 = vmul.f32 %v2049, %v6433
    %v6441 = vmul.f32 %v2048, %v6433
    %v6442 = vmul.f32 %v2047, %v6433
    %v6443 = vmul.f32 %v2046, %v6433
    %v6444 = vmul.f32 %v2045, %v6433
    %v6445 = vmul.f32 %v2044, %v6433
    %v6446 = vmul.f32 %v2043, %v6433
    %v6447 = vmul.f32 %v2042, %v6433
    %v6448 = vmul.f32 %v2041, %v6433
    %v6449 = vmul.f32 %v2040, %v6433
    %v6450 = vmul.f32 %v2055, %v6433
    %6452 = vset.pattern.permute.xlu0 0
    %6453 = vperm.xlu0 %6452, %v6411
    %v6454 = vpop.permute.xlu0 %6453
    %6457 = vset.pattern.permute.xlu0 0
    %6458 = vperm.xlu0 %6457, %v6412
    %v6459 = vpop.permute.xlu0 %6458
    %6462 = vset.pattern.permute.xlu0 0
    %6463 = vperm.xlu0 %6462, %v6413
    %v6464 = vpop.permute.xlu0 %6463
    %6467 = vset.pattern.permute.xlu0 0
    %6468 = vperm.xlu0 %6467, %v6414
    %v6469 = vpop.permute.xlu0 %6468
    %6472 = vset.pattern.permute.xlu0 0
    %6473 = vperm.xlu0 %6472, %v6415
    %v6474 = vpop.permute.xlu0 %6473
    %6477 = vset.pattern.permute.xlu0 0
    %6478 = vperm.xlu0 %6477, %v6416
    %v6479 = vpop.permute.xlu0 %6478
    %6482 = vset.pattern.permute.xlu0 0
    %6483 = vperm.xlu0 %6482, %v6417
    %v6484 = vpop.permute.xlu0 %6483
    %6487 = vset.pattern.permute.xlu0 0
    %6488 = vperm.xlu0 %6487, %v6418
    %v6489 = vpop.permute.xlu0 %6488
    %6492 = vset.pattern.permute.xlu0 0
    %6493 = vperm.xlu0 %6492, %v6419
    %v6494 = vpop.permute.xlu0 %6493
    %6497 = vset.pattern.permute.xlu0 0
    %6498 = vperm.xlu0 %6497, %v6420
    %v6499 = vpop.permute.xlu0 %6498
    %6502 = vset.pattern.permute.xlu0 0
    %6503 = vperm.xlu0 %6502, %v6421
    %v6504 = vpop.permute.xlu0 %6503
    %6507 = vset.pattern.permute.xlu0 0
    %6508 = vperm.xlu0 %6507, %v6422
    %v6509 = vpop.permute.xlu0 %6508
    %6512 = vset.pattern.permute.xlu0 0
    %6513 = vperm.xlu0 %6512, %v6423
    %v6514 = vpop.permute.xlu0 %6513
    %6517 = vset.pattern.permute.xlu0 0
    %6518 = vperm.xlu0 %6517, %v6424
    %v6519 = vpop.permute.xlu0 %6518
    %6522 = vset.pattern.permute.xlu0 0
    %6523 = vperm.xlu0 %6522, %v6425
    %v6524 = vpop.permute.xlu0 %6523
    %6527 = vset.pattern.permute.xlu0 0
    %6528 = vperm.xlu0 %6527, %v6426
    %v6529 = vpop.permute.xlu0 %6528
    %v6531 = vmul.f32 %v6435, %v6454
    %v6532 = vmul.f32 %v6436, %v6459
    %v6533 = vmul.f32 %v6437, %v6464
    %v6534 = vmul.f32 %v6438, %v6469
    %v6535 = vmul.f32 %v6439, %v6474
    %v6536 = vmul.f32 %v6440, %v6479
    %v6537 = vmul.f32 %v6441, %v6484
    %v6538 = vmul.f32 %v6442, %v6489
    %v6539 = vmul.f32 %v6443, %v6494
    %v6540 = vmul.f32 %v6444, %v6499
    %v6541 = vmul.f32 %v6445, %v6504
    %v6542 = vmul.f32 %v6446, %v6509
    %v6543 = vmul.f32 %v6447, %v6514
    %v6544 = vmul.f32 %v6448, %v6519
    %v6545 = vmul.f32 %v6449, %v6524
    %v6546 = vmul.f32 %v6450, %v6529
    %v6547 = vadd.f32 %v6395, %v6531
    %v6548 = vadd.f32 %v6396, %v6532
    %v6549 = vadd.f32 %v6397, %v6533
    %v6550 = vadd.f32 %v6398, %v6534
    %v6551 = vadd.f32 %v6399, %v6535
    %v6552 = vadd.f32 %v6400, %v6536
    %v6553 = vadd.f32 %v6401, %v6537
    %v6554 = vadd.f32 %v6402, %v6538
    %v6555 = vadd.f32 %v6403, %v6539
    %v6556 = vadd.f32 %v6404, %v6540
    %v6557 = vadd.f32 %v6405, %v6541
    %v6558 = vadd.f32 %v6406, %v6542
    %v6559 = vadd.f32 %v6407, %v6543
    %v6560 = vadd.f32 %v6408, %v6544
    %v6561 = vadd.f32 %v6409, %v6545
    %v6562 = vadd.f32 %v6410, %v6546
    %v6563 = vmul.f32 %v932, %v1396
    %v6564 = vmul.f32 %v933, %v1397
    %v6565 = vmul.f32 %v934, %v1398
    %v6566 = vmul.f32 %v935, %v1399
    %v6567 = vmul.f32 %v936, %v1400
    %v6568 = vmul.f32 %v937, %v1401
    %v6569 = vmul.f32 %v938, %v1402
    %v6570 = vmul.f32 %v939, %v1403
    %v6571 = vmul.f32 %v940, %v1404
    %v6572 = vmul.f32 %v941, %v1405
    %v6573 = vmul.f32 %v942, %v1406
    %v6574 = vmul.f32 %v943, %v1407
    %v6575 = vmul.f32 %v944, %v1408
    %v6576 = vmul.f32 %v945, %v1409
    %v6577 = vmul.f32 %v946, %v1410
    %v6578 = vmul.f32 %v947, %v1411
    %s6579 = scalar_lea.vmem %s7, 31
    %v6580 = vld [vmem:[%s6579] sm:$0x1]
    %v6582 = vlaneseq
    %v6583 = vshrl.u32 %v6582, 7
    %v6584 = vsub.s32 0, %v6583
    %v6585 = vrot.slane %v6580, %v6584
    %v6587 = vmul.f32 %v517, %v6585
    %v6588 = vmul.f32 %v518, %v6585
    %v6589 = vmul.f32 %v519, %v6585
    %v6590 = vmul.f32 %v520, %v6585
    %v6591 = vmul.f32 %v521, %v6585
    %v6592 = vmul.f32 %v522, %v6585
    %v6593 = vmul.f32 %v523, %v6585
    %v6594 = vmul.f32 %v524, %v6585
    %v6595 = vmul.f32 %v525, %v6585
    %v6596 = vmul.f32 %v526, %v6585
    %v6597 = vmul.f32 %v527, %v6585
    %v6598 = vmul.f32 %v528, %v6585
    %v6599 = vmul.f32 %v529, %v6585
    %v6600 = vmul.f32 %v530, %v6585
    %v6601 = vmul.f32 %v531, %v6585
    %v6602 = vmul.f32 %v516, %v6585
    %6604 = vset.pattern.permute.xlu0 0
    %6605 = vperm.xlu0 %6604, %v6563
    %v6606 = vpop.permute.xlu0 %6605
    %6609 = vset.pattern.permute.xlu0 0
    %6610 = vperm.xlu0 %6609, %v6564
    %v6611 = vpop.permute.xlu0 %6610
    %6614 = vset.pattern.permute.xlu0 0
    %6615 = vperm.xlu0 %6614, %v6565
    %v6616 = vpop.permute.xlu0 %6615
    %6619 = vset.pattern.permute.xlu0 0
    %6620 = vperm.xlu0 %6619, %v6566
    %v6621 = vpop.permute.xlu0 %6620
    %6624 = vset.pattern.permute.xlu0 0
    %6625 = vperm.xlu0 %6624, %v6567
    %v6626 = vpop.permute.xlu0 %6625
    %6629 = vset.pattern.permute.xlu0 0
    %6630 = vperm.xlu0 %6629, %v6568
    %v6631 = vpop.permute.xlu0 %6630
    %6634 = vset.pattern.permute.xlu0 0
    %6635 = vperm.xlu0 %6634, %v6569
    %v6636 = vpop.permute.xlu0 %6635
    %6639 = vset.pattern.permute.xlu0 0
    %6640 = vperm.xlu0 %6639, %v6570
    %v6641 = vpop.permute.xlu0 %6640
    %6644 = vset.pattern.permute.xlu0 0
    %6645 = vperm.xlu0 %6644, %v6571
    %v6646 = vpop.permute.xlu0 %6645
    %6649 = vset.pattern.permute.xlu0 0
    %6650 = vperm.xlu0 %6649, %v6572
    %v6651 = vpop.permute.xlu0 %6650
    %6654 = vset.pattern.permute.xlu0 0
    %6655 = vperm.xlu0 %6654, %v6573
    %v6656 = vpop.permute.xlu0 %6655
    %6659 = vset.pattern.permute.xlu0 0
    %6660 = vperm.xlu0 %6659, %v6574
    %v6661 = vpop.permute.xlu0 %6660
    %6664 = vset.pattern.permute.xlu0 0
    %6665 = vperm.xlu0 %6664, %v6575
    %v6666 = vpop.permute.xlu0 %6665
    %6669 = vset.pattern.permute.xlu0 0
    %6670 = vperm.xlu0 %6669, %v6576
    %v6671 = vpop.permute.xlu0 %6670
    %6674 = vset.pattern.permute.xlu0 0
    %6675 = vperm.xlu0 %6674, %v6577
    %v6676 = vpop.permute.xlu0 %6675
    %6679 = vset.pattern.permute.xlu0 0
    %6680 = vperm.xlu0 %6679, %v6578
    %v6681 = vpop.permute.xlu0 %6680
    %v6683 = vmul.f32 %v6587, %v6606
    %v6684 = vmul.f32 %v6588, %v6611
    %v6685 = vmul.f32 %v6589, %v6616
    %v6686 = vmul.f32 %v6590, %v6621
    %v6687 = vmul.f32 %v6591, %v6626
    %v6688 = vmul.f32 %v6592, %v6631
    %v6689 = vmul.f32 %v6593, %v6636
    %v6690 = vmul.f32 %v6594, %v6641
    %v6691 = vmul.f32 %v6595, %v6646
    %v6692 = vmul.f32 %v6596, %v6651
    %v6693 = vmul.f32 %v6597, %v6656
    %v6694 = vmul.f32 %v6598, %v6661
    %v6695 = vmul.f32 %v6599, %v6666
    %v6696 = vmul.f32 %v6600, %v6671
    %v6697 = vmul.f32 %v6601, %v6676
    %v6698 = vmul.f32 %v6602, %v6681
    %v6699 = vadd.f32 %v6547, %v6683
    %v6700 = vadd.f32 %v6548, %v6684
    %v6701 = vadd.f32 %v6549, %v6685
    %v6702 = vadd.f32 %v6550, %v6686
    %v6703 = vadd.f32 %v6551, %v6687
    %v6704 = vadd.f32 %v6552, %v6688
    %v6705 = vadd.f32 %v6553, %v6689
    %v6706 = vadd.f32 %v6554, %v6690
    %v6707 = vadd.f32 %v6555, %v6691
    %v6708 = vadd.f32 %v6556, %v6692
    %v6709 = vadd.f32 %v6557, %v6693
    %v6710 = vadd.f32 %v6558, %v6694
    %v6711 = vadd.f32 %v6559, %v6695
    %v6712 = vadd.f32 %v6560, %v6696
    %v6713 = vadd.f32 %v6561, %v6697
    %v6714 = vadd.f32 %v6562, %v6698
    %v6715 = vmul.f32 %v932, %v1476
    %v6716 = vmul.f32 %v933, %v1477
    %v6717 = vmul.f32 %v934, %v1478
    %v6718 = vmul.f32 %v935, %v1479
    %v6719 = vmul.f32 %v936, %v1480
    %v6720 = vmul.f32 %v937, %v1481
    %v6721 = vmul.f32 %v938, %v1482
    %v6722 = vmul.f32 %v939, %v1483
    %v6723 = vmul.f32 %v940, %v1484
    %v6724 = vmul.f32 %v941, %v1485
    %v6725 = vmul.f32 %v942, %v1486
    %v6726 = vmul.f32 %v943, %v1487
    %v6727 = vmul.f32 %v944, %v1488
    %v6728 = vmul.f32 %v945, %v1489
    %v6729 = vmul.f32 %v946, %v1490
    %v6730 = vmul.f32 %v947, %v1491
    %s6731 = scalar_lea.vmem %s7, 32
    %v6732 = vld [vmem:[%s6731] sm:$0x1]
    %v6734 = vlaneseq
    %v6735 = vshrl.u32 %v6734, 7
    %v6736 = vsub.s32 0, %v6735
    %v6737 = vrot.slane %v6732, %v6736
    %v6739 = vmul.f32 %v2390, %v6737
    %v6740 = vmul.f32 %v2389, %v6737
    %v6741 = vmul.f32 %v2388, %v6737
    %v6742 = vmul.f32 %v2387, %v6737
    %v6743 = vmul.f32 %v2386, %v6737
    %v6744 = vmul.f32 %v2385, %v6737
    %v6745 = vmul.f32 %v2384, %v6737
    %v6746 = vmul.f32 %v2383, %v6737
    %v6747 = vmul.f32 %v2382, %v6737
    %v6748 = vmul.f32 %v2381, %v6737
    %v6749 = vmul.f32 %v2380, %v6737
    %v6750 = vmul.f32 %v2379, %v6737
    %v6751 = vmul.f32 %v2378, %v6737
    %v6752 = vmul.f32 %v2377, %v6737
    %v6753 = vmul.f32 %v2392, %v6737
    %v6754 = vmul.f32 %v2391, %v6737
    %6756 = vset.pattern.permute.xlu0 0
    %6757 = vperm.xlu0 %6756, %v6715
    %v6758 = vpop.permute.xlu0 %6757
    %6761 = vset.pattern.permute.xlu0 0
    %6762 = vperm.xlu0 %6761, %v6716
    %v6763 = vpop.permute.xlu0 %6762
    %6766 = vset.pattern.permute.xlu0 0
    %6767 = vperm.xlu0 %6766, %v6717
    %v6768 = vpop.permute.xlu0 %6767
    %6771 = vset.pattern.permute.xlu0 0
    %6772 = vperm.xlu0 %6771, %v6718
    %v6773 = vpop.permute.xlu0 %6772
    %6776 = vset.pattern.permute.xlu0 0
    %6777 = vperm.xlu0 %6776, %v6719
    %v6778 = vpop.permute.xlu0 %6777
    %6781 = vset.pattern.permute.xlu0 0
    %6782 = vperm.xlu0 %6781, %v6720
    %v6783 = vpop.permute.xlu0 %6782
    %6786 = vset.pattern.permute.xlu0 0
    %6787 = vperm.xlu0 %6786, %v6721
    %v6788 = vpop.permute.xlu0 %6787
    %6791 = vset.pattern.permute.xlu0 0
    %6792 = vperm.xlu0 %6791, %v6722
    %v6793 = vpop.permute.xlu0 %6792
    %6796 = vset.pattern.permute.xlu0 0
    %6797 = vperm.xlu0 %6796, %v6723
    %v6798 = vpop.permute.xlu0 %6797
    %6801 = vset.pattern.permute.xlu0 0
    %6802 = vperm.xlu0 %6801, %v6724
    %v6803 = vpop.permute.xlu0 %6802
    %6806 = vset.pattern.permute.xlu0 0
    %6807 = vperm.xlu0 %6806, %v6725
    %v6808 = vpop.permute.xlu0 %6807
    %6811 = vset.pattern.permute.xlu0 0
    %6812 = vperm.xlu0 %6811, %v6726
    %v6813 = vpop.permute.xlu0 %6812
    %6816 = vset.pattern.permute.xlu0 0
    %6817 = vperm.xlu0 %6816, %v6727
    %v6818 = vpop.permute.xlu0 %6817
    %6821 = vset.pattern.permute.xlu0 0
    %6822 = vperm.xlu0 %6821, %v6728
    %v6823 = vpop.permute.xlu0 %6822
    %6826 = vset.pattern.permute.xlu0 0
    %6827 = vperm.xlu0 %6826, %v6729
    %v6828 = vpop.permute.xlu0 %6827
    %6831 = vset.pattern.permute.xlu0 0
    %6832 = vperm.xlu0 %6831, %v6730
    %v6833 = vpop.permute.xlu0 %6832
    %v6835 = vmul.f32 %v6739, %v6758
    %v6836 = vmul.f32 %v6740, %v6763
    %v6837 = vmul.f32 %v6741, %v6768
    %v6838 = vmul.f32 %v6742, %v6773
    %v6839 = vmul.f32 %v6743, %v6778
    %v6840 = vmul.f32 %v6744, %v6783
    %v6841 = vmul.f32 %v6745, %v6788
    %v6842 = vmul.f32 %v6746, %v6793
    %v6843 = vmul.f32 %v6747, %v6798
    %v6844 = vmul.f32 %v6748, %v6803
    %v6845 = vmul.f32 %v6749, %v6808
    %v6846 = vmul.f32 %v6750, %v6813
    %v6847 = vmul.f32 %v6751, %v6818
    %v6848 = vmul.f32 %v6752, %v6823
    %v6849 = vmul.f32 %v6753, %v6828
    %v6850 = vmul.f32 %v6754, %v6833
    %v6851 = vadd.f32 %v6699, %v6835
    %v6852 = vadd.f32 %v6700, %v6836
    %v6853 = vadd.f32 %v6701, %v6837
    %v6854 = vadd.f32 %v6702, %v6838
    %v6855 = vadd.f32 %v6703, %v6839
    %v6856 = vadd.f32 %v6704, %v6840
    %v6857 = vadd.f32 %v6705, %v6841
    %v6858 = vadd.f32 %v6706, %v6842
    %v6859 = vadd.f32 %v6707, %v6843
    %v6860 = vadd.f32 %v6708, %v6844
    %v6861 = vadd.f32 %v6709, %v6845
    %v6862 = vadd.f32 %v6710, %v6846
    %v6863 = vadd.f32 %v6711, %v6847
    %v6864 = vadd.f32 %v6712, %v6848
    %v6865 = vadd.f32 %v6713, %v6849
    %v6866 = vadd.f32 %v6714, %v6850
    %v6867 = vmul.f32 %v932, %v1556
    %v6868 = vmul.f32 %v933, %v1557
    %v6869 = vmul.f32 %v934, %v1558
    %v6870 = vmul.f32 %v935, %v1559
    %v6871 = vmul.f32 %v936, %v1560
    %v6872 = vmul.f32 %v937, %v1561
    %v6873 = vmul.f32 %v938, %v1562
    %v6874 = vmul.f32 %v939, %v1563
    %v6875 = vmul.f32 %v940, %v1564
    %v6876 = vmul.f32 %v941, %v1565
    %v6877 = vmul.f32 %v942, %v1566
    %v6878 = vmul.f32 %v943, %v1567
    %v6879 = vmul.f32 %v944, %v1568
    %v6880 = vmul.f32 %v945, %v1569
    %v6881 = vmul.f32 %v946, %v1570
    %v6882 = vmul.f32 %v947, %v1571
    %s6883 = scalar_lea.vmem %s7, 33
    %v6884 = vld [vmem:[%s6883] sm:$0x1]
    %v6886 = vlaneseq
    %v6887 = vshrl.u32 %v6886, 7
    %v6888 = vsub.s32 0, %v6887
    %v6889 = vrot.slane %v6884, %v6888
    %v6891 = vmul.f32 %v2575, %v6889
    %v6892 = vmul.f32 %v2574, %v6889
    %v6893 = vmul.f32 %v2573, %v6889
    %v6894 = vmul.f32 %v2572, %v6889
    %v6895 = vmul.f32 %v2571, %v6889
    %v6896 = vmul.f32 %v2570, %v6889
    %v6897 = vmul.f32 %v2569, %v6889
    %v6898 = vmul.f32 %v2568, %v6889
    %v6899 = vmul.f32 %v2567, %v6889
    %v6900 = vmul.f32 %v2566, %v6889
    %v6901 = vmul.f32 %v2565, %v6889
    %v6902 = vmul.f32 %v2564, %v6889
    %v6903 = vmul.f32 %v2563, %v6889
    %v6904 = vmul.f32 %v2562, %v6889
    %v6905 = vmul.f32 %v2577, %v6889
    %v6906 = vmul.f32 %v2576, %v6889
    %6908 = vset.pattern.permute.xlu0 0
    %6909 = vperm.xlu0 %6908, %v6867
    %v6910 = vpop.permute.xlu0 %6909
    %6913 = vset.pattern.permute.xlu0 0
    %6914 = vperm.xlu0 %6913, %v6868
    %v6915 = vpop.permute.xlu0 %6914
    %6918 = vset.pattern.permute.xlu0 0
    %6919 = vperm.xlu0 %6918, %v6869
    %v6920 = vpop.permute.xlu0 %6919
    %6923 = vset.pattern.permute.xlu0 0
    %6924 = vperm.xlu0 %6923, %v6870
    %v6925 = vpop.permute.xlu0 %6924
    %6928 = vset.pattern.permute.xlu0 0
    %6929 = vperm.xlu0 %6928, %v6871
    %v6930 = vpop.permute.xlu0 %6929
    %6933 = vset.pattern.permute.xlu0 0
    %6934 = vperm.xlu0 %6933, %v6872
    %v6935 = vpop.permute.xlu0 %6934
    %6938 = vset.pattern.permute.xlu0 0
    %6939 = vperm.xlu0 %6938, %v6873
    %v6940 = vpop.permute.xlu0 %6939
    %6943 = vset.pattern.permute.xlu0 0
    %6944 = vperm.xlu0 %6943, %v6874
    %v6945 = vpop.permute.xlu0 %6944
    %6948 = vset.pattern.permute.xlu0 0
    %6949 = vperm.xlu0 %6948, %v6875
    %v6950 = vpop.permute.xlu0 %6949
    %6953 = vset.pattern.permute.xlu0 0
    %6954 = vperm.xlu0 %6953, %v6876
    %v6955 = vpop.permute.xlu0 %6954
    %6958 = vset.pattern.permute.xlu0 0
    %6959 = vperm.xlu0 %6958, %v6877
    %v6960 = vpop.permute.xlu0 %6959
    %6963 = vset.pattern.permute.xlu0 0
    %6964 = vperm.xlu0 %6963, %v6878
    %v6965 = vpop.permute.xlu0 %6964
    %6968 = vset.pattern.permute.xlu0 0
    %6969 = vperm.xlu0 %6968, %v6879
    %v6970 = vpop.permute.xlu0 %6969
    %6973 = vset.pattern.permute.xlu0 0
    %6974 = vperm.xlu0 %6973, %v6880
    %v6975 = vpop.permute.xlu0 %6974
    %6978 = vset.pattern.permute.xlu0 0
    %6979 = vperm.xlu0 %6978, %v6881
    %v6980 = vpop.permute.xlu0 %6979
    %6983 = vset.pattern.permute.xlu0 0
    %6984 = vperm.xlu0 %6983, %v6882
    %v6985 = vpop.permute.xlu0 %6984
    %v6987 = vmul.f32 %v6891, %v6910
    %v6988 = vmul.f32 %v6892, %v6915
    %v6989 = vmul.f32 %v6893, %v6920
    %v6990 = vmul.f32 %v6894, %v6925
    %v6991 = vmul.f32 %v6895, %v6930
    %v6992 = vmul.f32 %v6896, %v6935
    %v6993 = vmul.f32 %v6897, %v6940
    %v6994 = vmul.f32 %v6898, %v6945
    %v6995 = vmul.f32 %v6899, %v6950
    %v6996 = vmul.f32 %v6900, %v6955
    %v6997 = vmul.f32 %v6901, %v6960
    %v6998 = vmul.f32 %v6902, %v6965
    %v6999 = vmul.f32 %v6903, %v6970
    %v7000 = vmul.f32 %v6904, %v6975
    %v7001 = vmul.f32 %v6905, %v6980
    %v7002 = vmul.f32 %v6906, %v6985
    %v7003 = vadd.f32 %v6851, %v6987
    %v7004 = vadd.f32 %v6852, %v6988
    %v7005 = vadd.f32 %v6853, %v6989
    %v7006 = vadd.f32 %v6854, %v6990
    %v7007 = vadd.f32 %v6855, %v6991
    %v7008 = vadd.f32 %v6856, %v6992
    %v7009 = vadd.f32 %v6857, %v6993
    %v7010 = vadd.f32 %v6858, %v6994
    %v7011 = vadd.f32 %v6859, %v6995
    %v7012 = vadd.f32 %v6860, %v6996
    %v7013 = vadd.f32 %v6861, %v6997
    %v7014 = vadd.f32 %v6862, %v6998
    %v7015 = vadd.f32 %v6863, %v6999
    %v7016 = vadd.f32 %v6864, %v7000
    %v7017 = vadd.f32 %v6865, %v7001
    %v7018 = vadd.f32 %v6866, %v7002
    %v7019 = vmul.f32 %v932, %v1636
    %v7020 = vmul.f32 %v933, %v1637
    %v7021 = vmul.f32 %v934, %v1638
    %v7022 = vmul.f32 %v935, %v1639
    %v7023 = vmul.f32 %v936, %v1640
    %v7024 = vmul.f32 %v937, %v1641
    %v7025 = vmul.f32 %v938, %v1642
    %v7026 = vmul.f32 %v939, %v1643
    %v7027 = vmul.f32 %v940, %v1644
    %v7028 = vmul.f32 %v941, %v1645
    %v7029 = vmul.f32 %v942, %v1646
    %v7030 = vmul.f32 %v943, %v1647
    %v7031 = vmul.f32 %v944, %v1648
    %v7032 = vmul.f32 %v945, %v1649
    %v7033 = vmul.f32 %v946, %v1650
    %v7034 = vmul.f32 %v947, %v1651
    %s7035 = scalar_lea.vmem %s7, 34
    %v7036 = vld [vmem:[%s7035] sm:$0x1]
    %v7038 = vlaneseq
    %v7039 = vshrl.u32 %v7038, 7
    %v7040 = vsub.s32 0, %v7039
    %v7041 = vrot.slane %v7036, %v7040
    %v7043 = vmul.f32 %v2760, %v7041
    %v7044 = vmul.f32 %v2759, %v7041
    %v7045 = vmul.f32 %v2758, %v7041
    %v7046 = vmul.f32 %v2757, %v7041
    %v7047 = vmul.f32 %v2756, %v7041
    %v7048 = vmul.f32 %v2755, %v7041
    %v7049 = vmul.f32 %v2754, %v7041
    %v7050 = vmul.f32 %v2753, %v7041
    %v7051 = vmul.f32 %v2752, %v7041
    %v7052 = vmul.f32 %v2751, %v7041
    %v7053 = vmul.f32 %v2750, %v7041
    %v7054 = vmul.f32 %v2749, %v7041
    %v7055 = vmul.f32 %v2748, %v7041
    %v7056 = vmul.f32 %v2747, %v7041
    %v7057 = vmul.f32 %v2762, %v7041
    %v7058 = vmul.f32 %v2761, %v7041
    %7060 = vset.pattern.permute.xlu0 0
    %7061 = vperm.xlu0 %7060, %v7019
    %v7062 = vpop.permute.xlu0 %7061
    %7065 = vset.pattern.permute.xlu0 0
    %7066 = vperm.xlu0 %7065, %v7020
    %v7067 = vpop.permute.xlu0 %7066
    %7070 = vset.pattern.permute.xlu0 0
    %7071 = vperm.xlu0 %7070, %v7021
    %v7072 = vpop.permute.xlu0 %7071
    %7075 = vset.pattern.permute.xlu0 0
    %7076 = vperm.xlu0 %7075, %v7022
    %v7077 = vpop.permute.xlu0 %7076
    %7080 = vset.pattern.permute.xlu0 0
    %7081 = vperm.xlu0 %7080, %v7023
    %v7082 = vpop.permute.xlu0 %7081
    %7085 = vset.pattern.permute.xlu0 0
    %7086 = vperm.xlu0 %7085, %v7024
    %v7087 = vpop.permute.xlu0 %7086
    %7090 = vset.pattern.permute.xlu0 0
    %7091 = vperm.xlu0 %7090, %v7025
    %v7092 = vpop.permute.xlu0 %7091
    %7095 = vset.pattern.permute.xlu0 0
    %7096 = vperm.xlu0 %7095, %v7026
    %v7097 = vpop.permute.xlu0 %7096
    %7100 = vset.pattern.permute.xlu0 0
    %7101 = vperm.xlu0 %7100, %v7027
    %v7102 = vpop.permute.xlu0 %7101
    %7105 = vset.pattern.permute.xlu0 0
    %7106 = vperm.xlu0 %7105, %v7028
    %v7107 = vpop.permute.xlu0 %7106
    %7110 = vset.pattern.permute.xlu0 0
    %7111 = vperm.xlu0 %7110, %v7029
    %v7112 = vpop.permute.xlu0 %7111
    %7115 = vset.pattern.permute.xlu0 0
    %7116 = vperm.xlu0 %7115, %v7030
    %v7117 = vpop.permute.xlu0 %7116
    %7120 = vset.pattern.permute.xlu0 0
    %7121 = vperm.xlu0 %7120, %v7031
    %v7122 = vpop.permute.xlu0 %7121
    %7125 = vset.pattern.permute.xlu0 0
    %7126 = vperm.xlu0 %7125, %v7032
    %v7127 = vpop.permute.xlu0 %7126
    %7130 = vset.pattern.permute.xlu0 0
    %7131 = vperm.xlu0 %7130, %v7033
    %v7132 = vpop.permute.xlu0 %7131
    %7135 = vset.pattern.permute.xlu0 0
    %7136 = vperm.xlu0 %7135, %v7034
    %v7137 = vpop.permute.xlu0 %7136
    %v7139 = vmul.f32 %v7043, %v7062
    %v7140 = vmul.f32 %v7044, %v7067
    %v7141 = vmul.f32 %v7045, %v7072
    %v7142 = vmul.f32 %v7046, %v7077
    %v7143 = vmul.f32 %v7047, %v7082
    %v7144 = vmul.f32 %v7048, %v7087
    %v7145 = vmul.f32 %v7049, %v7092
    %v7146 = vmul.f32 %v7050, %v7097
    %v7147 = vmul.f32 %v7051, %v7102
    %v7148 = vmul.f32 %v7052, %v7107
    %v7149 = vmul.f32 %v7053, %v7112
    %v7150 = vmul.f32 %v7054, %v7117
    %v7151 = vmul.f32 %v7055, %v7122
    %v7152 = vmul.f32 %v7056, %v7127
    %v7153 = vmul.f32 %v7057, %v7132
    %v7154 = vmul.f32 %v7058, %v7137
    %v7155 = vadd.f32 %v7003, %v7139
    %v7156 = vadd.f32 %v7004, %v7140
    %v7157 = vadd.f32 %v7005, %v7141
    %v7158 = vadd.f32 %v7006, %v7142
    %v7159 = vadd.f32 %v7007, %v7143
    %v7160 = vadd.f32 %v7008, %v7144
    %v7161 = vadd.f32 %v7009, %v7145
    %v7162 = vadd.f32 %v7010, %v7146
    %v7163 = vadd.f32 %v7011, %v7147
    %v7164 = vadd.f32 %v7012, %v7148
    %v7165 = vadd.f32 %v7013, %v7149
    %v7166 = vadd.f32 %v7014, %v7150
    %v7167 = vadd.f32 %v7015, %v7151
    %v7168 = vadd.f32 %v7016, %v7152
    %v7169 = vadd.f32 %v7017, %v7153
    %v7170 = vadd.f32 %v7018, %v7154
    %v7171 = vmul.f32 %v1012, %v1172
    %v7172 = vmul.f32 %v1013, %v1173
    %v7173 = vmul.f32 %v1014, %v1174
    %v7174 = vmul.f32 %v1015, %v1175
    %v7175 = vmul.f32 %v1016, %v1176
    %v7176 = vmul.f32 %v1017, %v1177
    %v7177 = vmul.f32 %v1018, %v1178
    %v7178 = vmul.f32 %v1019, %v1179
    %v7179 = vmul.f32 %v1020, %v1180
    %v7180 = vmul.f32 %v1021, %v1181
    %v7181 = vmul.f32 %v1022, %v1182
    %v7182 = vmul.f32 %v1023, %v1183
    %v7183 = vmul.f32 %v1024, %v1184
    %v7184 = vmul.f32 %v1025, %v1185
    %v7185 = vmul.f32 %v1026, %v1186
    %v7186 = vmul.f32 %v1027, %v1187
    %s7187 = scalar_lea.vmem %s7, 35
    %v7188 = vld [vmem:[%s7187] sm:$0x1]
    %v7190 = vlaneseq
    %v7191 = vshrl.u32 %v7190, 7
    %v7192 = vsub.s32 0, %v7191
    %v7193 = vrot.slane %v7188, %v7192
    %v7195 = vmul.f32 %v1684, %v7193
    %v7196 = vmul.f32 %v1683, %v7193
    %v7197 = vmul.f32 %v1682, %v7193
    %v7198 = vmul.f32 %v1681, %v7193
    %v7199 = vmul.f32 %v1680, %v7193
    %v7200 = vmul.f32 %v1679, %v7193
    %v7201 = vmul.f32 %v1678, %v7193
    %v7202 = vmul.f32 %v1677, %v7193
    %v7203 = vmul.f32 %v1676, %v7193
    %v7204 = vmul.f32 %v1675, %v7193
    %v7205 = vmul.f32 %v1674, %v7193
    %v7206 = vmul.f32 %v1673, %v7193
    %v7207 = vmul.f32 %v1672, %v7193
    %v7208 = vmul.f32 %v1671, %v7193
    %v7209 = vmul.f32 %v1686, %v7193
    %v7210 = vmul.f32 %v1685, %v7193
    %7212 = vset.pattern.permute.xlu0 0
    %7213 = vperm.xlu0 %7212, %v7171
    %v7214 = vpop.permute.xlu0 %7213
    %7217 = vset.pattern.permute.xlu0 0
    %7218 = vperm.xlu0 %7217, %v7172
    %v7219 = vpop.permute.xlu0 %7218
    %7222 = vset.pattern.permute.xlu0 0
    %7223 = vperm.xlu0 %7222, %v7173
    %v7224 = vpop.permute.xlu0 %7223
    %7227 = vset.pattern.permute.xlu0 0
    %7228 = vperm.xlu0 %7227, %v7174
    %v7229 = vpop.permute.xlu0 %7228
    %7232 = vset.pattern.permute.xlu0 0
    %7233 = vperm.xlu0 %7232, %v7175
    %v7234 = vpop.permute.xlu0 %7233
    %7237 = vset.pattern.permute.xlu0 0
    %7238 = vperm.xlu0 %7237, %v7176
    %v7239 = vpop.permute.xlu0 %7238
    %7242 = vset.pattern.permute.xlu0 0
    %7243 = vperm.xlu0 %7242, %v7177
    %v7244 = vpop.permute.xlu0 %7243
    %7247 = vset.pattern.permute.xlu0 0
    %7248 = vperm.xlu0 %7247, %v7178
    %v7249 = vpop.permute.xlu0 %7248
    %7252 = vset.pattern.permute.xlu0 0
    %7253 = vperm.xlu0 %7252, %v7179
    %v7254 = vpop.permute.xlu0 %7253
    %7257 = vset.pattern.permute.xlu0 0
    %7258 = vperm.xlu0 %7257, %v7180
    %v7259 = vpop.permute.xlu0 %7258
    %7262 = vset.pattern.permute.xlu0 0
    %7263 = vperm.xlu0 %7262, %v7181
    %v7264 = vpop.permute.xlu0 %7263
    %7267 = vset.pattern.permute.xlu0 0
    %7268 = vperm.xlu0 %7267, %v7182
    %v7269 = vpop.permute.xlu0 %7268
    %7272 = vset.pattern.permute.xlu0 0
    %7273 = vperm.xlu0 %7272, %v7183
    %v7274 = vpop.permute.xlu0 %7273
    %7277 = vset.pattern.permute.xlu0 0
    %7278 = vperm.xlu0 %7277, %v7184
    %v7279 = vpop.permute.xlu0 %7278
    %7282 = vset.pattern.permute.xlu0 0
    %7283 = vperm.xlu0 %7282, %v7185
    %v7284 = vpop.permute.xlu0 %7283
    %7287 = vset.pattern.permute.xlu0 0
    %7288 = vperm.xlu0 %7287, %v7186
    %v7289 = vpop.permute.xlu0 %7288
    %v7291 = vmul.f32 %v7195, %v7214
    %v7292 = vmul.f32 %v7196, %v7219
    %v7293 = vmul.f32 %v7197, %v7224
    %v7294 = vmul.f32 %v7198, %v7229
    %v7295 = vmul.f32 %v7199, %v7234
    %v7296 = vmul.f32 %v7200, %v7239
    %v7297 = vmul.f32 %v7201, %v7244
    %v7298 = vmul.f32 %v7202, %v7249
    %v7299 = vmul.f32 %v7203, %v7254
    %v7300 = vmul.f32 %v7204, %v7259
    %v7301 = vmul.f32 %v7205, %v7264
    %v7302 = vmul.f32 %v7206, %v7269
    %v7303 = vmul.f32 %v7207, %v7274
    %v7304 = vmul.f32 %v7208, %v7279
    %v7305 = vmul.f32 %v7209, %v7284
    %v7306 = vmul.f32 %v7210, %v7289
    %v7307 = vadd.f32 %v7155, %v7291
    %v7308 = vadd.f32 %v7156, %v7292
    %v7309 = vadd.f32 %v7157, %v7293
    %v7310 = vadd.f32 %v7158, %v7294
    %v7311 = vadd.f32 %v7159, %v7295
    %v7312 = vadd.f32 %v7160, %v7296
    %v7313 = vadd.f32 %v7161, %v7297
    %v7314 = vadd.f32 %v7162, %v7298
    %v7315 = vadd.f32 %v7163, %v7299
    %v7316 = vadd.f32 %v7164, %v7300
    %v7317 = vadd.f32 %v7165, %v7301
    %v7318 = vadd.f32 %v7166, %v7302
    %v7319 = vadd.f32 %v7167, %v7303
    %v7320 = vadd.f32 %v7168, %v7304
    %v7321 = vadd.f32 %v7169, %v7305
    %v7322 = vadd.f32 %v7170, %v7306
    %v7323 = vmul.f32 %v1012, %v1252
    %v7324 = vmul.f32 %v1013, %v1253
    %v7325 = vmul.f32 %v1014, %v1254
    %v7326 = vmul.f32 %v1015, %v1255
    %v7327 = vmul.f32 %v1016, %v1256
    %v7328 = vmul.f32 %v1017, %v1257
    %v7329 = vmul.f32 %v1018, %v1258
    %v7330 = vmul.f32 %v1019, %v1259
    %v7331 = vmul.f32 %v1020, %v1260
    %v7332 = vmul.f32 %v1021, %v1261
    %v7333 = vmul.f32 %v1022, %v1262
    %v7334 = vmul.f32 %v1023, %v1263
    %v7335 = vmul.f32 %v1024, %v1264
    %v7336 = vmul.f32 %v1025, %v1265
    %v7337 = vmul.f32 %v1026, %v1266
    %v7338 = vmul.f32 %v1027, %v1267
    %s7339 = scalar_lea.vmem %s7, 36
    %v7340 = vld [vmem:[%s7339] sm:$0x1]
    %v7342 = vlaneseq
    %v7343 = vshrl.u32 %v7342, 7
    %v7344 = vsub.s32 0, %v7343
    %v7345 = vrot.slane %v7340, %v7344
    %v7347 = vmul.f32 %v1868, %v7345
    %v7348 = vmul.f32 %v1867, %v7345
    %v7349 = vmul.f32 %v1866, %v7345
    %v7350 = vmul.f32 %v1865, %v7345
    %v7351 = vmul.f32 %v1864, %v7345
    %v7352 = vmul.f32 %v1863, %v7345
    %v7353 = vmul.f32 %v1862, %v7345
    %v7354 = vmul.f32 %v1861, %v7345
    %v7355 = vmul.f32 %v1860, %v7345
    %v7356 = vmul.f32 %v1859, %v7345
    %v7357 = vmul.f32 %v1858, %v7345
    %v7358 = vmul.f32 %v1857, %v7345
    %v7359 = vmul.f32 %v1856, %v7345
    %v7360 = vmul.f32 %v1855, %v7345
    %v7361 = vmul.f32 %v1870, %v7345
    %v7362 = vmul.f32 %v1869, %v7345
    %7364 = vset.pattern.permute.xlu0 0
    %7365 = vperm.xlu0 %7364, %v7323
    %v7366 = vpop.permute.xlu0 %7365
    %7369 = vset.pattern.permute.xlu0 0
    %7370 = vperm.xlu0 %7369, %v7324
    %v7371 = vpop.permute.xlu0 %7370
    %7374 = vset.pattern.permute.xlu0 0
    %7375 = vperm.xlu0 %7374, %v7325
    %v7376 = vpop.permute.xlu0 %7375
    %7379 = vset.pattern.permute.xlu0 0
    %7380 = vperm.xlu0 %7379, %v7326
    %v7381 = vpop.permute.xlu0 %7380
    %7384 = vset.pattern.permute.xlu0 0
    %7385 = vperm.xlu0 %7384, %v7327
    %v7386 = vpop.permute.xlu0 %7385
    %7389 = vset.pattern.permute.xlu0 0
    %7390 = vperm.xlu0 %7389, %v7328
    %v7391 = vpop.permute.xlu0 %7390
    %7394 = vset.pattern.permute.xlu0 0
    %7395 = vperm.xlu0 %7394, %v7329
    %v7396 = vpop.permute.xlu0 %7395
    %7399 = vset.pattern.permute.xlu0 0
    %7400 = vperm.xlu0 %7399, %v7330
    %v7401 = vpop.permute.xlu0 %7400
    %7404 = vset.pattern.permute.xlu0 0
    %7405 = vperm.xlu0 %7404, %v7331
    %v7406 = vpop.permute.xlu0 %7405
    %7409 = vset.pattern.permute.xlu0 0
    %7410 = vperm.xlu0 %7409, %v7332
    %v7411 = vpop.permute.xlu0 %7410
    %7414 = vset.pattern.permute.xlu0 0
    %7415 = vperm.xlu0 %7414, %v7333
    %v7416 = vpop.permute.xlu0 %7415
    %7419 = vset.pattern.permute.xlu0 0
    %7420 = vperm.xlu0 %7419, %v7334
    %v7421 = vpop.permute.xlu0 %7420
    %7424 = vset.pattern.permute.xlu0 0
    %7425 = vperm.xlu0 %7424, %v7335
    %v7426 = vpop.permute.xlu0 %7425
    %7429 = vset.pattern.permute.xlu0 0
    %7430 = vperm.xlu0 %7429, %v7336
    %v7431 = vpop.permute.xlu0 %7430
    %7434 = vset.pattern.permute.xlu0 0
    %7435 = vperm.xlu0 %7434, %v7337
    %v7436 = vpop.permute.xlu0 %7435
    %7439 = vset.pattern.permute.xlu0 0
    %7440 = vperm.xlu0 %7439, %v7338
    %v7441 = vpop.permute.xlu0 %7440
    %v7443 = vmul.f32 %v7347, %v7366
    %v7444 = vmul.f32 %v7348, %v7371
    %v7445 = vmul.f32 %v7349, %v7376
    %v7446 = vmul.f32 %v7350, %v7381
    %v7447 = vmul.f32 %v7351, %v7386
    %v7448 = vmul.f32 %v7352, %v7391
    %v7449 = vmul.f32 %v7353, %v7396
    %v7450 = vmul.f32 %v7354, %v7401
    %v7451 = vmul.f32 %v7355, %v7406
    %v7452 = vmul.f32 %v7356, %v7411
    %v7453 = vmul.f32 %v7357, %v7416
    %v7454 = vmul.f32 %v7358, %v7421
    %v7455 = vmul.f32 %v7359, %v7426
    %v7456 = vmul.f32 %v7360, %v7431
    %v7457 = vmul.f32 %v7361, %v7436
    %v7458 = vmul.f32 %v7362, %v7441
    %v7459 = vadd.f32 %v7307, %v7443
    %v7460 = vadd.f32 %v7308, %v7444
    %v7461 = vadd.f32 %v7309, %v7445
    %v7462 = vadd.f32 %v7310, %v7446
    %v7463 = vadd.f32 %v7311, %v7447
    %v7464 = vadd.f32 %v7312, %v7448
    %v7465 = vadd.f32 %v7313, %v7449
    %v7466 = vadd.f32 %v7314, %v7450
    %v7467 = vadd.f32 %v7315, %v7451
    %v7468 = vadd.f32 %v7316, %v7452
    %v7469 = vadd.f32 %v7317, %v7453
    %v7470 = vadd.f32 %v7318, %v7454
    %v7471 = vadd.f32 %v7319, %v7455
    %v7472 = vadd.f32 %v7320, %v7456
    %v7473 = vadd.f32 %v7321, %v7457
    %v7474 = vadd.f32 %v7322, %v7458
    %v7475 = vmul.f32 %v1012, %v1332
    %v7476 = vmul.f32 %v1013, %v1333
    %v7477 = vmul.f32 %v1014, %v1334
    %v7478 = vmul.f32 %v1015, %v1335
    %v7479 = vmul.f32 %v1016, %v1336
    %v7480 = vmul.f32 %v1017, %v1337
    %v7481 = vmul.f32 %v1018, %v1338
    %v7482 = vmul.f32 %v1019, %v1339
    %v7483 = vmul.f32 %v1020, %v1340
    %v7484 = vmul.f32 %v1021, %v1341
    %v7485 = vmul.f32 %v1022, %v1342
    %v7486 = vmul.f32 %v1023, %v1343
    %v7487 = vmul.f32 %v1024, %v1344
    %v7488 = vmul.f32 %v1025, %v1345
    %v7489 = vmul.f32 %v1026, %v1346
    %v7490 = vmul.f32 %v1027, %v1347
    %s7491 = scalar_lea.vmem %s7, 37
    %v7492 = vld [vmem:[%s7491] sm:$0x1]
    %v7494 = vlaneseq
    %v7495 = vshrl.u32 %v7494, 7
    %v7496 = vsub.s32 0, %v7495
    %v7497 = vrot.slane %v7492, %v7496
    %v7499 = vmul.f32 %v2053, %v7497
    %v7500 = vmul.f32 %v2052, %v7497
    %v7501 = vmul.f32 %v2051, %v7497
    %v7502 = vmul.f32 %v2050, %v7497
    %v7503 = vmul.f32 %v2049, %v7497
    %v7504 = vmul.f32 %v2048, %v7497
    %v7505 = vmul.f32 %v2047, %v7497
    %v7506 = vmul.f32 %v2046, %v7497
    %v7507 = vmul.f32 %v2045, %v7497
    %v7508 = vmul.f32 %v2044, %v7497
    %v7509 = vmul.f32 %v2043, %v7497
    %v7510 = vmul.f32 %v2042, %v7497
    %v7511 = vmul.f32 %v2041, %v7497
    %v7512 = vmul.f32 %v2040, %v7497
    %v7513 = vmul.f32 %v2055, %v7497
    %v7514 = vmul.f32 %v2054, %v7497
    %7516 = vset.pattern.permute.xlu0 0
    %7517 = vperm.xlu0 %7516, %v7475
    %v7518 = vpop.permute.xlu0 %7517
    %7521 = vset.pattern.permute.xlu0 0
    %7522 = vperm.xlu0 %7521, %v7476
    %v7523 = vpop.permute.xlu0 %7522
    %7526 = vset.pattern.permute.xlu0 0
    %7527 = vperm.xlu0 %7526, %v7477
    %v7528 = vpop.permute.xlu0 %7527
    %7531 = vset.pattern.permute.xlu0 0
    %7532 = vperm.xlu0 %7531, %v7478
    %v7533 = vpop.permute.xlu0 %7532
    %7536 = vset.pattern.permute.xlu0 0
    %7537 = vperm.xlu0 %7536, %v7479
    %v7538 = vpop.permute.xlu0 %7537
    %7541 = vset.pattern.permute.xlu0 0
    %7542 = vperm.xlu0 %7541, %v7480
    %v7543 = vpop.permute.xlu0 %7542
    %7546 = vset.pattern.permute.xlu0 0
    %7547 = vperm.xlu0 %7546, %v7481
    %v7548 = vpop.permute.xlu0 %7547
    %7551 = vset.pattern.permute.xlu0 0
    %7552 = vperm.xlu0 %7551, %v7482
    %v7553 = vpop.permute.xlu0 %7552
    %7556 = vset.pattern.permute.xlu0 0
    %7557 = vperm.xlu0 %7556, %v7483
    %v7558 = vpop.permute.xlu0 %7557
    %7561 = vset.pattern.permute.xlu0 0
    %7562 = vperm.xlu0 %7561, %v7484
    %v7563 = vpop.permute.xlu0 %7562
    %7566 = vset.pattern.permute.xlu0 0
    %7567 = vperm.xlu0 %7566, %v7485
    %v7568 = vpop.permute.xlu0 %7567
    %7571 = vset.pattern.permute.xlu0 0
    %7572 = vperm.xlu0 %7571, %v7486
    %v7573 = vpop.permute.xlu0 %7572
    %7576 = vset.pattern.permute.xlu0 0
    %7577 = vperm.xlu0 %7576, %v7487
    %v7578 = vpop.permute.xlu0 %7577
    %7581 = vset.pattern.permute.xlu0 0
    %7582 = vperm.xlu0 %7581, %v7488
    %v7583 = vpop.permute.xlu0 %7582
    %7586 = vset.pattern.permute.xlu0 0
    %7587 = vperm.xlu0 %7586, %v7489
    %v7588 = vpop.permute.xlu0 %7587
    %7591 = vset.pattern.permute.xlu0 0
    %7592 = vperm.xlu0 %7591, %v7490
    %v7593 = vpop.permute.xlu0 %7592
    %v7595 = vmul.f32 %v7499, %v7518
    %v7596 = vmul.f32 %v7500, %v7523
    %v7597 = vmul.f32 %v7501, %v7528
    %v7598 = vmul.f32 %v7502, %v7533
    %v7599 = vmul.f32 %v7503, %v7538
    %v7600 = vmul.f32 %v7504, %v7543
    %v7601 = vmul.f32 %v7505, %v7548
    %v7602 = vmul.f32 %v7506, %v7553
    %v7603 = vmul.f32 %v7507, %v7558
    %v7604 = vmul.f32 %v7508, %v7563
    %v7605 = vmul.f32 %v7509, %v7568
    %v7606 = vmul.f32 %v7510, %v7573
    %v7607 = vmul.f32 %v7511, %v7578
    %v7608 = vmul.f32 %v7512, %v7583
    %v7609 = vmul.f32 %v7513, %v7588
    %v7610 = vmul.f32 %v7514, %v7593
    %v7611 = vadd.f32 %v7459, %v7595
    %v7612 = vadd.f32 %v7460, %v7596
    %v7613 = vadd.f32 %v7461, %v7597
    %v7614 = vadd.f32 %v7462, %v7598
    %v7615 = vadd.f32 %v7463, %v7599
    %v7616 = vadd.f32 %v7464, %v7600
    %v7617 = vadd.f32 %v7465, %v7601
    %v7618 = vadd.f32 %v7466, %v7602
    %v7619 = vadd.f32 %v7467, %v7603
    %v7620 = vadd.f32 %v7468, %v7604
    %v7621 = vadd.f32 %v7469, %v7605
    %v7622 = vadd.f32 %v7470, %v7606
    %v7623 = vadd.f32 %v7471, %v7607
    %v7624 = vadd.f32 %v7472, %v7608
    %v7625 = vadd.f32 %v7473, %v7609
    %v7626 = vadd.f32 %v7474, %v7610
    %v7627 = vmul.f32 %v1012, %v1396
    %v7628 = vmul.f32 %v1013, %v1397
    %v7629 = vmul.f32 %v1014, %v1398
    %v7630 = vmul.f32 %v1015, %v1399
    %v7631 = vmul.f32 %v1016, %v1400
    %v7632 = vmul.f32 %v1017, %v1401
    %v7633 = vmul.f32 %v1018, %v1402
    %v7634 = vmul.f32 %v1019, %v1403
    %v7635 = vmul.f32 %v1020, %v1404
    %v7636 = vmul.f32 %v1021, %v1405
    %v7637 = vmul.f32 %v1022, %v1406
    %v7638 = vmul.f32 %v1023, %v1407
    %v7639 = vmul.f32 %v1024, %v1408
    %v7640 = vmul.f32 %v1025, %v1409
    %v7641 = vmul.f32 %v1026, %v1410
    %v7642 = vmul.f32 %v1027, %v1411
    %s7643 = scalar_lea.vmem %s7, 38
    %v7644 = vld [vmem:[%s7643] sm:$0x1]
    %v7646 = vlaneseq
    %v7647 = vshrl.u32 %v7646, 7
    %v7648 = vsub.s32 0, %v7647
    %v7649 = vrot.slane %v7644, %v7648
    %v7651 = vmul.f32 %v518, %v7649
    %v7652 = vmul.f32 %v519, %v7649
    %v7653 = vmul.f32 %v520, %v7649
    %v7654 = vmul.f32 %v521, %v7649
    %v7655 = vmul.f32 %v522, %v7649
    %v7656 = vmul.f32 %v523, %v7649
    %v7657 = vmul.f32 %v524, %v7649
    %v7658 = vmul.f32 %v525, %v7649
    %v7659 = vmul.f32 %v526, %v7649
    %v7660 = vmul.f32 %v527, %v7649
    %v7661 = vmul.f32 %v528, %v7649
    %v7662 = vmul.f32 %v529, %v7649
    %v7663 = vmul.f32 %v530, %v7649
    %v7664 = vmul.f32 %v531, %v7649
    %v7665 = vmul.f32 %v516, %v7649
    %v7666 = vmul.f32 %v517, %v7649
    %7668 = vset.pattern.permute.xlu0 0
    %7669 = vperm.xlu0 %7668, %v7627
    %v7670 = vpop.permute.xlu0 %7669
    %7673 = vset.pattern.permute.xlu0 0
    %7674 = vperm.xlu0 %7673, %v7628
    %v7675 = vpop.permute.xlu0 %7674
    %7678 = vset.pattern.permute.xlu0 0
    %7679 = vperm.xlu0 %7678, %v7629
    %v7680 = vpop.permute.xlu0 %7679
    %7683 = vset.pattern.permute.xlu0 0
    %7684 = vperm.xlu0 %7683, %v7630
    %v7685 = vpop.permute.xlu0 %7684
    %7688 = vset.pattern.permute.xlu0 0
    %7689 = vperm.xlu0 %7688, %v7631
    %v7690 = vpop.permute.xlu0 %7689
    %7693 = vset.pattern.permute.xlu0 0
    %7694 = vperm.xlu0 %7693, %v7632
    %v7695 = vpop.permute.xlu0 %7694
    %7698 = vset.pattern.permute.xlu0 0
    %7699 = vperm.xlu0 %7698, %v7633
    %v7700 = vpop.permute.xlu0 %7699
    %7703 = vset.pattern.permute.xlu0 0
    %7704 = vperm.xlu0 %7703, %v7634
    %v7705 = vpop.permute.xlu0 %7704
    %7708 = vset.pattern.permute.xlu0 0
    %7709 = vperm.xlu0 %7708, %v7635
    %v7710 = vpop.permute.xlu0 %7709
    %7713 = vset.pattern.permute.xlu0 0
    %7714 = vperm.xlu0 %7713, %v7636
    %v7715 = vpop.permute.xlu0 %7714
    %7718 = vset.pattern.permute.xlu0 0
    %7719 = vperm.xlu0 %7718, %v7637
    %v7720 = vpop.permute.xlu0 %7719
    %7723 = vset.pattern.permute.xlu0 0
    %7724 = vperm.xlu0 %7723, %v7638
    %v7725 = vpop.permute.xlu0 %7724
    %7728 = vset.pattern.permute.xlu0 0
    %7729 = vperm.xlu0 %7728, %v7639
    %v7730 = vpop.permute.xlu0 %7729
    %7733 = vset.pattern.permute.xlu0 0
    %7734 = vperm.xlu0 %7733, %v7640
    %v7735 = vpop.permute.xlu0 %7734
    %7738 = vset.pattern.permute.xlu0 0
    %7739 = vperm.xlu0 %7738, %v7641
    %v7740 = vpop.permute.xlu0 %7739
    %7743 = vset.pattern.permute.xlu0 0
    %7744 = vperm.xlu0 %7743, %v7642
    %v7745 = vpop.permute.xlu0 %7744
    %v7747 = vmul.f32 %v7651, %v7670
    %v7748 = vmul.f32 %v7652, %v7675
    %v7749 = vmul.f32 %v7653, %v7680
    %v7750 = vmul.f32 %v7654, %v7685
    %v7751 = vmul.f32 %v7655, %v7690
    %v7752 = vmul.f32 %v7656, %v7695
    %v7753 = vmul.f32 %v7657, %v7700
    %v7754 = vmul.f32 %v7658, %v7705
    %v7755 = vmul.f32 %v7659, %v7710
    %v7756 = vmul.f32 %v7660, %v7715
    %v7757 = vmul.f32 %v7661, %v7720
    %v7758 = vmul.f32 %v7662, %v7725
    %v7759 = vmul.f32 %v7663, %v7730
    %v7760 = vmul.f32 %v7664, %v7735
    %v7761 = vmul.f32 %v7665, %v7740
    %v7762 = vmul.f32 %v7666, %v7745
    %v7763 = vadd.f32 %v7611, %v7747
    %v7764 = vadd.f32 %v7612, %v7748
    %v7765 = vadd.f32 %v7613, %v7749
    %v7766 = vadd.f32 %v7614, %v7750
    %v7767 = vadd.f32 %v7615, %v7751
    %v7768 = vadd.f32 %v7616, %v7752
    %v7769 = vadd.f32 %v7617, %v7753
    %v7770 = vadd.f32 %v7618, %v7754
    %v7771 = vadd.f32 %v7619, %v7755
    %v7772 = vadd.f32 %v7620, %v7756
    %v7773 = vadd.f32 %v7621, %v7757
    %v7774 = vadd.f32 %v7622, %v7758
    %v7775 = vadd.f32 %v7623, %v7759
    %v7776 = vadd.f32 %v7624, %v7760
    %v7777 = vadd.f32 %v7625, %v7761
    %v7778 = vadd.f32 %v7626, %v7762
    %v7779 = vmul.f32 %v1012, %v1476
    %v7780 = vmul.f32 %v1013, %v1477
    %v7781 = vmul.f32 %v1014, %v1478
    %v7782 = vmul.f32 %v1015, %v1479
    %v7783 = vmul.f32 %v1016, %v1480
    %v7784 = vmul.f32 %v1017, %v1481
    %v7785 = vmul.f32 %v1018, %v1482
    %v7786 = vmul.f32 %v1019, %v1483
    %v7787 = vmul.f32 %v1020, %v1484
    %v7788 = vmul.f32 %v1021, %v1485
    %v7789 = vmul.f32 %v1022, %v1486
    %v7790 = vmul.f32 %v1023, %v1487
    %v7791 = vmul.f32 %v1024, %v1488
    %v7792 = vmul.f32 %v1025, %v1489
    %v7793 = vmul.f32 %v1026, %v1490
    %v7794 = vmul.f32 %v1027, %v1491
    %s7795 = scalar_lea.vmem %s7, 39
    %v7796 = vld [vmem:[%s7795] sm:$0x1]
    %v7798 = vlaneseq
    %v7799 = vshrl.u32 %v7798, 7
    %v7800 = vsub.s32 0, %v7799
    %v7801 = vrot.slane %v7796, %v7800
    %v7803 = vmul.f32 %v2389, %v7801
    %v7804 = vmul.f32 %v2388, %v7801
    %v7805 = vmul.f32 %v2387, %v7801
    %v7806 = vmul.f32 %v2386, %v7801
    %v7807 = vmul.f32 %v2385, %v7801
    %v7808 = vmul.f32 %v2384, %v7801
    %v7809 = vmul.f32 %v2383, %v7801
    %v7810 = vmul.f32 %v2382, %v7801
    %v7811 = vmul.f32 %v2381, %v7801
    %v7812 = vmul.f32 %v2380, %v7801
    %v7813 = vmul.f32 %v2379, %v7801
    %v7814 = vmul.f32 %v2378, %v7801
    %v7815 = vmul.f32 %v2377, %v7801
    %v7816 = vmul.f32 %v2392, %v7801
    %v7817 = vmul.f32 %v2391, %v7801
    %v7818 = vmul.f32 %v2390, %v7801
    %7820 = vset.pattern.permute.xlu0 0
    %7821 = vperm.xlu0 %7820, %v7779
    %v7822 = vpop.permute.xlu0 %7821
    %7825 = vset.pattern.permute.xlu0 0
    %7826 = vperm.xlu0 %7825, %v7780
    %v7827 = vpop.permute.xlu0 %7826
    %7830 = vset.pattern.permute.xlu0 0
    %7831 = vperm.xlu0 %7830, %v7781
    %v7832 = vpop.permute.xlu0 %7831
    %7835 = vset.pattern.permute.xlu0 0
    %7836 = vperm.xlu0 %7835, %v7782
    %v7837 = vpop.permute.xlu0 %7836
    %7840 = vset.pattern.permute.xlu0 0
    %7841 = vperm.xlu0 %7840, %v7783
    %v7842 = vpop.permute.xlu0 %7841
    %7845 = vset.pattern.permute.xlu0 0
    %7846 = vperm.xlu0 %7845, %v7784
    %v7847 = vpop.permute.xlu0 %7846
    %7850 = vset.pattern.permute.xlu0 0
    %7851 = vperm.xlu0 %7850, %v7785
    %v7852 = vpop.permute.xlu0 %7851
    %7855 = vset.pattern.permute.xlu0 0
    %7856 = vperm.xlu0 %7855, %v7786
    %v7857 = vpop.permute.xlu0 %7856
    %7860 = vset.pattern.permute.xlu0 0
    %7861 = vperm.xlu0 %7860, %v7787
    %v7862 = vpop.permute.xlu0 %7861
    %7865 = vset.pattern.permute.xlu0 0
    %7866 = vperm.xlu0 %7865, %v7788
    %v7867 = vpop.permute.xlu0 %7866
    %7870 = vset.pattern.permute.xlu0 0
    %7871 = vperm.xlu0 %7870, %v7789
    %v7872 = vpop.permute.xlu0 %7871
    %7875 = vset.pattern.permute.xlu0 0
    %7876 = vperm.xlu0 %7875, %v7790
    %v7877 = vpop.permute.xlu0 %7876
    %7880 = vset.pattern.permute.xlu0 0
    %7881 = vperm.xlu0 %7880, %v7791
    %v7882 = vpop.permute.xlu0 %7881
    %7885 = vset.pattern.permute.xlu0 0
    %7886 = vperm.xlu0 %7885, %v7792
    %v7887 = vpop.permute.xlu0 %7886
    %7890 = vset.pattern.permute.xlu0 0
    %7891 = vperm.xlu0 %7890, %v7793
    %v7892 = vpop.permute.xlu0 %7891
    %7895 = vset.pattern.permute.xlu0 0
    %7896 = vperm.xlu0 %7895, %v7794
    %v7897 = vpop.permute.xlu0 %7896
    %v7899 = vmul.f32 %v7803, %v7822
    %v7900 = vmul.f32 %v7804, %v7827
    %v7901 = vmul.f32 %v7805, %v7832
    %v7902 = vmul.f32 %v7806, %v7837
    %v7903 = vmul.f32 %v7807, %v7842
    %v7904 = vmul.f32 %v7808, %v7847
    %v7905 = vmul.f32 %v7809, %v7852
    %v7906 = vmul.f32 %v7810, %v7857
    %v7907 = vmul.f32 %v7811, %v7862
    %v7908 = vmul.f32 %v7812, %v7867
    %v7909 = vmul.f32 %v7813, %v7872
    %v7910 = vmul.f32 %v7814, %v7877
    %v7911 = vmul.f32 %v7815, %v7882
    %v7912 = vmul.f32 %v7816, %v7887
    %v7913 = vmul.f32 %v7817, %v7892
    %v7914 = vmul.f32 %v7818, %v7897
    %v7915 = vadd.f32 %v7763, %v7899
    %v7916 = vadd.f32 %v7764, %v7900
    %v7917 = vadd.f32 %v7765, %v7901
    %v7918 = vadd.f32 %v7766, %v7902
    %v7919 = vadd.f32 %v7767, %v7903
    %v7920 = vadd.f32 %v7768, %v7904
    %v7921 = vadd.f32 %v7769, %v7905
    %v7922 = vadd.f32 %v7770, %v7906
    %v7923 = vadd.f32 %v7771, %v7907
    %v7924 = vadd.f32 %v7772, %v7908
    %v7925 = vadd.f32 %v7773, %v7909
    %v7926 = vadd.f32 %v7774, %v7910
    %v7927 = vadd.f32 %v7775, %v7911
    %v7928 = vadd.f32 %v7776, %v7912
    %v7929 = vadd.f32 %v7777, %v7913
    %v7930 = vadd.f32 %v7778, %v7914
    %v7931 = vmul.f32 %v1012, %v1556
    %v7932 = vmul.f32 %v1013, %v1557
    %v7933 = vmul.f32 %v1014, %v1558
    %v7934 = vmul.f32 %v1015, %v1559
    %v7935 = vmul.f32 %v1016, %v1560
    %v7936 = vmul.f32 %v1017, %v1561
    %v7937 = vmul.f32 %v1018, %v1562
    %v7938 = vmul.f32 %v1019, %v1563
    %v7939 = vmul.f32 %v1020, %v1564
    %v7940 = vmul.f32 %v1021, %v1565
    %v7941 = vmul.f32 %v1022, %v1566
    %v7942 = vmul.f32 %v1023, %v1567
    %v7943 = vmul.f32 %v1024, %v1568
    %v7944 = vmul.f32 %v1025, %v1569
    %v7945 = vmul.f32 %v1026, %v1570
    %v7946 = vmul.f32 %v1027, %v1571
    %s7947 = scalar_lea.vmem %s7, 40
    %v7948 = vld [vmem:[%s7947] sm:$0x1]
    %v7950 = vlaneseq
    %v7951 = vshrl.u32 %v7950, 7
    %v7952 = vsub.s32 0, %v7951
    %v7953 = vrot.slane %v7948, %v7952
    %v7955 = vmul.f32 %v2574, %v7953
    %v7956 = vmul.f32 %v2573, %v7953
    %v7957 = vmul.f32 %v2572, %v7953
    %v7958 = vmul.f32 %v2571, %v7953
    %v7959 = vmul.f32 %v2570, %v7953
    %v7960 = vmul.f32 %v2569, %v7953
    %v7961 = vmul.f32 %v2568, %v7953
    %v7962 = vmul.f32 %v2567, %v7953
    %v7963 = vmul.f32 %v2566, %v7953
    %v7964 = vmul.f32 %v2565, %v7953
    %v7965 = vmul.f32 %v2564, %v7953
    %v7966 = vmul.f32 %v2563, %v7953
    %v7967 = vmul.f32 %v2562, %v7953
    %v7968 = vmul.f32 %v2577, %v7953
    %v7969 = vmul.f32 %v2576, %v7953
    %v7970 = vmul.f32 %v2575, %v7953
    %7972 = vset.pattern.permute.xlu0 0
    %7973 = vperm.xlu0 %7972, %v7931
    %v7974 = vpop.permute.xlu0 %7973
    %7977 = vset.pattern.permute.xlu0 0
    %7978 = vperm.xlu0 %7977, %v7932
    %v7979 = vpop.permute.xlu0 %7978
    %7982 = vset.pattern.permute.xlu0 0
    %7983 = vperm.xlu0 %7982, %v7933
    %v7984 = vpop.permute.xlu0 %7983
    %7987 = vset.pattern.permute.xlu0 0
    %7988 = vperm.xlu0 %7987, %v7934
    %v7989 = vpop.permute.xlu0 %7988
    %7992 = vset.pattern.permute.xlu0 0
    %7993 = vperm.xlu0 %7992, %v7935
    %v7994 = vpop.permute.xlu0 %7993
    %7997 = vset.pattern.permute.xlu0 0
    %7998 = vperm.xlu0 %7997, %v7936
    %v7999 = vpop.permute.xlu0 %7998
    %8002 = vset.pattern.permute.xlu0 0
    %8003 = vperm.xlu0 %8002, %v7937
    %v8004 = vpop.permute.xlu0 %8003
    %8007 = vset.pattern.permute.xlu0 0
    %8008 = vperm.xlu0 %8007, %v7938
    %v8009 = vpop.permute.xlu0 %8008
    %8012 = vset.pattern.permute.xlu0 0
    %8013 = vperm.xlu0 %8012, %v7939
    %v8014 = vpop.permute.xlu0 %8013
    %8017 = vset.pattern.permute.xlu0 0
    %8018 = vperm.xlu0 %8017, %v7940
    %v8019 = vpop.permute.xlu0 %8018
    %8022 = vset.pattern.permute.xlu0 0
    %8023 = vperm.xlu0 %8022, %v7941
    %v8024 = vpop.permute.xlu0 %8023
    %8027 = vset.pattern.permute.xlu0 0
    %8028 = vperm.xlu0 %8027, %v7942
    %v8029 = vpop.permute.xlu0 %8028
    %8032 = vset.pattern.permute.xlu0 0
    %8033 = vperm.xlu0 %8032, %v7943
    %v8034 = vpop.permute.xlu0 %8033
    %8037 = vset.pattern.permute.xlu0 0
    %8038 = vperm.xlu0 %8037, %v7944
    %v8039 = vpop.permute.xlu0 %8038
    %8042 = vset.pattern.permute.xlu0 0
    %8043 = vperm.xlu0 %8042, %v7945
    %v8044 = vpop.permute.xlu0 %8043
    %8047 = vset.pattern.permute.xlu0 0
    %8048 = vperm.xlu0 %8047, %v7946
    %v8049 = vpop.permute.xlu0 %8048
    %v8051 = vmul.f32 %v7955, %v7974
    %v8052 = vmul.f32 %v7956, %v7979
    %v8053 = vmul.f32 %v7957, %v7984
    %v8054 = vmul.f32 %v7958, %v7989
    %v8055 = vmul.f32 %v7959, %v7994
    %v8056 = vmul.f32 %v7960, %v7999
    %v8057 = vmul.f32 %v7961, %v8004
    %v8058 = vmul.f32 %v7962, %v8009
    %v8059 = vmul.f32 %v7963, %v8014
    %v8060 = vmul.f32 %v7964, %v8019
    %v8061 = vmul.f32 %v7965, %v8024
    %v8062 = vmul.f32 %v7966, %v8029
    %v8063 = vmul.f32 %v7967, %v8034
    %v8064 = vmul.f32 %v7968, %v8039
    %v8065 = vmul.f32 %v7969, %v8044
    %v8066 = vmul.f32 %v7970, %v8049
    %v8067 = vadd.f32 %v7915, %v8051
    %v8068 = vadd.f32 %v7916, %v8052
    %v8069 = vadd.f32 %v7917, %v8053
    %v8070 = vadd.f32 %v7918, %v8054
    %v8071 = vadd.f32 %v7919, %v8055
    %v8072 = vadd.f32 %v7920, %v8056
    %v8073 = vadd.f32 %v7921, %v8057
    %v8074 = vadd.f32 %v7922, %v8058
    %v8075 = vadd.f32 %v7923, %v8059
    %v8076 = vadd.f32 %v7924, %v8060
    %v8077 = vadd.f32 %v7925, %v8061
    %v8078 = vadd.f32 %v7926, %v8062
    %v8079 = vadd.f32 %v7927, %v8063
    %v8080 = vadd.f32 %v7928, %v8064
    %v8081 = vadd.f32 %v7929, %v8065
    %v8082 = vadd.f32 %v7930, %v8066
    %v8083 = vmul.f32 %v1012, %v1636
    %v8084 = vmul.f32 %v1013, %v1637
    %v8085 = vmul.f32 %v1014, %v1638
    %v8086 = vmul.f32 %v1015, %v1639
    %v8087 = vmul.f32 %v1016, %v1640
    %v8088 = vmul.f32 %v1017, %v1641
    %v8089 = vmul.f32 %v1018, %v1642
    %v8090 = vmul.f32 %v1019, %v1643
    %v8091 = vmul.f32 %v1020, %v1644
    %v8092 = vmul.f32 %v1021, %v1645
    %v8093 = vmul.f32 %v1022, %v1646
    %v8094 = vmul.f32 %v1023, %v1647
    %v8095 = vmul.f32 %v1024, %v1648
    %v8096 = vmul.f32 %v1025, %v1649
    %v8097 = vmul.f32 %v1026, %v1650
    %v8098 = vmul.f32 %v1027, %v1651
    %s8099 = scalar_lea.vmem %s7, 41
    %v8100 = vld [vmem:[%s8099] sm:$0x1]
    %v8102 = vlaneseq
    %v8103 = vshrl.u32 %v8102, 7
    %v8104 = vsub.s32 0, %v8103
    %v8105 = vrot.slane %v8100, %v8104
    %v8107 = vmul.f32 %v2759, %v8105
    %v8108 = vmul.f32 %v2758, %v8105
    %v8109 = vmul.f32 %v2757, %v8105
    %v8110 = vmul.f32 %v2756, %v8105
    %v8111 = vmul.f32 %v2755, %v8105
    %v8112 = vmul.f32 %v2754, %v8105
    %v8113 = vmul.f32 %v2753, %v8105
    %v8114 = vmul.f32 %v2752, %v8105
    %v8115 = vmul.f32 %v2751, %v8105
    %v8116 = vmul.f32 %v2750, %v8105
    %v8117 = vmul.f32 %v2749, %v8105
    %v8118 = vmul.f32 %v2748, %v8105
    %v8119 = vmul.f32 %v2747, %v8105
    %v8120 = vmul.f32 %v2762, %v8105
    %v8121 = vmul.f32 %v2761, %v8105
    %v8122 = vmul.f32 %v2760, %v8105
    %8124 = vset.pattern.permute.xlu0 0
    %8125 = vperm.xlu0 %8124, %v8083
    %v8126 = vpop.permute.xlu0 %8125
    %8129 = vset.pattern.permute.xlu0 0
    %8130 = vperm.xlu0 %8129, %v8084
    %v8131 = vpop.permute.xlu0 %8130
    %8134 = vset.pattern.permute.xlu0 0
    %8135 = vperm.xlu0 %8134, %v8085
    %v8136 = vpop.permute.xlu0 %8135
    %8139 = vset.pattern.permute.xlu0 0
    %8140 = vperm.xlu0 %8139, %v8086
    %v8141 = vpop.permute.xlu0 %8140
    %8144 = vset.pattern.permute.xlu0 0
    %8145 = vperm.xlu0 %8144, %v8087
    %v8146 = vpop.permute.xlu0 %8145
    %8149 = vset.pattern.permute.xlu0 0
    %8150 = vperm.xlu0 %8149, %v8088
    %v8151 = vpop.permute.xlu0 %8150
    %8154 = vset.pattern.permute.xlu0 0
    %8155 = vperm.xlu0 %8154, %v8089
    %v8156 = vpop.permute.xlu0 %8155
    %8159 = vset.pattern.permute.xlu0 0
    %8160 = vperm.xlu0 %8159, %v8090
    %v8161 = vpop.permute.xlu0 %8160
    %8164 = vset.pattern.permute.xlu0 0
    %8165 = vperm.xlu0 %8164, %v8091
    %v8166 = vpop.permute.xlu0 %8165
    %8169 = vset.pattern.permute.xlu0 0
    %8170 = vperm.xlu0 %8169, %v8092
    %v8171 = vpop.permute.xlu0 %8170
    %8174 = vset.pattern.permute.xlu0 0
    %8175 = vperm.xlu0 %8174, %v8093
    %v8176 = vpop.permute.xlu0 %8175
    %8179 = vset.pattern.permute.xlu0 0
    %8180 = vperm.xlu0 %8179, %v8094
    %v8181 = vpop.permute.xlu0 %8180
    %8184 = vset.pattern.permute.xlu0 0
    %8185 = vperm.xlu0 %8184, %v8095
    %v8186 = vpop.permute.xlu0 %8185
    %8189 = vset.pattern.permute.xlu0 0
    %8190 = vperm.xlu0 %8189, %v8096
    %v8191 = vpop.permute.xlu0 %8190
    %8194 = vset.pattern.permute.xlu0 0
    %8195 = vperm.xlu0 %8194, %v8097
    %v8196 = vpop.permute.xlu0 %8195
    %8199 = vset.pattern.permute.xlu0 0
    %8200 = vperm.xlu0 %8199, %v8098
    %v8201 = vpop.permute.xlu0 %8200
    %v8203 = vmul.f32 %v8107, %v8126
    %v8204 = vmul.f32 %v8108, %v8131
    %v8205 = vmul.f32 %v8109, %v8136
    %v8206 = vmul.f32 %v8110, %v8141
    %v8207 = vmul.f32 %v8111, %v8146
    %v8208 = vmul.f32 %v8112, %v8151
    %v8209 = vmul.f32 %v8113, %v8156
    %v8210 = vmul.f32 %v8114, %v8161
    %v8211 = vmul.f32 %v8115, %v8166
    %v8212 = vmul.f32 %v8116, %v8171
    %v8213 = vmul.f32 %v8117, %v8176
    %v8214 = vmul.f32 %v8118, %v8181
    %v8215 = vmul.f32 %v8119, %v8186
    %v8216 = vmul.f32 %v8120, %v8191
    %v8217 = vmul.f32 %v8121, %v8196
    %v8218 = vmul.f32 %v8122, %v8201
    %v8219 = vadd.f32 %v8067, %v8203
    %v8220 = vadd.f32 %v8068, %v8204
    %v8221 = vadd.f32 %v8069, %v8205
    %v8222 = vadd.f32 %v8070, %v8206
    %v8223 = vadd.f32 %v8071, %v8207
    %v8224 = vadd.f32 %v8072, %v8208
    %v8225 = vadd.f32 %v8073, %v8209
    %v8226 = vadd.f32 %v8074, %v8210
    %v8227 = vadd.f32 %v8075, %v8211
    %v8228 = vadd.f32 %v8076, %v8212
    %v8229 = vadd.f32 %v8077, %v8213
    %v8230 = vadd.f32 %v8078, %v8214
    %v8231 = vadd.f32 %v8079, %v8215
    %v8232 = vadd.f32 %v8080, %v8216
    %v8233 = vadd.f32 %v8081, %v8217
    %v8234 = vadd.f32 %v8082, %v8218
    %v8235 = vmul.f32 %v1092, %v1172
    %v8236 = vmul.f32 %v1093, %v1173
    %v8237 = vmul.f32 %v1094, %v1174
    %v8238 = vmul.f32 %v1095, %v1175
    %v8239 = vmul.f32 %v1096, %v1176
    %v8240 = vmul.f32 %v1097, %v1177
    %v8241 = vmul.f32 %v1098, %v1178
    %v8242 = vmul.f32 %v1099, %v1179
    %v8243 = vmul.f32 %v1100, %v1180
    %v8244 = vmul.f32 %v1101, %v1181
    %v8245 = vmul.f32 %v1102, %v1182
    %v8246 = vmul.f32 %v1103, %v1183
    %v8247 = vmul.f32 %v1104, %v1184
    %v8248 = vmul.f32 %v1105, %v1185
    %v8249 = vmul.f32 %v1106, %v1186
    %v8250 = vmul.f32 %v1107, %v1187
    %s8251 = scalar_lea.vmem %s7, 42
    %v8252 = vld [vmem:[%s8251] sm:$0x1]
    %v8254 = vlaneseq
    %v8255 = vshrl.u32 %v8254, 7
    %v8256 = vsub.s32 0, %v8255
    %v8257 = vrot.slane %v8252, %v8256
    %v8259 = vmul.f32 %v1683, %v8257
    %v8260 = vmul.f32 %v1682, %v8257
    %v8261 = vmul.f32 %v1681, %v8257
    %v8262 = vmul.f32 %v1680, %v8257
    %v8263 = vmul.f32 %v1679, %v8257
    %v8264 = vmul.f32 %v1678, %v8257
    %v8265 = vmul.f32 %v1677, %v8257
    %v8266 = vmul.f32 %v1676, %v8257
    %v8267 = vmul.f32 %v1675, %v8257
    %v8268 = vmul.f32 %v1674, %v8257
    %v8269 = vmul.f32 %v1673, %v8257
    %v8270 = vmul.f32 %v1672, %v8257
    %v8271 = vmul.f32 %v1671, %v8257
    %v8272 = vmul.f32 %v1686, %v8257
    %v8273 = vmul.f32 %v1685, %v8257
    %v8274 = vmul.f32 %v1684, %v8257
    %8276 = vset.pattern.permute.xlu0 0
    %8277 = vperm.xlu0 %8276, %v8235
    %v8278 = vpop.permute.xlu0 %8277
    %8281 = vset.pattern.permute.xlu0 0
    %8282 = vperm.xlu0 %8281, %v8236
    %v8283 = vpop.permute.xlu0 %8282
    %8286 = vset.pattern.permute.xlu0 0
    %8287 = vperm.xlu0 %8286, %v8237
    %v8288 = vpop.permute.xlu0 %8287
    %8291 = vset.pattern.permute.xlu0 0
    %8292 = vperm.xlu0 %8291, %v8238
    %v8293 = vpop.permute.xlu0 %8292
    %8296 = vset.pattern.permute.xlu0 0
    %8297 = vperm.xlu0 %8296, %v8239
    %v8298 = vpop.permute.xlu0 %8297
    %8301 = vset.pattern.permute.xlu0 0
    %8302 = vperm.xlu0 %8301, %v8240
    %v8303 = vpop.permute.xlu0 %8302
    %8306 = vset.pattern.permute.xlu0 0
    %8307 = vperm.xlu0 %8306, %v8241
    %v8308 = vpop.permute.xlu0 %8307
    %8311 = vset.pattern.permute.xlu0 0
    %8312 = vperm.xlu0 %8311, %v8242
    %v8313 = vpop.permute.xlu0 %8312
    %8316 = vset.pattern.permute.xlu0 0
    %8317 = vperm.xlu0 %8316, %v8243
    %v8318 = vpop.permute.xlu0 %8317
    %8321 = vset.pattern.permute.xlu0 0
    %8322 = vperm.xlu0 %8321, %v8244
    %v8323 = vpop.permute.xlu0 %8322
    %8326 = vset.pattern.permute.xlu0 0
    %8327 = vperm.xlu0 %8326, %v8245
    %v8328 = vpop.permute.xlu0 %8327
    %8331 = vset.pattern.permute.xlu0 0
    %8332 = vperm.xlu0 %8331, %v8246
    %v8333 = vpop.permute.xlu0 %8332
    %8336 = vset.pattern.permute.xlu0 0
    %8337 = vperm.xlu0 %8336, %v8247
    %v8338 = vpop.permute.xlu0 %8337
    %8341 = vset.pattern.permute.xlu0 0
    %8342 = vperm.xlu0 %8341, %v8248
    %v8343 = vpop.permute.xlu0 %8342
    %8346 = vset.pattern.permute.xlu0 0
    %8347 = vperm.xlu0 %8346, %v8249
    %v8348 = vpop.permute.xlu0 %8347
    %8351 = vset.pattern.permute.xlu0 0
    %8352 = vperm.xlu0 %8351, %v8250
    %v8353 = vpop.permute.xlu0 %8352
    %v8355 = vmul.f32 %v8259, %v8278
    %v8356 = vmul.f32 %v8260, %v8283
    %v8357 = vmul.f32 %v8261, %v8288
    %v8358 = vmul.f32 %v8262, %v8293
    %v8359 = vmul.f32 %v8263, %v8298
    %v8360 = vmul.f32 %v8264, %v8303
    %v8361 = vmul.f32 %v8265, %v8308
    %v8362 = vmul.f32 %v8266, %v8313
    %v8363 = vmul.f32 %v8267, %v8318
    %v8364 = vmul.f32 %v8268, %v8323
    %v8365 = vmul.f32 %v8269, %v8328
    %v8366 = vmul.f32 %v8270, %v8333
    %v8367 = vmul.f32 %v8271, %v8338
    %v8368 = vmul.f32 %v8272, %v8343
    %v8369 = vmul.f32 %v8273, %v8348
    %v8370 = vmul.f32 %v8274, %v8353
    %v8371 = vadd.f32 %v8219, %v8355
    %v8372 = vadd.f32 %v8220, %v8356
    %v8373 = vadd.f32 %v8221, %v8357
    %v8374 = vadd.f32 %v8222, %v8358
    %v8375 = vadd.f32 %v8223, %v8359
    %v8376 = vadd.f32 %v8224, %v8360
    %v8377 = vadd.f32 %v8225, %v8361
    %v8378 = vadd.f32 %v8226, %v8362
    %v8379 = vadd.f32 %v8227, %v8363
    %v8380 = vadd.f32 %v8228, %v8364
    %v8381 = vadd.f32 %v8229, %v8365
    %v8382 = vadd.f32 %v8230, %v8366
    %v8383 = vadd.f32 %v8231, %v8367
    %v8384 = vadd.f32 %v8232, %v8368
    %v8385 = vadd.f32 %v8233, %v8369
    %v8386 = vadd.f32 %v8234, %v8370
    %v8387 = vmul.f32 %v1092, %v1252
    %v8388 = vmul.f32 %v1093, %v1253
    %v8389 = vmul.f32 %v1094, %v1254
    %v8390 = vmul.f32 %v1095, %v1255
    %v8391 = vmul.f32 %v1096, %v1256
    %v8392 = vmul.f32 %v1097, %v1257
    %v8393 = vmul.f32 %v1098, %v1258
    %v8394 = vmul.f32 %v1099, %v1259
    %v8395 = vmul.f32 %v1100, %v1260
    %v8396 = vmul.f32 %v1101, %v1261
    %v8397 = vmul.f32 %v1102, %v1262
    %v8398 = vmul.f32 %v1103, %v1263
    %v8399 = vmul.f32 %v1104, %v1264
    %v8400 = vmul.f32 %v1105, %v1265
    %v8401 = vmul.f32 %v1106, %v1266
    %v8402 = vmul.f32 %v1107, %v1267
    %s8403 = scalar_lea.vmem %s7, 43
    %v8404 = vld [vmem:[%s8403] sm:$0x1]
    %v8406 = vlaneseq
    %v8407 = vshrl.u32 %v8406, 7
    %v8408 = vsub.s32 0, %v8407
    %v8409 = vrot.slane %v8404, %v8408
    %v8411 = vmul.f32 %v1867, %v8409
    %v8412 = vmul.f32 %v1866, %v8409
    %v8413 = vmul.f32 %v1865, %v8409
    %v8414 = vmul.f32 %v1864, %v8409
    %v8415 = vmul.f32 %v1863, %v8409
    %v8416 = vmul.f32 %v1862, %v8409
    %v8417 = vmul.f32 %v1861, %v8409
    %v8418 = vmul.f32 %v1860, %v8409
    %v8419 = vmul.f32 %v1859, %v8409
    %v8420 = vmul.f32 %v1858, %v8409
    %v8421 = vmul.f32 %v1857, %v8409
    %v8422 = vmul.f32 %v1856, %v8409
    %v8423 = vmul.f32 %v1855, %v8409
    %v8424 = vmul.f32 %v1870, %v8409
    %v8425 = vmul.f32 %v1869, %v8409
    %v8426 = vmul.f32 %v1868, %v8409
    %8428 = vset.pattern.permute.xlu0 0
    %8429 = vperm.xlu0 %8428, %v8387
    %v8430 = vpop.permute.xlu0 %8429
    %8433 = vset.pattern.permute.xlu0 0
    %8434 = vperm.xlu0 %8433, %v8388
    %v8435 = vpop.permute.xlu0 %8434
    %8438 = vset.pattern.permute.xlu0 0
    %8439 = vperm.xlu0 %8438, %v8389
    %v8440 = vpop.permute.xlu0 %8439
    %8443 = vset.pattern.permute.xlu0 0
    %8444 = vperm.xlu0 %8443, %v8390
    %v8445 = vpop.permute.xlu0 %8444
    %8448 = vset.pattern.permute.xlu0 0
    %8449 = vperm.xlu0 %8448, %v8391
    %v8450 = vpop.permute.xlu0 %8449
    %8453 = vset.pattern.permute.xlu0 0
    %8454 = vperm.xlu0 %8453, %v8392
    %v8455 = vpop.permute.xlu0 %8454
    %8458 = vset.pattern.permute.xlu0 0
    %8459 = vperm.xlu0 %8458, %v8393
    %v8460 = vpop.permute.xlu0 %8459
    %8463 = vset.pattern.permute.xlu0 0
    %8464 = vperm.xlu0 %8463, %v8394
    %v8465 = vpop.permute.xlu0 %8464
    %8468 = vset.pattern.permute.xlu0 0
    %8469 = vperm.xlu0 %8468, %v8395
    %v8470 = vpop.permute.xlu0 %8469
    %8473 = vset.pattern.permute.xlu0 0
    %8474 = vperm.xlu0 %8473, %v8396
    %v8475 = vpop.permute.xlu0 %8474
    %8478 = vset.pattern.permute.xlu0 0
    %8479 = vperm.xlu0 %8478, %v8397
    %v8480 = vpop.permute.xlu0 %8479
    %8483 = vset.pattern.permute.xlu0 0
    %8484 = vperm.xlu0 %8483, %v8398
    %v8485 = vpop.permute.xlu0 %8484
    %8488 = vset.pattern.permute.xlu0 0
    %8489 = vperm.xlu0 %8488, %v8399
    %v8490 = vpop.permute.xlu0 %8489
    %8493 = vset.pattern.permute.xlu0 0
    %8494 = vperm.xlu0 %8493, %v8400
    %v8495 = vpop.permute.xlu0 %8494
    %8498 = vset.pattern.permute.xlu0 0
    %8499 = vperm.xlu0 %8498, %v8401
    %v8500 = vpop.permute.xlu0 %8499
    %8503 = vset.pattern.permute.xlu0 0
    %8504 = vperm.xlu0 %8503, %v8402
    %v8505 = vpop.permute.xlu0 %8504
    %v8507 = vmul.f32 %v8411, %v8430
    %v8508 = vmul.f32 %v8412, %v8435
    %v8509 = vmul.f32 %v8413, %v8440
    %v8510 = vmul.f32 %v8414, %v8445
    %v8511 = vmul.f32 %v8415, %v8450
    %v8512 = vmul.f32 %v8416, %v8455
    %v8513 = vmul.f32 %v8417, %v8460
    %v8514 = vmul.f32 %v8418, %v8465
    %v8515 = vmul.f32 %v8419, %v8470
    %v8516 = vmul.f32 %v8420, %v8475
    %v8517 = vmul.f32 %v8421, %v8480
    %v8518 = vmul.f32 %v8422, %v8485
    %v8519 = vmul.f32 %v8423, %v8490
    %v8520 = vmul.f32 %v8424, %v8495
    %v8521 = vmul.f32 %v8425, %v8500
    %v8522 = vmul.f32 %v8426, %v8505
    %v8523 = vadd.f32 %v8371, %v8507
    %v8524 = vadd.f32 %v8372, %v8508
    %v8525 = vadd.f32 %v8373, %v8509
    %v8526 = vadd.f32 %v8374, %v8510
    %v8527 = vadd.f32 %v8375, %v8511
    %v8528 = vadd.f32 %v8376, %v8512
    %v8529 = vadd.f32 %v8377, %v8513
    %v8530 = vadd.f32 %v8378, %v8514
    %v8531 = vadd.f32 %v8379, %v8515
    %v8532 = vadd.f32 %v8380, %v8516
    %v8533 = vadd.f32 %v8381, %v8517
    %v8534 = vadd.f32 %v8382, %v8518
    %v8535 = vadd.f32 %v8383, %v8519
    %v8536 = vadd.f32 %v8384, %v8520
    %v8537 = vadd.f32 %v8385, %v8521
    %v8538 = vadd.f32 %v8386, %v8522
    %v8539 = vmul.f32 %v1092, %v1332
    %v8540 = vmul.f32 %v1093, %v1333
    %v8541 = vmul.f32 %v1094, %v1334
    %v8542 = vmul.f32 %v1095, %v1335
    %v8543 = vmul.f32 %v1096, %v1336
    %v8544 = vmul.f32 %v1097, %v1337
    %v8545 = vmul.f32 %v1098, %v1338
    %v8546 = vmul.f32 %v1099, %v1339
    %v8547 = vmul.f32 %v1100, %v1340
    %v8548 = vmul.f32 %v1101, %v1341
    %v8549 = vmul.f32 %v1102, %v1342
    %v8550 = vmul.f32 %v1103, %v1343
    %v8551 = vmul.f32 %v1104, %v1344
    %v8552 = vmul.f32 %v1105, %v1345
    %v8553 = vmul.f32 %v1106, %v1346
    %v8554 = vmul.f32 %v1107, %v1347
    %s8555 = scalar_lea.vmem %s7, 44
    %v8556 = vld [vmem:[%s8555] sm:$0x1]
    %v8558 = vlaneseq
    %v8559 = vshrl.u32 %v8558, 7
    %v8560 = vsub.s32 0, %v8559
    %v8561 = vrot.slane %v8556, %v8560
    %v8563 = vmul.f32 %v2052, %v8561
    %v8564 = vmul.f32 %v2051, %v8561
    %v8565 = vmul.f32 %v2050, %v8561
    %v8566 = vmul.f32 %v2049, %v8561
    %v8567 = vmul.f32 %v2048, %v8561
    %v8568 = vmul.f32 %v2047, %v8561
    %v8569 = vmul.f32 %v2046, %v8561
    %v8570 = vmul.f32 %v2045, %v8561
    %v8571 = vmul.f32 %v2044, %v8561
    %v8572 = vmul.f32 %v2043, %v8561
    %v8573 = vmul.f32 %v2042, %v8561
    %v8574 = vmul.f32 %v2041, %v8561
    %v8575 = vmul.f32 %v2040, %v8561
    %v8576 = vmul.f32 %v2055, %v8561
    %v8577 = vmul.f32 %v2054, %v8561
    %v8578 = vmul.f32 %v2053, %v8561
    %8580 = vset.pattern.permute.xlu0 0
    %8581 = vperm.xlu0 %8580, %v8539
    %v8582 = vpop.permute.xlu0 %8581
    %8585 = vset.pattern.permute.xlu0 0
    %8586 = vperm.xlu0 %8585, %v8540
    %v8587 = vpop.permute.xlu0 %8586
    %8590 = vset.pattern.permute.xlu0 0
    %8591 = vperm.xlu0 %8590, %v8541
    %v8592 = vpop.permute.xlu0 %8591
    %8595 = vset.pattern.permute.xlu0 0
    %8596 = vperm.xlu0 %8595, %v8542
    %v8597 = vpop.permute.xlu0 %8596
    %8600 = vset.pattern.permute.xlu0 0
    %8601 = vperm.xlu0 %8600, %v8543
    %v8602 = vpop.permute.xlu0 %8601
    %8605 = vset.pattern.permute.xlu0 0
    %8606 = vperm.xlu0 %8605, %v8544
    %v8607 = vpop.permute.xlu0 %8606
    %8610 = vset.pattern.permute.xlu0 0
    %8611 = vperm.xlu0 %8610, %v8545
    %v8612 = vpop.permute.xlu0 %8611
    %8615 = vset.pattern.permute.xlu0 0
    %8616 = vperm.xlu0 %8615, %v8546
    %v8617 = vpop.permute.xlu0 %8616
    %8620 = vset.pattern.permute.xlu0 0
    %8621 = vperm.xlu0 %8620, %v8547
    %v8622 = vpop.permute.xlu0 %8621
    %8625 = vset.pattern.permute.xlu0 0
    %8626 = vperm.xlu0 %8625, %v8548
    %v8627 = vpop.permute.xlu0 %8626
    %8630 = vset.pattern.permute.xlu0 0
    %8631 = vperm.xlu0 %8630, %v8549
    %v8632 = vpop.permute.xlu0 %8631
    %8635 = vset.pattern.permute.xlu0 0
    %8636 = vperm.xlu0 %8635, %v8550
    %v8637 = vpop.permute.xlu0 %8636
    %8640 = vset.pattern.permute.xlu0 0
    %8641 = vperm.xlu0 %8640, %v8551
    %v8642 = vpop.permute.xlu0 %8641
    %8645 = vset.pattern.permute.xlu0 0
    %8646 = vperm.xlu0 %8645, %v8552
    %v8647 = vpop.permute.xlu0 %8646
    %8650 = vset.pattern.permute.xlu0 0
    %8651 = vperm.xlu0 %8650, %v8553
    %v8652 = vpop.permute.xlu0 %8651
    %8655 = vset.pattern.permute.xlu0 0
    %8656 = vperm.xlu0 %8655, %v8554
    %v8657 = vpop.permute.xlu0 %8656
    %v8659 = vmul.f32 %v8563, %v8582
    %v8660 = vmul.f32 %v8564, %v8587
    %v8661 = vmul.f32 %v8565, %v8592
    %v8662 = vmul.f32 %v8566, %v8597
    %v8663 = vmul.f32 %v8567, %v8602
    %v8664 = vmul.f32 %v8568, %v8607
    %v8665 = vmul.f32 %v8569, %v8612
    %v8666 = vmul.f32 %v8570, %v8617
    %v8667 = vmul.f32 %v8571, %v8622
    %v8668 = vmul.f32 %v8572, %v8627
    %v8669 = vmul.f32 %v8573, %v8632
    %v8670 = vmul.f32 %v8574, %v8637
    %v8671 = vmul.f32 %v8575, %v8642
    %v8672 = vmul.f32 %v8576, %v8647
    %v8673 = vmul.f32 %v8577, %v8652
    %v8674 = vmul.f32 %v8578, %v8657
    %v8675 = vadd.f32 %v8523, %v8659
    %v8676 = vadd.f32 %v8524, %v8660
    %v8677 = vadd.f32 %v8525, %v8661
    %v8678 = vadd.f32 %v8526, %v8662
    %v8679 = vadd.f32 %v8527, %v8663
    %v8680 = vadd.f32 %v8528, %v8664
    %v8681 = vadd.f32 %v8529, %v8665
    %v8682 = vadd.f32 %v8530, %v8666
    %v8683 = vadd.f32 %v8531, %v8667
    %v8684 = vadd.f32 %v8532, %v8668
    %v8685 = vadd.f32 %v8533, %v8669
    %v8686 = vadd.f32 %v8534, %v8670
    %v8687 = vadd.f32 %v8535, %v8671
    %v8688 = vadd.f32 %v8536, %v8672
    %v8689 = vadd.f32 %v8537, %v8673
    %v8690 = vadd.f32 %v8538, %v8674
    %v8691 = vmul.f32 %v1092, %v1396
    %v8692 = vmul.f32 %v1093, %v1397
    %v8693 = vmul.f32 %v1094, %v1398
    %v8694 = vmul.f32 %v1095, %v1399
    %v8695 = vmul.f32 %v1096, %v1400
    %v8696 = vmul.f32 %v1097, %v1401
    %v8697 = vmul.f32 %v1098, %v1402
    %v8698 = vmul.f32 %v1099, %v1403
    %v8699 = vmul.f32 %v1100, %v1404
    %v8700 = vmul.f32 %v1101, %v1405
    %v8701 = vmul.f32 %v1102, %v1406
    %v8702 = vmul.f32 %v1103, %v1407
    %v8703 = vmul.f32 %v1104, %v1408
    %v8704 = vmul.f32 %v1105, %v1409
    %v8705 = vmul.f32 %v1106, %v1410
    %v8706 = vmul.f32 %v1107, %v1411
    %s8707 = scalar_lea.vmem %s7, 45
    %v8708 = vld [vmem:[%s8707] sm:$0x1]
    %v8710 = vlaneseq
    %v8711 = vshrl.u32 %v8710, 7
    %v8712 = vsub.s32 0, %v8711
    %v8713 = vrot.slane %v8708, %v8712
    %v8715 = vmul.f32 %v519, %v8713
    %v8716 = vmul.f32 %v520, %v8713
    %v8717 = vmul.f32 %v521, %v8713
    %v8718 = vmul.f32 %v522, %v8713
    %v8719 = vmul.f32 %v523, %v8713
    %v8720 = vmul.f32 %v524, %v8713
    %v8721 = vmul.f32 %v525, %v8713
    %v8722 = vmul.f32 %v526, %v8713
    %v8723 = vmul.f32 %v527, %v8713
    %v8724 = vmul.f32 %v528, %v8713
    %v8725 = vmul.f32 %v529, %v8713
    %v8726 = vmul.f32 %v530, %v8713
    %v8727 = vmul.f32 %v531, %v8713
    %v8728 = vmul.f32 %v516, %v8713
    %v8729 = vmul.f32 %v517, %v8713
    %v8730 = vmul.f32 %v518, %v8713
    %8732 = vset.pattern.permute.xlu0 0
    %8733 = vperm.xlu0 %8732, %v8691
    %v8734 = vpop.permute.xlu0 %8733
    %8737 = vset.pattern.permute.xlu0 0
    %8738 = vperm.xlu0 %8737, %v8692
    %v8739 = vpop.permute.xlu0 %8738
    %8742 = vset.pattern.permute.xlu0 0
    %8743 = vperm.xlu0 %8742, %v8693
    %v8744 = vpop.permute.xlu0 %8743
    %8747 = vset.pattern.permute.xlu0 0
    %8748 = vperm.xlu0 %8747, %v8694
    %v8749 = vpop.permute.xlu0 %8748
    %8752 = vset.pattern.permute.xlu0 0
    %8753 = vperm.xlu0 %8752, %v8695
    %v8754 = vpop.permute.xlu0 %8753
    %8757 = vset.pattern.permute.xlu0 0
    %8758 = vperm.xlu0 %8757, %v8696
    %v8759 = vpop.permute.xlu0 %8758
    %8762 = vset.pattern.permute.xlu0 0
    %8763 = vperm.xlu0 %8762, %v8697
    %v8764 = vpop.permute.xlu0 %8763
    %8767 = vset.pattern.permute.xlu0 0
    %8768 = vperm.xlu0 %8767, %v8698
    %v8769 = vpop.permute.xlu0 %8768
    %8772 = vset.pattern.permute.xlu0 0
    %8773 = vperm.xlu0 %8772, %v8699
    %v8774 = vpop.permute.xlu0 %8773
    %8777 = vset.pattern.permute.xlu0 0
    %8778 = vperm.xlu0 %8777, %v8700
    %v8779 = vpop.permute.xlu0 %8778
    %8782 = vset.pattern.permute.xlu0 0
    %8783 = vperm.xlu0 %8782, %v8701
    %v8784 = vpop.permute.xlu0 %8783
    %8787 = vset.pattern.permute.xlu0 0
    %8788 = vperm.xlu0 %8787, %v8702
    %v8789 = vpop.permute.xlu0 %8788
    %8792 = vset.pattern.permute.xlu0 0
    %8793 = vperm.xlu0 %8792, %v8703
    %v8794 = vpop.permute.xlu0 %8793
    %8797 = vset.pattern.permute.xlu0 0
    %8798 = vperm.xlu0 %8797, %v8704
    %v8799 = vpop.permute.xlu0 %8798
    %8802 = vset.pattern.permute.xlu0 0
    %8803 = vperm.xlu0 %8802, %v8705
    %v8804 = vpop.permute.xlu0 %8803
    %8807 = vset.pattern.permute.xlu0 0
    %8808 = vperm.xlu0 %8807, %v8706
    %v8809 = vpop.permute.xlu0 %8808
    %v8811 = vmul.f32 %v8715, %v8734
    %v8812 = vmul.f32 %v8716, %v8739
    %v8813 = vmul.f32 %v8717, %v8744
    %v8814 = vmul.f32 %v8718, %v8749
    %v8815 = vmul.f32 %v8719, %v8754
    %v8816 = vmul.f32 %v8720, %v8759
    %v8817 = vmul.f32 %v8721, %v8764
    %v8818 = vmul.f32 %v8722, %v8769
    %v8819 = vmul.f32 %v8723, %v8774
    %v8820 = vmul.f32 %v8724, %v8779
    %v8821 = vmul.f32 %v8725, %v8784
    %v8822 = vmul.f32 %v8726, %v8789
    %v8823 = vmul.f32 %v8727, %v8794
    %v8824 = vmul.f32 %v8728, %v8799
    %v8825 = vmul.f32 %v8729, %v8804
    %v8826 = vmul.f32 %v8730, %v8809
    %v8827 = vadd.f32 %v8675, %v8811
    %v8828 = vadd.f32 %v8676, %v8812
    %v8829 = vadd.f32 %v8677, %v8813
    %v8830 = vadd.f32 %v8678, %v8814
    %v8831 = vadd.f32 %v8679, %v8815
    %v8832 = vadd.f32 %v8680, %v8816
    %v8833 = vadd.f32 %v8681, %v8817
    %v8834 = vadd.f32 %v8682, %v8818
    %v8835 = vadd.f32 %v8683, %v8819
    %v8836 = vadd.f32 %v8684, %v8820
    %v8837 = vadd.f32 %v8685, %v8821
    %v8838 = vadd.f32 %v8686, %v8822
    %v8839 = vadd.f32 %v8687, %v8823
    %v8840 = vadd.f32 %v8688, %v8824
    %v8841 = vadd.f32 %v8689, %v8825
    %v8842 = vadd.f32 %v8690, %v8826
    %v8843 = vmul.f32 %v1092, %v1476
    %v8844 = vmul.f32 %v1093, %v1477
    %v8845 = vmul.f32 %v1094, %v1478
    %v8846 = vmul.f32 %v1095, %v1479
    %v8847 = vmul.f32 %v1096, %v1480
    %v8848 = vmul.f32 %v1097, %v1481
    %v8849 = vmul.f32 %v1098, %v1482
    %v8850 = vmul.f32 %v1099, %v1483
    %v8851 = vmul.f32 %v1100, %v1484
    %v8852 = vmul.f32 %v1101, %v1485
    %v8853 = vmul.f32 %v1102, %v1486
    %v8854 = vmul.f32 %v1103, %v1487
    %v8855 = vmul.f32 %v1104, %v1488
    %v8856 = vmul.f32 %v1105, %v1489
    %v8857 = vmul.f32 %v1106, %v1490
    %v8858 = vmul.f32 %v1107, %v1491
    %s8859 = scalar_lea.vmem %s7, 46
    %v8860 = vld [vmem:[%s8859] sm:$0x1]
    %v8862 = vlaneseq
    %v8863 = vshrl.u32 %v8862, 7
    %v8864 = vsub.s32 0, %v8863
    %v8865 = vrot.slane %v8860, %v8864
    %v8867 = vmul.f32 %v2388, %v8865
    %v8868 = vmul.f32 %v2387, %v8865
    %v8869 = vmul.f32 %v2386, %v8865
    %v8870 = vmul.f32 %v2385, %v8865
    %v8871 = vmul.f32 %v2384, %v8865
    %v8872 = vmul.f32 %v2383, %v8865
    %v8873 = vmul.f32 %v2382, %v8865
    %v8874 = vmul.f32 %v2381, %v8865
    %v8875 = vmul.f32 %v2380, %v8865
    %v8876 = vmul.f32 %v2379, %v8865
    %v8877 = vmul.f32 %v2378, %v8865
    %v8878 = vmul.f32 %v2377, %v8865
    %v8879 = vmul.f32 %v2392, %v8865
    %v8880 = vmul.f32 %v2391, %v8865
    %v8881 = vmul.f32 %v2390, %v8865
    %v8882 = vmul.f32 %v2389, %v8865
    %8884 = vset.pattern.permute.xlu0 0
    %8885 = vperm.xlu0 %8884, %v8843
    %v8886 = vpop.permute.xlu0 %8885
    %8889 = vset.pattern.permute.xlu0 0
    %8890 = vperm.xlu0 %8889, %v8844
    %v8891 = vpop.permute.xlu0 %8890
    %8894 = vset.pattern.permute.xlu0 0
    %8895 = vperm.xlu0 %8894, %v8845
    %v8896 = vpop.permute.xlu0 %8895
    %8899 = vset.pattern.permute.xlu0 0
    %8900 = vperm.xlu0 %8899, %v8846
    %v8901 = vpop.permute.xlu0 %8900
    %8904 = vset.pattern.permute.xlu0 0
    %8905 = vperm.xlu0 %8904, %v8847
    %v8906 = vpop.permute.xlu0 %8905
    %8909 = vset.pattern.permute.xlu0 0
    %8910 = vperm.xlu0 %8909, %v8848
    %v8911 = vpop.permute.xlu0 %8910
    %8914 = vset.pattern.permute.xlu0 0
    %8915 = vperm.xlu0 %8914, %v8849
    %v8916 = vpop.permute.xlu0 %8915
    %8919 = vset.pattern.permute.xlu0 0
    %8920 = vperm.xlu0 %8919, %v8850
    %v8921 = vpop.permute.xlu0 %8920
    %8924 = vset.pattern.permute.xlu0 0
    %8925 = vperm.xlu0 %8924, %v8851
    %v8926 = vpop.permute.xlu0 %8925
    %8929 = vset.pattern.permute.xlu0 0
    %8930 = vperm.xlu0 %8929, %v8852
    %v8931 = vpop.permute.xlu0 %8930
    %8934 = vset.pattern.permute.xlu0 0
    %8935 = vperm.xlu0 %8934, %v8853
    %v8936 = vpop.permute.xlu0 %8935
    %8939 = vset.pattern.permute.xlu0 0
    %8940 = vperm.xlu0 %8939, %v8854
    %v8941 = vpop.permute.xlu0 %8940
    %8944 = vset.pattern.permute.xlu0 0
    %8945 = vperm.xlu0 %8944, %v8855
    %v8946 = vpop.permute.xlu0 %8945
    %8949 = vset.pattern.permute.xlu0 0
    %8950 = vperm.xlu0 %8949, %v8856
    %v8951 = vpop.permute.xlu0 %8950
    %8954 = vset.pattern.permute.xlu0 0
    %8955 = vperm.xlu0 %8954, %v8857
    %v8956 = vpop.permute.xlu0 %8955
    %8959 = vset.pattern.permute.xlu0 0
    %8960 = vperm.xlu0 %8959, %v8858
    %v8961 = vpop.permute.xlu0 %8960
    %v8963 = vmul.f32 %v8867, %v8886
    %v8964 = vmul.f32 %v8868, %v8891
    %v8965 = vmul.f32 %v8869, %v8896
    %v8966 = vmul.f32 %v8870, %v8901
    %v8967 = vmul.f32 %v8871, %v8906
    %v8968 = vmul.f32 %v8872, %v8911
    %v8969 = vmul.f32 %v8873, %v8916
    %v8970 = vmul.f32 %v8874, %v8921
    %v8971 = vmul.f32 %v8875, %v8926
    %v8972 = vmul.f32 %v8876, %v8931
    %v8973 = vmul.f32 %v8877, %v8936
    %v8974 = vmul.f32 %v8878, %v8941
    %v8975 = vmul.f32 %v8879, %v8946
    %v8976 = vmul.f32 %v8880, %v8951
    %v8977 = vmul.f32 %v8881, %v8956
    %v8978 = vmul.f32 %v8882, %v8961
    %v8979 = vadd.f32 %v8827, %v8963
    %v8980 = vadd.f32 %v8828, %v8964
    %v8981 = vadd.f32 %v8829, %v8965
    %v8982 = vadd.f32 %v8830, %v8966
    %v8983 = vadd.f32 %v8831, %v8967
    %v8984 = vadd.f32 %v8832, %v8968
    %v8985 = vadd.f32 %v8833, %v8969
    %v8986 = vadd.f32 %v8834, %v8970
    %v8987 = vadd.f32 %v8835, %v8971
    %v8988 = vadd.f32 %v8836, %v8972
    %v8989 = vadd.f32 %v8837, %v8973
    %v8990 = vadd.f32 %v8838, %v8974
    %v8991 = vadd.f32 %v8839, %v8975
    %v8992 = vadd.f32 %v8840, %v8976
    %v8993 = vadd.f32 %v8841, %v8977
    %v8994 = vadd.f32 %v8842, %v8978
    %v8995 = vmul.f32 %v1092, %v1556
    %v8996 = vmul.f32 %v1093, %v1557
    %v8997 = vmul.f32 %v1094, %v1558
    %v8998 = vmul.f32 %v1095, %v1559
    %v8999 = vmul.f32 %v1096, %v1560
    %v9000 = vmul.f32 %v1097, %v1561
    %v9001 = vmul.f32 %v1098, %v1562
    %v9002 = vmul.f32 %v1099, %v1563
    %v9003 = vmul.f32 %v1100, %v1564
    %v9004 = vmul.f32 %v1101, %v1565
    %v9005 = vmul.f32 %v1102, %v1566
    %v9006 = vmul.f32 %v1103, %v1567
    %v9007 = vmul.f32 %v1104, %v1568
    %v9008 = vmul.f32 %v1105, %v1569
    %v9009 = vmul.f32 %v1106, %v1570
    %v9010 = vmul.f32 %v1107, %v1571
    %s9011 = scalar_lea.vmem %s7, 47
    %v9012 = vld [vmem:[%s9011] sm:$0x1]
    %v9014 = vlaneseq
    %v9015 = vshrl.u32 %v9014, 7
    %v9016 = vsub.s32 0, %v9015
    %v9017 = vrot.slane %v9012, %v9016
    %v9019 = vmul.f32 %v2573, %v9017
    %v9020 = vmul.f32 %v2572, %v9017
    %v9021 = vmul.f32 %v2571, %v9017
    %v9022 = vmul.f32 %v2570, %v9017
    %v9023 = vmul.f32 %v2569, %v9017
    %v9024 = vmul.f32 %v2568, %v9017
    %v9025 = vmul.f32 %v2567, %v9017
    %v9026 = vmul.f32 %v2566, %v9017
    %v9027 = vmul.f32 %v2565, %v9017
    %v9028 = vmul.f32 %v2564, %v9017
    %v9029 = vmul.f32 %v2563, %v9017
    %v9030 = vmul.f32 %v2562, %v9017
    %v9031 = vmul.f32 %v2577, %v9017
    %v9032 = vmul.f32 %v2576, %v9017
    %v9033 = vmul.f32 %v2575, %v9017
    %v9034 = vmul.f32 %v2574, %v9017
    %9036 = vset.pattern.permute.xlu0 0
    %9037 = vperm.xlu0 %9036, %v8995
    %v9038 = vpop.permute.xlu0 %9037
    %9041 = vset.pattern.permute.xlu0 0
    %9042 = vperm.xlu0 %9041, %v8996
    %v9043 = vpop.permute.xlu0 %9042
    %9046 = vset.pattern.permute.xlu0 0
    %9047 = vperm.xlu0 %9046, %v8997
    %v9048 = vpop.permute.xlu0 %9047
    %9051 = vset.pattern.permute.xlu0 0
    %9052 = vperm.xlu0 %9051, %v8998
    %v9053 = vpop.permute.xlu0 %9052
    %9056 = vset.pattern.permute.xlu0 0
    %9057 = vperm.xlu0 %9056, %v8999
    %v9058 = vpop.permute.xlu0 %9057
    %9061 = vset.pattern.permute.xlu0 0
    %9062 = vperm.xlu0 %9061, %v9000
    %v9063 = vpop.permute.xlu0 %9062
    %9066 = vset.pattern.permute.xlu0 0
    %9067 = vperm.xlu0 %9066, %v9001
    %v9068 = vpop.permute.xlu0 %9067
    %9071 = vset.pattern.permute.xlu0 0
    %9072 = vperm.xlu0 %9071, %v9002
    %v9073 = vpop.permute.xlu0 %9072
    %9076 = vset.pattern.permute.xlu0 0
    %9077 = vperm.xlu0 %9076, %v9003
    %v9078 = vpop.permute.xlu0 %9077
    %9081 = vset.pattern.permute.xlu0 0
    %9082 = vperm.xlu0 %9081, %v9004
    %v9083 = vpop.permute.xlu0 %9082
    %9086 = vset.pattern.permute.xlu0 0
    %9087 = vperm.xlu0 %9086, %v9005
    %v9088 = vpop.permute.xlu0 %9087
    %9091 = vset.pattern.permute.xlu0 0
    %9092 = vperm.xlu0 %9091, %v9006
    %v9093 = vpop.permute.xlu0 %9092
    %9096 = vset.pattern.permute.xlu0 0
    %9097 = vperm.xlu0 %9096, %v9007
    %v9098 = vpop.permute.xlu0 %9097
    %9101 = vset.pattern.permute.xlu0 0
    %9102 = vperm.xlu0 %9101, %v9008
    %v9103 = vpop.permute.xlu0 %9102
    %9106 = vset.pattern.permute.xlu0 0
    %9107 = vperm.xlu0 %9106, %v9009
    %v9108 = vpop.permute.xlu0 %9107
    %9111 = vset.pattern.permute.xlu0 0
    %9112 = vperm.xlu0 %9111, %v9010
    %v9113 = vpop.permute.xlu0 %9112
    %v9115 = vmul.f32 %v9019, %v9038
    %v9116 = vmul.f32 %v9020, %v9043
    %v9117 = vmul.f32 %v9021, %v9048
    %v9118 = vmul.f32 %v9022, %v9053
    %v9119 = vmul.f32 %v9023, %v9058
    %v9120 = vmul.f32 %v9024, %v9063
    %v9121 = vmul.f32 %v9025, %v9068
    %v9122 = vmul.f32 %v9026, %v9073
    %v9123 = vmul.f32 %v9027, %v9078
    %v9124 = vmul.f32 %v9028, %v9083
    %v9125 = vmul.f32 %v9029, %v9088
    %v9126 = vmul.f32 %v9030, %v9093
    %v9127 = vmul.f32 %v9031, %v9098
    %v9128 = vmul.f32 %v9032, %v9103
    %v9129 = vmul.f32 %v9033, %v9108
    %v9130 = vmul.f32 %v9034, %v9113
    %v9131 = vadd.f32 %v8979, %v9115
    %v9132 = vadd.f32 %v8980, %v9116
    %v9133 = vadd.f32 %v8981, %v9117
    %v9134 = vadd.f32 %v8982, %v9118
    %v9135 = vadd.f32 %v8983, %v9119
    %v9136 = vadd.f32 %v8984, %v9120
    %v9137 = vadd.f32 %v8985, %v9121
    %v9138 = vadd.f32 %v8986, %v9122
    %v9139 = vadd.f32 %v8987, %v9123
    %v9140 = vadd.f32 %v8988, %v9124
    %v9141 = vadd.f32 %v8989, %v9125
    %v9142 = vadd.f32 %v8990, %v9126
    %v9143 = vadd.f32 %v8991, %v9127
    %v9144 = vadd.f32 %v8992, %v9128
    %v9145 = vadd.f32 %v8993, %v9129
    %v9146 = vadd.f32 %v8994, %v9130
    %v9147 = vmul.f32 %v1092, %v1636
    %v9148 = vmul.f32 %v1093, %v1637
    %v9149 = vmul.f32 %v1094, %v1638
    %v9150 = vmul.f32 %v1095, %v1639
    %v9151 = vmul.f32 %v1096, %v1640
    %v9152 = vmul.f32 %v1097, %v1641
    %v9153 = vmul.f32 %v1098, %v1642
    %v9154 = vmul.f32 %v1099, %v1643
    %v9155 = vmul.f32 %v1100, %v1644
    %v9156 = vmul.f32 %v1101, %v1645
    %v9157 = vmul.f32 %v1102, %v1646
    %v9158 = vmul.f32 %v1103, %v1647
    %v9159 = vmul.f32 %v1104, %v1648
    %v9160 = vmul.f32 %v1105, %v1649
    %v9161 = vmul.f32 %v1106, %v1650
    %v9162 = vmul.f32 %v1107, %v1651
    %s9163 = scalar_lea.vmem %s7, 48
    %v9164 = vld [vmem:[%s9163] sm:$0x1]
    %v9166 = vlaneseq
    %v9167 = vshrl.u32 %v9166, 7
    %v9168 = vsub.s32 0, %v9167
    %v9169 = vrot.slane %v9164, %v9168
    %v9171 = vmul.f32 %v2758, %v9169
    %v9172 = vmul.f32 %v2757, %v9169
    %v9173 = vmul.f32 %v2756, %v9169
    %v9174 = vmul.f32 %v2755, %v9169
    %v9175 = vmul.f32 %v2754, %v9169
    %v9176 = vmul.f32 %v2753, %v9169
    %v9177 = vmul.f32 %v2752, %v9169
    %v9178 = vmul.f32 %v2751, %v9169
    %v9179 = vmul.f32 %v2750, %v9169
    %v9180 = vmul.f32 %v2749, %v9169
    %v9181 = vmul.f32 %v2748, %v9169
    %v9182 = vmul.f32 %v2747, %v9169
    %v9183 = vmul.f32 %v2762, %v9169
    %v9184 = vmul.f32 %v2761, %v9169
    %v9185 = vmul.f32 %v2760, %v9169
    %v9186 = vmul.f32 %v2759, %v9169
    %9188 = vset.pattern.permute.xlu0 0
    %9189 = vperm.xlu0 %9188, %v9147
    %v9190 = vpop.permute.xlu0 %9189
    %9193 = vset.pattern.permute.xlu0 0
    %9194 = vperm.xlu0 %9193, %v9148
    %v9195 = vpop.permute.xlu0 %9194
    %9198 = vset.pattern.permute.xlu0 0
    %9199 = vperm.xlu0 %9198, %v9149
    %v9200 = vpop.permute.xlu0 %9199
    %9203 = vset.pattern.permute.xlu0 0
    %9204 = vperm.xlu0 %9203, %v9150
    %v9205 = vpop.permute.xlu0 %9204
    %9208 = vset.pattern.permute.xlu0 0
    %9209 = vperm.xlu0 %9208, %v9151
    %v9210 = vpop.permute.xlu0 %9209
    %9213 = vset.pattern.permute.xlu0 0
    %9214 = vperm.xlu0 %9213, %v9152
    %v9215 = vpop.permute.xlu0 %9214
    %9218 = vset.pattern.permute.xlu0 0
    %9219 = vperm.xlu0 %9218, %v9153
    %v9220 = vpop.permute.xlu0 %9219
    %9223 = vset.pattern.permute.xlu0 0
    %9224 = vperm.xlu0 %9223, %v9154
    %v9225 = vpop.permute.xlu0 %9224
    %9228 = vset.pattern.permute.xlu0 0
    %9229 = vperm.xlu0 %9228, %v9155
    %v9230 = vpop.permute.xlu0 %9229
    %9233 = vset.pattern.permute.xlu0 0
    %9234 = vperm.xlu0 %9233, %v9156
    %v9235 = vpop.permute.xlu0 %9234
    %9238 = vset.pattern.permute.xlu0 0
    %9239 = vperm.xlu0 %9238, %v9157
    %v9240 = vpop.permute.xlu0 %9239
    %9243 = vset.pattern.permute.xlu0 0
    %9244 = vperm.xlu0 %9243, %v9158
    %v9245 = vpop.permute.xlu0 %9244
    %9248 = vset.pattern.permute.xlu0 0
    %9249 = vperm.xlu0 %9248, %v9159
    %v9250 = vpop.permute.xlu0 %9249
    %9253 = vset.pattern.permute.xlu0 0
    %9254 = vperm.xlu0 %9253, %v9160
    %v9255 = vpop.permute.xlu0 %9254
    %9258 = vset.pattern.permute.xlu0 0
    %9259 = vperm.xlu0 %9258, %v9161
    %v9260 = vpop.permute.xlu0 %9259
    %9263 = vset.pattern.permute.xlu0 0
    %9264 = vperm.xlu0 %9263, %v9162
    %v9265 = vpop.permute.xlu0 %9264
    %v9267 = vmul.f32 %v9171, %v9190
    %v9268 = vmul.f32 %v9172, %v9195
    %v9269 = vmul.f32 %v9173, %v9200
    %v9270 = vmul.f32 %v9174, %v9205
    %v9271 = vmul.f32 %v9175, %v9210
    %v9272 = vmul.f32 %v9176, %v9215
    %v9273 = vmul.f32 %v9177, %v9220
    %v9274 = vmul.f32 %v9178, %v9225
    %v9275 = vmul.f32 %v9179, %v9230
    %v9276 = vmul.f32 %v9180, %v9235
    %v9277 = vmul.f32 %v9181, %v9240
    %v9278 = vmul.f32 %v9182, %v9245
    %v9279 = vmul.f32 %v9183, %v9250
    %v9280 = vmul.f32 %v9184, %v9255
    %v9281 = vmul.f32 %v9185, %v9260
    %v9282 = vmul.f32 %v9186, %v9265
    %v9283 = vadd.f32 %v9131, %v9267
    %v9284 = vadd.f32 %v9132, %v9268
    %v9285 = vadd.f32 %v9133, %v9269
    %v9286 = vadd.f32 %v9134, %v9270
    %v9287 = vadd.f32 %v9135, %v9271
    %v9288 = vadd.f32 %v9136, %v9272
    %v9289 = vadd.f32 %v9137, %v9273
    %v9290 = vadd.f32 %v9138, %v9274
    %v9291 = vadd.f32 %v9139, %v9275
    %v9292 = vadd.f32 %v9140, %v9276
    %v9293 = vadd.f32 %v9141, %v9277
    %v9294 = vadd.f32 %v9142, %v9278
    %v9295 = vadd.f32 %v9143, %v9279
    %v9296 = vadd.f32 %v9144, %v9280
    %v9297 = vadd.f32 %v9145, %v9281
    %v9298 = vadd.f32 %v9146, %v9282
    %v9299 = vld [vmem:[%s8] sm:$0x1]
    %v9301 = vlaneseq
    %v9302 = vshrl.u32 %v9301, 7
    %v9303 = vsub.s32 0, %v9302
    %v9304 = vrot.slane %v9299, %v9303
    %v9306 = vadd.f32 %v9283, %v9304
    %v9307 = vadd.f32 %v9284, %v9304
    %v9308 = vadd.f32 %v9285, %v9304
    %v9309 = vadd.f32 %v9286, %v9304
    %v9310 = vadd.f32 %v9287, %v9304
    %v9311 = vadd.f32 %v9288, %v9304
    %v9312 = vadd.f32 %v9289, %v9304
    %v9313 = vadd.f32 %v9290, %v9304
    %v9314 = vadd.f32 %v9291, %v9304
    %v9315 = vadd.f32 %v9292, %v9304
    %v9316 = vadd.f32 %v9293, %v9304
    %v9317 = vadd.f32 %v9294, %v9304
    %v9318 = vadd.f32 %v9295, %v9304
    %v9319 = vadd.f32 %v9296, %v9304
    %v9320 = vadd.f32 %v9297, %v9304
    %v9321 = vadd.f32 %v9298, %v9304
    %v9322 = vld [vmem:[%s9] sm:$0x1]
    %v9323 = vld [vmem:[%s10] sm:$0x1]
    %v9324 = vsel %vm278, %v9306, 0.0
    %9325 = vadd.xlane.f32.xlu0 %v9324
    %v9326 = vpop.xlane.xlu0 %9325
    %v9327 = vsel %vm278, %v9307, 0.0
    %9328 = vadd.xlane.f32.xlu0 %v9327
    %v9329 = vpop.xlane.xlu0 %9328
    %v9330 = vsel %vm278, %v9308, 0.0
    %9331 = vadd.xlane.f32.xlu0 %v9330
    %v9332 = vpop.xlane.xlu0 %9331
    %v9333 = vsel %vm278, %v9309, 0.0
    %9334 = vadd.xlane.f32.xlu0 %v9333
    %v9335 = vpop.xlane.xlu0 %9334
    %v9336 = vsel %vm278, %v9310, 0.0
    %9337 = vadd.xlane.f32.xlu0 %v9336
    %v9338 = vpop.xlane.xlu0 %9337
    %v9339 = vsel %vm278, %v9311, 0.0
    %9340 = vadd.xlane.f32.xlu0 %v9339
    %v9341 = vpop.xlane.xlu0 %9340
    %v9342 = vsel %vm278, %v9312, 0.0
    %9343 = vadd.xlane.f32.xlu0 %v9342
    %v9344 = vpop.xlane.xlu0 %9343
    %v9345 = vsel %vm278, %v9313, 0.0
    %9346 = vadd.xlane.f32.xlu0 %v9345
    %v9347 = vpop.xlane.xlu0 %9346
    %v9348 = vsel %vm278, %v9314, 0.0
    %9349 = vadd.xlane.f32.xlu0 %v9348
    %v9350 = vpop.xlane.xlu0 %9349
    %v9351 = vsel %vm278, %v9315, 0.0
    %9352 = vadd.xlane.f32.xlu0 %v9351
    %v9353 = vpop.xlane.xlu0 %9352
    %v9354 = vsel %vm278, %v9316, 0.0
    %9355 = vadd.xlane.f32.xlu0 %v9354
    %v9356 = vpop.xlane.xlu0 %9355
    %v9357 = vsel %vm278, %v9317, 0.0
    %9358 = vadd.xlane.f32.xlu0 %v9357
    %v9359 = vpop.xlane.xlu0 %9358
    %v9360 = vsel %vm278, %v9318, 0.0
    %9361 = vadd.xlane.f32.xlu0 %v9360
    %v9362 = vpop.xlane.xlu0 %9361
    %v9363 = vsel %vm278, %v9319, 0.0
    %9364 = vadd.xlane.f32.xlu0 %v9363
    %v9365 = vpop.xlane.xlu0 %9364
    %v9366 = vsel %vm278, %v9320, 0.0
    %9367 = vadd.xlane.f32.xlu0 %v9366
    %v9368 = vpop.xlane.xlu0 %9367
    %v9369 = vsel %vm278, %v9321, 0.0
    %9370 = vadd.xlane.f32.xlu0 %v9369
    %v9371 = vpop.xlane.xlu0 %9370
    %v9372 = vmul.f32 %v9326, %v327
    %v9373 = vmul.f32 %v9329, %v327
    %v9374 = vmul.f32 %v9332, %v327
    %v9375 = vmul.f32 %v9335, %v327
    %v9376 = vmul.f32 %v9338, %v327
    %v9377 = vmul.f32 %v9341, %v327
    %v9378 = vmul.f32 %v9344, %v327
    %v9379 = vmul.f32 %v9347, %v327
    %v9380 = vmul.f32 %v9350, %v327
    %v9381 = vmul.f32 %v9353, %v327
    %v9382 = vmul.f32 %v9356, %v327
    %v9383 = vmul.f32 %v9359, %v327
    %v9384 = vmul.f32 %v9362, %v327
    %v9385 = vmul.f32 %v9365, %v327
    %v9386 = vmul.f32 %v9368, %v327
    %v9387 = vmul.f32 %v9371, %v327
    %v9388 = vsub.f32 %v9306, %v9372
    %v9389 = vsub.f32 %v9307, %v9373
    %v9390 = vsub.f32 %v9308, %v9374
    %v9391 = vsub.f32 %v9309, %v9375
    %v9392 = vsub.f32 %v9310, %v9376
    %v9393 = vsub.f32 %v9311, %v9377
    %v9394 = vsub.f32 %v9312, %v9378
    %v9395 = vsub.f32 %v9313, %v9379
    %v9396 = vsub.f32 %v9314, %v9380
    %v9397 = vsub.f32 %v9315, %v9381
    %v9398 = vsub.f32 %v9316, %v9382
    %v9399 = vsub.f32 %v9317, %v9383
    %v9400 = vsub.f32 %v9318, %v9384
    %v9401 = vsub.f32 %v9319, %v9385
    %v9402 = vsub.f32 %v9320, %v9386
    %v9403 = vsub.f32 %v9321, %v9387
    %v9404 = vmul.f32 %v9388, %v9388
    %v9405 = vmul.f32 %v9389, %v9389
    %v9406 = vmul.f32 %v9390, %v9390
    %v9407 = vmul.f32 %v9391, %v9391
    %v9408 = vmul.f32 %v9392, %v9392
    %v9409 = vmul.f32 %v9393, %v9393
    %v9410 = vmul.f32 %v9394, %v9394
    %v9411 = vmul.f32 %v9395, %v9395
    %v9412 = vmul.f32 %v9396, %v9396
    %v9413 = vmul.f32 %v9397, %v9397
    %v9414 = vmul.f32 %v9398, %v9398
    %v9415 = vmul.f32 %v9399, %v9399
    %v9416 = vmul.f32 %v9400, %v9400
    %v9417 = vmul.f32 %v9401, %v9401
    %v9418 = vmul.f32 %v9402, %v9402
    %v9419 = vmul.f32 %v9403, %v9403
    %v9420 = vsel %vm278, %v9404, 0.0
    %9421 = vadd.xlane.f32.xlu0 %v9420
    %v9422 = vpop.xlane.xlu0 %9421
    %v9423 = vsel %vm278, %v9405, 0.0
    %9424 = vadd.xlane.f32.xlu0 %v9423
    %v9425 = vpop.xlane.xlu0 %9424
    %v9426 = vsel %vm278, %v9406, 0.0
    %9427 = vadd.xlane.f32.xlu0 %v9426
    %v9428 = vpop.xlane.xlu0 %9427
    %v9429 = vsel %vm278, %v9407, 0.0
    %9430 = vadd.xlane.f32.xlu0 %v9429
    %v9431 = vpop.xlane.xlu0 %9430
    %v9432 = vsel %vm278, %v9408, 0.0
    %9433 = vadd.xlane.f32.xlu0 %v9432
    %v9434 = vpop.xlane.xlu0 %9433
    %v9435 = vsel %vm278, %v9409, 0.0
    %9436 = vadd.xlane.f32.xlu0 %v9435
    %v9437 = vpop.xlane.xlu0 %9436
    %v9438 = vsel %vm278, %v9410, 0.0
    %9439 = vadd.xlane.f32.xlu0 %v9438
    %v9440 = vpop.xlane.xlu0 %9439
    %v9441 = vsel %vm278, %v9411, 0.0
    %9442 = vadd.xlane.f32.xlu0 %v9441
    %v9443 = vpop.xlane.xlu0 %9442
    %v9444 = vsel %vm278, %v9412, 0.0
    %9445 = vadd.xlane.f32.xlu0 %v9444
    %v9446 = vpop.xlane.xlu0 %9445
    %v9447 = vsel %vm278, %v9413, 0.0
    %9448 = vadd.xlane.f32.xlu0 %v9447
    %v9449 = vpop.xlane.xlu0 %9448
    %v9450 = vsel %vm278, %v9414, 0.0
    %9451 = vadd.xlane.f32.xlu0 %v9450
    %v9452 = vpop.xlane.xlu0 %9451
    %v9453 = vsel %vm278, %v9415, 0.0
    %9454 = vadd.xlane.f32.xlu0 %v9453
    %v9455 = vpop.xlane.xlu0 %9454
    %v9456 = vsel %vm278, %v9416, 0.0
    %9457 = vadd.xlane.f32.xlu0 %v9456
    %v9458 = vpop.xlane.xlu0 %9457
    %v9459 = vsel %vm278, %v9417, 0.0
    %9460 = vadd.xlane.f32.xlu0 %v9459
    %v9461 = vpop.xlane.xlu0 %9460
    %v9462 = vsel %vm278, %v9418, 0.0
    %9463 = vadd.xlane.f32.xlu0 %v9462
    %v9464 = vpop.xlane.xlu0 %9463
    %v9465 = vsel %vm278, %v9419, 0.0
    %9466 = vadd.xlane.f32.xlu0 %v9465
    %v9467 = vpop.xlane.xlu0 %9466
    %v9468 = vmul.f32 %v9422, %v327
    %v9469 = vmul.f32 %v9425, %v327
    %v9470 = vmul.f32 %v9428, %v327
    %v9471 = vmul.f32 %v9431, %v327
    %v9472 = vmul.f32 %v9434, %v327
    %v9473 = vmul.f32 %v9437, %v327
    %v9474 = vmul.f32 %v9440, %v327
    %v9475 = vmul.f32 %v9443, %v327
    %v9476 = vmul.f32 %v9446, %v327
    %v9477 = vmul.f32 %v9449, %v327
    %v9478 = vmul.f32 %v9452, %v327
    %v9479 = vmul.f32 %v9455, %v327
    %v9480 = vmul.f32 %v9458, %v327
    %v9481 = vmul.f32 %v9461, %v327
    %v9482 = vmul.f32 %v9464, %v327
    %v9483 = vmul.f32 %v9467, %v327
    %v9484 = vadd.f32 %v9468, 1e-06
    %v9485 = vadd.f32 %v9469, 1e-06
    %v9486 = vadd.f32 %v9470, 1e-06
    %v9487 = vadd.f32 %v9471, 1e-06
    %v9488 = vadd.f32 %v9472, 1e-06
    %v9489 = vadd.f32 %v9473, 1e-06
    %v9490 = vadd.f32 %v9474, 1e-06
    %v9491 = vadd.f32 %v9475, 1e-06
    %v9492 = vadd.f32 %v9476, 1e-06
    %v9493 = vadd.f32 %v9477, 1e-06
    %v9494 = vadd.f32 %v9478, 1e-06
    %v9495 = vadd.f32 %v9479, 1e-06
    %v9496 = vadd.f32 %v9480, 1e-06
    %v9497 = vadd.f32 %v9481, 1e-06
    %v9498 = vadd.f32 %v9482, 1e-06
    %v9499 = vadd.f32 %v9483, 1e-06
    %v9500 = vrsqrt.pop %v9484
    %v9501 = vrsqrt.pop %v9485
    %v9502 = vrsqrt.pop %v9486
    %v9503 = vrsqrt.pop %v9487
    %v9504 = vrsqrt.pop %v9488
    %v9505 = vrsqrt.pop %v9489
    %v9506 = vrsqrt.pop %v9490
    %v9507 = vrsqrt.pop %v9491
    %v9508 = vrsqrt.pop %v9492
    %v9509 = vrsqrt.pop %v9493
    %v9510 = vrsqrt.pop %v9494
    %v9511 = vrsqrt.pop %v9495
    %v9512 = vrsqrt.pop %v9496
    %v9513 = vrsqrt.pop %v9497
    %v9514 = vrsqrt.pop %v9498
    %v9515 = vrsqrt.pop %v9499
    %v9516 = vmul.f32 %v9388, %v9500
    %v9517 = vmul.f32 %v9389, %v9501
    %v9518 = vmul.f32 %v9390, %v9502
    %v9519 = vmul.f32 %v9391, %v9503
    %v9520 = vmul.f32 %v9392, %v9504
    %v9521 = vmul.f32 %v9393, %v9505
    %v9522 = vmul.f32 %v9394, %v9506
    %v9523 = vmul.f32 %v9395, %v9507
    %v9524 = vmul.f32 %v9396, %v9508
    %v9525 = vmul.f32 %v9397, %v9509
    %v9526 = vmul.f32 %v9398, %v9510
    %v9527 = vmul.f32 %v9399, %v9511
    %v9528 = vmul.f32 %v9400, %v9512
    %v9529 = vmul.f32 %v9401, %v9513
    %v9530 = vmul.f32 %v9402, %v9514
    %v9531 = vmul.f32 %v9403, %v9515
    %v9533 = vlaneseq
    %v9534 = vshrl.u32 %v9533, 7
    %v9535 = vsub.s32 0, %v9534
    %v9536 = vrot.slane %v9322, %v9535
    %v9538 = vmul.f32 %v9516, %v9536
    %v9539 = vmul.f32 %v9517, %v9536
    %v9540 = vmul.f32 %v9518, %v9536
    %v9541 = vmul.f32 %v9519, %v9536
    %v9542 = vmul.f32 %v9520, %v9536
    %v9543 = vmul.f32 %v9521, %v9536
    %v9544 = vmul.f32 %v9522, %v9536
    %v9545 = vmul.f32 %v9523, %v9536
    %v9546 = vmul.f32 %v9524, %v9536
    %v9547 = vmul.f32 %v9525, %v9536
    %v9548 = vmul.f32 %v9526, %v9536
    %v9549 = vmul.f32 %v9527, %v9536
    %v9550 = vmul.f32 %v9528, %v9536
    %v9551 = vmul.f32 %v9529, %v9536
    %v9552 = vmul.f32 %v9530, %v9536
    %v9553 = vmul.f32 %v9531, %v9536
    %v9555 = vlaneseq
    %v9556 = vshrl.u32 %v9555, 7
    %v9557 = vsub.s32 0, %v9556
    %v9558 = vrot.slane %v9323, %v9557
    %v9560 = vadd.f32 %v9538, %v9558
    %v9561 = vadd.f32 %v9539, %v9558
    %v9562 = vadd.f32 %v9540, %v9558
    %v9563 = vadd.f32 %v9541, %v9558
    %v9564 = vadd.f32 %v9542, %v9558
    %v9565 = vadd.f32 %v9543, %v9558
    %v9566 = vadd.f32 %v9544, %v9558
    %v9567 = vadd.f32 %v9545, %v9558
    %v9568 = vadd.f32 %v9546, %v9558
    %v9569 = vadd.f32 %v9547, %v9558
    %v9570 = vadd.f32 %v9548, %v9558
    %v9571 = vadd.f32 %v9549, %v9558
    %v9572 = vadd.f32 %v9550, %v9558
    %v9573 = vadd.f32 %v9551, %v9558
    %v9574 = vadd.f32 %v9552, %v9558
    %v9575 = vadd.f32 %v9553, %v9558
    %v9576 = vpack.c.bf16 %v9561, %v9560
    %v9577 = vpack.c.bf16 %v9563, %v9562
    %v9578 = vpack.c.bf16 %v9565, %v9564
    %v9579 = vpack.c.bf16 %v9567, %v9566
    %v9580 = vpack.c.bf16 %v9569, %v9568
    %v9581 = vpack.c.bf16 %v9571, %v9570
    %v9582 = vpack.c.bf16 %v9573, %v9572
    %v9583 = vpack.c.bf16 %v9575, %v9574
    %v9584 = vld [vmem:[%s11] sm:$0xf]
    %v9585 = vld [vmem:[%s11 + $0x4] sm:$0xf]
    %v9586 = vld [vmem:[%s11 + $0x8] sm:$0xf]
    %v9587 = vld [vmem:[%s11 + $0xc] sm:$0xf]
    %v9588 = vld [vmem:[%s12] sm:$0x1]
    %v9590 = vlaneseq
    %v9591 = vshrl.u32 %v9590, 7
    %v9592 = vsub.s32 0, %v9591
    %v9593 = vrot.slane %v9588, %v9592
    %v9599 = vunpack.c.l.b16 %v9584
    %v9600 = vunpack.c.l.b16 %v9585
    %v9601 = vunpack.c.l.b16 %v9586
    %v9602 = vunpack.c.l.b16 %v9587
    %v9603 = vpack.c.b16 %v9600, %v9599
    %v9604 = vpack.c.b16 %v9602, %v9601
    %v9608 = vsel %vm278, %v9576, 0
    %v9611 = vsel %vm278, %v9577, 0
    %v9614 = vsel %vm278, %v9578, 0
    %v9617 = vsel %vm278, %v9579, 0
    %v9620 = vsel %vm278, %v9580, 0
    %v9623 = vsel %vm278, %v9581, 0
    %v9626 = vsel %vm278, %v9582, 0
    %v9629 = vsel %vm278, %v9583, 0
    %9631 = vmatprep.subr.bf16.mxu0 0
    %9632 = vmatpush1.bf16.msra.mxu0 0
    %9633 = vmatprep.subr.bf16.mxu0 0
    %9634 = vmatpush1.bf16.msra.mxu0 0
    %9635 = vmatprep.subr.bf16.mxu0 0
    %9636 = vmatpush1.bf16.msra.mxu0 0
    %9637 = vmatprep.subr.bf16.mxu0 0
    %9638 = vmatpush1.bf16.msra.mxu0 0
    %9639 = vmatprep.subr.bf16.mxu0 0
    %9640 = vmatpush1.bf16.msra.mxu0 0
    %9641 = vmatprep.subr.bf16.mxu0 0
    %9642 = vmatpush1.bf16.msra.mxu0 0
    %9643 = vmatprep.subr.bf16.mxu0 0
    %9644 = vmatpush1.bf16.msra.mxu0 %v9604
    %9645 = vmatprep.subr.bf16.mxu0 0
    %9646 = vmatpush1.bf16.msra.mxu0 %v9603
    %9647 = vmatprep.subr.bf16.mxu0 0
    %9648 = vmatpush2.bf16.msra.mxu0 0
    %9649 = vmatprep.subr.bf16.mxu0 0
    %9650 = vmatpush2.bf16.msra.mxu0 0
    %9651 = vmatprep.subr.bf16.mxu0 0
    %9652 = vmatpush2.bf16.msra.mxu0 0
    %9653 = vmatprep.subr.bf16.mxu0 0
    %9654 = vmatpush2.bf16.msra.mxu0 0
    %9655 = vmatprep.subr.bf16.mxu0 0
    %9656 = vmatpush2.bf16.msra.mxu0 0
    %9657 = vmatprep.subr.bf16.mxu0 0
    %9658 = vmatpush2.bf16.msra.mxu0 0
    %9659 = vmatprep.subr.bf16.mxu0 0
    %9660 = vmatpush2.bf16.msra.mxu0 0
    %9661 = vmatprep.subr.bf16.mxu0 0
    %9662 = vmatpush2.bf16.msra.mxu0 0
    %9663 = vmatprep.mubr.bf16.mxu0 0
    %9664 = vmatmul.mubr.bf16.gmra.mxu0 %v9608
    %v9665 = vpop.f32.mrf.mxu0
    %v9666 = vadd.f32 %v9593, %v9665
    %v9667 = vpop.f32.mrf.mxu0
    %v9668 = vpop.f32.mrf.mxu0
    %v9669 = vadd.f32 %v9593, %v9668
    %v9670 = vpop.f32.mrf.mxu0
    %9671 = vmatprep.mubr.bf16.mxu0 0
    %9672 = vmatmul.mubr.bf16.gmra.mxu0 %v9611
    %v9673 = vpop.f32.mrf.mxu0
    %v9674 = vadd.f32 %v9593, %v9673
    %v9675 = vpop.f32.mrf.mxu0
    %v9676 = vpop.f32.mrf.mxu0
    %v9677 = vadd.f32 %v9593, %v9676
    %v9678 = vpop.f32.mrf.mxu0
    %9679 = vmatprep.mubr.bf16.mxu0 0
    %9680 = vmatmul.mubr.bf16.gmra.mxu0 %v9614
    %v9681 = vpop.f32.mrf.mxu0
    %v9682 = vadd.f32 %v9593, %v9681
    %v9683 = vpop.f32.mrf.mxu0
    %v9684 = vpop.f32.mrf.mxu0
    %v9685 = vadd.f32 %v9593, %v9684
    %v9686 = vpop.f32.mrf.mxu0
    %9687 = vmatprep.mubr.bf16.mxu0 0
    %9688 = vmatmul.mubr.bf16.gmra.mxu0 %v9617
    %v9689 = vpop.f32.mrf.mxu0
    %v9690 = vadd.f32 %v9593, %v9689
    %v9691 = vpop.f32.mrf.mxu0
    %v9692 = vpop.f32.mrf.mxu0
    %v9693 = vadd.f32 %v9593, %v9692
    %v9694 = vpop.f32.mrf.mxu0
    %9695 = vmatprep.mubr.bf16.mxu0 0
    %9696 = vmatmul.mubr.bf16.gmra.mxu0 %v9620
    %v9697 = vpop.f32.mrf.mxu0
    %v9698 = vadd.f32 %v9593, %v9697
    %v9699 = vpop.f32.mrf.mxu0
    %v9700 = vpop.f32.mrf.mxu0
    %v9701 = vadd.f32 %v9593, %v9700
    %v9702 = vpop.f32.mrf.mxu0
    %9703 = vmatprep.mubr.bf16.mxu0 0
    %9704 = vmatmul.mubr.bf16.gmra.mxu0 %v9623
    %v9705 = vpop.f32.mrf.mxu0
    %v9706 = vadd.f32 %v9593, %v9705
    %v9707 = vpop.f32.mrf.mxu0
    %v9708 = vpop.f32.mrf.mxu0
    %v9709 = vadd.f32 %v9593, %v9708
    %v9710 = vpop.f32.mrf.mxu0
    %9711 = vmatprep.mubr.bf16.mxu0 0
    %9712 = vmatmul.mubr.bf16.gmra.mxu0 %v9626
    %v9713 = vpop.f32.mrf.mxu0
    %v9714 = vadd.f32 %v9593, %v9713
    %v9715 = vpop.f32.mrf.mxu0
    %v9716 = vpop.f32.mrf.mxu0
    %v9717 = vadd.f32 %v9593, %v9716
    %v9718 = vpop.f32.mrf.mxu0
    %9719 = vmatprep.mubr.bf16.mxu0 0
    %9720 = vmatmul.mubr.bf16.gmra.mxu0 %v9629
    %v9721 = vpop.f32.mrf.mxu0
    %v9722 = vadd.f32 %v9593, %v9721
    %v9723 = vpop.f32.mrf.mxu0
    %v9724 = vpop.f32.mrf.mxu0
    %v9725 = vadd.f32 %v9593, %v9724
    %v9726 = vpop.f32.mrf.mxu0
    %9727 = vdwg.mxu0
    %v9728 = vmul.f32 %v9666, 0.5
    %v9729 = vmul.f32 %v9669, 0.5
    %v9730 = vmul.f32 %v9674, 0.5
    %v9731 = vmul.f32 %v9677, 0.5
    %v9732 = vmul.f32 %v9682, 0.5
    %v9733 = vmul.f32 %v9685, 0.5
    %v9734 = vmul.f32 %v9690, 0.5
    %v9735 = vmul.f32 %v9693, 0.5
    %v9736 = vmul.f32 %v9698, 0.5
    %v9737 = vmul.f32 %v9701, 0.5
    %v9738 = vmul.f32 %v9706, 0.5
    %v9739 = vmul.f32 %v9709, 0.5
    %v9740 = vmul.f32 %v9714, 0.5
    %v9741 = vmul.f32 %v9717, 0.5
    %v9742 = vmul.f32 %v9722, 0.5
    %v9743 = vmul.f32 %v9725, 0.5
    %v9744 = vmul.f32 %v9666, 0.044715
    %v9745 = vmul.f32 %v9669, 0.044715
    %v9746 = vmul.f32 %v9674, 0.044715
    %v9747 = vmul.f32 %v9677, 0.044715
    %v9748 = vmul.f32 %v9682, 0.044715
    %v9749 = vmul.f32 %v9685, 0.044715
    %v9750 = vmul.f32 %v9690, 0.044715
    %v9751 = vmul.f32 %v9693, 0.044715
    %v9752 = vmul.f32 %v9698, 0.044715
    %v9753 = vmul.f32 %v9701, 0.044715
    %v9754 = vmul.f32 %v9706, 0.044715
    %v9755 = vmul.f32 %v9709, 0.044715
    %v9756 = vmul.f32 %v9714, 0.044715
    %v9757 = vmul.f32 %v9717, 0.044715
    %v9758 = vmul.f32 %v9722, 0.044715
    %v9759 = vmul.f32 %v9725, 0.044715
    %v9760 = vmul.f32 %v9744, %v9666
    %v9761 = vmul.f32 %v9745, %v9669
    %v9762 = vmul.f32 %v9746, %v9674
    %v9763 = vmul.f32 %v9747, %v9677
    %v9764 = vmul.f32 %v9748, %v9682
    %v9765 = vmul.f32 %v9749, %v9685
    %v9766 = vmul.f32 %v9750, %v9690
    %v9767 = vmul.f32 %v9751, %v9693
    %v9768 = vmul.f32 %v9752, %v9698
    %v9769 = vmul.f32 %v9753, %v9701
    %v9770 = vmul.f32 %v9754, %v9706
    %v9771 = vmul.f32 %v9755, %v9709
    %v9772 = vmul.f32 %v9756, %v9714
    %v9773 = vmul.f32 %v9757, %v9717
    %v9774 = vmul.f32 %v9758, %v9722
    %v9775 = vmul.f32 %v9759, %v9725
    %v9776 = vmul.f32 %v9760, %v9666
    %v9777 = vmul.f32 %v9761, %v9669
    %v9778 = vmul.f32 %v9762, %v9674
    %v9779 = vmul.f32 %v9763, %v9677
    %v9780 = vmul.f32 %v9764, %v9682
    %v9781 = vmul.f32 %v9765, %v9685
    %v9782 = vmul.f32 %v9766, %v9690
    %v9783 = vmul.f32 %v9767, %v9693
    %v9784 = vmul.f32 %v9768, %v9698
    %v9785 = vmul.f32 %v9769, %v9701
    %v9786 = vmul.f32 %v9770, %v9706
    %v9787 = vmul.f32 %v9771, %v9709
    %v9788 = vmul.f32 %v9772, %v9714
    %v9789 = vmul.f32 %v9773, %v9717
    %v9790 = vmul.f32 %v9774, %v9722
    %v9791 = vmul.f32 %v9775, %v9725
    %v9792 = vadd.f32 %v9666, %v9776
    %v9793 = vadd.f32 %v9669, %v9777
    %v9794 = vadd.f32 %v9674, %v9778
    %v9795 = vadd.f32 %v9677, %v9779
    %v9796 = vadd.f32 %v9682, %v9780
    %v9797 = vadd.f32 %v9685, %v9781
    %v9798 = vadd.f32 %v9690, %v9782
    %v9799 = vadd.f32 %v9693, %v9783
    %v9800 = vadd.f32 %v9698, %v9784
    %v9801 = vadd.f32 %v9701, %v9785
    %v9802 = vadd.f32 %v9706, %v9786
    %v9803 = vadd.f32 %v9709, %v9787
    %v9804 = vadd.f32 %v9714, %v9788
    %v9805 = vadd.f32 %v9717, %v9789
    %v9806 = vadd.f32 %v9722, %v9790
    %v9807 = vadd.f32 %v9725, %v9791
    %v9808 = vmul.f32 %v9792, 0.7978846
    %v9809 = vmul.f32 %v9793, 0.7978846
    %v9810 = vmul.f32 %v9794, 0.7978846
    %v9811 = vmul.f32 %v9795, 0.7978846
    %v9812 = vmul.f32 %v9796, 0.7978846
    %v9813 = vmul.f32 %v9797, 0.7978846
    %v9814 = vmul.f32 %v9798, 0.7978846
    %v9815 = vmul.f32 %v9799, 0.7978846
    %v9816 = vmul.f32 %v9800, 0.7978846
    %v9817 = vmul.f32 %v9801, 0.7978846
    %v9818 = vmul.f32 %v9802, 0.7978846
    %v9819 = vmul.f32 %v9803, 0.7978846
    %v9820 = vmul.f32 %v9804, 0.7978846
    %v9821 = vmul.f32 %v9805, 0.7978846
    %v9822 = vmul.f32 %v9806, 0.7978846
    %v9823 = vmul.f32 %v9807, 0.7978846
    %v9824 = vtanh.pop %v9808
    %v9825 = vtanh.pop %v9809
    %v9826 = vtanh.pop %v9810
    %v9827 = vtanh.pop %v9811
    %v9828 = vtanh.pop %v9812
    %v9829 = vtanh.pop %v9813
    %v9830 = vtanh.pop %v9814
    %v9831 = vtanh.pop %v9815
    %v9832 = vtanh.pop %v9816
    %v9833 = vtanh.pop %v9817
    %v9834 = vtanh.pop %v9818
    %v9835 = vtanh.pop %v9819
    %v9836 = vtanh.pop %v9820
    %v9837 = vtanh.pop %v9821
    %v9838 = vtanh.pop %v9822
    %v9839 = vtanh.pop %v9823
    %v9840 = vadd.f32 %v9824, 1.0
    %v9841 = vadd.f32 %v9825, 1.0
    %v9842 = vadd.f32 %v9826, 1.0
    %v9843 = vadd.f32 %v9827, 1.0
    %v9844 = vadd.f32 %v9828, 1.0
    %v9845 = vadd.f32 %v9829, 1.0
    %v9846 = vadd.f32 %v9830, 1.0
    %v9847 = vadd.f32 %v9831, 1.0
    %v9848 = vadd.f32 %v9832, 1.0
    %v9849 = vadd.f32 %v9833, 1.0
    %v9850 = vadd.f32 %v9834, 1.0
    %v9851 = vadd.f32 %v9835, 1.0
    %v9852 = vadd.f32 %v9836, 1.0
    %v9853 = vadd.f32 %v9837, 1.0
    %v9854 = vadd.f32 %v9838, 1.0
    %v9855 = vadd.f32 %v9839, 1.0
    %v9856 = vmul.f32 %v9728, %v9840
    %v9857 = vmul.f32 %v9729, %v9841
    %v9858 = vmul.f32 %v9730, %v9842
    %v9859 = vmul.f32 %v9731, %v9843
    %v9860 = vmul.f32 %v9732, %v9844
    %v9861 = vmul.f32 %v9733, %v9845
    %v9862 = vmul.f32 %v9734, %v9846
    %v9863 = vmul.f32 %v9735, %v9847
    %v9864 = vmul.f32 %v9736, %v9848
    %v9865 = vmul.f32 %v9737, %v9849
    %v9866 = vmul.f32 %v9738, %v9850
    %v9867 = vmul.f32 %v9739, %v9851
    %v9868 = vmul.f32 %v9740, %v9852
    %v9869 = vmul.f32 %v9741, %v9853
    %v9870 = vmul.f32 %v9742, %v9854
    %v9871 = vmul.f32 %v9743, %v9855
    %v9872 = vpack.c.bf16 %v9857, %v9856
    %v9873 = vpack.c.bf16 %v9859, %v9858
    %v9874 = vpack.c.bf16 %v9861, %v9860
    %v9875 = vpack.c.bf16 %v9863, %v9862
    %v9876 = vpack.c.bf16 %v9865, %v9864
    %v9877 = vpack.c.bf16 %v9867, %v9866
    %v9878 = vpack.c.bf16 %v9869, %v9868
    %v9879 = vpack.c.bf16 %v9871, %v9870
    %v9880 = vld [vmem:[%s13] sm:$0xf]
    %v9881 = vld [vmem:[%s13 + $0x4] sm:$0xf]
    %v9882 = vld [vmem:[%s13 + $0x8] sm:$0xf]
    %v9883 = vld [vmem:[%s13 + $0xc] sm:$0xf]
    %v9884 = vld [vmem:[%s13 + $0x10] sm:$0xf]
    %v9885 = vld [vmem:[%s13 + $0x14] sm:$0xf]
    %v9886 = vld [vmem:[%s13 + $0x18] sm:$0xf]
    %v9887 = vld [vmem:[%s13 + $0x1c] sm:$0xf]
    %v9888 = vld [vmem:[%s13 + $0x20] sm:$0xf]
    %v9889 = vld [vmem:[%s13 + $0x24] sm:$0xf]
    %v9890 = vld [vmem:[%s13 + $0x28] sm:$0xf]
    %v9891 = vld [vmem:[%s13 + $0x2c] sm:$0xf]
    %v9892 = vld [vmem:[%s13 + $0x30] sm:$0xf]
    %v9893 = vld [vmem:[%s13 + $0x34] sm:$0xf]
    %v9894 = vld [vmem:[%s13 + $0x38] sm:$0xf]
    %v9895 = vld [vmem:[%s13 + $0x3c] sm:$0xf]
    %v9896 = vld [vmem:[%s14] sm:$0x1]
    %v9898 = vlaneseq
    %v9899 = vshrl.u32 %v9898, 7
    %v9900 = vsub.s32 0, %v9899
    %v9901 = vrot.slane %v9896, %v9900
    %v9919 = vunpack.c.l.b16 %v9880
    %v9920 = vunpack.c.l.b16 %v9881
    %v9921 = vunpack.c.l.b16 %v9882
    %v9922 = vunpack.c.l.b16 %v9883
    %v9923 = vunpack.c.l.b16 %v9884
    %v9924 = vunpack.c.l.b16 %v9885
    %v9925 = vunpack.c.l.b16 %v9886
    %v9926 = vunpack.c.l.b16 %v9887
    %v9927 = vunpack.c.l.b16 %v9888
    %v9928 = vunpack.c.l.b16 %v9889
    %v9929 = vunpack.c.l.b16 %v9890
    %v9930 = vunpack.c.l.b16 %v9891
    %v9931 = vunpack.c.l.b16 %v9892
    %v9932 = vunpack.c.l.b16 %v9893
    %v9933 = vunpack.c.l.b16 %v9894
    %v9934 = vunpack.c.l.b16 %v9895
    %v9935 = vpack.c.b16 %v9920, %v9919
    %v9936 = vpack.c.b16 %v9922, %v9921
    %v9937 = vpack.c.b16 %v9924, %v9923
    %v9938 = vpack.c.b16 %v9926, %v9925
    %v9939 = vpack.c.b16 %v9928, %v9927
    %v9940 = vpack.c.b16 %v9930, %v9929
    %v9941 = vpack.c.b16 %v9932, %v9931
    %v9942 = vpack.c.b16 %v9934, %v9933
    %9951 = vmatprep.subr.bf16.mxu0 0
    %9952 = vmatpush1.bf16.msra.mxu0 %v9942
    %9953 = vmatprep.subr.bf16.mxu0 0
    %9954 = vmatpush1.bf16.msra.mxu0 %v9941
    %9955 = vmatprep.subr.bf16.mxu0 0
    %9956 = vmatpush1.bf16.msra.mxu0 %v9940
    %9957 = vmatprep.subr.bf16.mxu0 0
    %9958 = vmatpush1.bf16.msra.mxu0 %v9939
    %9959 = vmatprep.subr.bf16.mxu0 0
    %9960 = vmatpush1.bf16.msra.mxu0 %v9938
    %9961 = vmatprep.subr.bf16.mxu0 0
    %9962 = vmatpush1.bf16.msra.mxu0 %v9937
    %9963 = vmatprep.subr.bf16.mxu0 0
    %9964 = vmatpush1.bf16.msra.mxu0 %v9936
    %9965 = vmatprep.subr.bf16.mxu0 0
    %9966 = vmatpush1.bf16.msra.mxu0 %v9935
    %9967 = vmatprep.subr.bf16.mxu0 0
    %9968 = vmatpush2.bf16.msra.mxu0 0
    %9969 = vmatprep.subr.bf16.mxu0 0
    %9970 = vmatpush2.bf16.msra.mxu0 0
    %9971 = vmatprep.subr.bf16.mxu0 0
    %9972 = vmatpush2.bf16.msra.mxu0 0
    %9973 = vmatprep.subr.bf16.mxu0 0
    %9974 = vmatpush2.bf16.msra.mxu0 0
    %9975 = vmatprep.subr.bf16.mxu0 0
    %9976 = vmatpush2.bf16.msra.mxu0 0
    %9977 = vmatprep.subr.bf16.mxu0 0
    %9978 = vmatpush2.bf16.msra.mxu0 0
    %9979 = vmatprep.subr.bf16.mxu0 0
    %9980 = vmatpush2.bf16.msra.mxu0 0
    %9981 = vmatprep.subr.bf16.mxu0 0
    %9982 = vmatpush2.bf16.msra.mxu0 0
    %9983 = vmatprep.mubr.bf16.mxu0 0
    %9984 = vmatmul.mubr.bf16.gmra.mxu0 %v9872
    %v9985 = vpop.f32.mrf.mxu0
    %v9986 = vadd.f32 %v9901, %v9985
    %v9987 = vpop.f32.mrf.mxu0
    %v9988 = vpop.f32.mrf.mxu0
    %v9989 = vadd.f32 %v9901, %v9988
    %v9990 = vpop.f32.mrf.mxu0
    %9991 = vmatprep.mubr.bf16.mxu0 0
    %9992 = vmatmul.mubr.bf16.gmra.mxu0 %v9873
    %v9993 = vpop.f32.mrf.mxu0
    %v9994 = vadd.f32 %v9901, %v9993
    %v9995 = vpop.f32.mrf.mxu0
    %v9996 = vpop.f32.mrf.mxu0
    %v9997 = vadd.f32 %v9901, %v9996
    %v9998 = vpop.f32.mrf.mxu0
    %9999 = vmatprep.mubr.bf16.mxu0 0
    %10000 = vmatmul.mubr.bf16.gmra.mxu0 %v9874
    %v10001 = vpop.f32.mrf.mxu0
    %v10002 = vadd.f32 %v9901, %v10001
    %v10003 = vpop.f32.mrf.mxu0
    %v10004 = vpop.f32.mrf.mxu0
    %v10005 = vadd.f32 %v9901, %v10004
    %v10006 = vpop.f32.mrf.mxu0
    %10007 = vmatprep.mubr.bf16.mxu0 0
    %10008 = vmatmul.mubr.bf16.gmra.mxu0 %v9875
    %v10009 = vpop.f32.mrf.mxu0
    %v10010 = vadd.f32 %v9901, %v10009
    %v10011 = vpop.f32.mrf.mxu0
    %v10012 = vpop.f32.mrf.mxu0
    %v10013 = vadd.f32 %v9901, %v10012
    %v10014 = vpop.f32.mrf.mxu0
    %10015 = vmatprep.mubr.bf16.mxu0 0
    %10016 = vmatmul.mubr.bf16.gmra.mxu0 %v9876
    %v10017 = vpop.f32.mrf.mxu0
    %v10018 = vadd.f32 %v9901, %v10017
    %v10019 = vpop.f32.mrf.mxu0
    %v10020 = vpop.f32.mrf.mxu0
    %v10021 = vadd.f32 %v9901, %v10020
    %v10022 = vpop.f32.mrf.mxu0
    %10023 = vmatprep.mubr.bf16.mxu0 0
    %10024 = vmatmul.mubr.bf16.gmra.mxu0 %v9877
    %v10025 = vpop.f32.mrf.mxu0
    %v10026 = vadd.f32 %v9901, %v10025
    %v10027 = vpop.f32.mrf.mxu0
    %v10028 = vpop.f32.mrf.mxu0
    %v10029 = vadd.f32 %v9901, %v10028
    %v10030 = vpop.f32.mrf.mxu0
    %10031 = vmatprep.mubr.bf16.mxu0 0
    %10032 = vmatmul.mubr.bf16.gmra.mxu0 %v9878
    %v10033 = vpop.f32.mrf.mxu0
    %v10034 = vadd.f32 %v9901, %v10033
    %v10035 = vpop.f32.mrf.mxu0
    %v10036 = vpop.f32.mrf.mxu0
    %v10037 = vadd.f32 %v9901, %v10036
    %v10038 = vpop.f32.mrf.mxu0
    %10039 = vmatprep.mubr.bf16.mxu0 0
    %10040 = vmatmul.mubr.bf16.gmra.mxu0 %v9879
    %v10041 = vpop.f32.mrf.mxu0
    %v10042 = vadd.f32 %v9901, %v10041
    %v10043 = vpop.f32.mrf.mxu0
    %v10044 = vpop.f32.mrf.mxu0
    %v10045 = vadd.f32 %v9901, %v10044
    %v10046 = vpop.f32.mrf.mxu0
    %10047 = vdwg.mxu0
    %v10048 = vld [vmem:[%s15] sm:$0x1]
    %v10050 = vlaneseq
    %v10051 = vshrl.u32 %v10050, 7
    %v10052 = vsub.s32 0, %v10051
    %v10053 = vrot.slane %v10048, %v10052
    %v10055 = vmul.f32 %v10053, %v9986
    %v10056 = vmul.f32 %v10053, %v9989
    %v10057 = vmul.f32 %v10053, %v9994
    %v10058 = vmul.f32 %v10053, %v9997
    %v10059 = vmul.f32 %v10053, %v10002
    %v10060 = vmul.f32 %v10053, %v10005
    %v10061 = vmul.f32 %v10053, %v10010
    %v10062 = vmul.f32 %v10053, %v10013
    %v10063 = vmul.f32 %v10053, %v10018
    %v10064 = vmul.f32 %v10053, %v10021
    %v10065 = vmul.f32 %v10053, %v10026
    %v10066 = vmul.f32 %v10053, %v10029
    %v10067 = vmul.f32 %v10053, %v10034
    %v10068 = vmul.f32 %v10053, %v10037
    %v10069 = vmul.f32 %v10053, %v10042
    %v10070 = vmul.f32 %v10053, %v10045
    %v10071 = vadd.f32 %v516, %v10055
    %v10072 = vadd.f32 %v517, %v10056
    %v10073 = vadd.f32 %v518, %v10057
    %v10074 = vadd.f32 %v519, %v10058
    %v10075 = vadd.f32 %v520, %v10059
    %v10076 = vadd.f32 %v521, %v10060
    %v10077 = vadd.f32 %v522, %v10061
    %v10078 = vadd.f32 %v523, %v10062
    %v10079 = vadd.f32 %v524, %v10063
    %v10080 = vadd.f32 %v525, %v10064
    %v10081 = vadd.f32 %v526, %v10065
    %v10082 = vadd.f32 %v527, %v10066
    %v10083 = vadd.f32 %v528, %v10067
    %v10084 = vadd.f32 %v529, %v10068
    %v10085 = vadd.f32 %v530, %v10069
    %v10086 = vadd.f32 %v531, %v10070
    %v10087 = vsel %vm278, %v10071, 0.0
    %v10088 = vsel %vm278, %v10072, 0.0
    %v10089 = vadd.f32 %v10087, %v10088
    %v10090 = vsel %vm278, %v10073, 0.0
    %v10091 = vadd.f32 %v10089, %v10090
    %v10092 = vsel %vm278, %v10074, 0.0
    %v10093 = vadd.f32 %v10091, %v10092
    %v10094 = vsel %vm278, %v10075, 0.0
    %v10095 = vadd.f32 %v10093, %v10094
    %v10096 = vsel %vm278, %v10076, 0.0
    %v10097 = vadd.f32 %v10095, %v10096
    %v10098 = vsel %vm278, %v10077, 0.0
    %v10099 = vadd.f32 %v10097, %v10098
    %v10100 = vsel %vm278, %v10078, 0.0
    %v10101 = vadd.f32 %v10099, %v10100
    %v10102 = vrot.slane %v10101, 4
    %v10103 = vadd.f32 %v10101, %v10102
    %v10104 = vrot.slane %v10103, 2
    %v10105 = vadd.f32 %v10103, %v10104
    %v10106 = vrot.slane %v10105, 1
    %v10107 = vadd.f32 %v10105, %v10106
    %v10108 = vrcp.pop 64.0
    %v10109 = vmul.f32 %v10107, %v10108
    %v10110 = vsel %vm278, %v10079, 0.0
    %v10111 = vsel %vm278, %v10080, 0.0
    %v10112 = vadd.f32 %v10110, %v10111
    %v10113 = vsel %vm278, %v10081, 0.0
    %v10114 = vadd.f32 %v10112, %v10113
    %v10115 = vsel %vm278, %v10082, 0.0
    %v10116 = vadd.f32 %v10114, %v10115
    %v10117 = vsel %vm278, %v10083, 0.0
    %v10118 = vadd.f32 %v10116, %v10117
    %v10119 = vsel %vm278, %v10084, 0.0
    %v10120 = vadd.f32 %v10118, %v10119
    %v10121 = vsel %vm278, %v10085, 0.0
    %v10122 = vadd.f32 %v10120, %v10121
    %v10123 = vsel %vm278, %v10086, 0.0
    %v10124 = vadd.f32 %v10122, %v10123
    %v10125 = vrot.slane %v10124, 4
    %v10126 = vadd.f32 %v10124, %v10125
    %v10127 = vrot.slane %v10126, 2
    %v10128 = vadd.f32 %v10126, %v10127
    %v10129 = vrot.slane %v10128, 1
    %v10130 = vadd.f32 %v10128, %v10129
    %v10131 = vmul.f32 %v10130, %v10108
    %vm10132 = vcmask 1040384
    %v10133 = vsel %vm10132, %v10109, %v10131
    %v10134 = vld [vmem:[%s16] sm:$0x1]
    %v10135 = vld [vmem:[%s17] sm:$0x1]
    %vm10136 = vcmask 254976
    %v10137 = vsel %vm10136, %v10133, 0.0
    %10138 = vadd.xlane.f32.xlu0 %v10137
    %v10139 = vpop.xlane.xlu0 %10138
    %v10140 = vmul.f32 %v10139, %v327
    %v10141 = vsub.f32 %v10133, %v10140
    %v10142 = vmul.f32 %v10141, %v10141
    %v10143 = vsel %vm10136, %v10142, 0.0
    %10144 = vadd.xlane.f32.xlu0 %v10143
    %v10145 = vpop.xlane.xlu0 %10144
    %v10146 = vmul.f32 %v10145, %v327
    %v10147 = vadd.f32 %v10146, 1e-06
    %v10148 = vrsqrt.pop %v10147
    %v10149 = vmul.f32 %v10141, %v10148
    %v10151 = vlaneseq
    %v10152 = vshrl.u32 %v10151, 7
    %v10153 = vsub.s32 0, %v10152
    %v10154 = vrot.slane %v10134, %v10153
    %v10156 = vmul.f32 %v10149, %v10154
    %v10158 = vlaneseq
    %v10159 = vshrl.u32 %v10158, 7
    %v10160 = vsub.s32 0, %v10159
    %v10161 = vrot.slane %v10135, %v10160
    %v10163 = vadd.f32 %v10156, %v10161
    %v10164 = vpack.c.bf16 %v10163, %v10163
    %v10165 = vld [vmem:[%s18] sm:$0xf]
    %v10166 = vld [vmem:[%s18 + $0x4] sm:$0xf]
    %v10167 = vld [vmem:[%s18 + $0x8] sm:$0xf]
    %v10168 = vld [vmem:[%s18 + $0xc] sm:$0xf]
    %v10169 = vld [vmem:[%s19] sm:$0x1]
    %v10171 = vlaneseq
    %v10172 = vshrl.u32 %v10171, 7
    %v10173 = vsub.s32 0, %v10172
    %v10174 = vrot.slane %v10169, %v10173
    %v10180 = vunpack.c.l.b16 %v10165
    %v10181 = vunpack.c.l.b16 %v10166
    %v10182 = vunpack.c.l.b16 %v10167
    %v10183 = vunpack.c.l.b16 %v10168
    %v10184 = vpack.c.b16 %v10181, %v10180
    %v10185 = vpack.c.b16 %v10183, %v10182
    %v10189 = vsel %vm278, %v10164, 0
    %10191 = vmatprep.subr.bf16.mxu0 0
    %10192 = vmatpush1.bf16.msra.mxu0 0
    %10193 = vmatprep.subr.bf16.mxu0 0
    %10194 = vmatpush1.bf16.msra.mxu0 0
    %10195 = vmatprep.subr.bf16.mxu0 0
    %10196 = vmatpush1.bf16.msra.mxu0 0
    %10197 = vmatprep.subr.bf16.mxu0 0
    %10198 = vmatpush1.bf16.msra.mxu0 0
    %10199 = vmatprep.subr.bf16.mxu0 0
    %10200 = vmatpush1.bf16.msra.mxu0 0
    %10201 = vmatprep.subr.bf16.mxu0 0
    %10202 = vmatpush1.bf16.msra.mxu0 0
    %10203 = vmatprep.subr.bf16.mxu0 0
    %10204 = vmatpush1.bf16.msra.mxu0 %v10185
    %10205 = vmatprep.subr.bf16.mxu0 0
    %10206 = vmatpush1.bf16.msra.mxu0 %v10184
    %10207 = vmatprep.subr.bf16.mxu0 0
    %10208 = vmatpush2.bf16.msra.mxu0 0
    %10209 = vmatprep.subr.bf16.mxu0 0
    %10210 = vmatpush2.bf16.msra.mxu0 0
    %10211 = vmatprep.subr.bf16.mxu0 0
    %10212 = vmatpush2.bf16.msra.mxu0 0
    %10213 = vmatprep.subr.bf16.mxu0 0
    %10214 = vmatpush2.bf16.msra.mxu0 0
    %10215 = vmatprep.subr.bf16.mxu0 0
    %10216 = vmatpush2.bf16.msra.mxu0 0
    %10217 = vmatprep.subr.bf16.mxu0 0
    %10218 = vmatpush2.bf16.msra.mxu0 0
    %10219 = vmatprep.subr.bf16.mxu0 0
    %10220 = vmatpush2.bf16.msra.mxu0 0
    %10221 = vmatprep.subr.bf16.mxu0 0
    %10222 = vmatpush2.bf16.msra.mxu0 0
    %10223 = vmatprep.mubr.bf16.mxu0 0
    %10224 = vmatmul.mubr.bf16.gmra.mxu0 %v10189
    %v10225 = vpop.f32.mrf.mxu0
    %v10226 = vadd.f32 %v10174, %v10225
    %v10227 = vpop.f32.mrf.mxu0
    %v10228 = vpop.f32.mrf.mxu0
    %v10229 = vpop.f32.mrf.mxu0
    %10230 = vdwg.mxu0
    %10231 = vst [vmem:[#allocation2] sm:$0x3] %v10226
    // Predicated region
    $region82: #{forward.1} parent=1 // pred_check
      _
    $region83: #{forward.1} parent=1 // pred_check_branch
      %10233 = sbr.rel (0) target = $region85
    $region84: #{forward.1} parent=1 // pred_region
      %s10235 = ssub.s32 32, 32
      %10236 = vsyncadd [#allocation3], %s10235
      %s10238 = sshll.u32 [#allocation2], 4
      %s10239 = int_to_ptr.vmem [resolvable:$true] %s10238
      %10241 = dma.vmem_to_hbm [thread:$0]  %s10239, 32, %s20, [#allocation3]
    $region85: #{forward.1} parent=1 // pred_fallthru
      _
    // Predicated region
    $region86: #{forward.1} parent=1 // pred_check
      _
    $region87: #{forward.1} parent=1 // pred_check_branch
      %10243 = sbr.rel (0) target = $region89
    $region88: #{forward.1} parent=1 // pred_region
      %10244 = dma.done [#allocation3], 32
    $region89: #{forward.1} parent=1 // pred_fallthru
      _
    %10245 = vsyncpa [#allocation3], 1

</llo_original>
